<compile_context>
chip_gen: v7x
topology: tpu7x:2x2x1
jax: 0.10.0
libtpu: 0.0.40
codegen_flags: <defaults>
</compile_context>

<pallas_src>
import functools

import jax
import jax.numpy as jnp
from jax.experimental import pallas as pl
from jax.experimental.pallas import tpu as pltpu


def _round_up(x, m):
    return (x + m - 1) // m * m


# --------------------------------------------------------------------------- #
# Recurrent kernel: the WHOLE token sequence is decoded in one launch.
# --------------------------------------------------------------------------- #
def gru_seq_kernel(tok_ref,    # SMEM (T,) int32          (scalar prefetch)
                   emb_ref,    # VMEM (V, 1, Hp) f32      embedding table (resident)
                   h0_ref,     # VMEM (L, Hp)   f32       initial hidden
                   wrz_ref,    # VMEM (L, 2Hp, 2Hp) bf16  stacked r/z gate weights
                   brz_ref,    # VMEM (L, 2Hp)  f32       fused r/z biases (b_ih + b_hh)
                   win_ref,    # VMEM (L, Hp, Hp) bf16    x -> n gate weight
                   bin_ref,    # VMEM (L, Hp)   f32
                   whn_ref,    # VMEM (L, Hp, Hp) bf16    h -> n gate weight
                   bhn_ref,    # VMEM (L, Hp)   f32
                   hseq_ref,   # out  (T, 1, Hp) f32      last-layer hidden per step
                   hfin_ref):  # out  (L, Hp)   f32       final hidden state
    T = hseq_ref.shape[0]
    L, Hp = hfin_ref.shape

    def step(t, h_layers):
        x = emb_ref[tok_ref[t]]                      # (1, Hp) VMEM gather (address calc only)
        new_layers = []
        for l in range(L):                           # L tiny & static -> unrolled
            h = h_layers[l]                          # (1, Hp) f32, loop-carried in vregs
            lhs = jnp.concatenate([x, h], axis=-1).astype(jnp.bfloat16)   # (1, 2Hp)
            # Stacked r/z weight: i_r+h_r and i_z+h_z are summed inside the MXU.
            rz = jnp.dot(lhs, wrz_ref[l],
                         preferred_element_type=jnp.float32) + brz_ref[l:l + 1, :]
            r = jax.nn.sigmoid(rz[:, :Hp])
            z = jax.nn.sigmoid(rz[:, Hp:])
            i_n = jnp.dot(lhs[:, :Hp], win_ref[l],
                          preferred_element_type=jnp.float32) + bin_ref[l:l + 1, :]
            h_n = jnp.dot(lhs[:, Hp:], whn_ref[l],
                          preferred_element_type=jnp.float32) + bhn_ref[l:l + 1, :]
            n = jnp.tanh(i_n + r * h_n)
            h_new = (1.0 - z) * n + z * h            # f32 elementwise gate math
            new_layers.append(h_new)
            x = h_new                                # feed next layer
        hseq_ref[t] = x                              # (1, Hp) store, leading-dim index
        return tuple(new_layers)

    h_init = tuple(h0_ref[l:l + 1, :] for l in range(L))
    h_last = jax.lax.fori_loop(0, T, step, h_init, unroll=(T <= 16))
    hfin_ref[...] = jnp.concatenate(list(h_last), axis=0)   # single bulk writeback


# --------------------------------------------------------------------------- #
# Decoder kernel: one M=T matmul over the whole sequence, tiled over O.
# --------------------------------------------------------------------------- #
def decoder_kernel(h_ref, w_ref, b_ref, out_ref):
    out_ref[...] = (jnp.dot(h_ref[...].astype(jnp.bfloat16), w_ref[...],
                            preferred_element_type=jnp.float32) + b_ref[...])


def _decode_logits(hseq, wdec, bdec):
    """(T, Hp) @ (Hp, Op) + b in a tiny O-parallel pallas_call."""
    T, Hp = hseq.shape
    _, Op = wdec.shape
    # TODO(synk): at production vocab sizes, size tile_o against v7x's 32 MiB scoped
    # VMEM (64 MiB physical) with bf16 weights and set vmem_limit_bytes explicitly.
    tile_o = Op if Op <= 512 else 512
    if Op % tile_o:
        tile_o = Op
    return pl.pallas_call(
        decoder_kernel,
        out_shape=jax.ShapeDtypeStruct((T, Op), jnp.float32),
        grid_spec=pltpu.PrefetchScalarGridSpec(
            num_scalar_prefetch=0,
            grid=(Op // tile_o,),
            in_specs=[
                pl.BlockSpec((T, Hp), lambda j: (0, 0)),
                pl.BlockSpec((Hp, tile_o), lambda j: (0, j)),
                pl.BlockSpec((1, tile_o), lambda j: (0, j)),
            ],
            out_specs=pl.BlockSpec((T, tile_o), lambda j: (0, j)),
        ),
        compiler_params=pltpu.CompilerParams(dimension_semantics=("parallel",)),
    )(hseq, wdec, bdec)


# --------------------------------------------------------------------------- #
# One-time (load-time) weight repack: pad to 128 lanes, split/stack gates, bf16.
# --------------------------------------------------------------------------- #
def prepare_params(params):
    V, H = params["emb"].shape
    L = params["w_ih"].shape[0]
    O = params["w_dec"].shape[0]
    Hp = _round_up(H, 128)
    Op = _round_up(O, 128)

    # Embedding rows laid out (V, 1, Hp) so a leading-dim dynamic index fetches a row.
    emb_p = jnp.zeros((V, 1, Hp), jnp.float32).at[:, 0, :H].set(
        params["emb"].astype(jnp.float32))

    # Stacked r/z weight per layer:
    #   rows [0:H)      = x contribution, rows [Hp:Hp+H) = h contribution
    #   lanes [0:H)     = r gate,         lanes [Hp:Hp+H) = z gate
    # (no structurally-zero half; biases b_ih+b_hh pre-summed).
    w_rz = jnp.zeros((L, 2 * Hp, 2 * Hp), jnp.float32)
    b_rz = jnp.zeros((L, 2 * Hp), jnp.float32)
    w_in = jnp.zeros((L, Hp, Hp), jnp.float32)
    b_in = jnp.zeros((L, Hp), jnp.float32)
    w_hn = jnp.zeros((L, Hp, Hp), jnp.float32)
    b_hn = jnp.zeros((L, Hp), jnp.float32)
    for l in range(L):
        wih_t = params["w_ih"][l].T          # (H, 3H), gate order r, z, n
        whh_t = params["w_hh"][l].T
        w_rz = w_rz.at[l, 0:H, 0:H].set(wih_t[:, 0:H])                    # x -> r
        w_rz = w_rz.at[l, 0:H, Hp:Hp + H].set(wih_t[:, H:2 * H])          # x -> z
        w_rz = w_rz.at[l, Hp:Hp + H, 0:H].set(whh_t[:, 0:H])              # h -> r
        w_rz = w_rz.at[l, Hp:Hp + H, Hp:Hp + H].set(whh_t[:, H:2 * H])    # h -> z
        b_rz = b_rz.at[l, 0:H].set(params["b_ih"][l, 0:H] + params["b_hh"][l, 0:H])
        b_rz = b_rz.at[l, Hp:Hp + H].set(
            params["b_ih"][l, H:2 * H] + params["b_hh"][l, H:2 * H])
        w_in = w_in.at[l, 0:H, 0:H].set(wih_t[:, 2 * H:3 * H])
        b_in = b_in.at[l, 0:H].set(params["b_ih"][l, 2 * H:3 * H])
        w_hn = w_hn.at[l, 0:H, 0:H].set(whh_t[:, 2 * H:3 * H])
        b_hn = b_hn.at[l, 0:H].set(params["b_hh"][l, 2 * H:3 * H])

    wdec_p = jnp.zeros((Hp, Op), jnp.float32).at[:H, :O].set(params["w_dec"].T)
    bdec_p = jnp.zeros((1, Op), jnp.float32).at[0, :O].set(params["b_dec"])
    return {
        "emb": emb_p,
        "w_rz": w_rz.astype(jnp.bfloat16), "b_rz": b_rz,
        "w_in": w_in.astype(jnp.bfloat16), "b_in": b_in,
        "w_hn": w_hn.astype(jnp.bfloat16), "b_hn": b_hn,
        "wdec": wdec_p.astype(jnp.bfloat16), "bdec": bdec_p,
    }


@functools.partial(jax.jit, static_argnames=("H", "O"))
def rnn_decode_sequence(tokens, hidden, prepped, *, H, O):
    """encoder -> GRU(L layers) -> decoder over a whole token sequence.

    tokens: (T,) int32, hidden: (L, 1, H) f32.
    Returns per-step logits (T, O) and the final hidden state (L, 1, H).
    """
    T = tokens.shape[0]
    L = hidden.shape[0]
    Hp, Op = prepped["wdec"].shape
    V = prepped["emb"].shape[0]
    tokens = tokens.astype(jnp.int32)
    h0_p = jnp.zeros((L, Hp), jnp.float32).at[:, :H].set(
        hidden.reshape(L, H).astype(jnp.float32))

    hseq_p, hfin_p = pl.pallas_call(
        gru_seq_kernel,
        out_shape=(jax.ShapeDtypeStruct((T, 1, Hp), jnp.float32),
                   jax.ShapeDtypeStruct((L, Hp), jnp.float32)),
        grid_spec=pltpu.PrefetchScalarGridSpec(
            num_scalar_prefetch=1,            # token ids -> SMEM, drive emb gather
            grid=(1,),                        # whole sequence in ONE invocation
            in_specs=[
                pl.BlockSpec((V, 1, Hp), lambda i, tok: (0, 0, 0)),      # emb table
                pl.BlockSpec((L, Hp), lambda i, tok: (0, 0)),            # h0
                pl.BlockSpec((L, 2 * Hp, 2 * Hp), lambda i, tok: (0, 0, 0)),
                pl.BlockSpec((L, 2 * Hp), lambda i, tok: (0, 0)),
                pl.BlockSpec((L, Hp, Hp), lambda i, tok: (0, 0, 0)),
                pl.BlockSpec((L, Hp), lambda i, tok: (0, 0)),
                pl.BlockSpec((L, Hp, Hp), lambda i, tok: (0, 0, 0)),
                pl.BlockSpec((L, Hp), lambda i, tok: (0, 0)),
            ],
            out_specs=(
                pl.BlockSpec((T, 1, Hp), lambda i, tok: (0, 0, 0)),      # per-step h_L
                pl.BlockSpec((L, Hp), lambda i, tok: (0, 0)),            # final hidden
            ),
        ),
        compiler_params=pltpu.CompilerParams(
            dimension_semantics=("arbitrary",)),   # single sequential invocation
    )(tokens, prepped["emb"], h0_p, prepped["w_rz"], prepped["b_rz"],
      prepped["w_in"], prepped["b_in"], prepped["w_hn"], prepped["b_hn"])

    # Decoder: one M=T matmul over the whole sequence (hoisted out of recurrence).
    logits_p = _decode_logits(hseq_p.reshape(T, Hp), prepped["wdec"], prepped["bdec"])
    logits = logits_p[:, :O]
    h_new = hfin_p[:, :H].reshape(L, 1, H)
    return logits, h_new


def rnn_forward(token, hidden, prepped, *, H, O):
    """Single-step equivalent of PyTorch RNN.forward(input, hidden) (seq=1, batch=1)."""
    tokens = jnp.asarray(token, jnp.int32).reshape((1,))
    logits, h_new = rnn_decode_sequence(tokens, hidden, prepped, H=H, O=O)
    return logits, h_new    # logits: (1, O), h_new: (L, 1, H)


def rnn_sequence_ref(tokens, hidden, params):
    """Pure-JAX f32 reference matching torch.nn.GRU semantics (gate order r, z, n)."""
    L, _, H = hidden.shape
    h = hidden.reshape(L, H).astype(jnp.float32)
    outs = []
    for i in range(tokens.shape[0]):
        x = params["emb"][tokens[i]].reshape(1, H)
        new_h = []
        for l in range(L):
            hl = h[l:l + 1]
            gi = x @ params["w_ih"][l].T + params["b_ih"][l]
            gh = hl @ params["w_hh"][l].T + params["b_hh"][l]
            r = jax.nn.sigmoid(gi[:, 0:H] + gh[:, 0:H])
            z = jax.nn.sigmoid(gi[:, H:2 * H] + gh[:, H:2 * H])
            n = jnp.tanh(gi[:, 2 * H:] + r * gh[:, 2 * H:])
            hn = (1.0 - z) * n + z * hl
            new_h.append(hn)
            x = hn
        h = jnp.concatenate(new_h, axis=0)
        outs.append(x @ params["w_dec"].T + params["b_dec"])
    return jnp.concatenate(outs, axis=0), h.reshape(L, 1, H)


def init_params(key, input_size, hidden_size, output_size, n_layers):
    ks = jax.random.split(key, 8)
    H, V, O, L = hidden_size, input_size, output_size, n_layers
    s = 1.0 / jnp.sqrt(jnp.float32(H))
    return {
        "emb":   jax.random.normal(ks[0], (V, H), jnp.float32),
        "w_ih":  jax.random.uniform(ks[1], (L, 3 * H, H), jnp.float32, -s, s),
        "w_hh":  jax.random.uniform(ks[2], (L, 3 * H, H), jnp.float32, -s, s),
        "b_ih":  jax.random.uniform(ks[3], (L, 3 * H), jnp.float32, -s, s),
        "b_hh":  jax.random.uniform(ks[4], (L, 3 * H), jnp.float32, -s, s),
        "w_dec": jax.random.uniform(ks[5], (O, H), jnp.float32, -s, s),
        "b_dec": jax.random.uniform(ks[6], (O,), jnp.float32, -s, s),
    }


if __name__ == "__main__":
    input_size = 100     # vocab (≈ len(string.printable) in the original script)
    hidden_size = 120    # matches the PyTorch spec
    output_size = 100
    n_layers = 2         # matches the PyTorch spec
    seq_len = 8

    key = jax.random.PRNGKey(0)
    pkey, tkey = jax.random.split(key)
    params = init_params(pkey, input_size, hidden_size, output_size, n_layers)
    prepped = prepare_params(params)     # one-time repack, hoisted off the decode path

    tokens = jax.random.randint(tkey, (seq_len,), 0, input_size, dtype=jnp.int32)
    hidden = jnp.zeros((n_layers, 1, hidden_size), jnp.float32)   # init_hidden()

    # Full-sequence decode: ONE recurrent kernel launch + one decoder matmul.
    logits, h_final = rnn_decode_sequence(tokens, hidden, prepped,
                                          H=hidden_size, O=output_size)
    logits = jax.block_until_ready(logits)
    h_final = jax.block_until_ready(h_final)

    logits_ref, h_ref = rnn_sequence_ref(tokens, hidden, params)
    assert logits.shape == (seq_len, output_size)
    assert h_final.shape == (n_layers, 1, hidden_size)
    # Tolerances loosened vs the all-f32 version: gate/decoder weights are bf16.
    assert jnp.allclose(logits, logits_ref, atol=3e-2, rtol=3e-2), "logits mismatch"
    assert jnp.allclose(h_final, h_ref, atol=3e-2, rtol=3e-2), "hidden mismatch"

    # Single-step API: exact equivalent of RNN.forward(input, hidden).
    out1, h1 = rnn_forward(tokens[0], hidden, prepped, H=hidden_size, O=output_size)
    out1 = jax.block_until_ready(out1)
    out1_ref, h1_ref = rnn_sequence_ref(tokens[:1], hidden, params)
    assert out1.shape == (1, output_size)
    assert h1.shape == (n_layers, 1, hidden_size)
    assert jnp.allclose(out1, out1_ref, atol=3e-2, rtol=3e-2), "single-step output mismatch"
    assert jnp.allclose(h1, h1_ref, atol=3e-2, rtol=3e-2), "single-step hidden mismatch"

    print("KERNEL_OK")
</pallas_src>

<mosaic_0001>
module attributes {stable_mosaic.version = 11 : i64} {
  func.func @gru_seq_kernel(%arg0: i32, %arg1: memref<8xi32, #tpu.memory_space<smem>>, %arg2: memref<100x1x128xf32, #tpu.memory_space<vmem>>, %arg3: memref<2x128xf32, #tpu.memory_space<vmem>>, %arg4: memref<2x256x256xbf16, #tpu.memory_space<vmem>>, %arg5: memref<2x256xf32, #tpu.memory_space<vmem>>, %arg6: memref<2x128x128xbf16, #tpu.memory_space<vmem>>, %arg7: memref<2x128xf32, #tpu.memory_space<vmem>>, %arg8: memref<2x128x128xbf16, #tpu.memory_space<vmem>>, %arg9: memref<2x128xf32, #tpu.memory_space<vmem>>, %arg10: memref<8x1x128xf32, #tpu.memory_space<vmem>>, %arg11: memref<2x128xf32, #tpu.memory_space<vmem>>) attributes {dimension_semantics = [#tpu.dimension_semantics<arbitrary>], iteration_bounds = array<i64: 1>, scalar_prefetch = 1 : i64, scratch_operands = 0 : i64, tpu.core_type = #tpu.core_type<tc>, window_params = [{pipeline_mode = #tpu.pipeline_mode<synchronous>, transform_indices = @transform_0, window_bounds = array<i64: 100, 1, 128>}, {pipeline_mode = #tpu.pipeline_mode<synchronous>, transform_indices = @transform_1, window_bounds = array<i64: 2, 128>}, {pipeline_mode = #tpu.pipeline_mode<synchronous>, transform_indices = @transform_2, window_bounds = array<i64: 2, 256, 256>}, {pipeline_mode = #tpu.pipeline_mode<synchronous>, transform_indices = @transform_3, window_bounds = array<i64: 2, 256>}, {pipeline_mode = #tpu.pipeline_mode<synchronous>, transform_indices = @transform_4, window_bounds = array<i64: 2, 128, 128>}, {pipeline_mode = #tpu.pipeline_mode<synchronous>, transform_indices = @transform_5, window_bounds = array<i64: 2, 128>}, {pipeline_mode = #tpu.pipeline_mode<synchronous>, transform_indices = @transform_6, window_bounds = array<i64: 2, 128, 128>}, {pipeline_mode = #tpu.pipeline_mode<synchronous>, transform_indices = @transform_7, window_bounds = array<i64: 2, 128>}, {pipeline_mode = #tpu.pipeline_mode<synchronous>, transform_indices = @transform_8, window_bounds = array<i64: 8, 1, 128>}, {pipeline_mode = #tpu.pipeline_mode<synchronous>, transform_indices = @transform_9, window_bounds = array<i64: 2, 128>}]} {
    %c0 = arith.constant 0 : index
    %c0_0 = arith.constant 0 : index
    %0 = vector.load %arg3[%c0, %c0_0] : memref<2x128xf32, #tpu.memory_space<vmem>>, vector<1x128xf32>
    %c1 = arith.constant 1 : index
    %c0_1 = arith.constant 0 : index
    %1 = vector.load %arg3[%c1, %c0_1] : memref<2x128xf32, #tpu.memory_space<vmem>>, vector<1x128xf32>
    %c0_i32 = arith.constant 0 : i32
    %2 = arith.index_cast %c0_i32 : i32 to index
    %3 = memref.load %arg1[%2] : memref<8xi32, #tpu.memory_space<smem>>
    %4 = arith.index_cast %3 : i32 to index
    %c0_2 = arith.constant 0 : index
    %c0_3 = arith.constant 0 : index
    %5 = vector.load %arg2[%4, %c0_2, %c0_3] : memref<100x1x128xf32, #tpu.memory_space<vmem>>, vector<1x1x128xf32>
    %6 = vector.shape_cast %5 : vector<1x1x128xf32> to vector<1x128xf32>
    %7 = tpu.concatenate %6, %0 in 1 : vector<1x128xf32>, vector<1x128xf32> -> vector<1x256xf32>
    %8 = arith.truncf %7 : vector<1x256xf32> to vector<1x256xbf16>
    %c0_4 = arith.constant 0 : index
    %c0_5 = arith.constant 0 : index
    %c0_6 = arith.constant 0 : index
    %9 = vector.load %arg4[%c0_4, %c0_5, %c0_6] : memref<2x256x256xbf16, #tpu.memory_space<vmem>>, vector<1x256x256xbf16>
    %10 = vector.shape_cast %9 : vector<1x256x256xbf16> to vector<256x256xbf16>
    %cst = arith.constant dense<0.000000e+00> : vector<1x256xf32>
    %11 = tpu.matmul %8, %10, %cst {dimension_numbers = #tpu.dot_dimension_numbers<[1], [0], [0], [1], [0, 0, 1, 1], [], []>} : vector<1x256xbf16>, vector<256x256xbf16>, vector<1x256xf32> -> vector<1x256xf32>
    %c0_7 = arith.constant 0 : index
    %c0_8 = arith.constant 0 : index
    %12 = vector.load %arg5[%c0_7, %c0_8] : memref<2x256xf32, #tpu.memory_space<vmem>>, vector<1x256xf32>
    %13 = arith.addf %11, %12 : vector<1x256xf32>
    %14 = vector.extract_strided_slice %13 {offsets = [0, 0], sizes = [1, 128], strides = [1, 1]} : vector<1x256xf32> to vector<1x128xf32>
    %15 = arith.negf %14 : vector<1x128xf32>
    %16 = math.exp %15 : vector<1x128xf32>
    %cst_9 = arith.constant 1.000000e+00 : f32
    %17 = vector.broadcast %cst_9 : f32 to vector<1x128xf32>
    %18 = arith.addf %17, %16 : vector<1x128xf32>
    %19 = arith.divf %17, %18 : vector<1x128xf32>
    %20 = vector.extract_strided_slice %13 {offsets = [0, 128], sizes = [1, 128], strides = [1, 1]} : vector<1x256xf32> to vector<1x128xf32>
    %21 = arith.negf %20 : vector<1x128xf32>
    %22 = math.exp %21 : vector<1x128xf32>
    %cst_10 = arith.constant 1.000000e+00 : f32
    %23 = vector.broadcast %cst_10 : f32 to vector<1x128xf32>
    %24 = arith.addf %23, %22 : vector<1x128xf32>
    %25 = arith.divf %23, %24 : vector<1x128xf32>
    %26 = vector.extract_strided_slice %8 {offsets = [0, 0], sizes = [1, 128], strides = [1, 1]} : vector<1x256xbf16> to vector<1x128xbf16>
    %c0_11 = arith.constant 0 : index
    %c0_12 = arith.constant 0 : index
    %c0_13 = arith.constant 0 : index
    %27 = vector.load %arg6[%c0_11, %c0_12, %c0_13] : memref<2x128x128xbf16, #tpu.memory_space<vmem>>, vector<1x128x128xbf16>
    %28 = vector.shape_cast %27 : vector<1x128x128xbf16> to vector<128x128xbf16>
    %cst_14 = arith.constant dense<0.000000e+00> : vector<1x128xf32>
    %29 = tpu.matmul %26, %28, %cst_14 {dimension_numbers = #tpu.dot_dimension_numbers<[1], [0], [0], [1], [0, 0, 1, 1], [], []>} : vector<1x128xbf16>, vector<128x128xbf16>, vector<1x128xf32> -> vector<1x128xf32>
    %c0_15 = arith.constant 0 : index
    %c0_16 = arith.constant 0 : index
    %30 = vector.load %arg7[%c0_15, %c0_16] : memref<2x128xf32, #tpu.memory_space<vmem>>, vector<1x128xf32>
    %31 = arith.addf %29, %30 : vector<1x128xf32>
    %32 = vector.extract_strided_slice %8 {offsets = [0, 128], sizes = [1, 128], strides = [1, 1]} : vector<1x256xbf16> to vector<1x128xbf16>
    %c0_17 = arith.constant 0 : index
    %c0_18 = arith.constant 0 : index
    %c0_19 = arith.constant 0 : index
    %33 = vector.load %arg8[%c0_17, %c0_18, %c0_19] : memref<2x128x128xbf16, #tpu.memory_space<vmem>>, vector<1x128x128xbf16>
    %34 = vector.shape_cast %33 : vector<1x128x128xbf16> to vector<128x128xbf16>
    %cst_20 = arith.constant dense<0.000000e+00> : vector<1x128xf32>
    %35 = tpu.matmul %32, %34, %cst_20 {dimension_numbers = #tpu.dot_dimension_numbers<[1], [0], [0], [1], [0, 0, 1, 1], [], []>} : vector<1x128xbf16>, vector<128x128xbf16>, vector<1x128xf32> -> vector<1x128xf32>
    %c0_21 = arith.constant 0 : index
    %c0_22 = arith.constant 0 : index
    %36 = vector.load %arg9[%c0_21, %c0_22] : memref<2x128xf32, #tpu.memory_space<vmem>>, vector<1x128xf32>
    %37 = arith.addf %35, %36 : vector<1x128xf32>
    %38 = arith.mulf %19, %37 : vector<1x128xf32>
    %39 = arith.addf %31, %38 : vector<1x128xf32>
    %40 = math.tanh %39 : vector<1x128xf32>
    %cst_23 = arith.constant 1.000000e+00 : f32
    %41 = vector.broadcast %cst_23 : f32 to vector<1x128xf32>
    %42 = arith.subf %41, %25 : vector<1x128xf32>
    %43 = arith.mulf %42, %40 : vector<1x128xf32>
    %44 = arith.mulf %25, %0 : vector<1x128xf32>
    %45 = arith.addf %43, %44 : vector<1x128xf32>
    %46 = tpu.concatenate %45, %1 in 1 : vector<1x128xf32>, vector<1x128xf32> -> vector<1x256xf32>
    %47 = arith.truncf %46 : vector<1x256xf32> to vector<1x256xbf16>
    %c1_24 = arith.constant 1 : index
    %c0_25 = arith.constant 0 : index
    %c0_26 = arith.constant 0 : index
    %48 = vector.load %arg4[%c1_24, %c0_25, %c0_26] : memref<2x256x256xbf16, #tpu.memory_space<vmem>>, vector<1x256x256xbf16>
    %49 = vector.shape_cast %48 : vector<1x256x256xbf16> to vector<256x256xbf16>
    %cst_27 = arith.constant dense<0.000000e+00> : vector<1x256xf32>
    %50 = tpu.matmul %47, %49, %cst_27 {dimension_numbers = #tpu.dot_dimension_numbers<[1], [0], [0], [1], [0, 0, 1, 1], [], []>} : vector<1x256xbf16>, vector<256x256xbf16>, vector<1x256xf32> -> vector<1x256xf32>
    %c1_28 = arith.constant 1 : index
    %c0_29 = arith.constant 0 : index
    %51 = vector.load %arg5[%c1_28, %c0_29] : memref<2x256xf32, #tpu.memory_space<vmem>>, vector<1x256xf32>
    %52 = arith.addf %50, %51 : vector<1x256xf32>
    %53 = vector.extract_strided_slice %52 {offsets = [0, 0], sizes = [1, 128], strides = [1, 1]} : vector<1x256xf32> to vector<1x128xf32>
    %54 = arith.negf %53 : vector<1x128xf32>
    %55 = math.exp %54 : vector<1x128xf32>
    %cst_30 = arith.constant 1.000000e+00 : f32
    %56 = vector.broadcast %cst_30 : f32 to vector<1x128xf32>
    %57 = arith.addf %56, %55 : vector<1x128xf32>
    %58 = arith.divf %56, %57 : vector<1x128xf32>
    %59 = vector.extract_strided_slice %52 {offsets = [0, 128], sizes = [1, 128], strides = [1, 1]} : vector<1x256xf32> to vector<1x128xf32>
    %60 = arith.negf %59 : vector<1x128xf32>
    %61 = math.exp %60 : vector<1x128xf32>
    %cst_31 = arith.constant 1.000000e+00 : f32
    %62 = vector.broadcast %cst_31 : f32 to vector<1x128xf32>
    %63 = arith.addf %62, %61 : vector<1x128xf32>
    %64 = arith.divf %62, %63 : vector<1x128xf32>
    %65 = vector.extract_strided_slice %47 {offsets = [0, 0], sizes = [1, 128], strides = [1, 1]} : vector<1x256xbf16> to vector<1x128xbf16>
    %c1_32 = arith.constant 1 : index
    %c0_33 = arith.constant 0 : index
    %c0_34 = arith.constant 0 : index
    %66 = vector.load %arg6[%c1_32, %c0_33, %c0_34] : memref<2x128x128xbf16, #tpu.memory_space<vmem>>, vector<1x128x128xbf16>
    %67 = vector.shape_cast %66 : vector<1x128x128xbf16> to vector<128x128xbf16>
    %cst_35 = arith.constant dense<0.000000e+00> : vector<1x128xf32>
    %68 = tpu.matmul %65, %67, %cst_35 {dimension_numbers = #tpu.dot_dimension_numbers<[1], [0], [0], [1], [0, 0, 1, 1], [], []>} : vector<1x128xbf16>, vector<128x128xbf16>, vector<1x128xf32> -> vector<1x128xf32>
    %c1_36 = arith.constant 1 : index
    %c0_37 = arith.constant 0 : index
    %69 = vector.load %arg7[%c1_36, %c0_37] : memref<2x128xf32, #tpu.memory_space<vmem>>, vector<1x128xf32>
    %70 = arith.addf %68, %69 : vector<1x128xf32>
    %71 = vector.extract_strided_slice %47 {offsets = [0, 128], sizes = [1, 128], strides = [1, 1]} : vector<1x256xbf16> to vector<1x128xbf16>
    %c1_38 = arith.constant 1 : index
    %c0_39 = arith.constant 0 : index
    %c0_40 = arith.constant 0 : index
    %72 = vector.load %arg8[%c1_38, %c0_39, %c0_40] : memref<2x128x128xbf16, #tpu.memory_space<vmem>>, vector<1x128x128xbf16>
    %73 = vector.shape_cast %72 : vector<1x128x128xbf16> to vector<128x128xbf16>
    %cst_41 = arith.constant dense<0.000000e+00> : vector<1x128xf32>
    %74 = tpu.matmul %71, %73, %cst_41 {dimension_numbers = #tpu.dot_dimension_numbers<[1], [0], [0], [1], [0, 0, 1, 1], [], []>} : vector<1x128xbf16>, vector<128x128xbf16>, vector<1x128xf32> -> vector<1x128xf32>
    %c1_42 = arith.constant 1 : index
    %c0_43 = arith.constant 0 : index
    %75 = vector.load %arg9[%c1_42, %c0_43] : memref<2x128xf32, #tpu.memory_space<vmem>>, vector<1x128xf32>
    %76 = arith.addf %74, %75 : vector<1x128xf32>
    %77 = arith.mulf %58, %76 : vector<1x128xf32>
    %78 = arith.addf %70, %77 : vector<1x128xf32>
    %79 = math.tanh %78 : vector<1x128xf32>
    %cst_44 = arith.constant 1.000000e+00 : f32
    %80 = vector.broadcast %cst_44 : f32 to vector<1x128xf32>
    %81 = arith.subf %80, %64 : vector<1x128xf32>
    %82 = arith.mulf %81, %79 : vector<1x128xf32>
    %83 = arith.mulf %64, %1 : vector<1x128xf32>
    %84 = arith.addf %82, %83 : vector<1x128xf32>
    %85 = arith.index_cast %c0_i32 : i32 to index
    %c0_45 = arith.constant 0 : index
    %c0_46 = arith.constant 0 : index
    %86 = vector.load %arg10[%85, %c0_45, %c0_46] : memref<8x1x128xf32, #tpu.memory_space<vmem>>, vector<1x1x128xf32>
    %87 = vector.shape_cast %86 : vector<1x1x128xf32> to vector<1x128xf32>
    %88 = vector.shape_cast %84 : vector<1x128xf32> to vector<1x1x128xf32>
    tpu.vector_store %arg10[%85, %c0_45, %c0_46], %88 {strides = array<i32>} : memref<8x1x128xf32, #tpu.memory_space<vmem>>, vector<1x1x128xf32>,
    %c1_i32 = arith.constant 1 : i32
    %89 = arith.index_cast %c1_i32 : i32 to index
    %90 = memref.load %arg1[%89] : memref<8xi32, #tpu.memory_space<smem>>
    %91 = arith.index_cast %90 : i32 to index
    %c0_47 = arith.constant 0 : index
    %c0_48 = arith.constant 0 : index
    %92 = vector.load %arg2[%91, %c0_47, %c0_48] : memref<100x1x128xf32, #tpu.memory_space<vmem>>, vector<1x1x128xf32>
    %93 = vector.shape_cast %92 : vector<1x1x128xf32> to vector<1x128xf32>
    %94 = tpu.concatenate %93, %45 in 1 : vector<1x128xf32>, vector<1x128xf32> -> vector<1x256xf32>
    %95 = arith.truncf %94 : vector<1x256xf32> to vector<1x256xbf16>
    %c0_49 = arith.constant 0 : index
    %c0_50 = arith.constant 0 : index
    %c0_51 = arith.constant 0 : index
    %96 = vector.load %arg4[%c0_49, %c0_50, %c0_51] : memref<2x256x256xbf16, #tpu.memory_space<vmem>>, vector<1x256x256xbf16>
    %97 = vector.shape_cast %96 : vector<1x256x256xbf16> to vector<256x256xbf16>
    %cst_52 = arith.constant dense<0.000000e+00> : vector<1x256xf32>
    %98 = tpu.matmul %95, %97, %cst_52 {dimension_numbers = #tpu.dot_dimension_numbers<[1], [0], [0], [1], [0, 0, 1, 1], [], []>} : vector<1x256xbf16>, vector<256x256xbf16>, vector<1x256xf32> -> vector<1x256xf32>
    %c0_53 = arith.constant 0 : index
    %c0_54 = arith.constant 0 : index
    %99 = vector.load %arg5[%c0_53, %c0_54] : memref<2x256xf32, #tpu.memory_space<vmem>>, vector<1x256xf32>
    %100 = arith.addf %98, %99 : vector<1x256xf32>
    %101 = vector.extract_strided_slice %100 {offsets = [0, 0], sizes = [1, 128], strides = [1, 1]} : vector<1x256xf32> to vector<1x128xf32>
    %102 = arith.negf %101 : vector<1x128xf32>
    %103 = math.exp %102 : vector<1x128xf32>
    %cst_55 = arith.constant 1.000000e+00 : f32
    %104 = vector.broadcast %cst_55 : f32 to vector<1x128xf32>
    %105 = arith.addf %104, %103 : vector<1x128xf32>
    %106 = arith.divf %104, %105 : vector<1x128xf32>
    %107 = vector.extract_strided_slice %100 {offsets = [0, 128], sizes = [1, 128], strides = [1, 1]} : vector<1x256xf32> to vector<1x128xf32>
    %108 = arith.negf %107 : vector<1x128xf32>
    %109 = math.exp %108 : vector<1x128xf32>
    %cst_56 = arith.constant 1.000000e+00 : f32
    %110 = vector.broadcast %cst_56 : f32 to vector<1x128xf32>
    %111 = arith.addf %110, %109 : vector<1x128xf32>
    %112 = arith.divf %110, %111 : vector<1x128xf32>
    %113 = vector.extract_strided_slice %95 {offsets = [0, 0], sizes = [1, 128], strides = [1, 1]} : vector<1x256xbf16> to vector<1x128xbf16>
    %c0_57 = arith.constant 0 : index
    %c0_58 = arith.constant 0 : index
    %c0_59 = arith.constant 0 : index
    %114 = vector.load %arg6[%c0_57, %c0_58, %c0_59] : memref<2x128x128xbf16, #tpu.memory_space<vmem>>, vector<1x128x128xbf16>
    %115 = vector.shape_cast %114 : vector<1x128x128xbf16> to vector<128x128xbf16>
    %cst_60 = arith.constant dense<0.000000e+00> : vector<1x128xf32>
    %116 = tpu.matmul %113, %115, %cst_60 {dimension_numbers = #tpu.dot_dimension_numbers<[1], [0], [0], [1], [0, 0, 1, 1], [], []>} : vector<1x128xbf16>, vector<128x128xbf16>, vector<1x128xf32> -> vector<1x128xf32>
    %c0_61 = arith.constant 0 : index
    %c0_62 = arith.constant 0 : index
    %117 = vector.load %arg7[%c0_61, %c0_62] : memref<2x128xf32, #tpu.memory_space<vmem>>, vector<1x128xf32>
    %118 = arith.addf %116, %117 : vector<1x128xf32>
    %119 = vector.extract_strided_slice %95 {offsets = [0, 128], sizes = [1, 128], strides = [1, 1]} : vector<1x256xbf16> to vector<1x128xbf16>
    %c0_63 = arith.constant 0 : index
    %c0_64 = arith.constant 0 : index
    %c0_65 = arith.constant 0 : index
    %120 = vector.load %arg8[%c0_63, %c0_64, %c0_65] : memref<2x128x128xbf16, #tpu.memory_space<vmem>>, vector<1x128x128xbf16>
    %121 = vector.shape_cast %120 : vector<1x128x128xbf16> to vector<128x128xbf16>
    %cst_66 = arith.constant dense<0.000000e+00> : vector<1x128xf32>
    %122 = tpu.matmul %119, %121, %cst_66 {dimension_numbers = #tpu.dot_dimension_numbers<[1], [0], [0], [1], [0, 0, 1, 1], [], []>} : vector<1x128xbf16>, vector<128x128xbf16>, vector<1x128xf32> -> vector<1x128xf32>
    %c0_67 = arith.constant 0 : index
    %c0_68 = arith.constant 0 : index
    %123 = vector.load %arg9[%c0_67, %c0_68] : memref<2x128xf32, #tpu.memory_space<vmem>>, vector<1x128xf32>
    %124 = arith.addf %122, %123 : vector<1x128xf32>
    %125 = arith.mulf %106, %124 : vector<1x128xf32>
    %126 = arith.addf %118, %125 : vector<1x128xf32>
    %127 = math.tanh %126 : vector<1x128xf32>
    %cst_69 = arith.constant 1.000000e+00 : f32
    %128 = vector.broadcast %cst_69 : f32 to vector<1x128xf32>
    %129 = arith.subf %128, %112 : vector<1x128xf32>
    %130 = arith.mulf %129, %127 : vector<1x128xf32>
    %131 = arith.mulf %112, %45 : vector<1x128xf32>
    %132 = arith.addf %130, %131 : vector<1x128xf32>
    %133 = tpu.concatenate %132, %84 in 1 : vector<1x128xf32>, vector<1x128xf32> -> vector<1x256xf32>
    %134 = arith.truncf %133 : vector<1x256xf32> to vector<1x256xbf16>
    %c1_70 = arith.constant 1 : index
    %c0_71 = arith.constant 0 : index
    %c0_72 = arith.constant 0 : index
    %135 = vector.load %arg4[%c1_70, %c0_71, %c0_72] : memref<2x256x256xbf16, #tpu.memory_space<vmem>>, vector<1x256x256xbf16>
    %136 = vector.shape_cast %135 : vector<1x256x256xbf16> to vector<256x256xbf16>
    %cst_73 = arith.constant dense<0.000000e+00> : vector<1x256xf32>
    %137 = tpu.matmul %134, %136, %cst_73 {dimension_numbers = #tpu.dot_dimension_numbers<[1], [0], [0], [1], [0, 0, 1, 1], [], []>} : vector<1x256xbf16>, vector<256x256xbf16>, vector<1x256xf32> -> vector<1x256xf32>
    %c1_74 = arith.constant 1 : index
    %c0_75 = arith.constant 0 : index
    %138 = vector.load %arg5[%c1_74, %c0_75] : memref<2x256xf32, #tpu.memory_space<vmem>>, vector<1x256xf32>
    %139 = arith.addf %137, %138 : vector<1x256xf32>
    %140 = vector.extract_strided_slice %139 {offsets = [0, 0], sizes = [1, 128], strides = [1, 1]} : vector<1x256xf32> to vector<1x128xf32>
    %141 = arith.negf %140 : vector<1x128xf32>
    %142 = math.exp %141 : vector<1x128xf32>
    %cst_76 = arith.constant 1.000000e+00 : f32
    %143 = vector.broadcast %cst_76 : f32 to vector<1x128xf32>
    %144 = arith.addf %143, %142 : vector<1x128xf32>
    %145 = arith.divf %143, %144 : vector<1x128xf32>
    %146 = vector.extract_strided_slice %139 {offsets = [0, 128], sizes = [1, 128], strides = [1, 1]} : vector<1x256xf32> to vector<1x128xf32>
    %147 = arith.negf %146 : vector<1x128xf32>
    %148 = math.exp %147 : vector<1x128xf32>
    %cst_77 = arith.constant 1.000000e+00 : f32
    %149 = vector.broadcast %cst_77 : f32 to vector<1x128xf32>
    %150 = arith.addf %149, %148 : vector<1x128xf32>
    %151 = arith.divf %149, %150 : vector<1x128xf32>
    %152 = vector.extract_strided_slice %134 {offsets = [0, 0], sizes = [1, 128], strides = [1, 1]} : vector<1x256xbf16> to vector<1x128xbf16>
    %c1_78 = arith.constant 1 : index
    %c0_79 = arith.constant 0 : index
    %c0_80 = arith.constant 0 : index
    %153 = vector.load %arg6[%c1_78, %c0_79, %c0_80] : memref<2x128x128xbf16, #tpu.memory_space<vmem>>, vector<1x128x128xbf16>
    %154 = vector.shape_cast %153 : vector<1x128x128xbf16> to vector<128x128xbf16>
    %cst_81 = arith.constant dense<0.000000e+00> : vector<1x128xf32>
    %155 = tpu.matmul %152, %154, %cst_81 {dimension_numbers = #tpu.dot_dimension_numbers<[1], [0], [0], [1], [0, 0, 1, 1], [], []>} : vector<1x128xbf16>, vector<128x128xbf16>, vector<1x128xf32> -> vector<1x128xf32>
    %c1_82 = arith.constant 1 : index
    %c0_83 = arith.constant 0 : index
    %156 = vector.load %arg7[%c1_82, %c0_83] : memref<2x128xf32, #tpu.memory_space<vmem>>, vector<1x128xf32>
    %157 = arith.addf %155, %156 : vector<1x128xf32>
    %158 = vector.extract_strided_slice %134 {offsets = [0, 128], sizes = [1, 128], strides = [1, 1]} : vector<1x256xbf16> to vector<1x128xbf16>
    %c1_84 = arith.constant 1 : index
    %c0_85 = arith.constant 0 : index
    %c0_86 = arith.constant 0 : index
    %159 = vector.load %arg8[%c1_84, %c0_85, %c0_86] : memref<2x128x128xbf16, #tpu.memory_space<vmem>>, vector<1x128x128xbf16>
    %160 = vector.shape_cast %159 : vector<1x128x128xbf16> to vector<128x128xbf16>
    %cst_87 = arith.constant dense<0.000000e+00> : vector<1x128xf32>
    %161 = tpu.matmul %158, %160, %cst_87 {dimension_numbers = #tpu.dot_dimension_numbers<[1], [0], [0], [1], [0, 0, 1, 1], [], []>} : vector<1x128xbf16>, vector<128x128xbf16>, vector<1x128xf32> -> vector<1x128xf32>
    %c1_88 = arith.constant 1 : index
    %c0_89 = arith.constant 0 : index
    %162 = vector.load %arg9[%c1_88, %c0_89] : memref<2x128xf32, #tpu.memory_space<vmem>>, vector<1x128xf32>
    %163 = arith.addf %161, %162 : vector<1x128xf32>
    %164 = arith.mulf %145, %163 : vector<1x128xf32>
    %165 = arith.addf %157, %164 : vector<1x128xf32>
    %166 = math.tanh %165 : vector<1x128xf32>
    %cst_90 = arith.constant 1.000000e+00 : f32
    %167 = vector.broadcast %cst_90 : f32 to vector<1x128xf32>
    %168 = arith.subf %167, %151 : vector<1x128xf32>
    %169 = arith.mulf %168, %166 : vector<1x128xf32>
    %170 = arith.mulf %151, %84 : vector<1x128xf32>
    %171 = arith.addf %169, %170 : vector<1x128xf32>
    %172 = arith.index_cast %c1_i32 : i32 to index
    %c0_91 = arith.constant 0 : index
    %c0_92 = arith.constant 0 : index
    %173 = vector.load %arg10[%172, %c0_91, %c0_92] : memref<8x1x128xf32, #tpu.memory_space<vmem>>, vector<1x1x128xf32>
    %174 = vector.shape_cast %173 : vector<1x1x128xf32> to vector<1x128xf32>
    %175 = vector.shape_cast %171 : vector<1x128xf32> to vector<1x1x128xf32>
    tpu.vector_store %arg10[%172, %c0_91, %c0_92], %175 {strides = array<i32>} : memref<8x1x128xf32, #tpu.memory_space<vmem>>, vector<1x1x128xf32>,
    %c2_i32 = arith.constant 2 : i32
    %176 = arith.index_cast %c2_i32 : i32 to index
    %177 = memref.load %arg1[%176] : memref<8xi32, #tpu.memory_space<smem>>
    %178 = arith.index_cast %177 : i32 to index
    %c0_93 = arith.constant 0 : index
    %c0_94 = arith.constant 0 : index
    %179 = vector.load %arg2[%178, %c0_93, %c0_94] : memref<100x1x128xf32, #tpu.memory_space<vmem>>, vector<1x1x128xf32>
    %180 = vector.shape_cast %179 : vector<1x1x128xf32> to vector<1x128xf32>
    %181 = tpu.concatenate %180, %132 in 1 : vector<1x128xf32>, vector<1x128xf32> -> vector<1x256xf32>
    %182 = arith.truncf %181 : vector<1x256xf32> to vector<1x256xbf16>
    %c0_95 = arith.constant 0 : index
    %c0_96 = arith.constant 0 : index
    %c0_97 = arith.constant 0 : index
    %183 = vector.load %arg4[%c0_95, %c0_96, %c0_97] : memref<2x256x256xbf16, #tpu.memory_space<vmem>>, vector<1x256x256xbf16>
    %184 = vector.shape_cast %183 : vector<1x256x256xbf16> to vector<256x256xbf16>
    %cst_98 = arith.constant dense<0.000000e+00> : vector<1x256xf32>
    %185 = tpu.matmul %182, %184, %cst_98 {dimension_numbers = #tpu.dot_dimension_numbers<[1], [0], [0], [1], [0, 0, 1, 1], [], []>} : vector<1x256xbf16>, vector<256x256xbf16>, vector<1x256xf32> -> vector<1x256xf32>
    %c0_99 = arith.constant 0 : index
    %c0_100 = arith.constant 0 : index
    %186 = vector.load %arg5[%c0_99, %c0_100] : memref<2x256xf32, #tpu.memory_space<vmem>>, vector<1x256xf32>
    %187 = arith.addf %185, %186 : vector<1x256xf32>
    %188 = vector.extract_strided_slice %187 {offsets = [0, 0], sizes = [1, 128], strides = [1, 1]} : vector<1x256xf32> to vector<1x128xf32>
    %189 = arith.negf %188 : vector<1x128xf32>
    %190 = math.exp %189 : vector<1x128xf32>
    %cst_101 = arith.constant 1.000000e+00 : f32
    %191 = vector.broadcast %cst_101 : f32 to vector<1x128xf32>
    %192 = arith.addf %191, %190 : vector<1x128xf32>
    %193 = arith.divf %191, %192 : vector<1x128xf32>
    %194 = vector.extract_strided_slice %187 {offsets = [0, 128], sizes = [1, 128], strides = [1, 1]} : vector<1x256xf32> to vector<1x128xf32>
    %195 = arith.negf %194 : vector<1x128xf32>
    %196 = math.exp %195 : vector<1x128xf32>
    %cst_102 = arith.constant 1.000000e+00 : f32
    %197 = vector.broadcast %cst_102 : f32 to vector<1x128xf32>
    %198 = arith.addf %197, %196 : vector<1x128xf32>
    %199 = arith.divf %197, %198 : vector<1x128xf32>
    %200 = vector.extract_strided_slice %182 {offsets = [0, 0], sizes = [1, 128], strides = [1, 1]} : vector<1x256xbf16> to vector<1x128xbf16>
    %c0_103 = arith.constant 0 : index
    %c0_104 = arith.constant 0 : index
    %c0_105 = arith.constant 0 : index
    %201 = vector.load %arg6[%c0_103, %c0_104, %c0_105] : memref<2x128x128xbf16, #tpu.memory_space<vmem>>, vector<1x128x128xbf16>
    %202 = vector.shape_cast %201 : vector<1x128x128xbf16> to vector<128x128xbf16>
    %cst_106 = arith.constant dense<0.000000e+00> : vector<1x128xf32>
    %203 = tpu.matmul %200, %202, %cst_106 {dimension_numbers = #tpu.dot_dimension_numbers<[1], [0], [0], [1], [0, 0, 1, 1], [], []>} : vector<1x128xbf16>, vector<128x128xbf16>, vector<1x128xf32> -> vector<1x128xf32>
    %c0_107 = arith.constant 0 : index
    %c0_108 = arith.constant 0 : index
    %204 = vector.load %arg7[%c0_107, %c0_108] : memref<2x128xf32, #tpu.memory_space<vmem>>, vector<1x128xf32>
    %205 = arith.addf %203, %204 : vector<1x128xf32>
    %206 = vector.extract_strided_slice %182 {offsets = [0, 128], sizes = [1, 128], strides = [1, 1]} : vector<1x256xbf16> to vector<1x128xbf16>
    %c0_109 = arith.constant 0 : index
    %c0_110 = arith.constant 0 : index
    %c0_111 = arith.constant 0 : index
    %207 = vector.load %arg8[%c0_109, %c0_110, %c0_111] : memref<2x128x128xbf16, #tpu.memory_space<vmem>>, vector<1x128x128xbf16>
    %208 = vector.shape_cast %207 : vector<1x128x128xbf16> to vector<128x128xbf16>
    %cst_112 = arith.constant dense<0.000000e+00> : vector<1x128xf32>
    %209 = tpu.matmul %206, %208, %cst_112 {dimension_numbers = #tpu.dot_dimension_numbers<[1], [0], [0], [1], [0, 0, 1, 1], [], []>} : vector<1x128xbf16>, vector<128x128xbf16>, vector<1x128xf32> -> vector<1x128xf32>
    %c0_113 = arith.constant 0 : index
    %c0_114 = arith.constant 0 : index
    %210 = vector.load %arg9[%c0_113, %c0_114] : memref<2x128xf32, #tpu.memory_space<vmem>>, vector<1x128xf32>
    %211 = arith.addf %209, %210 : vector<1x128xf32>
    %212 = arith.mulf %193, %211 : vector<1x128xf32>
    %213 = arith.addf %205, %212 : vector<1x128xf32>
    %214 = math.tanh %213 : vector<1x128xf32>
    %cst_115 = arith.constant 1.000000e+00 : f32
    %215 = vector.broadcast %cst_115 : f32 to vector<1x128xf32>
    %216 = arith.subf %215, %199 : vector<1x128xf32>
    %217 = arith.mulf %216, %214 : vector<1x128xf32>
    %218 = arith.mulf %199, %132 : vector<1x128xf32>
    %219 = arith.addf %217, %218 : vector<1x128xf32>
    %220 = tpu.concatenate %219, %171 in 1 : vector<1x128xf32>, vector<1x128xf32> -> vector<1x256xf32>
    %221 = arith.truncf %220 : vector<1x256xf32> to vector<1x256xbf16>
    %c1_116 = arith.constant 1 : index
    %c0_117 = arith.constant 0 : index
    %c0_118 = arith.constant 0 : index
    %222 = vector.load %arg4[%c1_116, %c0_117, %c0_118] : memref<2x256x256xbf16, #tpu.memory_space<vmem>>, vector<1x256x256xbf16>
    %223 = vector.shape_cast %222 : vector<1x256x256xbf16> to vector<256x256xbf16>
    %cst_119 = arith.constant dense<0.000000e+00> : vector<1x256xf32>
    %224 = tpu.matmul %221, %223, %cst_119 {dimension_numbers = #tpu.dot_dimension_numbers<[1], [0], [0], [1], [0, 0, 1, 1], [], []>} : vector<1x256xbf16>, vector<256x256xbf16>, vector<1x256xf32> -> vector<1x256xf32>
    %c1_120 = arith.constant 1 : index
    %c0_121 = arith.constant 0 : index
    %225 = vector.load %arg5[%c1_120, %c0_121] : memref<2x256xf32, #tpu.memory_space<vmem>>, vector<1x256xf32>
    %226 = arith.addf %224, %225 : vector<1x256xf32>
    %227 = vector.extract_strided_slice %226 {offsets = [0, 0], sizes = [1, 128], strides = [1, 1]} : vector<1x256xf32> to vector<1x128xf32>
    %228 = arith.negf %227 : vector<1x128xf32>
    %229 = math.exp %228 : vector<1x128xf32>
    %cst_122 = arith.constant 1.000000e+00 : f32
    %230 = vector.broadcast %cst_122 : f32 to vector<1x128xf32>
    %231 = arith.addf %230, %229 : vector<1x128xf32>
    %232 = arith.divf %230, %231 : vector<1x128xf32>
    %233 = vector.extract_strided_slice %226 {offsets = [0, 128], sizes = [1, 128], strides = [1, 1]} : vector<1x256xf32> to vector<1x128xf32>
    %234 = arith.negf %233 : vector<1x128xf32>
    %235 = math.exp %234 : vector<1x128xf32>
    %cst_123 = arith.constant 1.000000e+00 : f32
    %236 = vector.broadcast %cst_123 : f32 to vector<1x128xf32>
    %237 = arith.addf %236, %235 : vector<1x128xf32>
    %238 = arith.divf %236, %237 : vector<1x128xf32>
    %239 = vector.extract_strided_slice %221 {offsets = [0, 0], sizes = [1, 128], strides = [1, 1]} : vector<1x256xbf16> to vector<1x128xbf16>
    %c1_124 = arith.constant 1 : index
    %c0_125 = arith.constant 0 : index
    %c0_126 = arith.constant 0 : index
    %240 = vector.load %arg6[%c1_124, %c0_125, %c0_126] : memref<2x128x128xbf16, #tpu.memory_space<vmem>>, vector<1x128x128xbf16>
    %241 = vector.shape_cast %240 : vector<1x128x128xbf16> to vector<128x128xbf16>
    %cst_127 = arith.constant dense<0.000000e+00> : vector<1x128xf32>
    %242 = tpu.matmul %239, %241, %cst_127 {dimension_numbers = #tpu.dot_dimension_numbers<[1], [0], [0], [1], [0, 0, 1, 1], [], []>} : vector<1x128xbf16>, vector<128x128xbf16>, vector<1x128xf32> -> vector<1x128xf32>
    %c1_128 = arith.constant 1 : index
    %c0_129 = arith.constant 0 : index
    %243 = vector.load %arg7[%c1_128, %c0_129] : memref<2x128xf32, #tpu.memory_space<vmem>>, vector<1x128xf32>
    %244 = arith.addf %242, %243 : vector<1x128xf32>
    %245 = vector.extract_strided_slice %221 {offsets = [0, 128], sizes = [1, 128], strides = [1, 1]} : vector<1x256xbf16> to vector<1x128xbf16>
    %c1_130 = arith.constant 1 : index
    %c0_131 = arith.constant 0 : index
    %c0_132 = arith.constant 0 : index
    %246 = vector.load %arg8[%c1_130, %c0_131, %c0_132] : memref<2x128x128xbf16, #tpu.memory_space<vmem>>, vector<1x128x128xbf16>
    %247 = vector.shape_cast %246 : vector<1x128x128xbf16> to vector<128x128xbf16>
    %cst_133 = arith.constant dense<0.000000e+00> : vector<1x128xf32>
    %248 = tpu.matmul %245, %247, %cst_133 {dimension_numbers = #tpu.dot_dimension_numbers<[1], [0], [0], [1], [0, 0, 1, 1], [], []>} : vector<1x128xbf16>, vector<128x128xbf16>, vector<1x128xf32> -> vector<1x128xf32>
    %c1_134 = arith.constant 1 : index
    %c0_135 = arith.constant 0 : index
    %249 = vector.load %arg9[%c1_134, %c0_135] : memref<2x128xf32, #tpu.memory_space<vmem>>, vector<1x128xf32>
    %250 = arith.addf %248, %249 : vector<1x128xf32>
    %251 = arith.mulf %232, %250 : vector<1x128xf32>
    %252 = arith.addf %244, %251 : vector<1x128xf32>
    %253 = math.tanh %252 : vector<1x128xf32>
    %cst_136 = arith.constant 1.000000e+00 : f32
    %254 = vector.broadcast %cst_136 : f32 to vector<1x128xf32>
    %255 = arith.subf %254, %238 : vector<1x128xf32>
    %256 = arith.mulf %255, %253 : vector<1x128xf32>
    %257 = arith.mulf %238, %171 : vector<1x128xf32>
    %258 = arith.addf %256, %257 : vector<1x128xf32>
    %259 = arith.index_cast %c2_i32 : i32 to index
    %c0_137 = arith.constant 0 : index
    %c0_138 = arith.constant 0 : index
    %260 = vector.load %arg10[%259, %c0_137, %c0_138] : memref<8x1x128xf32, #tpu.memory_space<vmem>>, vector<1x1x128xf32>
    %261 = vector.shape_cast %260 : vector<1x1x128xf32> to vector<1x128xf32>
    %262 = vector.shape_cast %258 : vector<1x128xf32> to vector<1x1x128xf32>
    tpu.vector_store %arg10[%259, %c0_137, %c0_138], %262 {strides = array<i32>} : memref<8x1x128xf32, #tpu.memory_space<vmem>>, vector<1x1x128xf32>,
    %c3_i32 = arith.constant 3 : i32
    %263 = arith.index_cast %c3_i32 : i32 to index
    %264 = memref.load %arg1[%263] : memref<8xi32, #tpu.memory_space<smem>>
    %265 = arith.index_cast %264 : i32 to index
    %c0_139 = arith.constant 0 : index
    %c0_140 = arith.constant 0 : index
    %266 = vector.load %arg2[%265, %c0_139, %c0_140] : memref<100x1x128xf32, #tpu.memory_space<vmem>>, vector<1x1x128xf32>
    %267 = vector.shape_cast %266 : vector<1x1x128xf32> to vector<1x128xf32>
    %268 = tpu.concatenate %267, %219 in 1 : vector<1x128xf32>, vector<1x128xf32> -> vector<1x256xf32>
    %269 = arith.truncf %268 : vector<1x256xf32> to vector<1x256xbf16>
    %c0_141 = arith.constant 0 : index
    %c0_142 = arith.constant 0 : index
    %c0_143 = arith.constant 0 : index
    %270 = vector.load %arg4[%c0_141, %c0_142, %c0_143] : memref<2x256x256xbf16, #tpu.memory_space<vmem>>, vector<1x256x256xbf16>
    %271 = vector.shape_cast %270 : vector<1x256x256xbf16> to vector<256x256xbf16>
    %cst_144 = arith.constant dense<0.000000e+00> : vector<1x256xf32>
    %272 = tpu.matmul %269, %271, %cst_144 {dimension_numbers = #tpu.dot_dimension_numbers<[1], [0], [0], [1], [0, 0, 1, 1], [], []>} : vector<1x256xbf16>, vector<256x256xbf16>, vector<1x256xf32> -> vector<1x256xf32>
    %c0_145 = arith.constant 0 : index
    %c0_146 = arith.constant 0 : index
    %273 = vector.load %arg5[%c0_145, %c0_146] : memref<2x256xf32, #tpu.memory_space<vmem>>, vector<1x256xf32>
    %274 = arith.addf %272, %273 : vector<1x256xf32>
    %275 = vector.extract_strided_slice %274 {offsets = [0, 0], sizes = [1, 128], strides = [1, 1]} : vector<1x256xf32> to vector<1x128xf32>
    %276 = arith.negf %275 : vector<1x128xf32>
    %277 = math.exp %276 : vector<1x128xf32>
    %cst_147 = arith.constant 1.000000e+00 : f32
    %278 = vector.broadcast %cst_147 : f32 to vector<1x128xf32>
    %279 = arith.addf %278, %277 : vector<1x128xf32>
    %280 = arith.divf %278, %279 : vector<1x128xf32>
    %281 = vector.extract_strided_slice %274 {offsets = [0, 128], sizes = [1, 128], strides = [1, 1]} : vector<1x256xf32> to vector<1x128xf32>
    %282 = arith.negf %281 : vector<1x128xf32>
    %283 = math.exp %282 : vector<1x128xf32>
    %cst_148 = arith.constant 1.000000e+00 : f32
    %284 = vector.broadcast %cst_148 : f32 to vector<1x128xf32>
    %285 = arith.addf %284, %283 : vector<1x128xf32>
    %286 = arith.divf %284, %285 : vector<1x128xf32>
    %287 = vector.extract_strided_slice %269 {offsets = [0, 0], sizes = [1, 128], strides = [1, 1]} : vector<1x256xbf16> to vector<1x128xbf16>
    %c0_149 = arith.constant 0 : index
    %c0_150 = arith.constant 0 : index
    %c0_151 = arith.constant 0 : index
    %288 = vector.load %arg6[%c0_149, %c0_150, %c0_151] : memref<2x128x128xbf16, #tpu.memory_space<vmem>>, vector<1x128x128xbf16>
    %289 = vector.shape_cast %288 : vector<1x128x128xbf16> to vector<128x128xbf16>
    %cst_152 = arith.constant dense<0.000000e+00> : vector<1x128xf32>
    %290 = tpu.matmul %287, %289, %cst_152 {dimension_numbers = #tpu.dot_dimension_numbers<[1], [0], [0], [1], [0, 0, 1, 1], [], []>} : vector<1x128xbf16>, vector<128x128xbf16>, vector<1x128xf32> -> vector<1x128xf32>
    %c0_153 = arith.constant 0 : index
    %c0_154 = arith.constant 0 : index
    %291 = vector.load %arg7[%c0_153, %c0_154] : memref<2x128xf32, #tpu.memory_space<vmem>>, vector<1x128xf32>
    %292 = arith.addf %290, %291 : vector<1x128xf32>
    %293 = vector.extract_strided_slice %269 {offsets = [0, 128], sizes = [1, 128], strides = [1, 1]} : vector<1x256xbf16> to vector<1x128xbf16>
    %c0_155 = arith.constant 0 : index
    %c0_156 = arith.constant 0 : index
    %c0_157 = arith.constant 0 : index
    %294 = vector.load %arg8[%c0_155, %c0_156, %c0_157] : memref<2x128x128xbf16, #tpu.memory_space<vmem>>, vector<1x128x128xbf16>
    %295 = vector.shape_cast %294 : vector<1x128x128xbf16> to vector<128x128xbf16>
    %cst_158 = arith.constant dense<0.000000e+00> : vector<1x128xf32>
    %296 = tpu.matmul %293, %295, %cst_158 {dimension_numbers = #tpu.dot_dimension_numbers<[1], [0], [0], [1], [0, 0, 1, 1], [], []>} : vector<1x128xbf16>, vector<128x128xbf16>, vector<1x128xf32> -> vector<1x128xf32>
    %c0_159 = arith.constant 0 : index
    %c0_160 = arith.constant 0 : index
    %297 = vector.load %arg9[%c0_159, %c0_160] : memref<2x128xf32, #tpu.memory_space<vmem>>, vector<1x128xf32>
    %298 = arith.addf %296, %297 : vector<1x128xf32>
    %299 = arith.mulf %280, %298 : vector<1x128xf32>
    %300 = arith.addf %292, %299 : vector<1x128xf32>
    %301 = math.tanh %300 : vector<1x128xf32>
    %cst_161 = arith.constant 1.000000e+00 : f32
    %302 = vector.broadcast %cst_161 : f32 to vector<1x128xf32>
    %303 = arith.subf %302, %286 : vector<1x128xf32>
    %304 = arith.mulf %303, %301 : vector<1x128xf32>
    %305 = arith.mulf %286, %219 : vector<1x128xf32>
    %306 = arith.addf %304, %305 : vector<1x128xf32>
    %307 = tpu.concatenate %306, %258 in 1 : vector<1x128xf32>, vector<1x128xf32> -> vector<1x256xf32>
    %308 = arith.truncf %307 : vector<1x256xf32> to vector<1x256xbf16>
    %c1_162 = arith.constant 1 : index
    %c0_163 = arith.constant 0 : index
    %c0_164 = arith.constant 0 : index
    %309 = vector.load %arg4[%c1_162, %c0_163, %c0_164] : memref<2x256x256xbf16, #tpu.memory_space<vmem>>, vector<1x256x256xbf16>
    %310 = vector.shape_cast %309 : vector<1x256x256xbf16> to vector<256x256xbf16>
    %cst_165 = arith.constant dense<0.000000e+00> : vector<1x256xf32>
    %311 = tpu.matmul %308, %310, %cst_165 {dimension_numbers = #tpu.dot_dimension_numbers<[1], [0], [0], [1], [0, 0, 1, 1], [], []>} : vector<1x256xbf16>, vector<256x256xbf16>, vector<1x256xf32> -> vector<1x256xf32>
    %c1_166 = arith.constant 1 : index
    %c0_167 = arith.constant 0 : index
    %312 = vector.load %arg5[%c1_166, %c0_167] : memref<2x256xf32, #tpu.memory_space<vmem>>, vector<1x256xf32>
    %313 = arith.addf %311, %312 : vector<1x256xf32>
    %314 = vector.extract_strided_slice %313 {offsets = [0, 0], sizes = [1, 128], strides = [1, 1]} : vector<1x256xf32> to vector<1x128xf32>
    %315 = arith.negf %314 : vector<1x128xf32>
    %316 = math.exp %315 : vector<1x128xf32>
    %cst_168 = arith.constant 1.000000e+00 : f32
    %317 = vector.broadcast %cst_168 : f32 to vector<1x128xf32>
    %318 = arith.addf %317, %316 : vector<1x128xf32>
    %319 = arith.divf %317, %318 : vector<1x128xf32>
    %320 = vector.extract_strided_slice %313 {offsets = [0, 128], sizes = [1, 128], strides = [1, 1]} : vector<1x256xf32> to vector<1x128xf32>
    %321 = arith.negf %320 : vector<1x128xf32>
    %322 = math.exp %321 : vector<1x128xf32>
    %cst_169 = arith.constant 1.000000e+00 : f32
    %323 = vector.broadcast %cst_169 : f32 to vector<1x128xf32>
    %324 = arith.addf %323, %322 : vector<1x128xf32>
    %325 = arith.divf %323, %324 : vector<1x128xf32>
    %326 = vector.extract_strided_slice %308 {offsets = [0, 0], sizes = [1, 128], strides = [1, 1]} : vector<1x256xbf16> to vector<1x128xbf16>
    %c1_170 = arith.constant 1 : index
    %c0_171 = arith.constant 0 : index
    %c0_172 = arith.constant 0 : index
    %327 = vector.load %arg6[%c1_170, %c0_171, %c0_172] : memref<2x128x128xbf16, #tpu.memory_space<vmem>>, vector<1x128x128xbf16>
    %328 = vector.shape_cast %327 : vector<1x128x128xbf16> to vector<128x128xbf16>
    %cst_173 = arith.constant dense<0.000000e+00> : vector<1x128xf32>
    %329 = tpu.matmul %326, %328, %cst_173 {dimension_numbers = #tpu.dot_dimension_numbers<[1], [0], [0], [1], [0, 0, 1, 1], [], []>} : vector<1x128xbf16>, vector<128x128xbf16>, vector<1x128xf32> -> vector<1x128xf32>
    %c1_174 = arith.constant 1 : index
    %c0_175 = arith.constant 0 : index
    %330 = vector.load %arg7[%c1_174, %c0_175] : memref<2x128xf32, #tpu.memory_space<vmem>>, vector<1x128xf32>
    %331 = arith.addf %329, %330 : vector<1x128xf32>
    %332 = vector.extract_strided_slice %308 {offsets = [0, 128], sizes = [1, 128], strides = [1, 1]} : vector<1x256xbf16> to vector<1x128xbf16>
    %c1_176 = arith.constant 1 : index
    %c0_177 = arith.constant 0 : index
    %c0_178 = arith.constant 0 : index
    %333 = vector.load %arg8[%c1_176, %c0_177, %c0_178] : memref<2x128x128xbf16, #tpu.memory_space<vmem>>, vector<1x128x128xbf16>
    %334 = vector.shape_cast %333 : vector<1x128x128xbf16> to vector<128x128xbf16>
    %cst_179 = arith.constant dense<0.000000e+00> : vector<1x128xf32>
    %335 = tpu.matmul %332, %334, %cst_179 {dimension_numbers = #tpu.dot_dimension_numbers<[1], [0], [0], [1], [0, 0, 1, 1], [], []>} : vector<1x128xbf16>, vector<128x128xbf16>, vector<1x128xf32> -> vector<1x128xf32>
    %c1_180 = arith.constant 1 : index
    %c0_181 = arith.constant 0 : index
    %336 = vector.load %arg9[%c1_180, %c0_181] : memref<2x128xf32, #tpu.memory_space<vmem>>, vector<1x128xf32>
    %337 = arith.addf %335, %336 : vector<1x128xf32>
    %338 = arith.mulf %319, %337 : vector<1x128xf32>
    %339 = arith.addf %331, %338 : vector<1x128xf32>
    %340 = math.tanh %339 : vector<1x128xf32>
    %cst_182 = arith.constant 1.000000e+00 : f32
    %341 = vector.broadcast %cst_182 : f32 to vector<1x128xf32>
    %342 = arith.subf %341, %325 : vector<1x128xf32>
    %343 = arith.mulf %342, %340 : vector<1x128xf32>
    %344 = arith.mulf %325, %258 : vector<1x128xf32>
    %345 = arith.addf %343, %344 : vector<1x128xf32>
    %346 = arith.index_cast %c3_i32 : i32 to index
    %c0_183 = arith.constant 0 : index
    %c0_184 = arith.constant 0 : index
    %347 = vector.load %arg10[%346, %c0_183, %c0_184] : memref<8x1x128xf32, #tpu.memory_space<vmem>>, vector<1x1x128xf32>
    %348 = vector.shape_cast %347 : vector<1x1x128xf32> to vector<1x128xf32>
    %349 = vector.shape_cast %345 : vector<1x128xf32> to vector<1x1x128xf32>
    tpu.vector_store %arg10[%346, %c0_183, %c0_184], %349 {strides = array<i32>} : memref<8x1x128xf32, #tpu.memory_space<vmem>>, vector<1x1x128xf32>,
    %c4_i32 = arith.constant 4 : i32
    %350 = arith.index_cast %c4_i32 : i32 to index
    %351 = memref.load %arg1[%350] : memref<8xi32, #tpu.memory_space<smem>>
    %352 = arith.index_cast %351 : i32 to index
    %c0_185 = arith.constant 0 : index
    %c0_186 = arith.constant 0 : index
    %353 = vector.load %arg2[%352, %c0_185, %c0_186] : memref<100x1x128xf32, #tpu.memory_space<vmem>>, vector<1x1x128xf32>
    %354 = vector.shape_cast %353 : vector<1x1x128xf32> to vector<1x128xf32>
    %355 = tpu.concatenate %354, %306 in 1 : vector<1x128xf32>, vector<1x128xf32> -> vector<1x256xf32>
    %356 = arith.truncf %355 : vector<1x256xf32> to vector<1x256xbf16>
    %c0_187 = arith.constant 0 : index
    %c0_188 = arith.constant 0 : index
    %c0_189 = arith.constant 0 : index
    %357 = vector.load %arg4[%c0_187, %c0_188, %c0_189] : memref<2x256x256xbf16, #tpu.memory_space<vmem>>, vector<1x256x256xbf16>
    %358 = vector.shape_cast %357 : vector<1x256x256xbf16> to vector<256x256xbf16>
    %cst_190 = arith.constant dense<0.000000e+00> : vector<1x256xf32>
    %359 = tpu.matmul %356, %358, %cst_190 {dimension_numbers = #tpu.dot_dimension_numbers<[1], [0], [0], [1], [0, 0, 1, 1], [], []>} : vector<1x256xbf16>, vector<256x256xbf16>, vector<1x256xf32> -> vector<1x256xf32>
    %c0_191 = arith.constant 0 : index
    %c0_192 = arith.constant 0 : index
    %360 = vector.load %arg5[%c0_191, %c0_192] : memref<2x256xf32, #tpu.memory_space<vmem>>, vector<1x256xf32>
    %361 = arith.addf %359, %360 : vector<1x256xf32>
    %362 = vector.extract_strided_slice %361 {offsets = [0, 0], sizes = [1, 128], strides = [1, 1]} : vector<1x256xf32> to vector<1x128xf32>
    %363 = arith.negf %362 : vector<1x128xf32>
    %364 = math.exp %363 : vector<1x128xf32>
    %cst_193 = arith.constant 1.000000e+00 : f32
    %365 = vector.broadcast %cst_193 : f32 to vector<1x128xf32>
    %366 = arith.addf %365, %364 : vector<1x128xf32>
    %367 = arith.divf %365, %366 : vector<1x128xf32>
    %368 = vector.extract_strided_slice %361 {offsets = [0, 128], sizes = [1, 128], strides = [1, 1]} : vector<1x256xf32> to vector<1x128xf32>
    %369 = arith.negf %368 : vector<1x128xf32>
    %370 = math.exp %369 : vector<1x128xf32>
    %cst_194 = arith.constant 1.000000e+00 : f32
    %371 = vector.broadcast %cst_194 : f32 to vector<1x128xf32>
    %372 = arith.addf %371, %370 : vector<1x128xf32>
    %373 = arith.divf %371, %372 : vector<1x128xf32>
    %374 = vector.extract_strided_slice %356 {offsets = [0, 0], sizes = [1, 128], strides = [1, 1]} : vector<1x256xbf16> to vector<1x128xbf16>
    %c0_195 = arith.constant 0 : index
    %c0_196 = arith.constant 0 : index
    %c0_197 = arith.constant 0 : index
    %375 = vector.load %arg6[%c0_195, %c0_196, %c0_197] : memref<2x128x128xbf16, #tpu.memory_space<vmem>>, vector<1x128x128xbf16>
    %376 = vector.shape_cast %375 : vector<1x128x128xbf16> to vector<128x128xbf16>
    %cst_198 = arith.constant dense<0.000000e+00> : vector<1x128xf32>
    %377 = tpu.matmul %374, %376, %cst_198 {dimension_numbers = #tpu.dot_dimension_numbers<[1], [0], [0], [1], [0, 0, 1, 1], [], []>} : vector<1x128xbf16>, vector<128x128xbf16>, vector<1x128xf32> -> vector<1x128xf32>
    %c0_199 = arith.constant 0 : index
    %c0_200 = arith.constant 0 : index
    %378 = vector.load %arg7[%c0_199, %c0_200] : memref<2x128xf32, #tpu.memory_space<vmem>>, vector<1x128xf32>
    %379 = arith.addf %377, %378 : vector<1x128xf32>
    %380 = vector.extract_strided_slice %356 {offsets = [0, 128], sizes = [1, 128], strides = [1, 1]} : vector<1x256xbf16> to vector<1x128xbf16>
    %c0_201 = arith.constant 0 : index
    %c0_202 = arith.constant 0 : index
    %c0_203 = arith.constant 0 : index
    %381 = vector.load %arg8[%c0_201, %c0_202, %c0_203] : memref<2x128x128xbf16, #tpu.memory_space<vmem>>, vector<1x128x128xbf16>
    %382 = vector.shape_cast %381 : vector<1x128x128xbf16> to vector<128x128xbf16>
    %cst_204 = arith.constant dense<0.000000e+00> : vector<1x128xf32>
    %383 = tpu.matmul %380, %382, %cst_204 {dimension_numbers = #tpu.dot_dimension_numbers<[1], [0], [0], [1], [0, 0, 1, 1], [], []>} : vector<1x128xbf16>, vector<128x128xbf16>, vector<1x128xf32> -> vector<1x128xf32>
    %c0_205 = arith.constant 0 : index
    %c0_206 = arith.constant 0 : index
    %384 = vector.load %arg9[%c0_205, %c0_206] : memref<2x128xf32, #tpu.memory_space<vmem>>, vector<1x128xf32>
    %385 = arith.addf %383, %384 : vector<1x128xf32>
    %386 = arith.mulf %367, %385 : vector<1x128xf32>
    %387 = arith.addf %379, %386 : vector<1x128xf32>
    %388 = math.tanh %387 : vector<1x128xf32>
    %cst_207 = arith.constant 1.000000e+00 : f32
    %389 = vector.broadcast %cst_207 : f32 to vector<1x128xf32>
    %390 = arith.subf %389, %373 : vector<1x128xf32>
    %391 = arith.mulf %390, %388 : vector<1x128xf32>
    %392 = arith.mulf %373, %306 : vector<1x128xf32>
    %393 = arith.addf %391, %392 : vector<1x128xf32>
    %394 = tpu.concatenate %393, %345 in 1 : vector<1x128xf32>, vector<1x128xf32> -> vector<1x256xf32>
    %395 = arith.truncf %394 : vector<1x256xf32> to vector<1x256xbf16>
    %c1_208 = arith.constant 1 : index
    %c0_209 = arith.constant 0 : index
    %c0_210 = arith.constant 0 : index
    %396 = vector.load %arg4[%c1_208, %c0_209, %c0_210] : memref<2x256x256xbf16, #tpu.memory_space<vmem>>, vector<1x256x256xbf16>
    %397 = vector.shape_cast %396 : vector<1x256x256xbf16> to vector<256x256xbf16>
    %cst_211 = arith.constant dense<0.000000e+00> : vector<1x256xf32>
    %398 = tpu.matmul %395, %397, %cst_211 {dimension_numbers = #tpu.dot_dimension_numbers<[1], [0], [0], [1], [0, 0, 1, 1], [], []>} : vector<1x256xbf16>, vector<256x256xbf16>, vector<1x256xf32> -> vector<1x256xf32>
    %c1_212 = arith.constant 1 : index
    %c0_213 = arith.constant 0 : index
    %399 = vector.load %arg5[%c1_212, %c0_213] : memref<2x256xf32, #tpu.memory_space<vmem>>, vector<1x256xf32>
    %400 = arith.addf %398, %399 : vector<1x256xf32>
    %401 = vector.extract_strided_slice %400 {offsets = [0, 0], sizes = [1, 128], strides = [1, 1]} : vector<1x256xf32> to vector<1x128xf32>
    %402 = arith.negf %401 : vector<1x128xf32>
    %403 = math.exp %402 : vector<1x128xf32>
    %cst_214 = arith.constant 1.000000e+00 : f32
    %404 = vector.broadcast %cst_214 : f32 to vector<1x128xf32>
    %405 = arith.addf %404, %403 : vector<1x128xf32>
    %406 = arith.divf %404, %405 : vector<1x128xf32>
    %407 = vector.extract_strided_slice %400 {offsets = [0, 128], sizes = [1, 128], strides = [1, 1]} : vector<1x256xf32> to vector<1x128xf32>
    %408 = arith.negf %407 : vector<1x128xf32>
    %409 = math.exp %408 : vector<1x128xf32>
    %cst_215 = arith.constant 1.000000e+00 : f32
    %410 = vector.broadcast %cst_215 : f32 to vector<1x128xf32>
    %411 = arith.addf %410, %409 : vector<1x128xf32>
    %412 = arith.divf %410, %411 : vector<1x128xf32>
    %413 = vector.extract_strided_slice %395 {offsets = [0, 0], sizes = [1, 128], strides = [1, 1]} : vector<1x256xbf16> to vector<1x128xbf16>
    %c1_216 = arith.constant 1 : index
    %c0_217 = arith.constant 0 : index
    %c0_218 = arith.constant 0 : index
    %414 = vector.load %arg6[%c1_216, %c0_217, %c0_218] : memref<2x128x128xbf16, #tpu.memory_space<vmem>>, vector<1x128x128xbf16>
    %415 = vector.shape_cast %414 : vector<1x128x128xbf16> to vector<128x128xbf16>
    %cst_219 = arith.constant dense<0.000000e+00> : vector<1x128xf32>
    %416 = tpu.matmul %413, %415, %cst_219 {dimension_numbers = #tpu.dot_dimension_numbers<[1], [0], [0], [1], [0, 0, 1, 1], [], []>} : vector<1x128xbf16>, vector<128x128xbf16>, vector<1x128xf32> -> vector<1x128xf32>
    %c1_220 = arith.constant 1 : index
    %c0_221 = arith.constant 0 : index
    %417 = vector.load %arg7[%c1_220, %c0_221] : memref<2x128xf32, #tpu.memory_space<vmem>>, vector<1x128xf32>
    %418 = arith.addf %416, %417 : vector<1x128xf32>
    %419 = vector.extract_strided_slice %395 {offsets = [0, 128], sizes = [1, 128], strides = [1, 1]} : vector<1x256xbf16> to vector<1x128xbf16>
    %c1_222 = arith.constant 1 : index
    %c0_223 = arith.constant 0 : index
    %c0_224 = arith.constant 0 : index
    %420 = vector.load %arg8[%c1_222, %c0_223, %c0_224] : memref<2x128x128xbf16, #tpu.memory_space<vmem>>, vector<1x128x128xbf16>
    %421 = vector.shape_cast %420 : vector<1x128x128xbf16> to vector<128x128xbf16>
    %cst_225 = arith.constant dense<0.000000e+00> : vector<1x128xf32>
    %422 = tpu.matmul %419, %421, %cst_225 {dimension_numbers = #tpu.dot_dimension_numbers<[1], [0], [0], [1], [0, 0, 1, 1], [], []>} : vector<1x128xbf16>, vector<128x128xbf16>, vector<1x128xf32> -> vector<1x128xf32>
    %c1_226 = arith.constant 1 : index
    %c0_227 = arith.constant 0 : index
    %423 = vector.load %arg9[%c1_226, %c0_227] : memref<2x128xf32, #tpu.memory_space<vmem>>, vector<1x128xf32>
    %424 = arith.addf %422, %423 : vector<1x128xf32>
    %425 = arith.mulf %406, %424 : vector<1x128xf32>
    %426 = arith.addf %418, %425 : vector<1x128xf32>
    %427 = math.tanh %426 : vector<1x128xf32>
    %cst_228 = arith.constant 1.000000e+00 : f32
    %428 = vector.broadcast %cst_228 : f32 to vector<1x128xf32>
    %429 = arith.subf %428, %412 : vector<1x128xf32>
    %430 = arith.mulf %429, %427 : vector<1x128xf32>
    %431 = arith.mulf %412, %345 : vector<1x128xf32>
    %432 = arith.addf %430, %431 : vector<1x128xf32>
    %433 = arith.index_cast %c4_i32 : i32 to index
    %c0_229 = arith.constant 0 : index
    %c0_230 = arith.constant 0 : index
    %434 = vector.load %arg10[%433, %c0_229, %c0_230] : memref<8x1x128xf32, #tpu.memory_space<vmem>>, vector<1x1x128xf32>
    %435 = vector.shape_cast %434 : vector<1x1x128xf32> to vector<1x128xf32>
    %436 = vector.shape_cast %432 : vector<1x128xf32> to vector<1x1x128xf32>
    tpu.vector_store %arg10[%433, %c0_229, %c0_230], %436 {strides = array<i32>} : memref<8x1x128xf32, #tpu.memory_space<vmem>>, vector<1x1x128xf32>,
    %c5_i32 = arith.constant 5 : i32
    %437 = arith.index_cast %c5_i32 : i32 to index
    %438 = memref.load %arg1[%437] : memref<8xi32, #tpu.memory_space<smem>>
    %439 = arith.index_cast %438 : i32 to index
    %c0_231 = arith.constant 0 : index
    %c0_232 = arith.constant 0 : index
    %440 = vector.load %arg2[%439, %c0_231, %c0_232] : memref<100x1x128xf32, #tpu.memory_space<vmem>>, vector<1x1x128xf32>
    %441 = vector.shape_cast %440 : vector<1x1x128xf32> to vector<1x128xf32>
    %442 = tpu.concatenate %441, %393 in 1 : vector<1x128xf32>, vector<1x128xf32> -> vector<1x256xf32>
    %443 = arith.truncf %442 : vector<1x256xf32> to vector<1x256xbf16>
    %c0_233 = arith.constant 0 : index
    %c0_234 = arith.constant 0 : index
    %c0_235 = arith.constant 0 : index
    %444 = vector.load %arg4[%c0_233, %c0_234, %c0_235] : memref<2x256x256xbf16, #tpu.memory_space<vmem>>, vector<1x256x256xbf16>
    %445 = vector.shape_cast %444 : vector<1x256x256xbf16> to vector<256x256xbf16>
    %cst_236 = arith.constant dense<0.000000e+00> : vector<1x256xf32>
    %446 = tpu.matmul %443, %445, %cst_236 {dimension_numbers = #tpu.dot_dimension_numbers<[1], [0], [0], [1], [0, 0, 1, 1], [], []>} : vector<1x256xbf16>, vector<256x256xbf16>, vector<1x256xf32> -> vector<1x256xf32>
    %c0_237 = arith.constant 0 : index
    %c0_238 = arith.constant 0 : index
    %447 = vector.load %arg5[%c0_237, %c0_238] : memref<2x256xf32, #tpu.memory_space<vmem>>, vector<1x256xf32>
    %448 = arith.addf %446, %447 : vector<1x256xf32>
    %449 = vector.extract_strided_slice %448 {offsets = [0, 0], sizes = [1, 128], strides = [1, 1]} : vector<1x256xf32> to vector<1x128xf32>
    %450 = arith.negf %449 : vector<1x128xf32>
    %451 = math.exp %450 : vector<1x128xf32>
    %cst_239 = arith.constant 1.000000e+00 : f32
    %452 = vector.broadcast %cst_239 : f32 to vector<1x128xf32>
    %453 = arith.addf %452, %451 : vector<1x128xf32>
    %454 = arith.divf %452, %453 : vector<1x128xf32>
    %455 = vector.extract_strided_slice %448 {offsets = [0, 128], sizes = [1, 128], strides = [1, 1]} : vector<1x256xf32> to vector<1x128xf32>
    %456 = arith.negf %455 : vector<1x128xf32>
    %457 = math.exp %456 : vector<1x128xf32>
    %cst_240 = arith.constant 1.000000e+00 : f32
    %458 = vector.broadcast %cst_240 : f32 to vector<1x128xf32>
    %459 = arith.addf %458, %457 : vector<1x128xf32>
    %460 = arith.divf %458, %459 : vector<1x128xf32>
    %461 = vector.extract_strided_slice %443 {offsets = [0, 0], sizes = [1, 128], strides = [1, 1]} : vector<1x256xbf16> to vector<1x128xbf16>
    %c0_241 = arith.constant 0 : index
    %c0_242 = arith.constant 0 : index
    %c0_243 = arith.constant 0 : index
    %462 = vector.load %arg6[%c0_241, %c0_242, %c0_243] : memref<2x128x128xbf16, #tpu.memory_space<vmem>>, vector<1x128x128xbf16>
    %463 = vector.shape_cast %462 : vector<1x128x128xbf16> to vector<128x128xbf16>
    %cst_244 = arith.constant dense<0.000000e+00> : vector<1x128xf32>
    %464 = tpu.matmul %461, %463, %cst_244 {dimension_numbers = #tpu.dot_dimension_numbers<[1], [0], [0], [1], [0, 0, 1, 1], [], []>} : vector<1x128xbf16>, vector<128x128xbf16>, vector<1x128xf32> -> vector<1x128xf32>
    %c0_245 = arith.constant 0 : index
    %c0_246 = arith.constant 0 : index
    %465 = vector.load %arg7[%c0_245, %c0_246] : memref<2x128xf32, #tpu.memory_space<vmem>>, vector<1x128xf32>
    %466 = arith.addf %464, %465 : vector<1x128xf32>
    %467 = vector.extract_strided_slice %443 {offsets = [0, 128], sizes = [1, 128], strides = [1, 1]} : vector<1x256xbf16> to vector<1x128xbf16>
    %c0_247 = arith.constant 0 : index
    %c0_248 = arith.constant 0 : index
    %c0_249 = arith.constant 0 : index
    %468 = vector.load %arg8[%c0_247, %c0_248, %c0_249] : memref<2x128x128xbf16, #tpu.memory_space<vmem>>, vector<1x128x128xbf16>
    %469 = vector.shape_cast %468 : vector<1x128x128xbf16> to vector<128x128xbf16>
    %cst_250 = arith.constant dense<0.000000e+00> : vector<1x128xf32>
    %470 = tpu.matmul %467, %469, %cst_250 {dimension_numbers = #tpu.dot_dimension_numbers<[1], [0], [0], [1], [0, 0, 1, 1], [], []>} : vector<1x128xbf16>, vector<128x128xbf16>, vector<1x128xf32> -> vector<1x128xf32>
    %c0_251 = arith.constant 0 : index
    %c0_252 = arith.constant 0 : index
    %471 = vector.load %arg9[%c0_251, %c0_252] : memref<2x128xf32, #tpu.memory_space<vmem>>, vector<1x128xf32>
    %472 = arith.addf %470, %471 : vector<1x128xf32>
    %473 = arith.mulf %454, %472 : vector<1x128xf32>
    %474 = arith.addf %466, %473 : vector<1x128xf32>
    %475 = math.tanh %474 : vector<1x128xf32>
    %cst_253 = arith.constant 1.000000e+00 : f32
    %476 = vector.broadcast %cst_253 : f32 to vector<1x128xf32>
    %477 = arith.subf %476, %460 : vector<1x128xf32>
    %478 = arith.mulf %477, %475 : vector<1x128xf32>
    %479 = arith.mulf %460, %393 : vector<1x128xf32>
    %480 = arith.addf %478, %479 : vector<1x128xf32>
    %481 = tpu.concatenate %480, %432 in 1 : vector<1x128xf32>, vector<1x128xf32> -> vector<1x256xf32>
    %482 = arith.truncf %481 : vector<1x256xf32> to vector<1x256xbf16>
    %c1_254 = arith.constant 1 : index
    %c0_255 = arith.constant 0 : index
    %c0_256 = arith.constant 0 : index
    %483 = vector.load %arg4[%c1_254, %c0_255, %c0_256] : memref<2x256x256xbf16, #tpu.memory_space<vmem>>, vector<1x256x256xbf16>
    %484 = vector.shape_cast %483 : vector<1x256x256xbf16> to vector<256x256xbf16>
    %cst_257 = arith.constant dense<0.000000e+00> : vector<1x256xf32>
    %485 = tpu.matmul %482, %484, %cst_257 {dimension_numbers = #tpu.dot_dimension_numbers<[1], [0], [0], [1], [0, 0, 1, 1], [], []>} : vector<1x256xbf16>, vector<256x256xbf16>, vector<1x256xf32> -> vector<1x256xf32>
    %c1_258 = arith.constant 1 : index
    %c0_259 = arith.constant 0 : index
    %486 = vector.load %arg5[%c1_258, %c0_259] : memref<2x256xf32, #tpu.memory_space<vmem>>, vector<1x256xf32>
    %487 = arith.addf %485, %486 : vector<1x256xf32>
    %488 = vector.extract_strided_slice %487 {offsets = [0, 0], sizes = [1, 128], strides = [1, 1]} : vector<1x256xf32> to vector<1x128xf32>
    %489 = arith.negf %488 : vector<1x128xf32>
    %490 = math.exp %489 : vector<1x128xf32>
    %cst_260 = arith.constant 1.000000e+00 : f32
    %491 = vector.broadcast %cst_260 : f32 to vector<1x128xf32>
    %492 = arith.addf %491, %490 : vector<1x128xf32>
    %493 = arith.divf %491, %492 : vector<1x128xf32>
    %494 = vector.extract_strided_slice %487 {offsets = [0, 128], sizes = [1, 128], strides = [1, 1]} : vector<1x256xf32> to vector<1x128xf32>
    %495 = arith.negf %494 : vector<1x128xf32>
    %496 = math.exp %495 : vector<1x128xf32>
    %cst_261 = arith.constant 1.000000e+00 : f32
    %497 = vector.broadcast %cst_261 : f32 to vector<1x128xf32>
    %498 = arith.addf %497, %496 : vector<1x128xf32>
    %499 = arith.divf %497, %498 : vector<1x128xf32>
    %500 = vector.extract_strided_slice %482 {offsets = [0, 0], sizes = [1, 128], strides = [1, 1]} : vector<1x256xbf16> to vector<1x128xbf16>
    %c1_262 = arith.constant 1 : index
    %c0_263 = arith.constant 0 : index
    %c0_264 = arith.constant 0 : index
    %501 = vector.load %arg6[%c1_262, %c0_263, %c0_264] : memref<2x128x128xbf16, #tpu.memory_space<vmem>>, vector<1x128x128xbf16>
    %502 = vector.shape_cast %501 : vector<1x128x128xbf16> to vector<128x128xbf16>
    %cst_265 = arith.constant dense<0.000000e+00> : vector<1x128xf32>
    %503 = tpu.matmul %500, %502, %cst_265 {dimension_numbers = #tpu.dot_dimension_numbers<[1], [0], [0], [1], [0, 0, 1, 1], [], []>} : vector<1x128xbf16>, vector<128x128xbf16>, vector<1x128xf32> -> vector<1x128xf32>
    %c1_266 = arith.constant 1 : index
    %c0_267 = arith.constant 0 : index
    %504 = vector.load %arg7[%c1_266, %c0_267] : memref<2x128xf32, #tpu.memory_space<vmem>>, vector<1x128xf32>
    %505 = arith.addf %503, %504 : vector<1x128xf32>
    %506 = vector.extract_strided_slice %482 {offsets = [0, 128], sizes = [1, 128], strides = [1, 1]} : vector<1x256xbf16> to vector<1x128xbf16>
    %c1_268 = arith.constant 1 : index
    %c0_269 = arith.constant 0 : index
    %c0_270 = arith.constant 0 : index
    %507 = vector.load %arg8[%c1_268, %c0_269, %c0_270] : memref<2x128x128xbf16, #tpu.memory_space<vmem>>, vector<1x128x128xbf16>
    %508 = vector.shape_cast %507 : vector<1x128x128xbf16> to vector<128x128xbf16>
    %cst_271 = arith.constant dense<0.000000e+00> : vector<1x128xf32>
    %509 = tpu.matmul %506, %508, %cst_271 {dimension_numbers = #tpu.dot_dimension_numbers<[1], [0], [0], [1], [0, 0, 1, 1], [], []>} : vector<1x128xbf16>, vector<128x128xbf16>, vector<1x128xf32> -> vector<1x128xf32>
    %c1_272 = arith.constant 1 : index
    %c0_273 = arith.constant 0 : index
    %510 = vector.load %arg9[%c1_272, %c0_273] : memref<2x128xf32, #tpu.memory_space<vmem>>, vector<1x128xf32>
    %511 = arith.addf %509, %510 : vector<1x128xf32>
    %512 = arith.mulf %493, %511 : vector<1x128xf32>
    %513 = arith.addf %505, %512 : vector<1x128xf32>
    %514 = math.tanh %513 : vector<1x128xf32>
    %cst_274 = arith.constant 1.000000e+00 : f32
    %515 = vector.broadcast %cst_274 : f32 to vector<1x128xf32>
    %516 = arith.subf %515, %499 : vector<1x128xf32>
    %517 = arith.mulf %516, %514 : vector<1x128xf32>
    %518 = arith.mulf %499, %432 : vector<1x128xf32>
    %519 = arith.addf %517, %518 : vector<1x128xf32>
    %520 = arith.index_cast %c5_i32 : i32 to index
    %c0_275 = arith.constant 0 : index
    %c0_276 = arith.constant 0 : index
    %521 = vector.load %arg10[%520, %c0_275, %c0_276] : memref<8x1x128xf32, #tpu.memory_space<vmem>>, vector<1x1x128xf32>
    %522 = vector.shape_cast %521 : vector<1x1x128xf32> to vector<1x128xf32>
    %523 = vector.shape_cast %519 : vector<1x128xf32> to vector<1x1x128xf32>
    tpu.vector_store %arg10[%520, %c0_275, %c0_276], %523 {strides = array<i32>} : memref<8x1x128xf32, #tpu.memory_space<vmem>>, vector<1x1x128xf32>,
    %c6_i32 = arith.constant 6 : i32
    %524 = arith.index_cast %c6_i32 : i32 to index
    %525 = memref.load %arg1[%524] : memref<8xi32, #tpu.memory_space<smem>>
    %526 = arith.index_cast %525 : i32 to index
    %c0_277 = arith.constant 0 : index
    %c0_278 = arith.constant 0 : index
    %527 = vector.load %arg2[%526, %c0_277, %c0_278] : memref<100x1x128xf32, #tpu.memory_space<vmem>>, vector<1x1x128xf32>
    %528 = vector.shape_cast %527 : vector<1x1x128xf32> to vector<1x128xf32>
    %529 = tpu.concatenate %528, %480 in 1 : vector<1x128xf32>, vector<1x128xf32> -> vector<1x256xf32>
    %530 = arith.truncf %529 : vector<1x256xf32> to vector<1x256xbf16>
    %c0_279 = arith.constant 0 : index
    %c0_280 = arith.constant 0 : index
    %c0_281 = arith.constant 0 : index
    %531 = vector.load %arg4[%c0_279, %c0_280, %c0_281] : memref<2x256x256xbf16, #tpu.memory_space<vmem>>, vector<1x256x256xbf16>
    %532 = vector.shape_cast %531 : vector<1x256x256xbf16> to vector<256x256xbf16>
    %cst_282 = arith.constant dense<0.000000e+00> : vector<1x256xf32>
    %533 = tpu.matmul %530, %532, %cst_282 {dimension_numbers = #tpu.dot_dimension_numbers<[1], [0], [0], [1], [0, 0, 1, 1], [], []>} : vector<1x256xbf16>, vector<256x256xbf16>, vector<1x256xf32> -> vector<1x256xf32>
    %c0_283 = arith.constant 0 : index
    %c0_284 = arith.constant 0 : index
    %534 = vector.load %arg5[%c0_283, %c0_284] : memref<2x256xf32, #tpu.memory_space<vmem>>, vector<1x256xf32>
    %535 = arith.addf %533, %534 : vector<1x256xf32>
    %536 = vector.extract_strided_slice %535 {offsets = [0, 0], sizes = [1, 128], strides = [1, 1]} : vector<1x256xf32> to vector<1x128xf32>
    %537 = arith.negf %536 : vector<1x128xf32>
    %538 = math.exp %537 : vector<1x128xf32>
    %cst_285 = arith.constant 1.000000e+00 : f32
    %539 = vector.broadcast %cst_285 : f32 to vector<1x128xf32>
    %540 = arith.addf %539, %538 : vector<1x128xf32>
    %541 = arith.divf %539, %540 : vector<1x128xf32>
    %542 = vector.extract_strided_slice %535 {offsets = [0, 128], sizes = [1, 128], strides = [1, 1]} : vector<1x256xf32> to vector<1x128xf32>
    %543 = arith.negf %542 : vector<1x128xf32>
    %544 = math.exp %543 : vector<1x128xf32>
    %cst_286 = arith.constant 1.000000e+00 : f32
    %545 = vector.broadcast %cst_286 : f32 to vector<1x128xf32>
    %546 = arith.addf %545, %544 : vector<1x128xf32>
    %547 = arith.divf %545, %546 : vector<1x128xf32>
    %548 = vector.extract_strided_slice %530 {offsets = [0, 0], sizes = [1, 128], strides = [1, 1]} : vector<1x256xbf16> to vector<1x128xbf16>
    %c0_287 = arith.constant 0 : index
    %c0_288 = arith.constant 0 : index
    %c0_289 = arith.constant 0 : index
    %549 = vector.load %arg6[%c0_287, %c0_288, %c0_289] : memref<2x128x128xbf16, #tpu.memory_space<vmem>>, vector<1x128x128xbf16>
    %550 = vector.shape_cast %549 : vector<1x128x128xbf16> to vector<128x128xbf16>
    %cst_290 = arith.constant dense<0.000000e+00> : vector<1x128xf32>
    %551 = tpu.matmul %548, %550, %cst_290 {dimension_numbers = #tpu.dot_dimension_numbers<[1], [0], [0], [1], [0, 0, 1, 1], [], []>} : vector<1x128xbf16>, vector<128x128xbf16>, vector<1x128xf32> -> vector<1x128xf32>
    %c0_291 = arith.constant 0 : index
    %c0_292 = arith.constant 0 : index
    %552 = vector.load %arg7[%c0_291, %c0_292] : memref<2x128xf32, #tpu.memory_space<vmem>>, vector<1x128xf32>
    %553 = arith.addf %551, %552 : vector<1x128xf32>
    %554 = vector.extract_strided_slice %530 {offsets = [0, 128], sizes = [1, 128], strides = [1, 1]} : vector<1x256xbf16> to vector<1x128xbf16>
    %c0_293 = arith.constant 0 : index
    %c0_294 = arith.constant 0 : index
    %c0_295 = arith.constant 0 : index
    %555 = vector.load %arg8[%c0_293, %c0_294, %c0_295] : memref<2x128x128xbf16, #tpu.memory_space<vmem>>, vector<1x128x128xbf16>
    %556 = vector.shape_cast %555 : vector<1x128x128xbf16> to vector<128x128xbf16>
    %cst_296 = arith.constant dense<0.000000e+00> : vector<1x128xf32>
    %557 = tpu.matmul %554, %556, %cst_296 {dimension_numbers = #tpu.dot_dimension_numbers<[1], [0], [0], [1], [0, 0, 1, 1], [], []>} : vector<1x128xbf16>, vector<128x128xbf16>, vector<1x128xf32> -> vector<1x128xf32>
    %c0_297 = arith.constant 0 : index
    %c0_298 = arith.constant 0 : index
    %558 = vector.load %arg9[%c0_297, %c0_298] : memref<2x128xf32, #tpu.memory_space<vmem>>, vector<1x128xf32>
    %559 = arith.addf %557, %558 : vector<1x128xf32>
    %560 = arith.mulf %541, %559 : vector<1x128xf32>
    %561 = arith.addf %553, %560 : vector<1x128xf32>
    %562 = math.tanh %561 : vector<1x128xf32>
    %cst_299 = arith.constant 1.000000e+00 : f32
    %563 = vector.broadcast %cst_299 : f32 to vector<1x128xf32>
    %564 = arith.subf %563, %547 : vector<1x128xf32>
    %565 = arith.mulf %564, %562 : vector<1x128xf32>
    %566 = arith.mulf %547, %480 : vector<1x128xf32>
    %567 = arith.addf %565, %566 : vector<1x128xf32>
    %568 = tpu.concatenate %567, %519 in 1 : vector<1x128xf32>, vector<1x128xf32> -> vector<1x256xf32>
    %569 = arith.truncf %568 : vector<1x256xf32> to vector<1x256xbf16>
    %c1_300 = arith.constant 1 : index
    %c0_301 = arith.constant 0 : index
    %c0_302 = arith.constant 0 : index
    %570 = vector.load %arg4[%c1_300, %c0_301, %c0_302] : memref<2x256x256xbf16, #tpu.memory_space<vmem>>, vector<1x256x256xbf16>
    %571 = vector.shape_cast %570 : vector<1x256x256xbf16> to vector<256x256xbf16>
    %cst_303 = arith.constant dense<0.000000e+00> : vector<1x256xf32>
    %572 = tpu.matmul %569, %571, %cst_303 {dimension_numbers = #tpu.dot_dimension_numbers<[1], [0], [0], [1], [0, 0, 1, 1], [], []>} : vector<1x256xbf16>, vector<256x256xbf16>, vector<1x256xf32> -> vector<1x256xf32>
    %c1_304 = arith.constant 1 : index
    %c0_305 = arith.constant 0 : index
    %573 = vector.load %arg5[%c1_304, %c0_305] : memref<2x256xf32, #tpu.memory_space<vmem>>, vector<1x256xf32>
    %574 = arith.addf %572, %573 : vector<1x256xf32>
    %575 = vector.extract_strided_slice %574 {offsets = [0, 0], sizes = [1, 128], strides = [1, 1]} : vector<1x256xf32> to vector<1x128xf32>
    %576 = arith.negf %575 : vector<1x128xf32>
    %577 = math.exp %576 : vector<1x128xf32>
    %cst_306 = arith.constant 1.000000e+00 : f32
    %578 = vector.broadcast %cst_306 : f32 to vector<1x128xf32>
    %579 = arith.addf %578, %577 : vector<1x128xf32>
    %580 = arith.divf %578, %579 : vector<1x128xf32>
    %581 = vector.extract_strided_slice %574 {offsets = [0, 128], sizes = [1, 128], strides = [1, 1]} : vector<1x256xf32> to vector<1x128xf32>
    %582 = arith.negf %581 : vector<1x128xf32>
    %583 = math.exp %582 : vector<1x128xf32>
    %cst_307 = arith.constant 1.000000e+00 : f32
    %584 = vector.broadcast %cst_307 : f32 to vector<1x128xf32>
    %585 = arith.addf %584, %583 : vector<1x128xf32>
    %586 = arith.divf %584, %585 : vector<1x128xf32>
    %587 = vector.extract_strided_slice %569 {offsets = [0, 0], sizes = [1, 128], strides = [1, 1]} : vector<1x256xbf16> to vector<1x128xbf16>
    %c1_308 = arith.constant 1 : index
    %c0_309 = arith.constant 0 : index
    %c0_310 = arith.constant 0 : index
    %588 = vector.load %arg6[%c1_308, %c0_309, %c0_310] : memref<2x128x128xbf16, #tpu.memory_space<vmem>>, vector<1x128x128xbf16>
    %589 = vector.shape_cast %588 : vector<1x128x128xbf16> to vector<128x128xbf16>
    %cst_311 = arith.constant dense<0.000000e+00> : vector<1x128xf32>
    %590 = tpu.matmul %587, %589, %cst_311 {dimension_numbers = #tpu.dot_dimension_numbers<[1], [0], [0], [1], [0, 0, 1, 1], [], []>} : vector<1x128xbf16>, vector<128x128xbf16>, vector<1x128xf32> -> vector<1x128xf32>
    %c1_312 = arith.constant 1 : index
    %c0_313 = arith.constant 0 : index
    %591 = vector.load %arg7[%c1_312, %c0_313] : memref<2x128xf32, #tpu.memory_space<vmem>>, vector<1x128xf32>
    %592 = arith.addf %590, %591 : vector<1x128xf32>
    %593 = vector.extract_strided_slice %569 {offsets = [0, 128], sizes = [1, 128], strides = [1, 1]} : vector<1x256xbf16> to vector<1x128xbf16>
    %c1_314 = arith.constant 1 : index
    %c0_315 = arith.constant 0 : index
    %c0_316 = arith.constant 0 : index
    %594 = vector.load %arg8[%c1_314, %c0_315, %c0_316] : memref<2x128x128xbf16, #tpu.memory_space<vmem>>, vector<1x128x128xbf16>
    %595 = vector.shape_cast %594 : vector<1x128x128xbf16> to vector<128x128xbf16>
    %cst_317 = arith.constant dense<0.000000e+00> : vector<1x128xf32>
    %596 = tpu.matmul %593, %595, %cst_317 {dimension_numbers = #tpu.dot_dimension_numbers<[1], [0], [0], [1], [0, 0, 1, 1], [], []>} : vector<1x128xbf16>, vector<128x128xbf16>, vector<1x128xf32> -> vector<1x128xf32>
    %c1_318 = arith.constant 1 : index
    %c0_319 = arith.constant 0 : index
    %597 = vector.load %arg9[%c1_318, %c0_319] : memref<2x128xf32, #tpu.memory_space<vmem>>, vector<1x128xf32>
    %598 = arith.addf %596, %597 : vector<1x128xf32>
    %599 = arith.mulf %580, %598 : vector<1x128xf32>
    %600 = arith.addf %592, %599 : vector<1x128xf32>
    %601 = math.tanh %600 : vector<1x128xf32>
    %cst_320 = arith.constant 1.000000e+00 : f32
    %602 = vector.broadcast %cst_320 : f32 to vector<1x128xf32>
    %603 = arith.subf %602, %586 : vector<1x128xf32>
    %604 = arith.mulf %603, %601 : vector<1x128xf32>
    %605 = arith.mulf %586, %519 : vector<1x128xf32>
    %606 = arith.addf %604, %605 : vector<1x128xf32>
    %607 = arith.index_cast %c6_i32 : i32 to index
    %c0_321 = arith.constant 0 : index
    %c0_322 = arith.constant 0 : index
    %608 = vector.load %arg10[%607, %c0_321, %c0_322] : memref<8x1x128xf32, #tpu.memory_space<vmem>>, vector<1x1x128xf32>
    %609 = vector.shape_cast %608 : vector<1x1x128xf32> to vector<1x128xf32>
    %610 = vector.shape_cast %606 : vector<1x128xf32> to vector<1x1x128xf32>
    tpu.vector_store %arg10[%607, %c0_321, %c0_322], %610 {strides = array<i32>} : memref<8x1x128xf32, #tpu.memory_space<vmem>>, vector<1x1x128xf32>,
    %c7_i32 = arith.constant 7 : i32
    %611 = arith.index_cast %c7_i32 : i32 to index
    %612 = memref.load %arg1[%611] : memref<8xi32, #tpu.memory_space<smem>>
    %613 = arith.index_cast %612 : i32 to index
    %c0_323 = arith.constant 0 : index
    %c0_324 = arith.constant 0 : index
    %614 = vector.load %arg2[%613, %c0_323, %c0_324] : memref<100x1x128xf32, #tpu.memory_space<vmem>>, vector<1x1x128xf32>
    %615 = vector.shape_cast %614 : vector<1x1x128xf32> to vector<1x128xf32>
    %616 = tpu.concatenate %615, %567 in 1 : vector<1x128xf32>, vector<1x128xf32> -> vector<1x256xf32>
    %617 = arith.truncf %616 : vector<1x256xf32> to vector<1x256xbf16>
    %c0_325 = arith.constant 0 : index
    %c0_326 = arith.constant 0 : index
    %c0_327 = arith.constant 0 : index
    %618 = vector.load %arg4[%c0_325, %c0_326, %c0_327] : memref<2x256x256xbf16, #tpu.memory_space<vmem>>, vector<1x256x256xbf16>
    %619 = vector.shape_cast %618 : vector<1x256x256xbf16> to vector<256x256xbf16>
    %cst_328 = arith.constant dense<0.000000e+00> : vector<1x256xf32>
    %620 = tpu.matmul %617, %619, %cst_328 {dimension_numbers = #tpu.dot_dimension_numbers<[1], [0], [0], [1], [0, 0, 1, 1], [], []>} : vector<1x256xbf16>, vector<256x256xbf16>, vector<1x256xf32> -> vector<1x256xf32>
    %c0_329 = arith.constant 0 : index
    %c0_330 = arith.constant 0 : index
    %621 = vector.load %arg5[%c0_329, %c0_330] : memref<2x256xf32, #tpu.memory_space<vmem>>, vector<1x256xf32>
    %622 = arith.addf %620, %621 : vector<1x256xf32>
    %623 = vector.extract_strided_slice %622 {offsets = [0, 0], sizes = [1, 128], strides = [1, 1]} : vector<1x256xf32> to vector<1x128xf32>
    %624 = arith.negf %623 : vector<1x128xf32>
    %625 = math.exp %624 : vector<1x128xf32>
    %cst_331 = arith.constant 1.000000e+00 : f32
    %626 = vector.broadcast %cst_331 : f32 to vector<1x128xf32>
    %627 = arith.addf %626, %625 : vector<1x128xf32>
    %628 = arith.divf %626, %627 : vector<1x128xf32>
    %629 = vector.extract_strided_slice %622 {offsets = [0, 128], sizes = [1, 128], strides = [1, 1]} : vector<1x256xf32> to vector<1x128xf32>
    %630 = arith.negf %629 : vector<1x128xf32>
    %631 = math.exp %630 : vector<1x128xf32>
    %cst_332 = arith.constant 1.000000e+00 : f32
    %632 = vector.broadcast %cst_332 : f32 to vector<1x128xf32>
    %633 = arith.addf %632, %631 : vector<1x128xf32>
    %634 = arith.divf %632, %633 : vector<1x128xf32>
    %635 = vector.extract_strided_slice %617 {offsets = [0, 0], sizes = [1, 128], strides = [1, 1]} : vector<1x256xbf16> to vector<1x128xbf16>
    %c0_333 = arith.constant 0 : index
    %c0_334 = arith.constant 0 : index
    %c0_335 = arith.constant 0 : index
    %636 = vector.load %arg6[%c0_333, %c0_334, %c0_335] : memref<2x128x128xbf16, #tpu.memory_space<vmem>>, vector<1x128x128xbf16>
    %637 = vector.shape_cast %636 : vector<1x128x128xbf16> to vector<128x128xbf16>
    %cst_336 = arith.constant dense<0.000000e+00> : vector<1x128xf32>
    %638 = tpu.matmul %635, %637, %cst_336 {dimension_numbers = #tpu.dot_dimension_numbers<[1], [0], [0], [1], [0, 0, 1, 1], [], []>} : vector<1x128xbf16>, vector<128x128xbf16>, vector<1x128xf32> -> vector<1x128xf32>
    %c0_337 = arith.constant 0 : index
    %c0_338 = arith.constant 0 : index
    %639 = vector.load %arg7[%c0_337, %c0_338] : memref<2x128xf32, #tpu.memory_space<vmem>>, vector<1x128xf32>
    %640 = arith.addf %638, %639 : vector<1x128xf32>
    %641 = vector.extract_strided_slice %617 {offsets = [0, 128], sizes = [1, 128], strides = [1, 1]} : vector<1x256xbf16> to vector<1x128xbf16>
    %c0_339 = arith.constant 0 : index
    %c0_340 = arith.constant 0 : index
    %c0_341 = arith.constant 0 : index
    %642 = vector.load %arg8[%c0_339, %c0_340, %c0_341] : memref<2x128x128xbf16, #tpu.memory_space<vmem>>, vector<1x128x128xbf16>
    %643 = vector.shape_cast %642 : vector<1x128x128xbf16> to vector<128x128xbf16>
    %cst_342 = arith.constant dense<0.000000e+00> : vector<1x128xf32>
    %644 = tpu.matmul %641, %643, %cst_342 {dimension_numbers = #tpu.dot_dimension_numbers<[1], [0], [0], [1], [0, 0, 1, 1], [], []>} : vector<1x128xbf16>, vector<128x128xbf16>, vector<1x128xf32> -> vector<1x128xf32>
    %c0_343 = arith.constant 0 : index
    %c0_344 = arith.constant 0 : index
    %645 = vector.load %arg9[%c0_343, %c0_344] : memref<2x128xf32, #tpu.memory_space<vmem>>, vector<1x128xf32>
    %646 = arith.addf %644, %645 : vector<1x128xf32>
    %647 = arith.mulf %628, %646 : vector<1x128xf32>
    %648 = arith.addf %640, %647 : vector<1x128xf32>
    %649 = math.tanh %648 : vector<1x128xf32>
    %cst_345 = arith.constant 1.000000e+00 : f32
    %650 = vector.broadcast %cst_345 : f32 to vector<1x128xf32>
    %651 = arith.subf %650, %634 : vector<1x128xf32>
    %652 = arith.mulf %651, %649 : vector<1x128xf32>
    %653 = arith.mulf %634, %567 : vector<1x128xf32>
    %654 = arith.addf %652, %653 : vector<1x128xf32>
    %655 = tpu.concatenate %654, %606 in 1 : vector<1x128xf32>, vector<1x128xf32> -> vector<1x256xf32>
    %656 = arith.truncf %655 : vector<1x256xf32> to vector<1x256xbf16>
    %c1_346 = arith.constant 1 : index
    %c0_347 = arith.constant 0 : index
    %c0_348 = arith.constant 0 : index
    %657 = vector.load %arg4[%c1_346, %c0_347, %c0_348] : memref<2x256x256xbf16, #tpu.memory_space<vmem>>, vector<1x256x256xbf16>
    %658 = vector.shape_cast %657 : vector<1x256x256xbf16> to vector<256x256xbf16>
    %cst_349 = arith.constant dense<0.000000e+00> : vector<1x256xf32>
    %659 = tpu.matmul %656, %658, %cst_349 {dimension_numbers = #tpu.dot_dimension_numbers<[1], [0], [0], [1], [0, 0, 1, 1], [], []>} : vector<1x256xbf16>, vector<256x256xbf16>, vector<1x256xf32> -> vector<1x256xf32>
    %c1_350 = arith.constant 1 : index
    %c0_351 = arith.constant 0 : index
    %660 = vector.load %arg5[%c1_350, %c0_351] : memref<2x256xf32, #tpu.memory_space<vmem>>, vector<1x256xf32>
    %661 = arith.addf %659, %660 : vector<1x256xf32>
    %662 = vector.extract_strided_slice %661 {offsets = [0, 0], sizes = [1, 128], strides = [1, 1]} : vector<1x256xf32> to vector<1x128xf32>
    %663 = arith.negf %662 : vector<1x128xf32>
    %664 = math.exp %663 : vector<1x128xf32>
    %cst_352 = arith.constant 1.000000e+00 : f32
    %665 = vector.broadcast %cst_352 : f32 to vector<1x128xf32>
    %666 = arith.addf %665, %664 : vector<1x128xf32>
    %667 = arith.divf %665, %666 : vector<1x128xf32>
    %668 = vector.extract_strided_slice %661 {offsets = [0, 128], sizes = [1, 128], strides = [1, 1]} : vector<1x256xf32> to vector<1x128xf32>
    %669 = arith.negf %668 : vector<1x128xf32>
    %670 = math.exp %669 : vector<1x128xf32>
    %cst_353 = arith.constant 1.000000e+00 : f32
    %671 = vector.broadcast %cst_353 : f32 to vector<1x128xf32>
    %672 = arith.addf %671, %670 : vector<1x128xf32>
    %673 = arith.divf %671, %672 : vector<1x128xf32>
    %674 = vector.extract_strided_slice %656 {offsets = [0, 0], sizes = [1, 128], strides = [1, 1]} : vector<1x256xbf16> to vector<1x128xbf16>
    %c1_354 = arith.constant 1 : index
    %c0_355 = arith.constant 0 : index
    %c0_356 = arith.constant 0 : index
    %675 = vector.load %arg6[%c1_354, %c0_355, %c0_356] : memref<2x128x128xbf16, #tpu.memory_space<vmem>>, vector<1x128x128xbf16>
    %676 = vector.shape_cast %675 : vector<1x128x128xbf16> to vector<128x128xbf16>
    %cst_357 = arith.constant dense<0.000000e+00> : vector<1x128xf32>
    %677 = tpu.matmul %674, %676, %cst_357 {dimension_numbers = #tpu.dot_dimension_numbers<[1], [0], [0], [1], [0, 0, 1, 1], [], []>} : vector<1x128xbf16>, vector<128x128xbf16>, vector<1x128xf32> -> vector<1x128xf32>
    %c1_358 = arith.constant 1 : index
    %c0_359 = arith.constant 0 : index
    %678 = vector.load %arg7[%c1_358, %c0_359] : memref<2x128xf32, #tpu.memory_space<vmem>>, vector<1x128xf32>
    %679 = arith.addf %677, %678 : vector<1x128xf32>
    %680 = vector.extract_strided_slice %656 {offsets = [0, 128], sizes = [1, 128], strides = [1, 1]} : vector<1x256xbf16> to vector<1x128xbf16>
    %c1_360 = arith.constant 1 : index
    %c0_361 = arith.constant 0 : index
    %c0_362 = arith.constant 0 : index
    %681 = vector.load %arg8[%c1_360, %c0_361, %c0_362] : memref<2x128x128xbf16, #tpu.memory_space<vmem>>, vector<1x128x128xbf16>
    %682 = vector.shape_cast %681 : vector<1x128x128xbf16> to vector<128x128xbf16>
    %cst_363 = arith.constant dense<0.000000e+00> : vector<1x128xf32>
    %683 = tpu.matmul %680, %682, %cst_363 {dimension_numbers = #tpu.dot_dimension_numbers<[1], [0], [0], [1], [0, 0, 1, 1], [], []>} : vector<1x128xbf16>, vector<128x128xbf16>, vector<1x128xf32> -> vector<1x128xf32>
    %c1_364 = arith.constant 1 : index
    %c0_365 = arith.constant 0 : index
    %684 = vector.load %arg9[%c1_364, %c0_365] : memref<2x128xf32, #tpu.memory_space<vmem>>, vector<1x128xf32>
    %685 = arith.addf %683, %684 : vector<1x128xf32>
    %686 = arith.mulf %667, %685 : vector<1x128xf32>
    %687 = arith.addf %679, %686 : vector<1x128xf32>
    %688 = math.tanh %687 : vector<1x128xf32>
    %cst_366 = arith.constant 1.000000e+00 : f32
    %689 = vector.broadcast %cst_366 : f32 to vector<1x128xf32>
    %690 = arith.subf %689, %673 : vector<1x128xf32>
    %691 = arith.mulf %690, %688 : vector<1x128xf32>
    %692 = arith.mulf %673, %606 : vector<1x128xf32>
    %693 = arith.addf %691, %692 : vector<1x128xf32>
    %694 = arith.index_cast %c7_i32 : i32 to index
    %c0_367 = arith.constant 0 : index
    %c0_368 = arith.constant 0 : index
    %695 = vector.load %arg10[%694, %c0_367, %c0_368] : memref<8x1x128xf32, #tpu.memory_space<vmem>>, vector<1x1x128xf32>
    %696 = vector.shape_cast %695 : vector<1x1x128xf32> to vector<1x128xf32>
    %697 = vector.shape_cast %693 : vector<1x128xf32> to vector<1x1x128xf32>
    tpu.vector_store %arg10[%694, %c0_367, %c0_368], %697 {strides = array<i32>} : memref<8x1x128xf32, #tpu.memory_space<vmem>>, vector<1x1x128xf32>,
    %c8_i32 = arith.constant 8 : i32
    %698 = tpu.concatenate %654, %693 in 0 : vector<1x128xf32>, vector<1x128xf32> -> vector<2x128xf32>
    %c0_369 = arith.constant 0 : index
    %c0_370 = arith.constant 0 : index
    %699 = vector.load %arg11[%c0_369, %c0_370] : memref<2x128xf32, #tpu.memory_space<vmem>>, vector<2x128xf32>
    tpu.vector_store %arg11[%c0_369, %c0_370], %698 {strides = array<i32>} : memref<2x128xf32, #tpu.memory_space<vmem>>, vector<2x128xf32>,
    return
  }
  func.func @transform_0(%arg0: i32, %arg1: memref<8xi32, #tpu.memory_space<smem>>) -> (i32, i32, i32) {
    %c0_i32 = arith.constant 0 : i32
    %c0_i32_0 = arith.constant 0 : i32
    %c0_i32_1 = arith.constant 0 : i32
    %c0_i32_2 = arith.constant 0 : i32
    return %c0_i32, %c0_i32_0, %c0_i32_1 : i32, i32, i32
  }
  func.func @transform_1(%arg0: i32, %arg1: memref<8xi32, #tpu.memory_space<smem>>) -> (i32, i32) {
    %c0_i32 = arith.constant 0 : i32
    %c0_i32_0 = arith.constant 0 : i32
    %c0_i32_1 = arith.constant 0 : i32
    return %c0_i32, %c0_i32_0 : i32, i32
  }
  func.func @transform_2(%arg0: i32, %arg1: memref<8xi32, #tpu.memory_space<smem>>) -> (i32, i32, i32) {
    %c0_i32 = arith.constant 0 : i32
    %c0_i32_0 = arith.constant 0 : i32
    %c0_i32_1 = arith.constant 0 : i32
    %c0_i32_2 = arith.constant 0 : i32
    return %c0_i32, %c0_i32_0, %c0_i32_1 : i32, i32, i32
  }
  func.func @transform_3(%arg0: i32, %arg1: memref<8xi32, #tpu.memory_space<smem>>) -> (i32, i32) {
    %c0_i32 = arith.constant 0 : i32
    %c0_i32_0 = arith.constant 0 : i32
    %c0_i32_1 = arith.constant 0 : i32
    return %c0_i32, %c0_i32_0 : i32, i32
  }
  func.func @transform_4(%arg0: i32, %arg1: memref<8xi32, #tpu.memory_space<smem>>) -> (i32, i32, i32) {
    %c0_i32 = arith.constant 0 : i32
    %c0_i32_0 = arith.constant 0 : i32
    %c0_i32_1 = arith.constant 0 : i32
    %c0_i32_2 = arith.constant 0 : i32
    return %c0_i32, %c0_i32_0, %c0_i32_1 : i32, i32, i32
  }
  func.func @transform_5(%arg0: i32, %arg1: memref<8xi32, #tpu.memory_space<smem>>) -> (i32, i32) {
    %c0_i32 = arith.constant 0 : i32
    %c0_i32_0 = arith.constant 0 : i32
    %c0_i32_1 = arith.constant 0 : i32
    return %c0_i32, %c0_i32_0 : i32, i32
  }
  func.func @transform_6(%arg0: i32, %arg1: memref<8xi32, #tpu.memory_space<smem>>) -> (i32, i32, i32) {
    %c0_i32 = arith.constant 0 : i32
    %c0_i32_0 = arith.constant 0 : i32
    %c0_i32_1 = arith.constant 0 : i32
    %c0_i32_2 = arith.constant 0 : i32
    return %c0_i32, %c0_i32_0, %c0_i32_1 : i32, i32, i32
  }
  func.func @transform_7(%arg0: i32, %arg1: memref<8xi32, #tpu.memory_space<smem>>) -> (i32, i32) {
    %c0_i32 = arith.constant 0 : i32
    %c0_i32_0 = arith.constant 0 : i32
    %c0_i32_1 = arith.constant 0 : i32
    return %c0_i32, %c0_i32_0 : i32, i32
  }
  func.func @transform_8(%arg0: i32, %arg1: memref<8xi32, #tpu.memory_space<smem>>) -> (i32, i32, i32) {
    %c0_i32 = arith.constant 0 : i32
    %c0_i32_0 = arith.constant 0 : i32
    %c0_i32_1 = arith.constant 0 : i32
    %c0_i32_2 = arith.constant 0 : i32
    return %c0_i32, %c0_i32_0, %c0_i32_1 : i32, i32, i32
  }
  func.func @transform_9(%arg0: i32, %arg1: memref<8xi32, #tpu.memory_space<smem>>) -> (i32, i32) {
    %c0_i32 = arith.constant 0 : i32
    %c0_i32_0 = arith.constant 0 : i32
    %c0_i32_1 = arith.constant 0 : i32
    return %c0_i32, %c0_i32_0 : i32, i32
  }
}

module attributes {stable_mosaic.version = 11 : i64} {
  func.func @decoder_kernel(%arg0: i32, %arg1: memref<8x128xf32, #tpu.memory_space<vmem>>, %arg2: memref<128x128xbf16, #tpu.memory_space<vmem>>, %arg3: memref<1x128xf32, #tpu.memory_space<vmem>>, %arg4: memref<8x128xf32, #tpu.memory_space<vmem>>) attributes {dimension_semantics = [#tpu.dimension_semantics<parallel>], iteration_bounds = array<i64: 1>, scalar_prefetch = 0 : i64, scratch_operands = 0 : i64, tpu.core_type = #tpu.core_type<tc>, window_params = [{pipeline_mode = #tpu.pipeline_mode<synchronous>, transform_indices = @transform_0, window_bounds = array<i64: 8, 128>}, {transform_indices = @transform_1, window_bounds = array<i64: 128, 128>}, {transform_indices = @transform_2, window_bounds = array<i64: 1, 128>}, {transform_indices = @transform_3, window_bounds = array<i64: 8, 128>}]} {
    %c0 = arith.constant 0 : index
    %c0_0 = arith.constant 0 : index
    %0 = vector.load %arg1[%c0, %c0_0] : memref<8x128xf32, #tpu.memory_space<vmem>>, vector<8x128xf32>
    %1 = arith.truncf %0 : vector<8x128xf32> to vector<8x128xbf16>
    %c0_1 = arith.constant 0 : index
    %c0_2 = arith.constant 0 : index
    %2 = vector.load %arg2[%c0_1, %c0_2] : memref<128x128xbf16, #tpu.memory_space<vmem>>, vector<128x128xbf16>
    %cst = arith.constant dense<0.000000e+00> : vector<8x128xf32>
    %3 = tpu.matmul %1, %2, %cst {dimension_numbers = #tpu.dot_dimension_numbers<[1], [0], [0], [1], [0, 0, 1, 1], [], []>} : vector<8x128xbf16>, vector<128x128xbf16>, vector<8x128xf32> -> vector<8x128xf32>
    %c0_3 = arith.constant 0 : index
    %c0_4 = arith.constant 0 : index
    %4 = vector.load %arg3[%c0_3, %c0_4] : memref<1x128xf32, #tpu.memory_space<vmem>>, vector<1x128xf32>
    %5 = vector.broadcast %4 : vector<1x128xf32> to vector<8x128xf32>
    %6 = arith.addf %3, %5 : vector<8x128xf32>
    %c0_5 = arith.constant 0 : index
    %c0_6 = arith.constant 0 : index
    %7 = vector.load %arg4[%c0_5, %c0_6] : memref<8x128xf32, #tpu.memory_space<vmem>>, vector<8x128xf32>
    tpu.vector_store %arg4[%c0_5, %c0_6], %6 {strides = array<i32>} : memref<8x128xf32, #tpu.memory_space<vmem>>, vector<8x128xf32>,
    return
  }
  func.func @transform_0(%arg0: i32) -> (i32, i32) {
    %c0_i32 = arith.constant 0 : i32
    %c0_i32_0 = arith.constant 0 : i32
    %c0_i32_1 = arith.constant 0 : i32
    return %c0_i32, %c0_i32_0 : i32, i32
  }
  func.func @transform_1(%arg0: i32) -> (i32, i32) {
    %c0_i32 = arith.constant 0 : i32
    %c0_i32_0 = arith.constant 0 : i32
    return %c0_i32, %arg0 : i32, i32
  }
  func.func @transform_2(%arg0: i32) -> (i32, i32) {
    %c0_i32 = arith.constant 0 : i32
    %c0_i32_0 = arith.constant 0 : i32
    return %c0_i32, %arg0 : i32, i32
  }
  func.func @transform_3(%arg0: i32) -> (i32, i32) {
    %c0_i32 = arith.constant 0 : i32
    %c0_i32_0 = arith.constant 0 : i32
    return %c0_i32, %arg0 : i32, i32
  }
}

</mosaic_0001>

<llo_original>
// kernel: rnn_decode_sequence.3
$region0: #{rnn_decode_sequence.3}
  #allocation0 [shape = 'u32[]', space=smem, size = 0x4, offset = 0x4, fixed_abs, tag = 'smem constant byte address 0x4 - core index']
  #allocation1 [shape = 'u32[144,128]{1,0:T(1,128)}', space=vmem, size = 0x12000, scoped, tag = 'internal scratch']
  %s0 = inlined_call_operand.vmem [shape: f32[8,128], index: 0, kind: input, shape index: {}]
  %s1 = inlined_call_operand.vmem [shape: bf16[128,128], index: 1, kind: input, shape index: {}]
  %s2 = inlined_call_operand.vmem [shape: f32[1,128], index: 2, kind: input, shape index: {}]
  %s3 = inlined_call_operand.hbm [shape: f32[8,128], index: 3, kind: output, shape index: {}]
  %s4 = sld [smem:[#allocation0]]
  $region22: #{rnn_decode_sequence.3} parent=0
    _
  %s6 = ssub.s32 1, %s4
  %s7 = scalar_select 0, %s6, %s4
  $region1: #{rnn_decode_sequence.3} parent=0
    #allocation2 [shape = 'u8[4096]{0}', space=vmem, size = 0x1000, scoped, tag = 'output window, operand 0, single buffered']
    #allocation3 [shape = 's32[1]{0}', space=sflag, size = 0x4, scoped, tag = 'scoped memory for rnn_decode_sequence.3']
    %8 = vsyncpa [#allocation3], 0
    // Predicated region
    $region2: #{rnn_decode_sequence.3} parent=1 // pred_check
      _
    $region3: #{rnn_decode_sequence.3} parent=1 // pred_check_branch
      %10 = sbr.rel (0) target = $region5
    $region4: #{rnn_decode_sequence.3} parent=1 // pred_region
      _
    $region5: #{rnn_decode_sequence.3} parent=1 // pred_fallthru
      _
    // Predicated region
    $region6: #{rnn_decode_sequence.3} parent=1 // pred_check
      _
    $region7: #{rnn_decode_sequence.3} parent=1 // pred_check_branch
      %12 = sbr.rel (0) target = $region9
    $region8: #{rnn_decode_sequence.3} parent=1 // pred_region
      _
    $region9: #{rnn_decode_sequence.3} parent=1 // pred_fallthru
      _
    // Predicated region
    $region10: #{rnn_decode_sequence.3} parent=1 // pred_check
      _
    $region11: #{rnn_decode_sequence.3} parent=1 // pred_check_branch
      %14 = sbr.rel (0) target = $region13
    $region12: #{rnn_decode_sequence.3} parent=1 // pred_region
      _
    $region13: #{rnn_decode_sequence.3} parent=1 // pred_fallthru
      _
    %v16 = vld [vmem:[%s0] sm:$0xff]
    %v17 = vpack.c.bf16 %v16, %v16
    %v18 = vld [vmem:[%s1] sm:$0xf]
    %v19 = vld [vmem:[%s1 + $0x4] sm:$0xf]
    %v20 = vld [vmem:[%s1 + $0x8] sm:$0xf]
    %v21 = vld [vmem:[%s1 + $0xc] sm:$0xf]
    %v22 = vld [vmem:[%s1 + $0x10] sm:$0xf]
    %v23 = vld [vmem:[%s1 + $0x14] sm:$0xf]
    %v24 = vld [vmem:[%s1 + $0x18] sm:$0xf]
    %v25 = vld [vmem:[%s1 + $0x1c] sm:$0xf]
    %v26 = vld [vmem:[%s1 + $0x20] sm:$0xf]
    %v27 = vld [vmem:[%s1 + $0x24] sm:$0xf]
    %v28 = vld [vmem:[%s1 + $0x28] sm:$0xf]
    %v29 = vld [vmem:[%s1 + $0x2c] sm:$0xf]
    %v30 = vld [vmem:[%s1 + $0x30] sm:$0xf]
    %v31 = vld [vmem:[%s1 + $0x34] sm:$0xf]
    %v32 = vld [vmem:[%s1 + $0x38] sm:$0xf]
    %v33 = vld [vmem:[%s1 + $0x3c] sm:$0xf]
    %v34 = vld [vmem:[%s2] sm:$0x1]
    %v36 = vlaneseq
    %v37 = vshrl.u32 %v36, 7
    %v38 = vsub.s32 0, %v37
    %v39 = vrot.slane %v34, %v38
    %v57 = vunpack.c.l.b16 %v18
    %v58 = vunpack.c.l.b16 %v19
    %v59 = vunpack.c.l.b16 %v20
    %v60 = vunpack.c.l.b16 %v21
    %v61 = vunpack.c.l.b16 %v22
    %v62 = vunpack.c.l.b16 %v23
    %v63 = vunpack.c.l.b16 %v24
    %v64 = vunpack.c.l.b16 %v25
    %v65 = vunpack.c.l.b16 %v26
    %v66 = vunpack.c.l.b16 %v27
    %v67 = vunpack.c.l.b16 %v28
    %v68 = vunpack.c.l.b16 %v29
    %v69 = vunpack.c.l.b16 %v30
    %v70 = vunpack.c.l.b16 %v31
    %v71 = vunpack.c.l.b16 %v32
    %v72 = vunpack.c.l.b16 %v33
    %v73 = vpack.c.b16 %v58, %v57
    %v74 = vpack.c.b16 %v60, %v59
    %v75 = vpack.c.b16 %v62, %v61
    %v76 = vpack.c.b16 %v64, %v63
    %v77 = vpack.c.b16 %v66, %v65
    %v78 = vpack.c.b16 %v68, %v67
    %v79 = vpack.c.b16 %v70, %v69
    %v80 = vpack.c.b16 %v72, %v71
    %89 = vmatprep.subr.bf16.mxu0 0
    %90 = vmatpush1.bf16.msra.mxu0 %v73
    %91 = vmatprep.subr.bf16.mxu0 0
    %92 = vmatpush1.bf16.msra.mxu0 %v74
    %93 = vmatprep.subr.bf16.mxu0 0
    %94 = vmatpush1.bf16.msra.mxu0 %v75
    %95 = vmatprep.subr.bf16.mxu0 0
    %96 = vmatpush1.bf16.msra.mxu0 %v76
    %97 = vmatprep.subr.bf16.mxu0 0
    %98 = vmatpush1.bf16.msra.mxu0 %v77
    %99 = vmatprep.subr.bf16.mxu0 0
    %100 = vmatpush1.bf16.msra.mxu0 %v78
    %101 = vmatprep.subr.bf16.mxu0 0
    %102 = vmatpush1.bf16.msra.mxu0 %v79
    %103 = vmatprep.subr.bf16.mxu0 0
    %104 = vmatpush1.bf16.msra.mxu0 %v80
    %105 = vmatprep.subr.bf16.mxu0 0
    %106 = vmatpush1.bf16.msra.mxu0 0
    %107 = vmatprep.subr.bf16.mxu0 0
    %108 = vmatpush1.bf16.msra.mxu0 0
    %109 = vmatprep.subr.bf16.mxu0 0
    %110 = vmatpush1.bf16.msra.mxu0 0
    %111 = vmatprep.subr.bf16.mxu0 0
    %112 = vmatpush1.bf16.msra.mxu0 0
    %113 = vmatprep.subr.bf16.mxu0 0
    %114 = vmatpush1.bf16.msra.mxu0 0
    %115 = vmatprep.subr.bf16.mxu0 0
    %116 = vmatpush1.bf16.msra.mxu0 0
    %117 = vmatprep.subr.bf16.mxu0 0
    %118 = vmatpush1.bf16.msra.mxu0 0
    %119 = vmatprep.subr.bf16.mxu0 0
    %120 = vmatpush1.bf16.msra.mxu0 0
    %121 = vmatprep.mubr.bf16.mxu0 0
    %122 = vmatmul.mubr.bf16.gmra.mrb[0].mxu0 %v17
    %v123 = vpop.f32.mrb[0].mxu0
    %v124 = vadd.f32 %v39, %v123
    %v125 = vpop.f32.mrb[0].mxu0
    %v126 = vpop.f32.mrb[0].mxu0
    %v127 = vpop.f32.mrb[0].mxu0
    %128 = vdwg.mxu0
    %129 = vst [vmem:[#allocation2] sm:$0xff] %v124
    // Predicated region
    $region14: #{rnn_decode_sequence.3} parent=1 // pred_check
      _
    $region15: #{rnn_decode_sequence.3} parent=1 // pred_check_branch
      %131 = sbr.rel (0) target = $region17
    $region16: #{rnn_decode_sequence.3} parent=1 // pred_region
      %s133 = ssub.s32 128, 128
      %134 = vsyncadd [#allocation3], %s133
      %s136 = sshll.u32 [#allocation2], 4
      %s137 = int_to_ptr.vmem [resolvable:$true] %s136
      %139 = dma.vmem_to_hbm [thread:$0]  %s137, 128, %s3, [#allocation3]
    $region17: #{rnn_decode_sequence.3} parent=1 // pred_fallthru
      _
    // Predicated region
    $region18: #{rnn_decode_sequence.3} parent=1 // pred_check
      _
    $region19: #{rnn_decode_sequence.3} parent=1 // pred_check_branch
      %141 = sbr.rel (0) target = $region21
    $region20: #{rnn_decode_sequence.3} parent=1 // pred_region
      %142 = dma.done [#allocation3], 128
    $region21: #{rnn_decode_sequence.3} parent=1 // pred_fallthru
      _
    %143 = vsyncpa [#allocation3], 1

// kernel: rnn_decode_sequence.2
$region0: #{rnn_decode_sequence.2}
  #allocation0 [shape = 'u32[]', space=smem, size = 0x4, offset = 0x4, fixed_abs, tag = 'smem constant byte address 0x4 - core index']
  #allocation1 [shape = 'u32[144,128]{1,0:T(1,128)}', space=vmem, size = 0x12000, scoped, tag = 'internal scratch']
  #allocation2 [shape = 's32[1]{0}', space=sflag, size = 0x4, scoped, tag = 'scoped memory for rnn_decode_sequence.2']
  #allocation3 [shape = 'u8[512]{0}', space=smem, size = 0x200, scoped, tag = 'prefetched SMEM operand 0']
  %s0 = inlined_call_operand.vmem [shape: s32[8], index: 0, kind: input, shape index: {}]
  %s1 = inlined_call_operand.hbm [shape: f32[100,1,128], index: 1, kind: input, shape index: {}]
  %s2 = inlined_call_operand.vmem [shape: f32[2,128], index: 2, kind: input, shape index: {}]
  %s3 = inlined_call_operand.hbm [shape: bf16[2,256,256], index: 3, kind: input, shape index: {}]
  %s4 = inlined_call_operand.vmem [shape: f32[2,256], index: 4, kind: input, shape index: {}]
  %s5 = inlined_call_operand.hbm [shape: bf16[2,128,128], index: 5, kind: input, shape index: {}]
  %s6 = inlined_call_operand.vmem [shape: f32[2,128], index: 6, kind: input, shape index: {}]
  %s7 = inlined_call_operand.hbm [shape: bf16[2,128,128], index: 7, kind: input, shape index: {}]
  %s8 = inlined_call_operand.vmem [shape: f32[2,128], index: 8, kind: input, shape index: {}]
  %s9 = inlined_call_operand.vmem [shape: f32[8,1,128], index: 9, kind: output, shape index: {0}]
  %s10 = inlined_call_operand.hbm [shape: f32[2,128], index: 10, kind: output, shape index: {1}]
  %11 = xla_tuple %s9, %s10
  %s12 = sld [smem:[#allocation0]]
  $region66: #{rnn_decode_sequence.2} parent=0
    _
  %s14 = ssub.s32 1, %s12
  %s15 = scalar_select 0, %s14, %s12
  %s16 = sshll.u32 %s0, 4
  %s17 = int_to_ptr.vmem [resolvable:$true] %s16
  %19 = dma.vmem_to_smem %s17, 16, [#allocation3], [#allocation2]
  %20 = dma.done [#allocation2], 16
  %21 = sfence
  $region1: #{rnn_decode_sequence.2} parent=0
    #allocation4 [shape = 'u8[51200]{0}', space=vmem, size = 0xc800, scoped, tag = 'input window, operand 1, single buffered']
    #allocation5 [shape = 's32[1]{0}', space=sflag, size = 0x4, scoped, tag = 'scoped memory for rnn_decode_sequence.2']
    #allocation6 [shape = 's32[1]{0}', space=sflag, size = 0x4, scoped, tag = 'scoped memory for rnn_decode_sequence.2']
    #allocation7 [shape = 'u8[262144]{0}', space=vmem, size = 0x40000, scoped, tag = 'input window, operand 3, single buffered']
    #allocation8 [shape = 's32[1]{0}', space=sflag, size = 0x4, scoped, tag = 'scoped memory for rnn_decode_sequence.2']
    #allocation9 [shape = 'u8[65536]{0}', space=vmem, size = 0x10000, scoped, tag = 'input window, operand 5, single buffered']
    #allocation10 [shape = 'u8[65536]{0}', space=vmem, size = 0x10000, scoped, tag = 'input window, operand 7, single buffered']
    #allocation11 [shape = 's32[1]{0}', space=sflag, size = 0x4, scoped, tag = 'scoped memory for rnn_decode_sequence.2']
    #allocation12 [shape = 'u8[1024]{0}', space=vmem, size = 0x400, scoped, tag = 'output window, operand 1, single buffered']
    %22 = vsyncpa [#allocation5], 0
    %23 = vsyncpa [#allocation8], 0
    %24 = vsyncpa [#allocation11], 0
    %25 = vsyncpa [#allocation6], 0
    // Predicated region
    $region2: #{rnn_decode_sequence.2} parent=1 // pred_check
      _
    $region3: #{rnn_decode_sequence.2} parent=1 // pred_check_branch
      %27 = sbr.rel (0) target = $region5
    $region4: #{rnn_decode_sequence.2} parent=1 // pred_region
      %s29 = ssub.s32 1600, 1600
      %30 = vsyncadd [#allocation5], %s29
      %s31 = sshll.u32 [#allocation4], 4
      %s32 = int_to_ptr.vmem [resolvable:$true] %s31
      %37 = dma.hbm_to_vmem [thread:$0]  %s1, 1600, %s32, [#allocation5], 16, 16, 1
    $region5: #{rnn_decode_sequence.2} parent=1 // pred_fallthru
      _
    // Predicated region
    $region6: #{rnn_decode_sequence.2} parent=1 // pred_check
      _
    $region7: #{rnn_decode_sequence.2} parent=1 // pred_check_branch
      %39 = sbr.rel (0) target = $region9
    $region8: #{rnn_decode_sequence.2} parent=1 // pred_region
      _
    $region9: #{rnn_decode_sequence.2} parent=1 // pred_fallthru
      _
    // Predicated region
    $region10: #{rnn_decode_sequence.2} parent=1 // pred_check
      _
    $region11: #{rnn_decode_sequence.2} parent=1 // pred_check_branch
      %41 = sbr.rel (0) target = $region13
    $region12: #{rnn_decode_sequence.2} parent=1 // pred_region
      %s43 = ssub.s32 8192, 8192
      %44 = vsyncadd [#allocation8], %s43
      %s45 = sshll.u32 [#allocation7], 4
      %s46 = int_to_ptr.vmem [resolvable:$true] %s45
      %51 = dma.hbm_to_vmem [thread:$0]  %s3, 8192, %s46, [#allocation8], 128, 128, 8
    $region13: #{rnn_decode_sequence.2} parent=1 // pred_fallthru
      _
    // Predicated region
    $region14: #{rnn_decode_sequence.2} parent=1 // pred_check
      _
    $region15: #{rnn_decode_sequence.2} parent=1 // pred_check_branch
      %53 = sbr.rel (0) target = $region17
    $region16: #{rnn_decode_sequence.2} parent=1 // pred_region
      _
    $region17: #{rnn_decode_sequence.2} parent=1 // pred_fallthru
      _
    // Predicated region
    $region18: #{rnn_decode_sequence.2} parent=1 // pred_check
      _
    $region19: #{rnn_decode_sequence.2} parent=1 // pred_check_branch
      %55 = sbr.rel (0) target = $region21
    $region20: #{rnn_decode_sequence.2} parent=1 // pred_region
      %s57 = ssub.s32 2048, 2048
      %58 = vsyncadd [#allocation8], %s57
      %s59 = sshll.u32 [#allocation9], 4
      %s60 = int_to_ptr.vmem [resolvable:$true] %s59
      %65 = dma.hbm_to_vmem [thread:$0]  %s5, 2048, %s60, [#allocation8], 64, 64, 4
    $region21: #{rnn_decode_sequence.2} parent=1 // pred_fallthru
      _
    // Predicated region
    $region22: #{rnn_decode_sequence.2} parent=1 // pred_check
      _
    $region23: #{rnn_decode_sequence.2} parent=1 // pred_check_branch
      %67 = sbr.rel (0) target = $region25
    $region24: #{rnn_decode_sequence.2} parent=1 // pred_region
      _
    $region25: #{rnn_decode_sequence.2} parent=1 // pred_fallthru
      _
    // Predicated region
    $region26: #{rnn_decode_sequence.2} parent=1 // pred_check
      _
    $region27: #{rnn_decode_sequence.2} parent=1 // pred_check_branch
      %69 = sbr.rel (0) target = $region29
    $region28: #{rnn_decode_sequence.2} parent=1 // pred_region
      %s71 = ssub.s32 2048, 2048
      %72 = vsyncadd [#allocation11], %s71
      %s73 = sshll.u32 [#allocation10], 4
      %s74 = int_to_ptr.vmem [resolvable:$true] %s73
      %79 = dma.hbm_to_vmem [thread:$0]  %s7, 2048, %s74, [#allocation11], 64, 64, 4
    $region29: #{rnn_decode_sequence.2} parent=1 // pred_fallthru
      _
    // Predicated region
    $region30: #{rnn_decode_sequence.2} parent=1 // pred_check
      _
    $region31: #{rnn_decode_sequence.2} parent=1 // pred_check_branch
      %81 = sbr.rel (0) target = $region33
    $region32: #{rnn_decode_sequence.2} parent=1 // pred_region
      _
    $region33: #{rnn_decode_sequence.2} parent=1 // pred_fallthru
      _
    // Predicated region
    $region34: #{rnn_decode_sequence.2} parent=1 // pred_check
      _
    $region35: #{rnn_decode_sequence.2} parent=1 // pred_check_branch
      %83 = sbr.rel (0) target = $region37
    $region36: #{rnn_decode_sequence.2} parent=1 // pred_region
      %84 = dma.done [#allocation5], 1600
    $region37: #{rnn_decode_sequence.2} parent=1 // pred_fallthru
      _
    // Predicated region
    $region38: #{rnn_decode_sequence.2} parent=1 // pred_check
      _
    $region39: #{rnn_decode_sequence.2} parent=1 // pred_check_branch
      %86 = sbr.rel (0) target = $region41
    $region40: #{rnn_decode_sequence.2} parent=1 // pred_region
      %87 = dma.done [#allocation8], 8192
    $region41: #{rnn_decode_sequence.2} parent=1 // pred_fallthru
      _
    // Predicated region
    $region42: #{rnn_decode_sequence.2} parent=1 // pred_check
      _
    $region43: #{rnn_decode_sequence.2} parent=1 // pred_check_branch
      %89 = sbr.rel (0) target = $region45
    $region44: #{rnn_decode_sequence.2} parent=1 // pred_region
      %90 = dma.done [#allocation8], 2048
    $region45: #{rnn_decode_sequence.2} parent=1 // pred_fallthru
      _
    // Predicated region
    $region46: #{rnn_decode_sequence.2} parent=1 // pred_check
      _
    $region47: #{rnn_decode_sequence.2} parent=1 // pred_check_branch
      %92 = sbr.rel (0) target = $region49
    $region48: #{rnn_decode_sequence.2} parent=1 // pred_region
      %93 = dma.done [#allocation11], 2048
    $region49: #{rnn_decode_sequence.2} parent=1 // pred_fallthru
      _
    %v95 = vld [vmem:[%s2] sm:$0x1]
    %v96 = vld [vmem:[%s2 + $0x1] sm:$0x1]
    %s97 = sld [smem:[#allocation3]]
    %s98 = scalar_lea.vmem [#allocation4], %s97
    %v99 = vld [vmem:[%s98] sm:$0x1]
    %v100 = vpack.c.bf16 %v99, %v99
    %v101 = vpack.c.bf16 %v95, %v95
    %v102 = vld [vmem:[#allocation7] sm:$0xff]
    %v103 = vld [vmem:[#allocation7 + $0x8] sm:$0xff]
    %v104 = vld [vmem:[#allocation7 + $0x10] sm:$0xff]
    %v105 = vld [vmem:[#allocation7 + $0x18] sm:$0xff]
    %v106 = vld [vmem:[#allocation7 + $0x20] sm:$0xff]
    %v107 = vld [vmem:[#allocation7 + $0x28] sm:$0xff]
    %v108 = vld [vmem:[#allocation7 + $0x30] sm:$0xff]
    %v109 = vld [vmem:[#allocation7 + $0x38] sm:$0xff]
    %v110 = vld [vmem:[#allocation7 + $0x40] sm:$0xff]
    %v111 = vld [vmem:[#allocation7 + $0x48] sm:$0xff]
    %v112 = vld [vmem:[#allocation7 + $0x50] sm:$0xff]
    %v113 = vld [vmem:[#allocation7 + $0x58] sm:$0xff]
    %v114 = vld [vmem:[#allocation7 + $0x60] sm:$0xff]
    %v115 = vld [vmem:[#allocation7 + $0x68] sm:$0xff]
    %v116 = vld [vmem:[#allocation7 + $0x70] sm:$0xff]
    %v117 = vld [vmem:[#allocation7 + $0x78] sm:$0xff]
    %v118 = vld [vmem:[#allocation7 + $0x80] sm:$0xff]
    %v119 = vld [vmem:[#allocation7 + $0x88] sm:$0xff]
    %v120 = vld [vmem:[#allocation7 + $0x90] sm:$0xff]
    %v121 = vld [vmem:[#allocation7 + $0x98] sm:$0xff]
    %v122 = vld [vmem:[#allocation7 + $0xa0] sm:$0xff]
    %v123 = vld [vmem:[#allocation7 + $0xa8] sm:$0xff]
    %v124 = vld [vmem:[#allocation7 + $0xb0] sm:$0xff]
    %v125 = vld [vmem:[#allocation7 + $0xb8] sm:$0xff]
    %v126 = vld [vmem:[#allocation7 + $0xc0] sm:$0xff]
    %v127 = vld [vmem:[#allocation7 + $0xc8] sm:$0xff]
    %v128 = vld [vmem:[#allocation7 + $0xd0] sm:$0xff]
    %v129 = vld [vmem:[#allocation7 + $0xd8] sm:$0xff]
    %v130 = vld [vmem:[#allocation7 + $0xe0] sm:$0xff]
    %v131 = vld [vmem:[#allocation7 + $0xe8] sm:$0xff]
    %v132 = vld [vmem:[#allocation7 + $0xf0] sm:$0xff]
    %v133 = vld [vmem:[#allocation7 + $0xf8] sm:$0xff]
    %v134 = vld [vmem:[%s4] ss:$2 sm:$0x3]
    %v167 = vunpack.c.l.b16 %v102
    %v168 = vunpack.c.h.b16 %v102
    %v169 = vunpack.c.l.b16 %v103
    %v170 = vunpack.c.h.b16 %v103
    %v171 = vunpack.c.l.b16 %v104
    %v172 = vunpack.c.h.b16 %v104
    %v173 = vunpack.c.l.b16 %v105
    %v174 = vunpack.c.h.b16 %v105
    %v175 = vunpack.c.l.b16 %v106
    %v176 = vunpack.c.h.b16 %v106
    %v177 = vunpack.c.l.b16 %v107
    %v178 = vunpack.c.h.b16 %v107
    %v179 = vunpack.c.l.b16 %v108
    %v180 = vunpack.c.h.b16 %v108
    %v181 = vunpack.c.l.b16 %v109
    %v182 = vunpack.c.h.b16 %v109
    %v183 = vunpack.c.l.b16 %v110
    %v184 = vunpack.c.h.b16 %v110
    %v185 = vunpack.c.l.b16 %v111
    %v186 = vunpack.c.h.b16 %v111
    %v187 = vunpack.c.l.b16 %v112
    %v188 = vunpack.c.h.b16 %v112
    %v189 = vunpack.c.l.b16 %v113
    %v190 = vunpack.c.h.b16 %v113
    %v191 = vunpack.c.l.b16 %v114
    %v192 = vunpack.c.h.b16 %v114
    %v193 = vunpack.c.l.b16 %v115
    %v194 = vunpack.c.h.b16 %v115
    %v195 = vunpack.c.l.b16 %v116
    %v196 = vunpack.c.h.b16 %v116
    %v197 = vunpack.c.l.b16 %v117
    %v198 = vunpack.c.h.b16 %v117
    %v199 = vunpack.c.l.b16 %v118
    %v200 = vunpack.c.h.b16 %v118
    %v201 = vunpack.c.l.b16 %v119
    %v202 = vunpack.c.h.b16 %v119
    %v203 = vunpack.c.l.b16 %v120
    %v204 = vunpack.c.h.b16 %v120
    %v205 = vunpack.c.l.b16 %v121
    %v206 = vunpack.c.h.b16 %v121
    %v207 = vunpack.c.l.b16 %v122
    %v208 = vunpack.c.h.b16 %v122
    %v209 = vunpack.c.l.b16 %v123
    %v210 = vunpack.c.h.b16 %v123
    %v211 = vunpack.c.l.b16 %v124
    %v212 = vunpack.c.h.b16 %v124
    %v213 = vunpack.c.l.b16 %v125
    %v214 = vunpack.c.h.b16 %v125
    %v215 = vunpack.c.l.b16 %v126
    %v216 = vunpack.c.h.b16 %v126
    %v217 = vunpack.c.l.b16 %v127
    %v218 = vunpack.c.h.b16 %v127
    %v219 = vunpack.c.l.b16 %v128
    %v220 = vunpack.c.h.b16 %v128
    %v221 = vunpack.c.l.b16 %v129
    %v222 = vunpack.c.h.b16 %v129
    %v223 = vunpack.c.l.b16 %v130
    %v224 = vunpack.c.h.b16 %v130
    %v225 = vunpack.c.l.b16 %v131
    %v226 = vunpack.c.h.b16 %v131
    %v227 = vunpack.c.l.b16 %v132
    %v228 = vunpack.c.h.b16 %v132
    %v229 = vunpack.c.l.b16 %v133
    %v230 = vunpack.c.h.b16 %v133
    %v231 = vpack.c.b16 %v169, %v167
    %v232 = vpack.c.b16 %v170, %v168
    %v233 = vpack.c.b16 %v173, %v171
    %v234 = vpack.c.b16 %v174, %v172
    %v235 = vpack.c.b16 %v177, %v175
    %v236 = vpack.c.b16 %v178, %v176
    %v237 = vpack.c.b16 %v181, %v179
    %v238 = vpack.c.b16 %v182, %v180
    %v239 = vpack.c.b16 %v185, %v183
    %v240 = vpack.c.b16 %v186, %v184
    %v241 = vpack.c.b16 %v189, %v187
    %v242 = vpack.c.b16 %v190, %v188
    %v243 = vpack.c.b16 %v193, %v191
    %v244 = vpack.c.b16 %v194, %v192
    %v245 = vpack.c.b16 %v197, %v195
    %v246 = vpack.c.b16 %v198, %v196
    %v247 = vpack.c.b16 %v201, %v199
    %v248 = vpack.c.b16 %v202, %v200
    %v249 = vpack.c.b16 %v205, %v203
    %v250 = vpack.c.b16 %v206, %v204
    %v251 = vpack.c.b16 %v209, %v207
    %v252 = vpack.c.b16 %v210, %v208
    %v253 = vpack.c.b16 %v213, %v211
    %v254 = vpack.c.b16 %v214, %v212
    %v255 = vpack.c.b16 %v217, %v215
    %v256 = vpack.c.b16 %v218, %v216
    %v257 = vpack.c.b16 %v221, %v219
    %v258 = vpack.c.b16 %v222, %v220
    %v259 = vpack.c.b16 %v225, %v223
    %v260 = vpack.c.b16 %v226, %v224
    %v261 = vpack.c.b16 %v229, %v227
    %v262 = vpack.c.b16 %v230, %v228
    %v296 = vlaneseq
    %v297 = vshrl.u32 %v296, 7
    %v298 = vsub.s32 0, %v297
    %v299 = vrot.slane %v134, %v298
    %v300 = vlaneseq
    %v301 = vshrl.u32 %v300, 7
    %v302 = vsub.s32 1, %v301
    %v303 = vrot.slane %v134, %v302
    %306 = vmatprep.subr.bf16.mxu0 %v232
    %307 = vmatpush1.bf16.msra.mxu0 %v231
    %308 = vmatprep.subr.bf16.mxu0 %v234
    %309 = vmatpush1.bf16.msra.mxu0 %v233
    %310 = vmatprep.subr.bf16.mxu0 %v236
    %311 = vmatpush1.bf16.msra.mxu0 %v235
    %312 = vmatprep.subr.bf16.mxu0 %v238
    %313 = vmatpush1.bf16.msra.mxu0 %v237
    %314 = vmatprep.subr.bf16.mxu0 %v240
    %315 = vmatpush1.bf16.msra.mxu0 %v239
    %316 = vmatprep.subr.bf16.mxu0 %v242
    %317 = vmatpush1.bf16.msra.mxu0 %v241
    %318 = vmatprep.subr.bf16.mxu0 %v244
    %319 = vmatpush1.bf16.msra.mxu0 %v243
    %320 = vmatprep.subr.bf16.mxu0 %v246
    %321 = vmatpush1.bf16.msra.mxu0 %v245
    %322 = vmatprep.subr.bf16.mxu0 %v248
    %323 = vmatpush1.bf16.msra.mxu0 %v247
    %324 = vmatprep.subr.bf16.mxu0 %v250
    %325 = vmatpush1.bf16.msra.mxu0 %v249
    %326 = vmatprep.subr.bf16.mxu0 %v252
    %327 = vmatpush1.bf16.msra.mxu0 %v251
    %328 = vmatprep.subr.bf16.mxu0 %v254
    %329 = vmatpush1.bf16.msra.mxu0 %v253
    %330 = vmatprep.subr.bf16.mxu0 %v256
    %331 = vmatpush1.bf16.msra.mxu0 %v255
    %332 = vmatprep.subr.bf16.mxu0 %v258
    %333 = vmatpush1.bf16.msra.mxu0 %v257
    %334 = vmatprep.subr.bf16.mxu0 %v260
    %335 = vmatpush1.bf16.msra.mxu0 %v259
    %336 = vmatprep.subr.bf16.mxu0 %v262
    %337 = vmatpush1.bf16.msra.mxu0 %v261
    %338 = vmatprep.mubr.bf16.mxu0 %v101
    %339 = vmatmul.mubr.bf16.gmra.mrb[0].mxu0 %v100
    %v340 = vpop.f32.mrb[0].mxu0
    %v341 = vadd.f32 %v299, %v340
    %v342 = vpop.f32.mrb[0].mxu0
    %v343 = vadd.f32 %v303, %v342
    %v344 = vpop.f32.mrb[0].mxu0
    %v345 = vpop.f32.mrb[0].mxu0
    %346 = vdwg.mxu0
    %v347 = vxor.u32 %v341, 2147483648
    %v348 = vmul.f32 %v347, 1.442695
    %v349 = vpow.pop %v348
    %v350 = vadd.f32 %v349, 1.0
    %v351 = vrcp.pop %v350
    %v352 = vmul.f32 1.0, %v351
    %v353 = vxor.u32 %v343, 2147483648
    %v354 = vmul.f32 %v353, 1.442695
    %v355 = vpow.pop %v354
    %v356 = vadd.f32 %v355, 1.0
    %v357 = vrcp.pop %v356
    %v358 = vmul.f32 1.0, %v357
    %v359 = vld [vmem:[#allocation9] sm:$0xf]
    %v360 = vld [vmem:[#allocation9 + $0x4] sm:$0xf]
    %v361 = vld [vmem:[#allocation9 + $0x8] sm:$0xf]
    %v362 = vld [vmem:[#allocation9 + $0xc] sm:$0xf]
    %v363 = vld [vmem:[#allocation9 + $0x10] sm:$0xf]
    %v364 = vld [vmem:[#allocation9 + $0x14] sm:$0xf]
    %v365 = vld [vmem:[#allocation9 + $0x18] sm:$0xf]
    %v366 = vld [vmem:[#allocation9 + $0x1c] sm:$0xf]
    %v367 = vld [vmem:[#allocation9 + $0x20] sm:$0xf]
    %v368 = vld [vmem:[#allocation9 + $0x24] sm:$0xf]
    %v369 = vld [vmem:[#allocation9 + $0x28] sm:$0xf]
    %v370 = vld [vmem:[#allocation9 + $0x2c] sm:$0xf]
    %v371 = vld [vmem:[#allocation9 + $0x30] sm:$0xf]
    %v372 = vld [vmem:[#allocation9 + $0x34] sm:$0xf]
    %v373 = vld [vmem:[#allocation9 + $0x38] sm:$0xf]
    %v374 = vld [vmem:[#allocation9 + $0x3c] sm:$0xf]
    %v375 = vld [vmem:[%s6] sm:$0x1]
    %v392 = vunpack.c.l.b16 %v359
    %v393 = vunpack.c.l.b16 %v360
    %v394 = vunpack.c.l.b16 %v361
    %v395 = vunpack.c.l.b16 %v362
    %v396 = vunpack.c.l.b16 %v363
    %v397 = vunpack.c.l.b16 %v364
    %v398 = vunpack.c.l.b16 %v365
    %v399 = vunpack.c.l.b16 %v366
    %v400 = vunpack.c.l.b16 %v367
    %v401 = vunpack.c.l.b16 %v368
    %v402 = vunpack.c.l.b16 %v369
    %v403 = vunpack.c.l.b16 %v370
    %v404 = vunpack.c.l.b16 %v371
    %v405 = vunpack.c.l.b16 %v372
    %v406 = vunpack.c.l.b16 %v373
    %v407 = vunpack.c.l.b16 %v374
    %v408 = vpack.c.b16 %v393, %v392
    %v409 = vpack.c.b16 %v395, %v394
    %v410 = vpack.c.b16 %v397, %v396
    %v411 = vpack.c.b16 %v399, %v398
    %v412 = vpack.c.b16 %v401, %v400
    %v413 = vpack.c.b16 %v403, %v402
    %v414 = vpack.c.b16 %v405, %v404
    %v415 = vpack.c.b16 %v407, %v406
    %424 = vmatprep.subr.bf16.mxu0 0
    %425 = vmatpush1.bf16.msra.mxu0 %v408
    %426 = vmatprep.subr.bf16.mxu0 0
    %427 = vmatpush1.bf16.msra.mxu0 %v409
    %428 = vmatprep.subr.bf16.mxu0 0
    %429 = vmatpush1.bf16.msra.mxu0 %v410
    %430 = vmatprep.subr.bf16.mxu0 0
    %431 = vmatpush1.bf16.msra.mxu0 %v411
    %432 = vmatprep.subr.bf16.mxu0 0
    %433 = vmatpush1.bf16.msra.mxu0 %v412
    %434 = vmatprep.subr.bf16.mxu0 0
    %435 = vmatpush1.bf16.msra.mxu0 %v413
    %436 = vmatprep.subr.bf16.mxu0 0
    %437 = vmatpush1.bf16.msra.mxu0 %v414
    %438 = vmatprep.subr.bf16.mxu0 0
    %439 = vmatpush1.bf16.msra.mxu0 %v415
    %440 = vmatprep.subr.bf16.mxu0 0
    %441 = vmatpush1.bf16.msra.mxu0 0
    %442 = vmatprep.subr.bf16.mxu0 0
    %443 = vmatpush1.bf16.msra.mxu0 0
    %444 = vmatprep.subr.bf16.mxu0 0
    %445 = vmatpush1.bf16.msra.mxu0 0
    %446 = vmatprep.subr.bf16.mxu0 0
    %447 = vmatpush1.bf16.msra.mxu0 0
    %448 = vmatprep.subr.bf16.mxu0 0
    %449 = vmatpush1.bf16.msra.mxu0 0
    %450 = vmatprep.subr.bf16.mxu0 0
    %451 = vmatpush1.bf16.msra.mxu0 0
    %452 = vmatprep.subr.bf16.mxu0 0
    %453 = vmatpush1.bf16.msra.mxu0 0
    %454 = vmatprep.subr.bf16.mxu0 0
    %455 = vmatpush1.bf16.msra.mxu0 0
    %456 = vmatprep.mubr.bf16.mxu0 0
    %457 = vmatmul.mubr.bf16.gmra.mrb[0].mxu0 %v100
    %v458 = vpop.f32.mrb[0].mxu0
    %v459 = vadd.f32 %v375, %v458
    %v460 = vpop.f32.mrb[0].mxu0
    %v461 = vpop.f32.mrb[0].mxu0
    %v462 = vpop.f32.mrb[0].mxu0
    %463 = vdwg.mxu0
    %v464 = vld [vmem:[#allocation10] sm:$0xf]
    %v465 = vld [vmem:[#allocation10 + $0x4] sm:$0xf]
    %v466 = vld [vmem:[#allocation10 + $0x8] sm:$0xf]
    %v467 = vld [vmem:[#allocation10 + $0xc] sm:$0xf]
    %v468 = vld [vmem:[#allocation10 + $0x10] sm:$0xf]
    %v469 = vld [vmem:[#allocation10 + $0x14] sm:$0xf]
    %v470 = vld [vmem:[#allocation10 + $0x18] sm:$0xf]
    %v471 = vld [vmem:[#allocation10 + $0x1c] sm:$0xf]
    %v472 = vld [vmem:[#allocation10 + $0x20] sm:$0xf]
    %v473 = vld [vmem:[#allocation10 + $0x24] sm:$0xf]
    %v474 = vld [vmem:[#allocation10 + $0x28] sm:$0xf]
    %v475 = vld [vmem:[#allocation10 + $0x2c] sm:$0xf]
    %v476 = vld [vmem:[#allocation10 + $0x30] sm:$0xf]
    %v477 = vld [vmem:[#allocation10 + $0x34] sm:$0xf]
    %v478 = vld [vmem:[#allocation10 + $0x38] sm:$0xf]
    %v479 = vld [vmem:[#allocation10 + $0x3c] sm:$0xf]
    %v480 = vld [vmem:[%s8] sm:$0x1]
    %v497 = vunpack.c.l.b16 %v464
    %v498 = vunpack.c.l.b16 %v465
    %v499 = vunpack.c.l.b16 %v466
    %v500 = vunpack.c.l.b16 %v467
    %v501 = vunpack.c.l.b16 %v468
    %v502 = vunpack.c.l.b16 %v469
    %v503 = vunpack.c.l.b16 %v470
    %v504 = vunpack.c.l.b16 %v471
    %v505 = vunpack.c.l.b16 %v472
    %v506 = vunpack.c.l.b16 %v473
    %v507 = vunpack.c.l.b16 %v474
    %v508 = vunpack.c.l.b16 %v475
    %v509 = vunpack.c.l.b16 %v476
    %v510 = vunpack.c.l.b16 %v477
    %v511 = vunpack.c.l.b16 %v478
    %v512 = vunpack.c.l.b16 %v479
    %v513 = vpack.c.b16 %v498, %v497
    %v514 = vpack.c.b16 %v500, %v499
    %v515 = vpack.c.b16 %v502, %v501
    %v516 = vpack.c.b16 %v504, %v503
    %v517 = vpack.c.b16 %v506, %v505
    %v518 = vpack.c.b16 %v508, %v507
    %v519 = vpack.c.b16 %v510, %v509
    %v520 = vpack.c.b16 %v512, %v511
    %529 = vmatprep.subr.bf16.mxu0 0
    %530 = vmatpush1.bf16.msra.mxu0 %v513
    %531 = vmatprep.subr.bf16.mxu0 0
    %532 = vmatpush1.bf16.msra.mxu0 %v514
    %533 = vmatprep.subr.bf16.mxu0 0
    %534 = vmatpush1.bf16.msra.mxu0 %v515
    %535 = vmatprep.subr.bf16.mxu0 0
    %536 = vmatpush1.bf16.msra.mxu0 %v516
    %537 = vmatprep.subr.bf16.mxu0 0
    %538 = vmatpush1.bf16.msra.mxu0 %v517
    %539 = vmatprep.subr.bf16.mxu0 0
    %540 = vmatpush1.bf16.msra.mxu0 %v518
    %541 = vmatprep.subr.bf16.mxu0 0
    %542 = vmatpush1.bf16.msra.mxu0 %v519
    %543 = vmatprep.subr.bf16.mxu0 0
    %544 = vmatpush1.bf16.msra.mxu0 %v520
    %545 = vmatprep.subr.bf16.mxu0 0
    %546 = vmatpush1.bf16.msra.mxu0 0
    %547 = vmatprep.subr.bf16.mxu0 0
    %548 = vmatpush1.bf16.msra.mxu0 0
    %549 = vmatprep.subr.bf16.mxu0 0
    %550 = vmatpush1.bf16.msra.mxu0 0
    %551 = vmatprep.subr.bf16.mxu0 0
    %552 = vmatpush1.bf16.msra.mxu0 0
    %553 = vmatprep.subr.bf16.mxu0 0
    %554 = vmatpush1.bf16.msra.mxu0 0
    %555 = vmatprep.subr.bf16.mxu0 0
    %556 = vmatpush1.bf16.msra.mxu0 0
    %557 = vmatprep.subr.bf16.mxu0 0
    %558 = vmatpush1.bf16.msra.mxu0 0
    %559 = vmatprep.subr.bf16.mxu0 0
    %560 = vmatpush1.bf16.msra.mxu0 0
    %561 = vmatprep.mubr.bf16.mxu0 0
    %562 = vmatmul.mubr.bf16.gmra.mrb[0].mxu0 %v101
    %v563 = vpop.f32.mrb[0].mxu0
    %v564 = vadd.f32 %v480, %v563
    %v565 = vpop.f32.mrb[0].mxu0
    %v566 = vpop.f32.mrb[0].mxu0
    %v567 = vpop.f32.mrb[0].mxu0
    %568 = vdwg.mxu0
    %v569 = vmul.f32 %v352, %v564
    %v570 = vadd.f32 %v459, %v569
    %v571 = vtanh.pop %v570
    %v572 = vsub.f32 1.0, %v358
    %v573 = vmul.f32 %v572, %v571
    %v574 = vmul.f32 %v358, %v95
    %v575 = vadd.f32 %v573, %v574
    %v576 = vpack.c.bf16 %v575, %v575
    %v577 = vpack.c.bf16 %v96, %v96
    %s578 = scalar_lea.vmem [#allocation7], 256
    %v579 = vld [vmem:[%s578] sm:$0xff]
    %v580 = vld [vmem:[%s578 + $0x8] sm:$0xff]
    %v581 = vld [vmem:[%s578 + $0x10] sm:$0xff]
    %v582 = vld [vmem:[%s578 + $0x18] sm:$0xff]
    %v583 = vld [vmem:[%s578 + $0x20] sm:$0xff]
    %v584 = vld [vmem:[%s578 + $0x28] sm:$0xff]
    %v585 = vld [vmem:[%s578 + $0x30] sm:$0xff]
    %v586 = vld [vmem:[%s578 + $0x38] sm:$0xff]
    %v587 = vld [vmem:[%s578 + $0x40] sm:$0xff]
    %v588 = vld [vmem:[%s578 + $0x48] sm:$0xff]
    %v589 = vld [vmem:[%s578 + $0x50] sm:$0xff]
    %v590 = vld [vmem:[%s578 + $0x58] sm:$0xff]
    %v591 = vld [vmem:[%s578 + $0x60] sm:$0xff]
    %v592 = vld [vmem:[%s578 + $0x68] sm:$0xff]
    %v593 = vld [vmem:[%s578 + $0x70] sm:$0xff]
    %v594 = vld [vmem:[%s578 + $0x78] sm:$0xff]
    %v595 = vld [vmem:[%s578 + $0x80] sm:$0xff]
    %v596 = vld [vmem:[%s578 + $0x88] sm:$0xff]
    %v597 = vld [vmem:[%s578 + $0x90] sm:$0xff]
    %v598 = vld [vmem:[%s578 + $0x98] sm:$0xff]
    %v599 = vld [vmem:[%s578 + $0xa0] sm:$0xff]
    %v600 = vld [vmem:[%s578 + $0xa8] sm:$0xff]
    %v601 = vld [vmem:[%s578 + $0xb0] sm:$0xff]
    %v602 = vld [vmem:[%s578 + $0xb8] sm:$0xff]
    %v603 = vld [vmem:[%s578 + $0xc0] sm:$0xff]
    %v604 = vld [vmem:[%s578 + $0xc8] sm:$0xff]
    %v605 = vld [vmem:[%s578 + $0xd0] sm:$0xff]
    %v606 = vld [vmem:[%s578 + $0xd8] sm:$0xff]
    %v607 = vld [vmem:[%s578 + $0xe0] sm:$0xff]
    %v608 = vld [vmem:[%s578 + $0xe8] sm:$0xff]
    %v609 = vld [vmem:[%s578 + $0xf0] sm:$0xff]
    %v610 = vld [vmem:[%s578 + $0xf8] sm:$0xff]
    %s611 = scalar_lea.vmem %s4, 1
    %v612 = vld [vmem:[%s611] ss:$2 sm:$0x3]
    %v645 = vunpack.c.l.b16 %v579
    %v646 = vunpack.c.h.b16 %v579
    %v647 = vunpack.c.l.b16 %v580
    %v648 = vunpack.c.h.b16 %v580
    %v649 = vunpack.c.l.b16 %v581
    %v650 = vunpack.c.h.b16 %v581
    %v651 = vunpack.c.l.b16 %v582
    %v652 = vunpack.c.h.b16 %v582
    %v653 = vunpack.c.l.b16 %v583
    %v654 = vunpack.c.h.b16 %v583
    %v655 = vunpack.c.l.b16 %v584
    %v656 = vunpack.c.h.b16 %v584
    %v657 = vunpack.c.l.b16 %v585
    %v658 = vunpack.c.h.b16 %v585
    %v659 = vunpack.c.l.b16 %v586
    %v660 = vunpack.c.h.b16 %v586
    %v661 = vunpack.c.l.b16 %v587
    %v662 = vunpack.c.h.b16 %v587
    %v663 = vunpack.c.l.b16 %v588
    %v664 = vunpack.c.h.b16 %v588
    %v665 = vunpack.c.l.b16 %v589
    %v666 = vunpack.c.h.b16 %v589
    %v667 = vunpack.c.l.b16 %v590
    %v668 = vunpack.c.h.b16 %v590
    %v669 = vunpack.c.l.b16 %v591
    %v670 = vunpack.c.h.b16 %v591
    %v671 = vunpack.c.l.b16 %v592
    %v672 = vunpack.c.h.b16 %v592
    %v673 = vunpack.c.l.b16 %v593
    %v674 = vunpack.c.h.b16 %v593
    %v675 = vunpack.c.l.b16 %v594
    %v676 = vunpack.c.h.b16 %v594
    %v677 = vunpack.c.l.b16 %v595
    %v678 = vunpack.c.h.b16 %v595
    %v679 = vunpack.c.l.b16 %v596
    %v680 = vunpack.c.h.b16 %v596
    %v681 = vunpack.c.l.b16 %v597
    %v682 = vunpack.c.h.b16 %v597
    %v683 = vunpack.c.l.b16 %v598
    %v684 = vunpack.c.h.b16 %v598
    %v685 = vunpack.c.l.b16 %v599
    %v686 = vunpack.c.h.b16 %v599
    %v687 = vunpack.c.l.b16 %v600
    %v688 = vunpack.c.h.b16 %v600
    %v689 = vunpack.c.l.b16 %v601
    %v690 = vunpack.c.h.b16 %v601
    %v691 = vunpack.c.l.b16 %v602
    %v692 = vunpack.c.h.b16 %v602
    %v693 = vunpack.c.l.b16 %v603
    %v694 = vunpack.c.h.b16 %v603
    %v695 = vunpack.c.l.b16 %v604
    %v696 = vunpack.c.h.b16 %v604
    %v697 = vunpack.c.l.b16 %v605
    %v698 = vunpack.c.h.b16 %v605
    %v699 = vunpack.c.l.b16 %v606
    %v700 = vunpack.c.h.b16 %v606
    %v701 = vunpack.c.l.b16 %v607
    %v702 = vunpack.c.h.b16 %v607
    %v703 = vunpack.c.l.b16 %v608
    %v704 = vunpack.c.h.b16 %v608
    %v705 = vunpack.c.l.b16 %v609
    %v706 = vunpack.c.h.b16 %v609
    %v707 = vunpack.c.l.b16 %v610
    %v708 = vunpack.c.h.b16 %v610
    %v709 = vpack.c.b16 %v647, %v645
    %v710 = vpack.c.b16 %v648, %v646
    %v711 = vpack.c.b16 %v651, %v649
    %v712 = vpack.c.b16 %v652, %v650
    %v713 = vpack.c.b16 %v655, %v653
    %v714 = vpack.c.b16 %v656, %v654
    %v715 = vpack.c.b16 %v659, %v657
    %v716 = vpack.c.b16 %v660, %v658
    %v717 = vpack.c.b16 %v663, %v661
    %v718 = vpack.c.b16 %v664, %v662
    %v719 = vpack.c.b16 %v667, %v665
    %v720 = vpack.c.b16 %v668, %v666
    %v721 = vpack.c.b16 %v671, %v669
    %v722 = vpack.c.b16 %v672, %v670
    %v723 = vpack.c.b16 %v675, %v673
    %v724 = vpack.c.b16 %v676, %v674
    %v725 = vpack.c.b16 %v679, %v677
    %v726 = vpack.c.b16 %v680, %v678
    %v727 = vpack.c.b16 %v683, %v681
    %v728 = vpack.c.b16 %v684, %v682
    %v729 = vpack.c.b16 %v687, %v685
    %v730 = vpack.c.b16 %v688, %v686
    %v731 = vpack.c.b16 %v691, %v689
    %v732 = vpack.c.b16 %v692, %v690
    %v733 = vpack.c.b16 %v695, %v693
    %v734 = vpack.c.b16 %v696, %v694
    %v735 = vpack.c.b16 %v699, %v697
    %v736 = vpack.c.b16 %v700, %v698
    %v737 = vpack.c.b16 %v703, %v701
    %v738 = vpack.c.b16 %v704, %v702
    %v739 = vpack.c.b16 %v707, %v705
    %v740 = vpack.c.b16 %v708, %v706
    %v774 = vlaneseq
    %v775 = vshrl.u32 %v774, 7
    %v776 = vsub.s32 0, %v775
    %v777 = vrot.slane %v612, %v776
    %v778 = vlaneseq
    %v779 = vshrl.u32 %v778, 7
    %v780 = vsub.s32 1, %v779
    %v781 = vrot.slane %v612, %v780
    %784 = vmatprep.subr.bf16.mxu0 %v710
    %785 = vmatpush1.bf16.msra.mxu0 %v709
    %786 = vmatprep.subr.bf16.mxu0 %v712
    %787 = vmatpush1.bf16.msra.mxu0 %v711
    %788 = vmatprep.subr.bf16.mxu0 %v714
    %789 = vmatpush1.bf16.msra.mxu0 %v713
    %790 = vmatprep.subr.bf16.mxu0 %v716
    %791 = vmatpush1.bf16.msra.mxu0 %v715
    %792 = vmatprep.subr.bf16.mxu0 %v718
    %793 = vmatpush1.bf16.msra.mxu0 %v717
    %794 = vmatprep.subr.bf16.mxu0 %v720
    %795 = vmatpush1.bf16.msra.mxu0 %v719
    %796 = vmatprep.subr.bf16.mxu0 %v722
    %797 = vmatpush1.bf16.msra.mxu0 %v721
    %798 = vmatprep.subr.bf16.mxu0 %v724
    %799 = vmatpush1.bf16.msra.mxu0 %v723
    %800 = vmatprep.subr.bf16.mxu0 %v726
    %801 = vmatpush1.bf16.msra.mxu0 %v725
    %802 = vmatprep.subr.bf16.mxu0 %v728
    %803 = vmatpush1.bf16.msra.mxu0 %v727
    %804 = vmatprep.subr.bf16.mxu0 %v730
    %805 = vmatpush1.bf16.msra.mxu0 %v729
    %806 = vmatprep.subr.bf16.mxu0 %v732
    %807 = vmatpush1.bf16.msra.mxu0 %v731
    %808 = vmatprep.subr.bf16.mxu0 %v734
    %809 = vmatpush1.bf16.msra.mxu0 %v733
    %810 = vmatprep.subr.bf16.mxu0 %v736
    %811 = vmatpush1.bf16.msra.mxu0 %v735
    %812 = vmatprep.subr.bf16.mxu0 %v738
    %813 = vmatpush1.bf16.msra.mxu0 %v737
    %814 = vmatprep.subr.bf16.mxu0 %v740
    %815 = vmatpush1.bf16.msra.mxu0 %v739
    %816 = vmatprep.mubr.bf16.mxu0 %v577
    %817 = vmatmul.mubr.bf16.gmra.mrb[0].mxu0 %v576
    %v818 = vpop.f32.mrb[0].mxu0
    %v819 = vadd.f32 %v777, %v818
    %v820 = vpop.f32.mrb[0].mxu0
    %v821 = vadd.f32 %v781, %v820
    %v822 = vpop.f32.mrb[0].mxu0
    %v823 = vpop.f32.mrb[0].mxu0
    %824 = vdwg.mxu0
    %v825 = vxor.u32 %v819, 2147483648
    %v826 = vmul.f32 %v825, 1.442695
    %v827 = vpow.pop %v826
    %v828 = vadd.f32 %v827, 1.0
    %v829 = vrcp.pop %v828
    %v830 = vmul.f32 1.0, %v829
    %v831 = vxor.u32 %v821, 2147483648
    %v832 = vmul.f32 %v831, 1.442695
    %v833 = vpow.pop %v832
    %v834 = vadd.f32 %v833, 1.0
    %v835 = vrcp.pop %v834
    %v836 = vmul.f32 1.0, %v835
    %s837 = scalar_lea.vmem [#allocation9], 64
    %v838 = vld [vmem:[%s837] sm:$0xf]
    %v839 = vld [vmem:[%s837 + $0x4] sm:$0xf]
    %v840 = vld [vmem:[%s837 + $0x8] sm:$0xf]
    %v841 = vld [vmem:[%s837 + $0xc] sm:$0xf]
    %v842 = vld [vmem:[%s837 + $0x10] sm:$0xf]
    %v843 = vld [vmem:[%s837 + $0x14] sm:$0xf]
    %v844 = vld [vmem:[%s837 + $0x18] sm:$0xf]
    %v845 = vld [vmem:[%s837 + $0x1c] sm:$0xf]
    %v846 = vld [vmem:[%s837 + $0x20] sm:$0xf]
    %v847 = vld [vmem:[%s837 + $0x24] sm:$0xf]
    %v848 = vld [vmem:[%s837 + $0x28] sm:$0xf]
    %v849 = vld [vmem:[%s837 + $0x2c] sm:$0xf]
    %v850 = vld [vmem:[%s837 + $0x30] sm:$0xf]
    %v851 = vld [vmem:[%s837 + $0x34] sm:$0xf]
    %v852 = vld [vmem:[%s837 + $0x38] sm:$0xf]
    %v853 = vld [vmem:[%s837 + $0x3c] sm:$0xf]
    %v854 = vld [vmem:[%s6 + $0x1] sm:$0x1]
    %v871 = vunpack.c.l.b16 %v838
    %v872 = vunpack.c.l.b16 %v839
    %v873 = vunpack.c.l.b16 %v840
    %v874 = vunpack.c.l.b16 %v841
    %v875 = vunpack.c.l.b16 %v842
    %v876 = vunpack.c.l.b16 %v843
    %v877 = vunpack.c.l.b16 %v844
    %v878 = vunpack.c.l.b16 %v845
    %v879 = vunpack.c.l.b16 %v846
    %v880 = vunpack.c.l.b16 %v847
    %v881 = vunpack.c.l.b16 %v848
    %v882 = vunpack.c.l.b16 %v849
    %v883 = vunpack.c.l.b16 %v850
    %v884 = vunpack.c.l.b16 %v851
    %v885 = vunpack.c.l.b16 %v852
    %v886 = vunpack.c.l.b16 %v853
    %v887 = vpack.c.b16 %v872, %v871
    %v888 = vpack.c.b16 %v874, %v873
    %v889 = vpack.c.b16 %v876, %v875
    %v890 = vpack.c.b16 %v878, %v877
    %v891 = vpack.c.b16 %v880, %v879
    %v892 = vpack.c.b16 %v882, %v881
    %v893 = vpack.c.b16 %v884, %v883
    %v894 = vpack.c.b16 %v886, %v885
    %903 = vmatprep.subr.bf16.mxu0 0
    %904 = vmatpush1.bf16.msra.mxu0 %v887
    %905 = vmatprep.subr.bf16.mxu0 0
    %906 = vmatpush1.bf16.msra.mxu0 %v888
    %907 = vmatprep.subr.bf16.mxu0 0
    %908 = vmatpush1.bf16.msra.mxu0 %v889
    %909 = vmatprep.subr.bf16.mxu0 0
    %910 = vmatpush1.bf16.msra.mxu0 %v890
    %911 = vmatprep.subr.bf16.mxu0 0
    %912 = vmatpush1.bf16.msra.mxu0 %v891
    %913 = vmatprep.subr.bf16.mxu0 0
    %914 = vmatpush1.bf16.msra.mxu0 %v892
    %915 = vmatprep.subr.bf16.mxu0 0
    %916 = vmatpush1.bf16.msra.mxu0 %v893
    %917 = vmatprep.subr.bf16.mxu0 0
    %918 = vmatpush1.bf16.msra.mxu0 %v894
    %919 = vmatprep.subr.bf16.mxu0 0
    %920 = vmatpush1.bf16.msra.mxu0 0
    %921 = vmatprep.subr.bf16.mxu0 0
    %922 = vmatpush1.bf16.msra.mxu0 0
    %923 = vmatprep.subr.bf16.mxu0 0
    %924 = vmatpush1.bf16.msra.mxu0 0
    %925 = vmatprep.subr.bf16.mxu0 0
    %926 = vmatpush1.bf16.msra.mxu0 0
    %927 = vmatprep.subr.bf16.mxu0 0
    %928 = vmatpush1.bf16.msra.mxu0 0
    %929 = vmatprep.subr.bf16.mxu0 0
    %930 = vmatpush1.bf16.msra.mxu0 0
    %931 = vmatprep.subr.bf16.mxu0 0
    %932 = vmatpush1.bf16.msra.mxu0 0
    %933 = vmatprep.subr.bf16.mxu0 0
    %934 = vmatpush1.bf16.msra.mxu0 0
    %935 = vmatprep.mubr.bf16.mxu0 0
    %936 = vmatmul.mubr.bf16.gmra.mrb[0].mxu0 %v576
    %v937 = vpop.f32.mrb[0].mxu0
    %v938 = vadd.f32 %v854, %v937
    %v939 = vpop.f32.mrb[0].mxu0
    %v940 = vpop.f32.mrb[0].mxu0
    %v941 = vpop.f32.mrb[0].mxu0
    %942 = vdwg.mxu0
    %s943 = scalar_lea.vmem [#allocation10], 64
    %v944 = vld [vmem:[%s943] sm:$0xf]
    %v945 = vld [vmem:[%s943 + $0x4] sm:$0xf]
    %v946 = vld [vmem:[%s943 + $0x8] sm:$0xf]
    %v947 = vld [vmem:[%s943 + $0xc] sm:$0xf]
    %v948 = vld [vmem:[%s943 + $0x10] sm:$0xf]
    %v949 = vld [vmem:[%s943 + $0x14] sm:$0xf]
    %v950 = vld [vmem:[%s943 + $0x18] sm:$0xf]
    %v951 = vld [vmem:[%s943 + $0x1c] sm:$0xf]
    %v952 = vld [vmem:[%s943 + $0x20] sm:$0xf]
    %v953 = vld [vmem:[%s943 + $0x24] sm:$0xf]
    %v954 = vld [vmem:[%s943 + $0x28] sm:$0xf]
    %v955 = vld [vmem:[%s943 + $0x2c] sm:$0xf]
    %v956 = vld [vmem:[%s943 + $0x30] sm:$0xf]
    %v957 = vld [vmem:[%s943 + $0x34] sm:$0xf]
    %v958 = vld [vmem:[%s943 + $0x38] sm:$0xf]
    %v959 = vld [vmem:[%s943 + $0x3c] sm:$0xf]
    %v960 = vld [vmem:[%s8 + $0x1] sm:$0x1]
    %v977 = vunpack.c.l.b16 %v944
    %v978 = vunpack.c.l.b16 %v945
    %v979 = vunpack.c.l.b16 %v946
    %v980 = vunpack.c.l.b16 %v947
    %v981 = vunpack.c.l.b16 %v948
    %v982 = vunpack.c.l.b16 %v949
    %v983 = vunpack.c.l.b16 %v950
    %v984 = vunpack.c.l.b16 %v951
    %v985 = vunpack.c.l.b16 %v952
    %v986 = vunpack.c.l.b16 %v953
    %v987 = vunpack.c.l.b16 %v954
    %v988 = vunpack.c.l.b16 %v955
    %v989 = vunpack.c.l.b16 %v956
    %v990 = vunpack.c.l.b16 %v957
    %v991 = vunpack.c.l.b16 %v958
    %v992 = vunpack.c.l.b16 %v959
    %v993 = vpack.c.b16 %v978, %v977
    %v994 = vpack.c.b16 %v980, %v979
    %v995 = vpack.c.b16 %v982, %v981
    %v996 = vpack.c.b16 %v984, %v983
    %v997 = vpack.c.b16 %v986, %v985
    %v998 = vpack.c.b16 %v988, %v987
    %v999 = vpack.c.b16 %v990, %v989
    %v1000 = vpack.c.b16 %v992, %v991
    %1009 = vmatprep.subr.bf16.mxu0 0
    %1010 = vmatpush1.bf16.msra.mxu0 %v993
    %1011 = vmatprep.subr.bf16.mxu0 0
    %1012 = vmatpush1.bf16.msra.mxu0 %v994
    %1013 = vmatprep.subr.bf16.mxu0 0
    %1014 = vmatpush1.bf16.msra.mxu0 %v995
    %1015 = vmatprep.subr.bf16.mxu0 0
    %1016 = vmatpush1.bf16.msra.mxu0 %v996
    %1017 = vmatprep.subr.bf16.mxu0 0
    %1018 = vmatpush1.bf16.msra.mxu0 %v997
    %1019 = vmatprep.subr.bf16.mxu0 0
    %1020 = vmatpush1.bf16.msra.mxu0 %v998
    %1021 = vmatprep.subr.bf16.mxu0 0
    %1022 = vmatpush1.bf16.msra.mxu0 %v999
    %1023 = vmatprep.subr.bf16.mxu0 0
    %1024 = vmatpush1.bf16.msra.mxu0 %v1000
    %1025 = vmatprep.subr.bf16.mxu0 0
    %1026 = vmatpush1.bf16.msra.mxu0 0
    %1027 = vmatprep.subr.bf16.mxu0 0
    %1028 = vmatpush1.bf16.msra.mxu0 0
    %1029 = vmatprep.subr.bf16.mxu0 0
    %1030 = vmatpush1.bf16.msra.mxu0 0
    %1031 = vmatprep.subr.bf16.mxu0 0
    %1032 = vmatpush1.bf16.msra.mxu0 0
    %1033 = vmatprep.subr.bf16.mxu0 0
    %1034 = vmatpush1.bf16.msra.mxu0 0
    %1035 = vmatprep.subr.bf16.mxu0 0
    %1036 = vmatpush1.bf16.msra.mxu0 0
    %1037 = vmatprep.subr.bf16.mxu0 0
    %1038 = vmatpush1.bf16.msra.mxu0 0
    %1039 = vmatprep.subr.bf16.mxu0 0
    %1040 = vmatpush1.bf16.msra.mxu0 0
    %1041 = vmatprep.mubr.bf16.mxu0 0
    %1042 = vmatmul.mubr.bf16.gmra.mrb[0].mxu0 %v577
    %v1043 = vpop.f32.mrb[0].mxu0
    %v1044 = vadd.f32 %v960, %v1043
    %v1045 = vpop.f32.mrb[0].mxu0
    %v1046 = vpop.f32.mrb[0].mxu0
    %v1047 = vpop.f32.mrb[0].mxu0
    %1048 = vdwg.mxu0
    %v1049 = vmul.f32 %v830, %v1044
    %v1050 = vadd.f32 %v938, %v1049
    %v1051 = vtanh.pop %v1050
    %v1052 = vsub.f32 1.0, %v836
    %v1053 = vmul.f32 %v1052, %v1051
    %v1054 = vmul.f32 %v836, %v96
    %v1055 = vadd.f32 %v1053, %v1054
    %1056 = vst [vmem:[%s9] sm:$0x1] %v1055
    %s1057 = sld [smem:[#allocation3 + $0x1]]
    %s1058 = scalar_lea.vmem [#allocation4], %s1057
    %v1059 = vld [vmem:[%s1058] sm:$0x1]
    %v1060 = vpack.c.bf16 %v1059, %v1059
    %v1061 = vld [vmem:[#allocation7] sm:$0xff]
    %v1062 = vld [vmem:[#allocation7 + $0x8] sm:$0xff]
    %v1063 = vld [vmem:[#allocation7 + $0x10] sm:$0xff]
    %v1064 = vld [vmem:[#allocation7 + $0x18] sm:$0xff]
    %v1065 = vld [vmem:[#allocation7 + $0x20] sm:$0xff]
    %v1066 = vld [vmem:[#allocation7 + $0x28] sm:$0xff]
    %v1067 = vld [vmem:[#allocation7 + $0x30] sm:$0xff]
    %v1068 = vld [vmem:[#allocation7 + $0x38] sm:$0xff]
    %v1069 = vld [vmem:[#allocation7 + $0x40] sm:$0xff]
    %v1070 = vld [vmem:[#allocation7 + $0x48] sm:$0xff]
    %v1071 = vld [vmem:[#allocation7 + $0x50] sm:$0xff]
    %v1072 = vld [vmem:[#allocation7 + $0x58] sm:$0xff]
    %v1073 = vld [vmem:[#allocation7 + $0x60] sm:$0xff]
    %v1074 = vld [vmem:[#allocation7 + $0x68] sm:$0xff]
    %v1075 = vld [vmem:[#allocation7 + $0x70] sm:$0xff]
    %v1076 = vld [vmem:[#allocation7 + $0x78] sm:$0xff]
    %v1077 = vld [vmem:[#allocation7 + $0x80] sm:$0xff]
    %v1078 = vld [vmem:[#allocation7 + $0x88] sm:$0xff]
    %v1079 = vld [vmem:[#allocation7 + $0x90] sm:$0xff]
    %v1080 = vld [vmem:[#allocation7 + $0x98] sm:$0xff]
    %v1081 = vld [vmem:[#allocation7 + $0xa0] sm:$0xff]
    %v1082 = vld [vmem:[#allocation7 + $0xa8] sm:$0xff]
    %v1083 = vld [vmem:[#allocation7 + $0xb0] sm:$0xff]
    %v1084 = vld [vmem:[#allocation7 + $0xb8] sm:$0xff]
    %v1085 = vld [vmem:[#allocation7 + $0xc0] sm:$0xff]
    %v1086 = vld [vmem:[#allocation7 + $0xc8] sm:$0xff]
    %v1087 = vld [vmem:[#allocation7 + $0xd0] sm:$0xff]
    %v1088 = vld [vmem:[#allocation7 + $0xd8] sm:$0xff]
    %v1089 = vld [vmem:[#allocation7 + $0xe0] sm:$0xff]
    %v1090 = vld [vmem:[#allocation7 + $0xe8] sm:$0xff]
    %v1091 = vld [vmem:[#allocation7 + $0xf0] sm:$0xff]
    %v1092 = vld [vmem:[#allocation7 + $0xf8] sm:$0xff]
    %v1093 = vld [vmem:[%s4] ss:$2 sm:$0x3]
    %v1126 = vunpack.c.l.b16 %v1061
    %v1127 = vunpack.c.h.b16 %v1061
    %v1128 = vunpack.c.l.b16 %v1062
    %v1129 = vunpack.c.h.b16 %v1062
    %v1130 = vunpack.c.l.b16 %v1063
    %v1131 = vunpack.c.h.b16 %v1063
    %v1132 = vunpack.c.l.b16 %v1064
    %v1133 = vunpack.c.h.b16 %v1064
    %v1134 = vunpack.c.l.b16 %v1065
    %v1135 = vunpack.c.h.b16 %v1065
    %v1136 = vunpack.c.l.b16 %v1066
    %v1137 = vunpack.c.h.b16 %v1066
    %v1138 = vunpack.c.l.b16 %v1067
    %v1139 = vunpack.c.h.b16 %v1067
    %v1140 = vunpack.c.l.b16 %v1068
    %v1141 = vunpack.c.h.b16 %v1068
    %v1142 = vunpack.c.l.b16 %v1069
    %v1143 = vunpack.c.h.b16 %v1069
    %v1144 = vunpack.c.l.b16 %v1070
    %v1145 = vunpack.c.h.b16 %v1070
    %v1146 = vunpack.c.l.b16 %v1071
    %v1147 = vunpack.c.h.b16 %v1071
    %v1148 = vunpack.c.l.b16 %v1072
    %v1149 = vunpack.c.h.b16 %v1072
    %v1150 = vunpack.c.l.b16 %v1073
    %v1151 = vunpack.c.h.b16 %v1073
    %v1152 = vunpack.c.l.b16 %v1074
    %v1153 = vunpack.c.h.b16 %v1074
    %v1154 = vunpack.c.l.b16 %v1075
    %v1155 = vunpack.c.h.b16 %v1075
    %v1156 = vunpack.c.l.b16 %v1076
    %v1157 = vunpack.c.h.b16 %v1076
    %v1158 = vunpack.c.l.b16 %v1077
    %v1159 = vunpack.c.h.b16 %v1077
    %v1160 = vunpack.c.l.b16 %v1078
    %v1161 = vunpack.c.h.b16 %v1078
    %v1162 = vunpack.c.l.b16 %v1079
    %v1163 = vunpack.c.h.b16 %v1079
    %v1164 = vunpack.c.l.b16 %v1080
    %v1165 = vunpack.c.h.b16 %v1080
    %v1166 = vunpack.c.l.b16 %v1081
    %v1167 = vunpack.c.h.b16 %v1081
    %v1168 = vunpack.c.l.b16 %v1082
    %v1169 = vunpack.c.h.b16 %v1082
    %v1170 = vunpack.c.l.b16 %v1083
    %v1171 = vunpack.c.h.b16 %v1083
    %v1172 = vunpack.c.l.b16 %v1084
    %v1173 = vunpack.c.h.b16 %v1084
    %v1174 = vunpack.c.l.b16 %v1085
    %v1175 = vunpack.c.h.b16 %v1085
    %v1176 = vunpack.c.l.b16 %v1086
    %v1177 = vunpack.c.h.b16 %v1086
    %v1178 = vunpack.c.l.b16 %v1087
    %v1179 = vunpack.c.h.b16 %v1087
    %v1180 = vunpack.c.l.b16 %v1088
    %v1181 = vunpack.c.h.b16 %v1088
    %v1182 = vunpack.c.l.b16 %v1089
    %v1183 = vunpack.c.h.b16 %v1089
    %v1184 = vunpack.c.l.b16 %v1090
    %v1185 = vunpack.c.h.b16 %v1090
    %v1186 = vunpack.c.l.b16 %v1091
    %v1187 = vunpack.c.h.b16 %v1091
    %v1188 = vunpack.c.l.b16 %v1092
    %v1189 = vunpack.c.h.b16 %v1092
    %v1190 = vpack.c.b16 %v1128, %v1126
    %v1191 = vpack.c.b16 %v1129, %v1127
    %v1192 = vpack.c.b16 %v1132, %v1130
    %v1193 = vpack.c.b16 %v1133, %v1131
    %v1194 = vpack.c.b16 %v1136, %v1134
    %v1195 = vpack.c.b16 %v1137, %v1135
    %v1196 = vpack.c.b16 %v1140, %v1138
    %v1197 = vpack.c.b16 %v1141, %v1139
    %v1198 = vpack.c.b16 %v1144, %v1142
    %v1199 = vpack.c.b16 %v1145, %v1143
    %v1200 = vpack.c.b16 %v1148, %v1146
    %v1201 = vpack.c.b16 %v1149, %v1147
    %v1202 = vpack.c.b16 %v1152, %v1150
    %v1203 = vpack.c.b16 %v1153, %v1151
    %v1204 = vpack.c.b16 %v1156, %v1154
    %v1205 = vpack.c.b16 %v1157, %v1155
    %v1206 = vpack.c.b16 %v1160, %v1158
    %v1207 = vpack.c.b16 %v1161, %v1159
    %v1208 = vpack.c.b16 %v1164, %v1162
    %v1209 = vpack.c.b16 %v1165, %v1163
    %v1210 = vpack.c.b16 %v1168, %v1166
    %v1211 = vpack.c.b16 %v1169, %v1167
    %v1212 = vpack.c.b16 %v1172, %v1170
    %v1213 = vpack.c.b16 %v1173, %v1171
    %v1214 = vpack.c.b16 %v1176, %v1174
    %v1215 = vpack.c.b16 %v1177, %v1175
    %v1216 = vpack.c.b16 %v1180, %v1178
    %v1217 = vpack.c.b16 %v1181, %v1179
    %v1218 = vpack.c.b16 %v1184, %v1182
    %v1219 = vpack.c.b16 %v1185, %v1183
    %v1220 = vpack.c.b16 %v1188, %v1186
    %v1221 = vpack.c.b16 %v1189, %v1187
    %v1255 = vlaneseq
    %v1256 = vshrl.u32 %v1255, 7
    %v1257 = vsub.s32 0, %v1256
    %v1258 = vrot.slane %v1093, %v1257
    %v1259 = vlaneseq
    %v1260 = vshrl.u32 %v1259, 7
    %v1261 = vsub.s32 1, %v1260
    %v1262 = vrot.slane %v1093, %v1261
    %1265 = vmatprep.subr.bf16.mxu0 %v1191
    %1266 = vmatpush1.bf16.msra.mxu0 %v1190
    %1267 = vmatprep.subr.bf16.mxu0 %v1193
    %1268 = vmatpush1.bf16.msra.mxu0 %v1192
    %1269 = vmatprep.subr.bf16.mxu0 %v1195
    %1270 = vmatpush1.bf16.msra.mxu0 %v1194
    %1271 = vmatprep.subr.bf16.mxu0 %v1197
    %1272 = vmatpush1.bf16.msra.mxu0 %v1196
    %1273 = vmatprep.subr.bf16.mxu0 %v1199
    %1274 = vmatpush1.bf16.msra.mxu0 %v1198
    %1275 = vmatprep.subr.bf16.mxu0 %v1201
    %1276 = vmatpush1.bf16.msra.mxu0 %v1200
    %1277 = vmatprep.subr.bf16.mxu0 %v1203
    %1278 = vmatpush1.bf16.msra.mxu0 %v1202
    %1279 = vmatprep.subr.bf16.mxu0 %v1205
    %1280 = vmatpush1.bf16.msra.mxu0 %v1204
    %1281 = vmatprep.subr.bf16.mxu0 %v1207
    %1282 = vmatpush1.bf16.msra.mxu0 %v1206
    %1283 = vmatprep.subr.bf16.mxu0 %v1209
    %1284 = vmatpush1.bf16.msra.mxu0 %v1208
    %1285 = vmatprep.subr.bf16.mxu0 %v1211
    %1286 = vmatpush1.bf16.msra.mxu0 %v1210
    %1287 = vmatprep.subr.bf16.mxu0 %v1213
    %1288 = vmatpush1.bf16.msra.mxu0 %v1212
    %1289 = vmatprep.subr.bf16.mxu0 %v1215
    %1290 = vmatpush1.bf16.msra.mxu0 %v1214
    %1291 = vmatprep.subr.bf16.mxu0 %v1217
    %1292 = vmatpush1.bf16.msra.mxu0 %v1216
    %1293 = vmatprep.subr.bf16.mxu0 %v1219
    %1294 = vmatpush1.bf16.msra.mxu0 %v1218
    %1295 = vmatprep.subr.bf16.mxu0 %v1221
    %1296 = vmatpush1.bf16.msra.mxu0 %v1220
    %1297 = vmatprep.mubr.bf16.mxu0 %v576
    %1298 = vmatmul.mubr.bf16.gmra.mrb[0].mxu0 %v1060
    %v1299 = vpop.f32.mrb[0].mxu0
    %v1300 = vadd.f32 %v1258, %v1299
    %v1301 = vpop.f32.mrb[0].mxu0
    %v1302 = vadd.f32 %v1262, %v1301
    %v1303 = vpop.f32.mrb[0].mxu0
    %v1304 = vpop.f32.mrb[0].mxu0
    %1305 = vdwg.mxu0
    %v1306 = vxor.u32 %v1300, 2147483648
    %v1307 = vmul.f32 %v1306, 1.442695
    %v1308 = vpow.pop %v1307
    %v1309 = vadd.f32 %v1308, 1.0
    %v1310 = vrcp.pop %v1309
    %v1311 = vmul.f32 1.0, %v1310
    %v1312 = vxor.u32 %v1302, 2147483648
    %v1313 = vmul.f32 %v1312, 1.442695
    %v1314 = vpow.pop %v1313
    %v1315 = vadd.f32 %v1314, 1.0
    %v1316 = vrcp.pop %v1315
    %v1317 = vmul.f32 1.0, %v1316
    %v1318 = vld [vmem:[#allocation9] sm:$0xf]
    %v1319 = vld [vmem:[#allocation9 + $0x4] sm:$0xf]
    %v1320 = vld [vmem:[#allocation9 + $0x8] sm:$0xf]
    %v1321 = vld [vmem:[#allocation9 + $0xc] sm:$0xf]
    %v1322 = vld [vmem:[#allocation9 + $0x10] sm:$0xf]
    %v1323 = vld [vmem:[#allocation9 + $0x14] sm:$0xf]
    %v1324 = vld [vmem:[#allocation9 + $0x18] sm:$0xf]
    %v1325 = vld [vmem:[#allocation9 + $0x1c] sm:$0xf]
    %v1326 = vld [vmem:[#allocation9 + $0x20] sm:$0xf]
    %v1327 = vld [vmem:[#allocation9 + $0x24] sm:$0xf]
    %v1328 = vld [vmem:[#allocation9 + $0x28] sm:$0xf]
    %v1329 = vld [vmem:[#allocation9 + $0x2c] sm:$0xf]
    %v1330 = vld [vmem:[#allocation9 + $0x30] sm:$0xf]
    %v1331 = vld [vmem:[#allocation9 + $0x34] sm:$0xf]
    %v1332 = vld [vmem:[#allocation9 + $0x38] sm:$0xf]
    %v1333 = vld [vmem:[#allocation9 + $0x3c] sm:$0xf]
    %v1334 = vld [vmem:[%s6] sm:$0x1]
    %v1351 = vunpack.c.l.b16 %v1318
    %v1352 = vunpack.c.l.b16 %v1319
    %v1353 = vunpack.c.l.b16 %v1320
    %v1354 = vunpack.c.l.b16 %v1321
    %v1355 = vunpack.c.l.b16 %v1322
    %v1356 = vunpack.c.l.b16 %v1323
    %v1357 = vunpack.c.l.b16 %v1324
    %v1358 = vunpack.c.l.b16 %v1325
    %v1359 = vunpack.c.l.b16 %v1326
    %v1360 = vunpack.c.l.b16 %v1327
    %v1361 = vunpack.c.l.b16 %v1328
    %v1362 = vunpack.c.l.b16 %v1329
    %v1363 = vunpack.c.l.b16 %v1330
    %v1364 = vunpack.c.l.b16 %v1331
    %v1365 = vunpack.c.l.b16 %v1332
    %v1366 = vunpack.c.l.b16 %v1333
    %v1367 = vpack.c.b16 %v1352, %v1351
    %v1368 = vpack.c.b16 %v1354, %v1353
    %v1369 = vpack.c.b16 %v1356, %v1355
    %v1370 = vpack.c.b16 %v1358, %v1357
    %v1371 = vpack.c.b16 %v1360, %v1359
    %v1372 = vpack.c.b16 %v1362, %v1361
    %v1373 = vpack.c.b16 %v1364, %v1363
    %v1374 = vpack.c.b16 %v1366, %v1365
    %1383 = vmatprep.subr.bf16.mxu0 0
    %1384 = vmatpush1.bf16.msra.mxu0 %v1367
    %1385 = vmatprep.subr.bf16.mxu0 0
    %1386 = vmatpush1.bf16.msra.mxu0 %v1368
    %1387 = vmatprep.subr.bf16.mxu0 0
    %1388 = vmatpush1.bf16.msra.mxu0 %v1369
    %1389 = vmatprep.subr.bf16.mxu0 0
    %1390 = vmatpush1.bf16.msra.mxu0 %v1370
    %1391 = vmatprep.subr.bf16.mxu0 0
    %1392 = vmatpush1.bf16.msra.mxu0 %v1371
    %1393 = vmatprep.subr.bf16.mxu0 0
    %1394 = vmatpush1.bf16.msra.mxu0 %v1372
    %1395 = vmatprep.subr.bf16.mxu0 0
    %1396 = vmatpush1.bf16.msra.mxu0 %v1373
    %1397 = vmatprep.subr.bf16.mxu0 0
    %1398 = vmatpush1.bf16.msra.mxu0 %v1374
    %1399 = vmatprep.subr.bf16.mxu0 0
    %1400 = vmatpush1.bf16.msra.mxu0 0
    %1401 = vmatprep.subr.bf16.mxu0 0
    %1402 = vmatpush1.bf16.msra.mxu0 0
    %1403 = vmatprep.subr.bf16.mxu0 0
    %1404 = vmatpush1.bf16.msra.mxu0 0
    %1405 = vmatprep.subr.bf16.mxu0 0
    %1406 = vmatpush1.bf16.msra.mxu0 0
    %1407 = vmatprep.subr.bf16.mxu0 0
    %1408 = vmatpush1.bf16.msra.mxu0 0
    %1409 = vmatprep.subr.bf16.mxu0 0
    %1410 = vmatpush1.bf16.msra.mxu0 0
    %1411 = vmatprep.subr.bf16.mxu0 0
    %1412 = vmatpush1.bf16.msra.mxu0 0
    %1413 = vmatprep.subr.bf16.mxu0 0
    %1414 = vmatpush1.bf16.msra.mxu0 0
    %1415 = vmatprep.mubr.bf16.mxu0 0
    %1416 = vmatmul.mubr.bf16.gmra.mrb[0].mxu0 %v1060
    %v1417 = vpop.f32.mrb[0].mxu0
    %v1418 = vadd.f32 %v1334, %v1417
    %v1419 = vpop.f32.mrb[0].mxu0
    %v1420 = vpop.f32.mrb[0].mxu0
    %v1421 = vpop.f32.mrb[0].mxu0
    %1422 = vdwg.mxu0
    %v1423 = vld [vmem:[#allocation10] sm:$0xf]
    %v1424 = vld [vmem:[#allocation10 + $0x4] sm:$0xf]
    %v1425 = vld [vmem:[#allocation10 + $0x8] sm:$0xf]
    %v1426 = vld [vmem:[#allocation10 + $0xc] sm:$0xf]
    %v1427 = vld [vmem:[#allocation10 + $0x10] sm:$0xf]
    %v1428 = vld [vmem:[#allocation10 + $0x14] sm:$0xf]
    %v1429 = vld [vmem:[#allocation10 + $0x18] sm:$0xf]
    %v1430 = vld [vmem:[#allocation10 + $0x1c] sm:$0xf]
    %v1431 = vld [vmem:[#allocation10 + $0x20] sm:$0xf]
    %v1432 = vld [vmem:[#allocation10 + $0x24] sm:$0xf]
    %v1433 = vld [vmem:[#allocation10 + $0x28] sm:$0xf]
    %v1434 = vld [vmem:[#allocation10 + $0x2c] sm:$0xf]
    %v1435 = vld [vmem:[#allocation10 + $0x30] sm:$0xf]
    %v1436 = vld [vmem:[#allocation10 + $0x34] sm:$0xf]
    %v1437 = vld [vmem:[#allocation10 + $0x38] sm:$0xf]
    %v1438 = vld [vmem:[#allocation10 + $0x3c] sm:$0xf]
    %v1439 = vld [vmem:[%s8] sm:$0x1]
    %v1456 = vunpack.c.l.b16 %v1423
    %v1457 = vunpack.c.l.b16 %v1424
    %v1458 = vunpack.c.l.b16 %v1425
    %v1459 = vunpack.c.l.b16 %v1426
    %v1460 = vunpack.c.l.b16 %v1427
    %v1461 = vunpack.c.l.b16 %v1428
    %v1462 = vunpack.c.l.b16 %v1429
    %v1463 = vunpack.c.l.b16 %v1430
    %v1464 = vunpack.c.l.b16 %v1431
    %v1465 = vunpack.c.l.b16 %v1432
    %v1466 = vunpack.c.l.b16 %v1433
    %v1467 = vunpack.c.l.b16 %v1434
    %v1468 = vunpack.c.l.b16 %v1435
    %v1469 = vunpack.c.l.b16 %v1436
    %v1470 = vunpack.c.l.b16 %v1437
    %v1471 = vunpack.c.l.b16 %v1438
    %v1472 = vpack.c.b16 %v1457, %v1456
    %v1473 = vpack.c.b16 %v1459, %v1458
    %v1474 = vpack.c.b16 %v1461, %v1460
    %v1475 = vpack.c.b16 %v1463, %v1462
    %v1476 = vpack.c.b16 %v1465, %v1464
    %v1477 = vpack.c.b16 %v1467, %v1466
    %v1478 = vpack.c.b16 %v1469, %v1468
    %v1479 = vpack.c.b16 %v1471, %v1470
    %1488 = vmatprep.subr.bf16.mxu0 0
    %1489 = vmatpush1.bf16.msra.mxu0 %v1472
    %1490 = vmatprep.subr.bf16.mxu0 0
    %1491 = vmatpush1.bf16.msra.mxu0 %v1473
    %1492 = vmatprep.subr.bf16.mxu0 0
    %1493 = vmatpush1.bf16.msra.mxu0 %v1474
    %1494 = vmatprep.subr.bf16.mxu0 0
    %1495 = vmatpush1.bf16.msra.mxu0 %v1475
    %1496 = vmatprep.subr.bf16.mxu0 0
    %1497 = vmatpush1.bf16.msra.mxu0 %v1476
    %1498 = vmatprep.subr.bf16.mxu0 0
    %1499 = vmatpush1.bf16.msra.mxu0 %v1477
    %1500 = vmatprep.subr.bf16.mxu0 0
    %1501 = vmatpush1.bf16.msra.mxu0 %v1478
    %1502 = vmatprep.subr.bf16.mxu0 0
    %1503 = vmatpush1.bf16.msra.mxu0 %v1479
    %1504 = vmatprep.subr.bf16.mxu0 0
    %1505 = vmatpush1.bf16.msra.mxu0 0
    %1506 = vmatprep.subr.bf16.mxu0 0
    %1507 = vmatpush1.bf16.msra.mxu0 0
    %1508 = vmatprep.subr.bf16.mxu0 0
    %1509 = vmatpush1.bf16.msra.mxu0 0
    %1510 = vmatprep.subr.bf16.mxu0 0
    %1511 = vmatpush1.bf16.msra.mxu0 0
    %1512 = vmatprep.subr.bf16.mxu0 0
    %1513 = vmatpush1.bf16.msra.mxu0 0
    %1514 = vmatprep.subr.bf16.mxu0 0
    %1515 = vmatpush1.bf16.msra.mxu0 0
    %1516 = vmatprep.subr.bf16.mxu0 0
    %1517 = vmatpush1.bf16.msra.mxu0 0
    %1518 = vmatprep.subr.bf16.mxu0 0
    %1519 = vmatpush1.bf16.msra.mxu0 0
    %1520 = vmatprep.mubr.bf16.mxu0 0
    %1521 = vmatmul.mubr.bf16.gmra.mrb[0].mxu0 %v576
    %v1522 = vpop.f32.mrb[0].mxu0
    %v1523 = vadd.f32 %v1439, %v1522
    %v1524 = vpop.f32.mrb[0].mxu0
    %v1525 = vpop.f32.mrb[0].mxu0
    %v1526 = vpop.f32.mrb[0].mxu0
    %1527 = vdwg.mxu0
    %v1528 = vmul.f32 %v1311, %v1523
    %v1529 = vadd.f32 %v1418, %v1528
    %v1530 = vtanh.pop %v1529
    %v1531 = vsub.f32 1.0, %v1317
    %v1532 = vmul.f32 %v1531, %v1530
    %v1533 = vmul.f32 %v1317, %v575
    %v1534 = vadd.f32 %v1532, %v1533
    %v1535 = vpack.c.bf16 %v1534, %v1534
    %v1536 = vpack.c.bf16 %v1055, %v1055
    %v1537 = vld [vmem:[%s578] sm:$0xff]
    %v1538 = vld [vmem:[%s578 + $0x8] sm:$0xff]
    %v1539 = vld [vmem:[%s578 + $0x10] sm:$0xff]
    %v1540 = vld [vmem:[%s578 + $0x18] sm:$0xff]
    %v1541 = vld [vmem:[%s578 + $0x20] sm:$0xff]
    %v1542 = vld [vmem:[%s578 + $0x28] sm:$0xff]
    %v1543 = vld [vmem:[%s578 + $0x30] sm:$0xff]
    %v1544 = vld [vmem:[%s578 + $0x38] sm:$0xff]
    %v1545 = vld [vmem:[%s578 + $0x40] sm:$0xff]
    %v1546 = vld [vmem:[%s578 + $0x48] sm:$0xff]
    %v1547 = vld [vmem:[%s578 + $0x50] sm:$0xff]
    %v1548 = vld [vmem:[%s578 + $0x58] sm:$0xff]
    %v1549 = vld [vmem:[%s578 + $0x60] sm:$0xff]
    %v1550 = vld [vmem:[%s578 + $0x68] sm:$0xff]
    %v1551 = vld [vmem:[%s578 + $0x70] sm:$0xff]
    %v1552 = vld [vmem:[%s578 + $0x78] sm:$0xff]
    %v1553 = vld [vmem:[%s578 + $0x80] sm:$0xff]
    %v1554 = vld [vmem:[%s578 + $0x88] sm:$0xff]
    %v1555 = vld [vmem:[%s578 + $0x90] sm:$0xff]
    %v1556 = vld [vmem:[%s578 + $0x98] sm:$0xff]
    %v1557 = vld [vmem:[%s578 + $0xa0] sm:$0xff]
    %v1558 = vld [vmem:[%s578 + $0xa8] sm:$0xff]
    %v1559 = vld [vmem:[%s578 + $0xb0] sm:$0xff]
    %v1560 = vld [vmem:[%s578 + $0xb8] sm:$0xff]
    %v1561 = vld [vmem:[%s578 + $0xc0] sm:$0xff]
    %v1562 = vld [vmem:[%s578 + $0xc8] sm:$0xff]
    %v1563 = vld [vmem:[%s578 + $0xd0] sm:$0xff]
    %v1564 = vld [vmem:[%s578 + $0xd8] sm:$0xff]
    %v1565 = vld [vmem:[%s578 + $0xe0] sm:$0xff]
    %v1566 = vld [vmem:[%s578 + $0xe8] sm:$0xff]
    %v1567 = vld [vmem:[%s578 + $0xf0] sm:$0xff]
    %v1568 = vld [vmem:[%s578 + $0xf8] sm:$0xff]
    %v1569 = vld [vmem:[%s611] ss:$2 sm:$0x3]
    %v1602 = vunpack.c.l.b16 %v1537
    %v1603 = vunpack.c.h.b16 %v1537
    %v1604 = vunpack.c.l.b16 %v1538
    %v1605 = vunpack.c.h.b16 %v1538
    %v1606 = vunpack.c.l.b16 %v1539
    %v1607 = vunpack.c.h.b16 %v1539
    %v1608 = vunpack.c.l.b16 %v1540
    %v1609 = vunpack.c.h.b16 %v1540
    %v1610 = vunpack.c.l.b16 %v1541
    %v1611 = vunpack.c.h.b16 %v1541
    %v1612 = vunpack.c.l.b16 %v1542
    %v1613 = vunpack.c.h.b16 %v1542
    %v1614 = vunpack.c.l.b16 %v1543
    %v1615 = vunpack.c.h.b16 %v1543
    %v1616 = vunpack.c.l.b16 %v1544
    %v1617 = vunpack.c.h.b16 %v1544
    %v1618 = vunpack.c.l.b16 %v1545
    %v1619 = vunpack.c.h.b16 %v1545
    %v1620 = vunpack.c.l.b16 %v1546
    %v1621 = vunpack.c.h.b16 %v1546
    %v1622 = vunpack.c.l.b16 %v1547
    %v1623 = vunpack.c.h.b16 %v1547
    %v1624 = vunpack.c.l.b16 %v1548
    %v1625 = vunpack.c.h.b16 %v1548
    %v1626 = vunpack.c.l.b16 %v1549
    %v1627 = vunpack.c.h.b16 %v1549
    %v1628 = vunpack.c.l.b16 %v1550
    %v1629 = vunpack.c.h.b16 %v1550
    %v1630 = vunpack.c.l.b16 %v1551
    %v1631 = vunpack.c.h.b16 %v1551
    %v1632 = vunpack.c.l.b16 %v1552
    %v1633 = vunpack.c.h.b16 %v1552
    %v1634 = vunpack.c.l.b16 %v1553
    %v1635 = vunpack.c.h.b16 %v1553
    %v1636 = vunpack.c.l.b16 %v1554
    %v1637 = vunpack.c.h.b16 %v1554
    %v1638 = vunpack.c.l.b16 %v1555
    %v1639 = vunpack.c.h.b16 %v1555
    %v1640 = vunpack.c.l.b16 %v1556
    %v1641 = vunpack.c.h.b16 %v1556
    %v1642 = vunpack.c.l.b16 %v1557
    %v1643 = vunpack.c.h.b16 %v1557
    %v1644 = vunpack.c.l.b16 %v1558
    %v1645 = vunpack.c.h.b16 %v1558
    %v1646 = vunpack.c.l.b16 %v1559
    %v1647 = vunpack.c.h.b16 %v1559
    %v1648 = vunpack.c.l.b16 %v1560
    %v1649 = vunpack.c.h.b16 %v1560
    %v1650 = vunpack.c.l.b16 %v1561
    %v1651 = vunpack.c.h.b16 %v1561
    %v1652 = vunpack.c.l.b16 %v1562
    %v1653 = vunpack.c.h.b16 %v1562
    %v1654 = vunpack.c.l.b16 %v1563
    %v1655 = vunpack.c.h.b16 %v1563
    %v1656 = vunpack.c.l.b16 %v1564
    %v1657 = vunpack.c.h.b16 %v1564
    %v1658 = vunpack.c.l.b16 %v1565
    %v1659 = vunpack.c.h.b16 %v1565
    %v1660 = vunpack.c.l.b16 %v1566
    %v1661 = vunpack.c.h.b16 %v1566
    %v1662 = vunpack.c.l.b16 %v1567
    %v1663 = vunpack.c.h.b16 %v1567
    %v1664 = vunpack.c.l.b16 %v1568
    %v1665 = vunpack.c.h.b16 %v1568
    %v1666 = vpack.c.b16 %v1604, %v1602
    %v1667 = vpack.c.b16 %v1605, %v1603
    %v1668 = vpack.c.b16 %v1608, %v1606
    %v1669 = vpack.c.b16 %v1609, %v1607
    %v1670 = vpack.c.b16 %v1612, %v1610
    %v1671 = vpack.c.b16 %v1613, %v1611
    %v1672 = vpack.c.b16 %v1616, %v1614
    %v1673 = vpack.c.b16 %v1617, %v1615
    %v1674 = vpack.c.b16 %v1620, %v1618
    %v1675 = vpack.c.b16 %v1621, %v1619
    %v1676 = vpack.c.b16 %v1624, %v1622
    %v1677 = vpack.c.b16 %v1625, %v1623
    %v1678 = vpack.c.b16 %v1628, %v1626
    %v1679 = vpack.c.b16 %v1629, %v1627
    %v1680 = vpack.c.b16 %v1632, %v1630
    %v1681 = vpack.c.b16 %v1633, %v1631
    %v1682 = vpack.c.b16 %v1636, %v1634
    %v1683 = vpack.c.b16 %v1637, %v1635
    %v1684 = vpack.c.b16 %v1640, %v1638
    %v1685 = vpack.c.b16 %v1641, %v1639
    %v1686 = vpack.c.b16 %v1644, %v1642
    %v1687 = vpack.c.b16 %v1645, %v1643
    %v1688 = vpack.c.b16 %v1648, %v1646
    %v1689 = vpack.c.b16 %v1649, %v1647
    %v1690 = vpack.c.b16 %v1652, %v1650
    %v1691 = vpack.c.b16 %v1653, %v1651
    %v1692 = vpack.c.b16 %v1656, %v1654
    %v1693 = vpack.c.b16 %v1657, %v1655
    %v1694 = vpack.c.b16 %v1660, %v1658
    %v1695 = vpack.c.b16 %v1661, %v1659
    %v1696 = vpack.c.b16 %v1664, %v1662
    %v1697 = vpack.c.b16 %v1665, %v1663
    %v1731 = vlaneseq
    %v1732 = vshrl.u32 %v1731, 7
    %v1733 = vsub.s32 0, %v1732
    %v1734 = vrot.slane %v1569, %v1733
    %v1735 = vlaneseq
    %v1736 = vshrl.u32 %v1735, 7
    %v1737 = vsub.s32 1, %v1736
    %v1738 = vrot.slane %v1569, %v1737
    %1741 = vmatprep.subr.bf16.mxu0 %v1667
    %1742 = vmatpush1.bf16.msra.mxu0 %v1666
    %1743 = vmatprep.subr.bf16.mxu0 %v1669
    %1744 = vmatpush1.bf16.msra.mxu0 %v1668
    %1745 = vmatprep.subr.bf16.mxu0 %v1671
    %1746 = vmatpush1.bf16.msra.mxu0 %v1670
    %1747 = vmatprep.subr.bf16.mxu0 %v1673
    %1748 = vmatpush1.bf16.msra.mxu0 %v1672
    %1749 = vmatprep.subr.bf16.mxu0 %v1675
    %1750 = vmatpush1.bf16.msra.mxu0 %v1674
    %1751 = vmatprep.subr.bf16.mxu0 %v1677
    %1752 = vmatpush1.bf16.msra.mxu0 %v1676
    %1753 = vmatprep.subr.bf16.mxu0 %v1679
    %1754 = vmatpush1.bf16.msra.mxu0 %v1678
    %1755 = vmatprep.subr.bf16.mxu0 %v1681
    %1756 = vmatpush1.bf16.msra.mxu0 %v1680
    %1757 = vmatprep.subr.bf16.mxu0 %v1683
    %1758 = vmatpush1.bf16.msra.mxu0 %v1682
    %1759 = vmatprep.subr.bf16.mxu0 %v1685
    %1760 = vmatpush1.bf16.msra.mxu0 %v1684
    %1761 = vmatprep.subr.bf16.mxu0 %v1687
    %1762 = vmatpush1.bf16.msra.mxu0 %v1686
    %1763 = vmatprep.subr.bf16.mxu0 %v1689
    %1764 = vmatpush1.bf16.msra.mxu0 %v1688
    %1765 = vmatprep.subr.bf16.mxu0 %v1691
    %1766 = vmatpush1.bf16.msra.mxu0 %v1690
    %1767 = vmatprep.subr.bf16.mxu0 %v1693
    %1768 = vmatpush1.bf16.msra.mxu0 %v1692
    %1769 = vmatprep.subr.bf16.mxu0 %v1695
    %1770 = vmatpush1.bf16.msra.mxu0 %v1694
    %1771 = vmatprep.subr.bf16.mxu0 %v1697
    %1772 = vmatpush1.bf16.msra.mxu0 %v1696
    %1773 = vmatprep.mubr.bf16.mxu0 %v1536
    %1774 = vmatmul.mubr.bf16.gmra.mrb[0].mxu0 %v1535
    %v1775 = vpop.f32.mrb[0].mxu0
    %v1776 = vadd.f32 %v1734, %v1775
    %v1777 = vpop.f32.mrb[0].mxu0
    %v1778 = vadd.f32 %v1738, %v1777
    %v1779 = vpop.f32.mrb[0].mxu0
    %v1780 = vpop.f32.mrb[0].mxu0
    %1781 = vdwg.mxu0
    %v1782 = vxor.u32 %v1776, 2147483648
    %v1783 = vmul.f32 %v1782, 1.442695
    %v1784 = vpow.pop %v1783
    %v1785 = vadd.f32 %v1784, 1.0
    %v1786 = vrcp.pop %v1785
    %v1787 = vmul.f32 1.0, %v1786
    %v1788 = vxor.u32 %v1778, 2147483648
    %v1789 = vmul.f32 %v1788, 1.442695
    %v1790 = vpow.pop %v1789
    %v1791 = vadd.f32 %v1790, 1.0
    %v1792 = vrcp.pop %v1791
    %v1793 = vmul.f32 1.0, %v1792
    %v1794 = vld [vmem:[%s837] sm:$0xf]
    %v1795 = vld [vmem:[%s837 + $0x4] sm:$0xf]
    %v1796 = vld [vmem:[%s837 + $0x8] sm:$0xf]
    %v1797 = vld [vmem:[%s837 + $0xc] sm:$0xf]
    %v1798 = vld [vmem:[%s837 + $0x10] sm:$0xf]
    %v1799 = vld [vmem:[%s837 + $0x14] sm:$0xf]
    %v1800 = vld [vmem:[%s837 + $0x18] sm:$0xf]
    %v1801 = vld [vmem:[%s837 + $0x1c] sm:$0xf]
    %v1802 = vld [vmem:[%s837 + $0x20] sm:$0xf]
    %v1803 = vld [vmem:[%s837 + $0x24] sm:$0xf]
    %v1804 = vld [vmem:[%s837 + $0x28] sm:$0xf]
    %v1805 = vld [vmem:[%s837 + $0x2c] sm:$0xf]
    %v1806 = vld [vmem:[%s837 + $0x30] sm:$0xf]
    %v1807 = vld [vmem:[%s837 + $0x34] sm:$0xf]
    %v1808 = vld [vmem:[%s837 + $0x38] sm:$0xf]
    %v1809 = vld [vmem:[%s837 + $0x3c] sm:$0xf]
    %v1810 = vld [vmem:[%s6 + $0x1] sm:$0x1]
    %v1827 = vunpack.c.l.b16 %v1794
    %v1828 = vunpack.c.l.b16 %v1795
    %v1829 = vunpack.c.l.b16 %v1796
    %v1830 = vunpack.c.l.b16 %v1797
    %v1831 = vunpack.c.l.b16 %v1798
    %v1832 = vunpack.c.l.b16 %v1799
    %v1833 = vunpack.c.l.b16 %v1800
    %v1834 = vunpack.c.l.b16 %v1801
    %v1835 = vunpack.c.l.b16 %v1802
    %v1836 = vunpack.c.l.b16 %v1803
    %v1837 = vunpack.c.l.b16 %v1804
    %v1838 = vunpack.c.l.b16 %v1805
    %v1839 = vunpack.c.l.b16 %v1806
    %v1840 = vunpack.c.l.b16 %v1807
    %v1841 = vunpack.c.l.b16 %v1808
    %v1842 = vunpack.c.l.b16 %v1809
    %v1843 = vpack.c.b16 %v1828, %v1827
    %v1844 = vpack.c.b16 %v1830, %v1829
    %v1845 = vpack.c.b16 %v1832, %v1831
    %v1846 = vpack.c.b16 %v1834, %v1833
    %v1847 = vpack.c.b16 %v1836, %v1835
    %v1848 = vpack.c.b16 %v1838, %v1837
    %v1849 = vpack.c.b16 %v1840, %v1839
    %v1850 = vpack.c.b16 %v1842, %v1841
    %1859 = vmatprep.subr.bf16.mxu0 0
    %1860 = vmatpush1.bf16.msra.mxu0 %v1843
    %1861 = vmatprep.subr.bf16.mxu0 0
    %1862 = vmatpush1.bf16.msra.mxu0 %v1844
    %1863 = vmatprep.subr.bf16.mxu0 0
    %1864 = vmatpush1.bf16.msra.mxu0 %v1845
    %1865 = vmatprep.subr.bf16.mxu0 0
    %1866 = vmatpush1.bf16.msra.mxu0 %v1846
    %1867 = vmatprep.subr.bf16.mxu0 0
    %1868 = vmatpush1.bf16.msra.mxu0 %v1847
    %1869 = vmatprep.subr.bf16.mxu0 0
    %1870 = vmatpush1.bf16.msra.mxu0 %v1848
    %1871 = vmatprep.subr.bf16.mxu0 0
    %1872 = vmatpush1.bf16.msra.mxu0 %v1849
    %1873 = vmatprep.subr.bf16.mxu0 0
    %1874 = vmatpush1.bf16.msra.mxu0 %v1850
    %1875 = vmatprep.subr.bf16.mxu0 0
    %1876 = vmatpush1.bf16.msra.mxu0 0
    %1877 = vmatprep.subr.bf16.mxu0 0
    %1878 = vmatpush1.bf16.msra.mxu0 0
    %1879 = vmatprep.subr.bf16.mxu0 0
    %1880 = vmatpush1.bf16.msra.mxu0 0
    %1881 = vmatprep.subr.bf16.mxu0 0
    %1882 = vmatpush1.bf16.msra.mxu0 0
    %1883 = vmatprep.subr.bf16.mxu0 0
    %1884 = vmatpush1.bf16.msra.mxu0 0
    %1885 = vmatprep.subr.bf16.mxu0 0
    %1886 = vmatpush1.bf16.msra.mxu0 0
    %1887 = vmatprep.subr.bf16.mxu0 0
    %1888 = vmatpush1.bf16.msra.mxu0 0
    %1889 = vmatprep.subr.bf16.mxu0 0
    %1890 = vmatpush1.bf16.msra.mxu0 0
    %1891 = vmatprep.mubr.bf16.mxu0 0
    %1892 = vmatmul.mubr.bf16.gmra.mrb[0].mxu0 %v1535
    %v1893 = vpop.f32.mrb[0].mxu0
    %v1894 = vadd.f32 %v1810, %v1893
    %v1895 = vpop.f32.mrb[0].mxu0
    %v1896 = vpop.f32.mrb[0].mxu0
    %v1897 = vpop.f32.mrb[0].mxu0
    %1898 = vdwg.mxu0
    %v1899 = vld [vmem:[%s943] sm:$0xf]
    %v1900 = vld [vmem:[%s943 + $0x4] sm:$0xf]
    %v1901 = vld [vmem:[%s943 + $0x8] sm:$0xf]
    %v1902 = vld [vmem:[%s943 + $0xc] sm:$0xf]
    %v1903 = vld [vmem:[%s943 + $0x10] sm:$0xf]
    %v1904 = vld [vmem:[%s943 + $0x14] sm:$0xf]
    %v1905 = vld [vmem:[%s943 + $0x18] sm:$0xf]
    %v1906 = vld [vmem:[%s943 + $0x1c] sm:$0xf]
    %v1907 = vld [vmem:[%s943 + $0x20] sm:$0xf]
    %v1908 = vld [vmem:[%s943 + $0x24] sm:$0xf]
    %v1909 = vld [vmem:[%s943 + $0x28] sm:$0xf]
    %v1910 = vld [vmem:[%s943 + $0x2c] sm:$0xf]
    %v1911 = vld [vmem:[%s943 + $0x30] sm:$0xf]
    %v1912 = vld [vmem:[%s943 + $0x34] sm:$0xf]
    %v1913 = vld [vmem:[%s943 + $0x38] sm:$0xf]
    %v1914 = vld [vmem:[%s943 + $0x3c] sm:$0xf]
    %v1915 = vld [vmem:[%s8 + $0x1] sm:$0x1]
    %v1932 = vunpack.c.l.b16 %v1899
    %v1933 = vunpack.c.l.b16 %v1900
    %v1934 = vunpack.c.l.b16 %v1901
    %v1935 = vunpack.c.l.b16 %v1902
    %v1936 = vunpack.c.l.b16 %v1903
    %v1937 = vunpack.c.l.b16 %v1904
    %v1938 = vunpack.c.l.b16 %v1905
    %v1939 = vunpack.c.l.b16 %v1906
    %v1940 = vunpack.c.l.b16 %v1907
    %v1941 = vunpack.c.l.b16 %v1908
    %v1942 = vunpack.c.l.b16 %v1909
    %v1943 = vunpack.c.l.b16 %v1910
    %v1944 = vunpack.c.l.b16 %v1911
    %v1945 = vunpack.c.l.b16 %v1912
    %v1946 = vunpack.c.l.b16 %v1913
    %v1947 = vunpack.c.l.b16 %v1914
    %v1948 = vpack.c.b16 %v1933, %v1932
    %v1949 = vpack.c.b16 %v1935, %v1934
    %v1950 = vpack.c.b16 %v1937, %v1936
    %v1951 = vpack.c.b16 %v1939, %v1938
    %v1952 = vpack.c.b16 %v1941, %v1940
    %v1953 = vpack.c.b16 %v1943, %v1942
    %v1954 = vpack.c.b16 %v1945, %v1944
    %v1955 = vpack.c.b16 %v1947, %v1946
    %1964 = vmatprep.subr.bf16.mxu0 0
    %1965 = vmatpush1.bf16.msra.mxu0 %v1948
    %1966 = vmatprep.subr.bf16.mxu0 0
    %1967 = vmatpush1.bf16.msra.mxu0 %v1949
    %1968 = vmatprep.subr.bf16.mxu0 0
    %1969 = vmatpush1.bf16.msra.mxu0 %v1950
    %1970 = vmatprep.subr.bf16.mxu0 0
    %1971 = vmatpush1.bf16.msra.mxu0 %v1951
    %1972 = vmatprep.subr.bf16.mxu0 0
    %1973 = vmatpush1.bf16.msra.mxu0 %v1952
    %1974 = vmatprep.subr.bf16.mxu0 0
    %1975 = vmatpush1.bf16.msra.mxu0 %v1953
    %1976 = vmatprep.subr.bf16.mxu0 0
    %1977 = vmatpush1.bf16.msra.mxu0 %v1954
    %1978 = vmatprep.subr.bf16.mxu0 0
    %1979 = vmatpush1.bf16.msra.mxu0 %v1955
    %1980 = vmatprep.subr.bf16.mxu0 0
    %1981 = vmatpush1.bf16.msra.mxu0 0
    %1982 = vmatprep.subr.bf16.mxu0 0
    %1983 = vmatpush1.bf16.msra.mxu0 0
    %1984 = vmatprep.subr.bf16.mxu0 0
    %1985 = vmatpush1.bf16.msra.mxu0 0
    %1986 = vmatprep.subr.bf16.mxu0 0
    %1987 = vmatpush1.bf16.msra.mxu0 0
    %1988 = vmatprep.subr.bf16.mxu0 0
    %1989 = vmatpush1.bf16.msra.mxu0 0
    %1990 = vmatprep.subr.bf16.mxu0 0
    %1991 = vmatpush1.bf16.msra.mxu0 0
    %1992 = vmatprep.subr.bf16.mxu0 0
    %1993 = vmatpush1.bf16.msra.mxu0 0
    %1994 = vmatprep.subr.bf16.mxu0 0
    %1995 = vmatpush1.bf16.msra.mxu0 0
    %1996 = vmatprep.mubr.bf16.mxu0 0
    %1997 = vmatmul.mubr.bf16.gmra.mrb[0].mxu0 %v1536
    %v1998 = vpop.f32.mrb[0].mxu0
    %v1999 = vadd.f32 %v1915, %v1998
    %v2000 = vpop.f32.mrb[0].mxu0
    %v2001 = vpop.f32.mrb[0].mxu0
    %v2002 = vpop.f32.mrb[0].mxu0
    %2003 = vdwg.mxu0
    %v2004 = vmul.f32 %v1787, %v1999
    %v2005 = vadd.f32 %v1894, %v2004
    %v2006 = vtanh.pop %v2005
    %v2007 = vsub.f32 1.0, %v1793
    %v2008 = vmul.f32 %v2007, %v2006
    %v2009 = vmul.f32 %v1793, %v1055
    %v2010 = vadd.f32 %v2008, %v2009
    %s2011 = scalar_lea.vmem %s9, 1
    %2012 = vst [vmem:[%s2011] sm:$0x1] %v2010
    %s2013 = sld [smem:[#allocation3 + $0x2]]
    %s2014 = scalar_lea.vmem [#allocation4], %s2013
    %v2015 = vld [vmem:[%s2014] sm:$0x1]
    %v2016 = vpack.c.bf16 %v2015, %v2015
    %v2017 = vld [vmem:[#allocation7] sm:$0xff]
    %v2018 = vld [vmem:[#allocation7 + $0x8] sm:$0xff]
    %v2019 = vld [vmem:[#allocation7 + $0x10] sm:$0xff]
    %v2020 = vld [vmem:[#allocation7 + $0x18] sm:$0xff]
    %v2021 = vld [vmem:[#allocation7 + $0x20] sm:$0xff]
    %v2022 = vld [vmem:[#allocation7 + $0x28] sm:$0xff]
    %v2023 = vld [vmem:[#allocation7 + $0x30] sm:$0xff]
    %v2024 = vld [vmem:[#allocation7 + $0x38] sm:$0xff]
    %v2025 = vld [vmem:[#allocation7 + $0x40] sm:$0xff]
    %v2026 = vld [vmem:[#allocation7 + $0x48] sm:$0xff]
    %v2027 = vld [vmem:[#allocation7 + $0x50] sm:$0xff]
    %v2028 = vld [vmem:[#allocation7 + $0x58] sm:$0xff]
    %v2029 = vld [vmem:[#allocation7 + $0x60] sm:$0xff]
    %v2030 = vld [vmem:[#allocation7 + $0x68] sm:$0xff]
    %v2031 = vld [vmem:[#allocation7 + $0x70] sm:$0xff]
    %v2032 = vld [vmem:[#allocation7 + $0x78] sm:$0xff]
    %v2033 = vld [vmem:[#allocation7 + $0x80] sm:$0xff]
    %v2034 = vld [vmem:[#allocation7 + $0x88] sm:$0xff]
    %v2035 = vld [vmem:[#allocation7 + $0x90] sm:$0xff]
    %v2036 = vld [vmem:[#allocation7 + $0x98] sm:$0xff]
    %v2037 = vld [vmem:[#allocation7 + $0xa0] sm:$0xff]
    %v2038 = vld [vmem:[#allocation7 + $0xa8] sm:$0xff]
    %v2039 = vld [vmem:[#allocation7 + $0xb0] sm:$0xff]
    %v2040 = vld [vmem:[#allocation7 + $0xb8] sm:$0xff]
    %v2041 = vld [vmem:[#allocation7 + $0xc0] sm:$0xff]
    %v2042 = vld [vmem:[#allocation7 + $0xc8] sm:$0xff]
    %v2043 = vld [vmem:[#allocation7 + $0xd0] sm:$0xff]
    %v2044 = vld [vmem:[#allocation7 + $0xd8] sm:$0xff]
    %v2045 = vld [vmem:[#allocation7 + $0xe0] sm:$0xff]
    %v2046 = vld [vmem:[#allocation7 + $0xe8] sm:$0xff]
    %v2047 = vld [vmem:[#allocation7 + $0xf0] sm:$0xff]
    %v2048 = vld [vmem:[#allocation7 + $0xf8] sm:$0xff]
    %v2049 = vld [vmem:[%s4] ss:$2 sm:$0x3]
    %v2082 = vunpack.c.l.b16 %v2017
    %v2083 = vunpack.c.h.b16 %v2017
    %v2084 = vunpack.c.l.b16 %v2018
    %v2085 = vunpack.c.h.b16 %v2018
    %v2086 = vunpack.c.l.b16 %v2019
    %v2087 = vunpack.c.h.b16 %v2019
    %v2088 = vunpack.c.l.b16 %v2020
    %v2089 = vunpack.c.h.b16 %v2020
    %v2090 = vunpack.c.l.b16 %v2021
    %v2091 = vunpack.c.h.b16 %v2021
    %v2092 = vunpack.c.l.b16 %v2022
    %v2093 = vunpack.c.h.b16 %v2022
    %v2094 = vunpack.c.l.b16 %v2023
    %v2095 = vunpack.c.h.b16 %v2023
    %v2096 = vunpack.c.l.b16 %v2024
    %v2097 = vunpack.c.h.b16 %v2024
    %v2098 = vunpack.c.l.b16 %v2025
    %v2099 = vunpack.c.h.b16 %v2025
    %v2100 = vunpack.c.l.b16 %v2026
    %v2101 = vunpack.c.h.b16 %v2026
    %v2102 = vunpack.c.l.b16 %v2027
    %v2103 = vunpack.c.h.b16 %v2027
    %v2104 = vunpack.c.l.b16 %v2028
    %v2105 = vunpack.c.h.b16 %v2028
    %v2106 = vunpack.c.l.b16 %v2029
    %v2107 = vunpack.c.h.b16 %v2029
    %v2108 = vunpack.c.l.b16 %v2030
    %v2109 = vunpack.c.h.b16 %v2030
    %v2110 = vunpack.c.l.b16 %v2031
    %v2111 = vunpack.c.h.b16 %v2031
    %v2112 = vunpack.c.l.b16 %v2032
    %v2113 = vunpack.c.h.b16 %v2032
    %v2114 = vunpack.c.l.b16 %v2033
    %v2115 = vunpack.c.h.b16 %v2033
    %v2116 = vunpack.c.l.b16 %v2034
    %v2117 = vunpack.c.h.b16 %v2034
    %v2118 = vunpack.c.l.b16 %v2035
    %v2119 = vunpack.c.h.b16 %v2035
    %v2120 = vunpack.c.l.b16 %v2036
    %v2121 = vunpack.c.h.b16 %v2036
    %v2122 = vunpack.c.l.b16 %v2037
    %v2123 = vunpack.c.h.b16 %v2037
    %v2124 = vunpack.c.l.b16 %v2038
    %v2125 = vunpack.c.h.b16 %v2038
    %v2126 = vunpack.c.l.b16 %v2039
    %v2127 = vunpack.c.h.b16 %v2039
    %v2128 = vunpack.c.l.b16 %v2040
    %v2129 = vunpack.c.h.b16 %v2040
    %v2130 = vunpack.c.l.b16 %v2041
    %v2131 = vunpack.c.h.b16 %v2041
    %v2132 = vunpack.c.l.b16 %v2042
    %v2133 = vunpack.c.h.b16 %v2042
    %v2134 = vunpack.c.l.b16 %v2043
    %v2135 = vunpack.c.h.b16 %v2043
    %v2136 = vunpack.c.l.b16 %v2044
    %v2137 = vunpack.c.h.b16 %v2044
    %v2138 = vunpack.c.l.b16 %v2045
    %v2139 = vunpack.c.h.b16 %v2045
    %v2140 = vunpack.c.l.b16 %v2046
    %v2141 = vunpack.c.h.b16 %v2046
    %v2142 = vunpack.c.l.b16 %v2047
    %v2143 = vunpack.c.h.b16 %v2047
    %v2144 = vunpack.c.l.b16 %v2048
    %v2145 = vunpack.c.h.b16 %v2048
    %v2146 = vpack.c.b16 %v2084, %v2082
    %v2147 = vpack.c.b16 %v2085, %v2083
    %v2148 = vpack.c.b16 %v2088, %v2086
    %v2149 = vpack.c.b16 %v2089, %v2087
    %v2150 = vpack.c.b16 %v2092, %v2090
    %v2151 = vpack.c.b16 %v2093, %v2091
    %v2152 = vpack.c.b16 %v2096, %v2094
    %v2153 = vpack.c.b16 %v2097, %v2095
    %v2154 = vpack.c.b16 %v2100, %v2098
    %v2155 = vpack.c.b16 %v2101, %v2099
    %v2156 = vpack.c.b16 %v2104, %v2102
    %v2157 = vpack.c.b16 %v2105, %v2103
    %v2158 = vpack.c.b16 %v2108, %v2106
    %v2159 = vpack.c.b16 %v2109, %v2107
    %v2160 = vpack.c.b16 %v2112, %v2110
    %v2161 = vpack.c.b16 %v2113, %v2111
    %v2162 = vpack.c.b16 %v2116, %v2114
    %v2163 = vpack.c.b16 %v2117, %v2115
    %v2164 = vpack.c.b16 %v2120, %v2118
    %v2165 = vpack.c.b16 %v2121, %v2119
    %v2166 = vpack.c.b16 %v2124, %v2122
    %v2167 = vpack.c.b16 %v2125, %v2123
    %v2168 = vpack.c.b16 %v2128, %v2126
    %v2169 = vpack.c.b16 %v2129, %v2127
    %v2170 = vpack.c.b16 %v2132, %v2130
    %v2171 = vpack.c.b16 %v2133, %v2131
    %v2172 = vpack.c.b16 %v2136, %v2134
    %v2173 = vpack.c.b16 %v2137, %v2135
    %v2174 = vpack.c.b16 %v2140, %v2138
    %v2175 = vpack.c.b16 %v2141, %v2139
    %v2176 = vpack.c.b16 %v2144, %v2142
    %v2177 = vpack.c.b16 %v2145, %v2143
    %v2211 = vlaneseq
    %v2212 = vshrl.u32 %v2211, 7
    %v2213 = vsub.s32 0, %v2212
    %v2214 = vrot.slane %v2049, %v2213
    %v2215 = vlaneseq
    %v2216 = vshrl.u32 %v2215, 7
    %v2217 = vsub.s32 1, %v2216
    %v2218 = vrot.slane %v2049, %v2217
    %2221 = vmatprep.subr.bf16.mxu0 %v2147
    %2222 = vmatpush1.bf16.msra.mxu0 %v2146
    %2223 = vmatprep.subr.bf16.mxu0 %v2149
    %2224 = vmatpush1.bf16.msra.mxu0 %v2148
    %2225 = vmatprep.subr.bf16.mxu0 %v2151
    %2226 = vmatpush1.bf16.msra.mxu0 %v2150
    %2227 = vmatprep.subr.bf16.mxu0 %v2153
    %2228 = vmatpush1.bf16.msra.mxu0 %v2152
    %2229 = vmatprep.subr.bf16.mxu0 %v2155
    %2230 = vmatpush1.bf16.msra.mxu0 %v2154
    %2231 = vmatprep.subr.bf16.mxu0 %v2157
    %2232 = vmatpush1.bf16.msra.mxu0 %v2156
    %2233 = vmatprep.subr.bf16.mxu0 %v2159
    %2234 = vmatpush1.bf16.msra.mxu0 %v2158
    %2235 = vmatprep.subr.bf16.mxu0 %v2161
    %2236 = vmatpush1.bf16.msra.mxu0 %v2160
    %2237 = vmatprep.subr.bf16.mxu0 %v2163
    %2238 = vmatpush1.bf16.msra.mxu0 %v2162
    %2239 = vmatprep.subr.bf16.mxu0 %v2165
    %2240 = vmatpush1.bf16.msra.mxu0 %v2164
    %2241 = vmatprep.subr.bf16.mxu0 %v2167
    %2242 = vmatpush1.bf16.msra.mxu0 %v2166
    %2243 = vmatprep.subr.bf16.mxu0 %v2169
    %2244 = vmatpush1.bf16.msra.mxu0 %v2168
    %2245 = vmatprep.subr.bf16.mxu0 %v2171
    %2246 = vmatpush1.bf16.msra.mxu0 %v2170
    %2247 = vmatprep.subr.bf16.mxu0 %v2173
    %2248 = vmatpush1.bf16.msra.mxu0 %v2172
    %2249 = vmatprep.subr.bf16.mxu0 %v2175
    %2250 = vmatpush1.bf16.msra.mxu0 %v2174
    %2251 = vmatprep.subr.bf16.mxu0 %v2177
    %2252 = vmatpush1.bf16.msra.mxu0 %v2176
    %2253 = vmatprep.mubr.bf16.mxu0 %v1535
    %2254 = vmatmul.mubr.bf16.gmra.mrb[0].mxu0 %v2016
    %v2255 = vpop.f32.mrb[0].mxu0
    %v2256 = vadd.f32 %v2214, %v2255
    %v2257 = vpop.f32.mrb[0].mxu0
    %v2258 = vadd.f32 %v2218, %v2257
    %v2259 = vpop.f32.mrb[0].mxu0
    %v2260 = vpop.f32.mrb[0].mxu0
    %2261 = vdwg.mxu0
    %v2262 = vxor.u32 %v2256, 2147483648
    %v2263 = vmul.f32 %v2262, 1.442695
    %v2264 = vpow.pop %v2263
    %v2265 = vadd.f32 %v2264, 1.0
    %v2266 = vrcp.pop %v2265
    %v2267 = vmul.f32 1.0, %v2266
    %v2268 = vxor.u32 %v2258, 2147483648
    %v2269 = vmul.f32 %v2268, 1.442695
    %v2270 = vpow.pop %v2269
    %v2271 = vadd.f32 %v2270, 1.0
    %v2272 = vrcp.pop %v2271
    %v2273 = vmul.f32 1.0, %v2272
    %v2274 = vld [vmem:[#allocation9] sm:$0xf]
    %v2275 = vld [vmem:[#allocation9 + $0x4] sm:$0xf]
    %v2276 = vld [vmem:[#allocation9 + $0x8] sm:$0xf]
    %v2277 = vld [vmem:[#allocation9 + $0xc] sm:$0xf]
    %v2278 = vld [vmem:[#allocation9 + $0x10] sm:$0xf]
    %v2279 = vld [vmem:[#allocation9 + $0x14] sm:$0xf]
    %v2280 = vld [vmem:[#allocation9 + $0x18] sm:$0xf]
    %v2281 = vld [vmem:[#allocation9 + $0x1c] sm:$0xf]
    %v2282 = vld [vmem:[#allocation9 + $0x20] sm:$0xf]
    %v2283 = vld [vmem:[#allocation9 + $0x24] sm:$0xf]
    %v2284 = vld [vmem:[#allocation9 + $0x28] sm:$0xf]
    %v2285 = vld [vmem:[#allocation9 + $0x2c] sm:$0xf]
    %v2286 = vld [vmem:[#allocation9 + $0x30] sm:$0xf]
    %v2287 = vld [vmem:[#allocation9 + $0x34] sm:$0xf]
    %v2288 = vld [vmem:[#allocation9 + $0x38] sm:$0xf]
    %v2289 = vld [vmem:[#allocation9 + $0x3c] sm:$0xf]
    %v2290 = vld [vmem:[%s6] sm:$0x1]
    %v2307 = vunpack.c.l.b16 %v2274
    %v2308 = vunpack.c.l.b16 %v2275
    %v2309 = vunpack.c.l.b16 %v2276
    %v2310 = vunpack.c.l.b16 %v2277
    %v2311 = vunpack.c.l.b16 %v2278
    %v2312 = vunpack.c.l.b16 %v2279
    %v2313 = vunpack.c.l.b16 %v2280
    %v2314 = vunpack.c.l.b16 %v2281
    %v2315 = vunpack.c.l.b16 %v2282
    %v2316 = vunpack.c.l.b16 %v2283
    %v2317 = vunpack.c.l.b16 %v2284
    %v2318 = vunpack.c.l.b16 %v2285
    %v2319 = vunpack.c.l.b16 %v2286
    %v2320 = vunpack.c.l.b16 %v2287
    %v2321 = vunpack.c.l.b16 %v2288
    %v2322 = vunpack.c.l.b16 %v2289
    %v2323 = vpack.c.b16 %v2308, %v2307
    %v2324 = vpack.c.b16 %v2310, %v2309
    %v2325 = vpack.c.b16 %v2312, %v2311
    %v2326 = vpack.c.b16 %v2314, %v2313
    %v2327 = vpack.c.b16 %v2316, %v2315
    %v2328 = vpack.c.b16 %v2318, %v2317
    %v2329 = vpack.c.b16 %v2320, %v2319
    %v2330 = vpack.c.b16 %v2322, %v2321
    %2339 = vmatprep.subr.bf16.mxu0 0
    %2340 = vmatpush1.bf16.msra.mxu0 %v2323
    %2341 = vmatprep.subr.bf16.mxu0 0
    %2342 = vmatpush1.bf16.msra.mxu0 %v2324
    %2343 = vmatprep.subr.bf16.mxu0 0
    %2344 = vmatpush1.bf16.msra.mxu0 %v2325
    %2345 = vmatprep.subr.bf16.mxu0 0
    %2346 = vmatpush1.bf16.msra.mxu0 %v2326
    %2347 = vmatprep.subr.bf16.mxu0 0
    %2348 = vmatpush1.bf16.msra.mxu0 %v2327
    %2349 = vmatprep.subr.bf16.mxu0 0
    %2350 = vmatpush1.bf16.msra.mxu0 %v2328
    %2351 = vmatprep.subr.bf16.mxu0 0
    %2352 = vmatpush1.bf16.msra.mxu0 %v2329
    %2353 = vmatprep.subr.bf16.mxu0 0
    %2354 = vmatpush1.bf16.msra.mxu0 %v2330
    %2355 = vmatprep.subr.bf16.mxu0 0
    %2356 = vmatpush1.bf16.msra.mxu0 0
    %2357 = vmatprep.subr.bf16.mxu0 0
    %2358 = vmatpush1.bf16.msra.mxu0 0
    %2359 = vmatprep.subr.bf16.mxu0 0
    %2360 = vmatpush1.bf16.msra.mxu0 0
    %2361 = vmatprep.subr.bf16.mxu0 0
    %2362 = vmatpush1.bf16.msra.mxu0 0
    %2363 = vmatprep.subr.bf16.mxu0 0
    %2364 = vmatpush1.bf16.msra.mxu0 0
    %2365 = vmatprep.subr.bf16.mxu0 0
    %2366 = vmatpush1.bf16.msra.mxu0 0
    %2367 = vmatprep.subr.bf16.mxu0 0
    %2368 = vmatpush1.bf16.msra.mxu0 0
    %2369 = vmatprep.subr.bf16.mxu0 0
    %2370 = vmatpush1.bf16.msra.mxu0 0
    %2371 = vmatprep.mubr.bf16.mxu0 0
    %2372 = vmatmul.mubr.bf16.gmra.mrb[0].mxu0 %v2016
    %v2373 = vpop.f32.mrb[0].mxu0
    %v2374 = vadd.f32 %v2290, %v2373
    %v2375 = vpop.f32.mrb[0].mxu0
    %v2376 = vpop.f32.mrb[0].mxu0
    %v2377 = vpop.f32.mrb[0].mxu0
    %2378 = vdwg.mxu0
    %v2379 = vld [vmem:[#allocation10] sm:$0xf]
    %v2380 = vld [vmem:[#allocation10 + $0x4] sm:$0xf]
    %v2381 = vld [vmem:[#allocation10 + $0x8] sm:$0xf]
    %v2382 = vld [vmem:[#allocation10 + $0xc] sm:$0xf]
    %v2383 = vld [vmem:[#allocation10 + $0x10] sm:$0xf]
    %v2384 = vld [vmem:[#allocation10 + $0x14] sm:$0xf]
    %v2385 = vld [vmem:[#allocation10 + $0x18] sm:$0xf]
    %v2386 = vld [vmem:[#allocation10 + $0x1c] sm:$0xf]
    %v2387 = vld [vmem:[#allocation10 + $0x20] sm:$0xf]
    %v2388 = vld [vmem:[#allocation10 + $0x24] sm:$0xf]
    %v2389 = vld [vmem:[#allocation10 + $0x28] sm:$0xf]
    %v2390 = vld [vmem:[#allocation10 + $0x2c] sm:$0xf]
    %v2391 = vld [vmem:[#allocation10 + $0x30] sm:$0xf]
    %v2392 = vld [vmem:[#allocation10 + $0x34] sm:$0xf]
    %v2393 = vld [vmem:[#allocation10 + $0x38] sm:$0xf]
    %v2394 = vld [vmem:[#allocation10 + $0x3c] sm:$0xf]
    %v2395 = vld [vmem:[%s8] sm:$0x1]
    %v2412 = vunpack.c.l.b16 %v2379
    %v2413 = vunpack.c.l.b16 %v2380
    %v2414 = vunpack.c.l.b16 %v2381
    %v2415 = vunpack.c.l.b16 %v2382
    %v2416 = vunpack.c.l.b16 %v2383
    %v2417 = vunpack.c.l.b16 %v2384
    %v2418 = vunpack.c.l.b16 %v2385
    %v2419 = vunpack.c.l.b16 %v2386
    %v2420 = vunpack.c.l.b16 %v2387
    %v2421 = vunpack.c.l.b16 %v2388
    %v2422 = vunpack.c.l.b16 %v2389
    %v2423 = vunpack.c.l.b16 %v2390
    %v2424 = vunpack.c.l.b16 %v2391
    %v2425 = vunpack.c.l.b16 %v2392
    %v2426 = vunpack.c.l.b16 %v2393
    %v2427 = vunpack.c.l.b16 %v2394
    %v2428 = vpack.c.b16 %v2413, %v2412
    %v2429 = vpack.c.b16 %v2415, %v2414
    %v2430 = vpack.c.b16 %v2417, %v2416
    %v2431 = vpack.c.b16 %v2419, %v2418
    %v2432 = vpack.c.b16 %v2421, %v2420
    %v2433 = vpack.c.b16 %v2423, %v2422
    %v2434 = vpack.c.b16 %v2425, %v2424
    %v2435 = vpack.c.b16 %v2427, %v2426
    %2444 = vmatprep.subr.bf16.mxu0 0
    %2445 = vmatpush1.bf16.msra.mxu0 %v2428
    %2446 = vmatprep.subr.bf16.mxu0 0
    %2447 = vmatpush1.bf16.msra.mxu0 %v2429
    %2448 = vmatprep.subr.bf16.mxu0 0
    %2449 = vmatpush1.bf16.msra.mxu0 %v2430
    %2450 = vmatprep.subr.bf16.mxu0 0
    %2451 = vmatpush1.bf16.msra.mxu0 %v2431
    %2452 = vmatprep.subr.bf16.mxu0 0
    %2453 = vmatpush1.bf16.msra.mxu0 %v2432
    %2454 = vmatprep.subr.bf16.mxu0 0
    %2455 = vmatpush1.bf16.msra.mxu0 %v2433
    %2456 = vmatprep.subr.bf16.mxu0 0
    %2457 = vmatpush1.bf16.msra.mxu0 %v2434
    %2458 = vmatprep.subr.bf16.mxu0 0
    %2459 = vmatpush1.bf16.msra.mxu0 %v2435
    %2460 = vmatprep.subr.bf16.mxu0 0
    %2461 = vmatpush1.bf16.msra.mxu0 0
    %2462 = vmatprep.subr.bf16.mxu0 0
    %2463 = vmatpush1.bf16.msra.mxu0 0
    %2464 = vmatprep.subr.bf16.mxu0 0
    %2465 = vmatpush1.bf16.msra.mxu0 0
    %2466 = vmatprep.subr.bf16.mxu0 0
    %2467 = vmatpush1.bf16.msra.mxu0 0
    %2468 = vmatprep.subr.bf16.mxu0 0
    %2469 = vmatpush1.bf16.msra.mxu0 0
    %2470 = vmatprep.subr.bf16.mxu0 0
    %2471 = vmatpush1.bf16.msra.mxu0 0
    %2472 = vmatprep.subr.bf16.mxu0 0
    %2473 = vmatpush1.bf16.msra.mxu0 0
    %2474 = vmatprep.subr.bf16.mxu0 0
    %2475 = vmatpush1.bf16.msra.mxu0 0
    %2476 = vmatprep.mubr.bf16.mxu0 0
    %2477 = vmatmul.mubr.bf16.gmra.mrb[0].mxu0 %v1535
    %v2478 = vpop.f32.mrb[0].mxu0
    %v2479 = vadd.f32 %v2395, %v2478
    %v2480 = vpop.f32.mrb[0].mxu0
    %v2481 = vpop.f32.mrb[0].mxu0
    %v2482 = vpop.f32.mrb[0].mxu0
    %2483 = vdwg.mxu0
    %v2484 = vmul.f32 %v2267, %v2479
    %v2485 = vadd.f32 %v2374, %v2484
    %v2486 = vtanh.pop %v2485
    %v2487 = vsub.f32 1.0, %v2273
    %v2488 = vmul.f32 %v2487, %v2486
    %v2489 = vmul.f32 %v2273, %v1534
    %v2490 = vadd.f32 %v2488, %v2489
    %v2491 = vpack.c.bf16 %v2490, %v2490
    %v2492 = vpack.c.bf16 %v2010, %v2010
    %v2493 = vld [vmem:[%s578] sm:$0xff]
    %v2494 = vld [vmem:[%s578 + $0x8] sm:$0xff]
    %v2495 = vld [vmem:[%s578 + $0x10] sm:$0xff]
    %v2496 = vld [vmem:[%s578 + $0x18] sm:$0xff]
    %v2497 = vld [vmem:[%s578 + $0x20] sm:$0xff]
    %v2498 = vld [vmem:[%s578 + $0x28] sm:$0xff]
    %v2499 = vld [vmem:[%s578 + $0x30] sm:$0xff]
    %v2500 = vld [vmem:[%s578 + $0x38] sm:$0xff]
    %v2501 = vld [vmem:[%s578 + $0x40] sm:$0xff]
    %v2502 = vld [vmem:[%s578 + $0x48] sm:$0xff]
    %v2503 = vld [vmem:[%s578 + $0x50] sm:$0xff]
    %v2504 = vld [vmem:[%s578 + $0x58] sm:$0xff]
    %v2505 = vld [vmem:[%s578 + $0x60] sm:$0xff]
    %v2506 = vld [vmem:[%s578 + $0x68] sm:$0xff]
    %v2507 = vld [vmem:[%s578 + $0x70] sm:$0xff]
    %v2508 = vld [vmem:[%s578 + $0x78] sm:$0xff]
    %v2509 = vld [vmem:[%s578 + $0x80] sm:$0xff]
    %v2510 = vld [vmem:[%s578 + $0x88] sm:$0xff]
    %v2511 = vld [vmem:[%s578 + $0x90] sm:$0xff]
    %v2512 = vld [vmem:[%s578 + $0x98] sm:$0xff]
    %v2513 = vld [vmem:[%s578 + $0xa0] sm:$0xff]
    %v2514 = vld [vmem:[%s578 + $0xa8] sm:$0xff]
    %v2515 = vld [vmem:[%s578 + $0xb0] sm:$0xff]
    %v2516 = vld [vmem:[%s578 + $0xb8] sm:$0xff]
    %v2517 = vld [vmem:[%s578 + $0xc0] sm:$0xff]
    %v2518 = vld [vmem:[%s578 + $0xc8] sm:$0xff]
    %v2519 = vld [vmem:[%s578 + $0xd0] sm:$0xff]
    %v2520 = vld [vmem:[%s578 + $0xd8] sm:$0xff]
    %v2521 = vld [vmem:[%s578 + $0xe0] sm:$0xff]
    %v2522 = vld [vmem:[%s578 + $0xe8] sm:$0xff]
    %v2523 = vld [vmem:[%s578 + $0xf0] sm:$0xff]
    %v2524 = vld [vmem:[%s578 + $0xf8] sm:$0xff]
    %v2525 = vld [vmem:[%s611] ss:$2 sm:$0x3]
    %v2558 = vunpack.c.l.b16 %v2493
    %v2559 = vunpack.c.h.b16 %v2493
    %v2560 = vunpack.c.l.b16 %v2494
    %v2561 = vunpack.c.h.b16 %v2494
    %v2562 = vunpack.c.l.b16 %v2495
    %v2563 = vunpack.c.h.b16 %v2495
    %v2564 = vunpack.c.l.b16 %v2496
    %v2565 = vunpack.c.h.b16 %v2496
    %v2566 = vunpack.c.l.b16 %v2497
    %v2567 = vunpack.c.h.b16 %v2497
    %v2568 = vunpack.c.l.b16 %v2498
    %v2569 = vunpack.c.h.b16 %v2498
    %v2570 = vunpack.c.l.b16 %v2499
    %v2571 = vunpack.c.h.b16 %v2499
    %v2572 = vunpack.c.l.b16 %v2500
    %v2573 = vunpack.c.h.b16 %v2500
    %v2574 = vunpack.c.l.b16 %v2501
    %v2575 = vunpack.c.h.b16 %v2501
    %v2576 = vunpack.c.l.b16 %v2502
    %v2577 = vunpack.c.h.b16 %v2502
    %v2578 = vunpack.c.l.b16 %v2503
    %v2579 = vunpack.c.h.b16 %v2503
    %v2580 = vunpack.c.l.b16 %v2504
    %v2581 = vunpack.c.h.b16 %v2504
    %v2582 = vunpack.c.l.b16 %v2505
    %v2583 = vunpack.c.h.b16 %v2505
    %v2584 = vunpack.c.l.b16 %v2506
    %v2585 = vunpack.c.h.b16 %v2506
    %v2586 = vunpack.c.l.b16 %v2507
    %v2587 = vunpack.c.h.b16 %v2507
    %v2588 = vunpack.c.l.b16 %v2508
    %v2589 = vunpack.c.h.b16 %v2508
    %v2590 = vunpack.c.l.b16 %v2509
    %v2591 = vunpack.c.h.b16 %v2509
    %v2592 = vunpack.c.l.b16 %v2510
    %v2593 = vunpack.c.h.b16 %v2510
    %v2594 = vunpack.c.l.b16 %v2511
    %v2595 = vunpack.c.h.b16 %v2511
    %v2596 = vunpack.c.l.b16 %v2512
    %v2597 = vunpack.c.h.b16 %v2512
    %v2598 = vunpack.c.l.b16 %v2513
    %v2599 = vunpack.c.h.b16 %v2513
    %v2600 = vunpack.c.l.b16 %v2514
    %v2601 = vunpack.c.h.b16 %v2514
    %v2602 = vunpack.c.l.b16 %v2515
    %v2603 = vunpack.c.h.b16 %v2515
    %v2604 = vunpack.c.l.b16 %v2516
    %v2605 = vunpack.c.h.b16 %v2516
    %v2606 = vunpack.c.l.b16 %v2517
    %v2607 = vunpack.c.h.b16 %v2517
    %v2608 = vunpack.c.l.b16 %v2518
    %v2609 = vunpack.c.h.b16 %v2518
    %v2610 = vunpack.c.l.b16 %v2519
    %v2611 = vunpack.c.h.b16 %v2519
    %v2612 = vunpack.c.l.b16 %v2520
    %v2613 = vunpack.c.h.b16 %v2520
    %v2614 = vunpack.c.l.b16 %v2521
    %v2615 = vunpack.c.h.b16 %v2521
    %v2616 = vunpack.c.l.b16 %v2522
    %v2617 = vunpack.c.h.b16 %v2522
    %v2618 = vunpack.c.l.b16 %v2523
    %v2619 = vunpack.c.h.b16 %v2523
    %v2620 = vunpack.c.l.b16 %v2524
    %v2621 = vunpack.c.h.b16 %v2524
    %v2622 = vpack.c.b16 %v2560, %v2558
    %v2623 = vpack.c.b16 %v2561, %v2559
    %v2624 = vpack.c.b16 %v2564, %v2562
    %v2625 = vpack.c.b16 %v2565, %v2563
    %v2626 = vpack.c.b16 %v2568, %v2566
    %v2627 = vpack.c.b16 %v2569, %v2567
    %v2628 = vpack.c.b16 %v2572, %v2570
    %v2629 = vpack.c.b16 %v2573, %v2571
    %v2630 = vpack.c.b16 %v2576, %v2574
    %v2631 = vpack.c.b16 %v2577, %v2575
    %v2632 = vpack.c.b16 %v2580, %v2578
    %v2633 = vpack.c.b16 %v2581, %v2579
    %v2634 = vpack.c.b16 %v2584, %v2582
    %v2635 = vpack.c.b16 %v2585, %v2583
    %v2636 = vpack.c.b16 %v2588, %v2586
    %v2637 = vpack.c.b16 %v2589, %v2587
    %v2638 = vpack.c.b16 %v2592, %v2590
    %v2639 = vpack.c.b16 %v2593, %v2591
    %v2640 = vpack.c.b16 %v2596, %v2594
    %v2641 = vpack.c.b16 %v2597, %v2595
    %v2642 = vpack.c.b16 %v2600, %v2598
    %v2643 = vpack.c.b16 %v2601, %v2599
    %v2644 = vpack.c.b16 %v2604, %v2602
    %v2645 = vpack.c.b16 %v2605, %v2603
    %v2646 = vpack.c.b16 %v2608, %v2606
    %v2647 = vpack.c.b16 %v2609, %v2607
    %v2648 = vpack.c.b16 %v2612, %v2610
    %v2649 = vpack.c.b16 %v2613, %v2611
    %v2650 = vpack.c.b16 %v2616, %v2614
    %v2651 = vpack.c.b16 %v2617, %v2615
    %v2652 = vpack.c.b16 %v2620, %v2618
    %v2653 = vpack.c.b16 %v2621, %v2619
    %v2687 = vlaneseq
    %v2688 = vshrl.u32 %v2687, 7
    %v2689 = vsub.s32 0, %v2688
    %v2690 = vrot.slane %v2525, %v2689
    %v2691 = vlaneseq
    %v2692 = vshrl.u32 %v2691, 7
    %v2693 = vsub.s32 1, %v2692
    %v2694 = vrot.slane %v2525, %v2693
    %2697 = vmatprep.subr.bf16.mxu0 %v2623
    %2698 = vmatpush1.bf16.msra.mxu0 %v2622
    %2699 = vmatprep.subr.bf16.mxu0 %v2625
    %2700 = vmatpush1.bf16.msra.mxu0 %v2624
    %2701 = vmatprep.subr.bf16.mxu0 %v2627
    %2702 = vmatpush1.bf16.msra.mxu0 %v2626
    %2703 = vmatprep.subr.bf16.mxu0 %v2629
    %2704 = vmatpush1.bf16.msra.mxu0 %v2628
    %2705 = vmatprep.subr.bf16.mxu0 %v2631
    %2706 = vmatpush1.bf16.msra.mxu0 %v2630
    %2707 = vmatprep.subr.bf16.mxu0 %v2633
    %2708 = vmatpush1.bf16.msra.mxu0 %v2632
    %2709 = vmatprep.subr.bf16.mxu0 %v2635
    %2710 = vmatpush1.bf16.msra.mxu0 %v2634
    %2711 = vmatprep.subr.bf16.mxu0 %v2637
    %2712 = vmatpush1.bf16.msra.mxu0 %v2636
    %2713 = vmatprep.subr.bf16.mxu0 %v2639
    %2714 = vmatpush1.bf16.msra.mxu0 %v2638
    %2715 = vmatprep.subr.bf16.mxu0 %v2641
    %2716 = vmatpush1.bf16.msra.mxu0 %v2640
    %2717 = vmatprep.subr.bf16.mxu0 %v2643
    %2718 = vmatpush1.bf16.msra.mxu0 %v2642
    %2719 = vmatprep.subr.bf16.mxu0 %v2645
    %2720 = vmatpush1.bf16.msra.mxu0 %v2644
    %2721 = vmatprep.subr.bf16.mxu0 %v2647
    %2722 = vmatpush1.bf16.msra.mxu0 %v2646
    %2723 = vmatprep.subr.bf16.mxu0 %v2649
    %2724 = vmatpush1.bf16.msra.mxu0 %v2648
    %2725 = vmatprep.subr.bf16.mxu0 %v2651
    %2726 = vmatpush1.bf16.msra.mxu0 %v2650
    %2727 = vmatprep.subr.bf16.mxu0 %v2653
    %2728 = vmatpush1.bf16.msra.mxu0 %v2652
    %2729 = vmatprep.mubr.bf16.mxu0 %v2492
    %2730 = vmatmul.mubr.bf16.gmra.mrb[0].mxu0 %v2491
    %v2731 = vpop.f32.mrb[0].mxu0
    %v2732 = vadd.f32 %v2690, %v2731
    %v2733 = vpop.f32.mrb[0].mxu0
    %v2734 = vadd.f32 %v2694, %v2733
    %v2735 = vpop.f32.mrb[0].mxu0
    %v2736 = vpop.f32.mrb[0].mxu0
    %2737 = vdwg.mxu0
    %v2738 = vxor.u32 %v2732, 2147483648
    %v2739 = vmul.f32 %v2738, 1.442695
    %v2740 = vpow.pop %v2739
    %v2741 = vadd.f32 %v2740, 1.0
    %v2742 = vrcp.pop %v2741
    %v2743 = vmul.f32 1.0, %v2742
    %v2744 = vxor.u32 %v2734, 2147483648
    %v2745 = vmul.f32 %v2744, 1.442695
    %v2746 = vpow.pop %v2745
    %v2747 = vadd.f32 %v2746, 1.0
    %v2748 = vrcp.pop %v2747
    %v2749 = vmul.f32 1.0, %v2748
    %v2750 = vld [vmem:[%s837] sm:$0xf]
    %v2751 = vld [vmem:[%s837 + $0x4] sm:$0xf]
    %v2752 = vld [vmem:[%s837 + $0x8] sm:$0xf]
    %v2753 = vld [vmem:[%s837 + $0xc] sm:$0xf]
    %v2754 = vld [vmem:[%s837 + $0x10] sm:$0xf]
    %v2755 = vld [vmem:[%s837 + $0x14] sm:$0xf]
    %v2756 = vld [vmem:[%s837 + $0x18] sm:$0xf]
    %v2757 = vld [vmem:[%s837 + $0x1c] sm:$0xf]
    %v2758 = vld [vmem:[%s837 + $0x20] sm:$0xf]
    %v2759 = vld [vmem:[%s837 + $0x24] sm:$0xf]
    %v2760 = vld [vmem:[%s837 + $0x28] sm:$0xf]
    %v2761 = vld [vmem:[%s837 + $0x2c] sm:$0xf]
    %v2762 = vld [vmem:[%s837 + $0x30] sm:$0xf]
    %v2763 = vld [vmem:[%s837 + $0x34] sm:$0xf]
    %v2764 = vld [vmem:[%s837 + $0x38] sm:$0xf]
    %v2765 = vld [vmem:[%s837 + $0x3c] sm:$0xf]
    %v2766 = vld [vmem:[%s6 + $0x1] sm:$0x1]
    %v2783 = vunpack.c.l.b16 %v2750
    %v2784 = vunpack.c.l.b16 %v2751
    %v2785 = vunpack.c.l.b16 %v2752
    %v2786 = vunpack.c.l.b16 %v2753
    %v2787 = vunpack.c.l.b16 %v2754
    %v2788 = vunpack.c.l.b16 %v2755
    %v2789 = vunpack.c.l.b16 %v2756
    %v2790 = vunpack.c.l.b16 %v2757
    %v2791 = vunpack.c.l.b16 %v2758
    %v2792 = vunpack.c.l.b16 %v2759
    %v2793 = vunpack.c.l.b16 %v2760
    %v2794 = vunpack.c.l.b16 %v2761
    %v2795 = vunpack.c.l.b16 %v2762
    %v2796 = vunpack.c.l.b16 %v2763
    %v2797 = vunpack.c.l.b16 %v2764
    %v2798 = vunpack.c.l.b16 %v2765
    %v2799 = vpack.c.b16 %v2784, %v2783
    %v2800 = vpack.c.b16 %v2786, %v2785
    %v2801 = vpack.c.b16 %v2788, %v2787
    %v2802 = vpack.c.b16 %v2790, %v2789
    %v2803 = vpack.c.b16 %v2792, %v2791
    %v2804 = vpack.c.b16 %v2794, %v2793
    %v2805 = vpack.c.b16 %v2796, %v2795
    %v2806 = vpack.c.b16 %v2798, %v2797
    %2815 = vmatprep.subr.bf16.mxu0 0
    %2816 = vmatpush1.bf16.msra.mxu0 %v2799
    %2817 = vmatprep.subr.bf16.mxu0 0
    %2818 = vmatpush1.bf16.msra.mxu0 %v2800
    %2819 = vmatprep.subr.bf16.mxu0 0
    %2820 = vmatpush1.bf16.msra.mxu0 %v2801
    %2821 = vmatprep.subr.bf16.mxu0 0
    %2822 = vmatpush1.bf16.msra.mxu0 %v2802
    %2823 = vmatprep.subr.bf16.mxu0 0
    %2824 = vmatpush1.bf16.msra.mxu0 %v2803
    %2825 = vmatprep.subr.bf16.mxu0 0
    %2826 = vmatpush1.bf16.msra.mxu0 %v2804
    %2827 = vmatprep.subr.bf16.mxu0 0
    %2828 = vmatpush1.bf16.msra.mxu0 %v2805
    %2829 = vmatprep.subr.bf16.mxu0 0
    %2830 = vmatpush1.bf16.msra.mxu0 %v2806
    %2831 = vmatprep.subr.bf16.mxu0 0
    %2832 = vmatpush1.bf16.msra.mxu0 0
    %2833 = vmatprep.subr.bf16.mxu0 0
    %2834 = vmatpush1.bf16.msra.mxu0 0
    %2835 = vmatprep.subr.bf16.mxu0 0
    %2836 = vmatpush1.bf16.msra.mxu0 0
    %2837 = vmatprep.subr.bf16.mxu0 0
    %2838 = vmatpush1.bf16.msra.mxu0 0
    %2839 = vmatprep.subr.bf16.mxu0 0
    %2840 = vmatpush1.bf16.msra.mxu0 0
    %2841 = vmatprep.subr.bf16.mxu0 0
    %2842 = vmatpush1.bf16.msra.mxu0 0
    %2843 = vmatprep.subr.bf16.mxu0 0
    %2844 = vmatpush1.bf16.msra.mxu0 0
    %2845 = vmatprep.subr.bf16.mxu0 0
    %2846 = vmatpush1.bf16.msra.mxu0 0
    %2847 = vmatprep.mubr.bf16.mxu0 0
    %2848 = vmatmul.mubr.bf16.gmra.mrb[0].mxu0 %v2491
    %v2849 = vpop.f32.mrb[0].mxu0
    %v2850 = vadd.f32 %v2766, %v2849
    %v2851 = vpop.f32.mrb[0].mxu0
    %v2852 = vpop.f32.mrb[0].mxu0
    %v2853 = vpop.f32.mrb[0].mxu0
    %2854 = vdwg.mxu0
    %v2855 = vld [vmem:[%s943] sm:$0xf]
    %v2856 = vld [vmem:[%s943 + $0x4] sm:$0xf]
    %v2857 = vld [vmem:[%s943 + $0x8] sm:$0xf]
    %v2858 = vld [vmem:[%s943 + $0xc] sm:$0xf]
    %v2859 = vld [vmem:[%s943 + $0x10] sm:$0xf]
    %v2860 = vld [vmem:[%s943 + $0x14] sm:$0xf]
    %v2861 = vld [vmem:[%s943 + $0x18] sm:$0xf]
    %v2862 = vld [vmem:[%s943 + $0x1c] sm:$0xf]
    %v2863 = vld [vmem:[%s943 + $0x20] sm:$0xf]
    %v2864 = vld [vmem:[%s943 + $0x24] sm:$0xf]
    %v2865 = vld [vmem:[%s943 + $0x28] sm:$0xf]
    %v2866 = vld [vmem:[%s943 + $0x2c] sm:$0xf]
    %v2867 = vld [vmem:[%s943 + $0x30] sm:$0xf]
    %v2868 = vld [vmem:[%s943 + $0x34] sm:$0xf]
    %v2869 = vld [vmem:[%s943 + $0x38] sm:$0xf]
    %v2870 = vld [vmem:[%s943 + $0x3c] sm:$0xf]
    %v2871 = vld [vmem:[%s8 + $0x1] sm:$0x1]
    %v2888 = vunpack.c.l.b16 %v2855
    %v2889 = vunpack.c.l.b16 %v2856
    %v2890 = vunpack.c.l.b16 %v2857
    %v2891 = vunpack.c.l.b16 %v2858
    %v2892 = vunpack.c.l.b16 %v2859
    %v2893 = vunpack.c.l.b16 %v2860
    %v2894 = vunpack.c.l.b16 %v2861
    %v2895 = vunpack.c.l.b16 %v2862
    %v2896 = vunpack.c.l.b16 %v2863
    %v2897 = vunpack.c.l.b16 %v2864
    %v2898 = vunpack.c.l.b16 %v2865
    %v2899 = vunpack.c.l.b16 %v2866
    %v2900 = vunpack.c.l.b16 %v2867
    %v2901 = vunpack.c.l.b16 %v2868
    %v2902 = vunpack.c.l.b16 %v2869
    %v2903 = vunpack.c.l.b16 %v2870
    %v2904 = vpack.c.b16 %v2889, %v2888
    %v2905 = vpack.c.b16 %v2891, %v2890
    %v2906 = vpack.c.b16 %v2893, %v2892
    %v2907 = vpack.c.b16 %v2895, %v2894
    %v2908 = vpack.c.b16 %v2897, %v2896
    %v2909 = vpack.c.b16 %v2899, %v2898
    %v2910 = vpack.c.b16 %v2901, %v2900
    %v2911 = vpack.c.b16 %v2903, %v2902
    %2920 = vmatprep.subr.bf16.mxu0 0
    %2921 = vmatpush1.bf16.msra.mxu0 %v2904
    %2922 = vmatprep.subr.bf16.mxu0 0
    %2923 = vmatpush1.bf16.msra.mxu0 %v2905
    %2924 = vmatprep.subr.bf16.mxu0 0
    %2925 = vmatpush1.bf16.msra.mxu0 %v2906
    %2926 = vmatprep.subr.bf16.mxu0 0
    %2927 = vmatpush1.bf16.msra.mxu0 %v2907
    %2928 = vmatprep.subr.bf16.mxu0 0
    %2929 = vmatpush1.bf16.msra.mxu0 %v2908
    %2930 = vmatprep.subr.bf16.mxu0 0
    %2931 = vmatpush1.bf16.msra.mxu0 %v2909
    %2932 = vmatprep.subr.bf16.mxu0 0
    %2933 = vmatpush1.bf16.msra.mxu0 %v2910
    %2934 = vmatprep.subr.bf16.mxu0 0
    %2935 = vmatpush1.bf16.msra.mxu0 %v2911
    %2936 = vmatprep.subr.bf16.mxu0 0
    %2937 = vmatpush1.bf16.msra.mxu0 0
    %2938 = vmatprep.subr.bf16.mxu0 0
    %2939 = vmatpush1.bf16.msra.mxu0 0
    %2940 = vmatprep.subr.bf16.mxu0 0
    %2941 = vmatpush1.bf16.msra.mxu0 0
    %2942 = vmatprep.subr.bf16.mxu0 0
    %2943 = vmatpush1.bf16.msra.mxu0 0
    %2944 = vmatprep.subr.bf16.mxu0 0
    %2945 = vmatpush1.bf16.msra.mxu0 0
    %2946 = vmatprep.subr.bf16.mxu0 0
    %2947 = vmatpush1.bf16.msra.mxu0 0
    %2948 = vmatprep.subr.bf16.mxu0 0
    %2949 = vmatpush1.bf16.msra.mxu0 0
    %2950 = vmatprep.subr.bf16.mxu0 0
    %2951 = vmatpush1.bf16.msra.mxu0 0
    %2952 = vmatprep.mubr.bf16.mxu0 0
    %2953 = vmatmul.mubr.bf16.gmra.mrb[0].mxu0 %v2492
    %v2954 = vpop.f32.mrb[0].mxu0
    %v2955 = vadd.f32 %v2871, %v2954
    %v2956 = vpop.f32.mrb[0].mxu0
    %v2957 = vpop.f32.mrb[0].mxu0
    %v2958 = vpop.f32.mrb[0].mxu0
    %2959 = vdwg.mxu0
    %v2960 = vmul.f32 %v2743, %v2955
    %v2961 = vadd.f32 %v2850, %v2960
    %v2962 = vtanh.pop %v2961
    %v2963 = vsub.f32 1.0, %v2749
    %v2964 = vmul.f32 %v2963, %v2962
    %v2965 = vmul.f32 %v2749, %v2010
    %v2966 = vadd.f32 %v2964, %v2965
    %s2967 = scalar_lea.vmem %s9, 2
    %2968 = vst [vmem:[%s2967] sm:$0x1] %v2966
    %s2969 = sld [smem:[#allocation3 + $0x3]]
    %s2970 = scalar_lea.vmem [#allocation4], %s2969
    %v2971 = vld [vmem:[%s2970] sm:$0x1]
    %v2972 = vpack.c.bf16 %v2971, %v2971
    %v2973 = vld [vmem:[#allocation7] sm:$0xff]
    %v2974 = vld [vmem:[#allocation7 + $0x8] sm:$0xff]
    %v2975 = vld [vmem:[#allocation7 + $0x10] sm:$0xff]
    %v2976 = vld [vmem:[#allocation7 + $0x18] sm:$0xff]
    %v2977 = vld [vmem:[#allocation7 + $0x20] sm:$0xff]
    %v2978 = vld [vmem:[#allocation7 + $0x28] sm:$0xff]
    %v2979 = vld [vmem:[#allocation7 + $0x30] sm:$0xff]
    %v2980 = vld [vmem:[#allocation7 + $0x38] sm:$0xff]
    %v2981 = vld [vmem:[#allocation7 + $0x40] sm:$0xff]
    %v2982 = vld [vmem:[#allocation7 + $0x48] sm:$0xff]
    %v2983 = vld [vmem:[#allocation7 + $0x50] sm:$0xff]
    %v2984 = vld [vmem:[#allocation7 + $0x58] sm:$0xff]
    %v2985 = vld [vmem:[#allocation7 + $0x60] sm:$0xff]
    %v2986 = vld [vmem:[#allocation7 + $0x68] sm:$0xff]
    %v2987 = vld [vmem:[#allocation7 + $0x70] sm:$0xff]
    %v2988 = vld [vmem:[#allocation7 + $0x78] sm:$0xff]
    %v2989 = vld [vmem:[#allocation7 + $0x80] sm:$0xff]
    %v2990 = vld [vmem:[#allocation7 + $0x88] sm:$0xff]
    %v2991 = vld [vmem:[#allocation7 + $0x90] sm:$0xff]
    %v2992 = vld [vmem:[#allocation7 + $0x98] sm:$0xff]
    %v2993 = vld [vmem:[#allocation7 + $0xa0] sm:$0xff]
    %v2994 = vld [vmem:[#allocation7 + $0xa8] sm:$0xff]
    %v2995 = vld [vmem:[#allocation7 + $0xb0] sm:$0xff]
    %v2996 = vld [vmem:[#allocation7 + $0xb8] sm:$0xff]
    %v2997 = vld [vmem:[#allocation7 + $0xc0] sm:$0xff]
    %v2998 = vld [vmem:[#allocation7 + $0xc8] sm:$0xff]
    %v2999 = vld [vmem:[#allocation7 + $0xd0] sm:$0xff]
    %v3000 = vld [vmem:[#allocation7 + $0xd8] sm:$0xff]
    %v3001 = vld [vmem:[#allocation7 + $0xe0] sm:$0xff]
    %v3002 = vld [vmem:[#allocation7 + $0xe8] sm:$0xff]
    %v3003 = vld [vmem:[#allocation7 + $0xf0] sm:$0xff]
    %v3004 = vld [vmem:[#allocation7 + $0xf8] sm:$0xff]
    %v3005 = vld [vmem:[%s4] ss:$2 sm:$0x3]
    %v3038 = vunpack.c.l.b16 %v2973
    %v3039 = vunpack.c.h.b16 %v2973
    %v3040 = vunpack.c.l.b16 %v2974
    %v3041 = vunpack.c.h.b16 %v2974
    %v3042 = vunpack.c.l.b16 %v2975
    %v3043 = vunpack.c.h.b16 %v2975
    %v3044 = vunpack.c.l.b16 %v2976
    %v3045 = vunpack.c.h.b16 %v2976
    %v3046 = vunpack.c.l.b16 %v2977
    %v3047 = vunpack.c.h.b16 %v2977
    %v3048 = vunpack.c.l.b16 %v2978
    %v3049 = vunpack.c.h.b16 %v2978
    %v3050 = vunpack.c.l.b16 %v2979
    %v3051 = vunpack.c.h.b16 %v2979
    %v3052 = vunpack.c.l.b16 %v2980
    %v3053 = vunpack.c.h.b16 %v2980
    %v3054 = vunpack.c.l.b16 %v2981
    %v3055 = vunpack.c.h.b16 %v2981
    %v3056 = vunpack.c.l.b16 %v2982
    %v3057 = vunpack.c.h.b16 %v2982
    %v3058 = vunpack.c.l.b16 %v2983
    %v3059 = vunpack.c.h.b16 %v2983
    %v3060 = vunpack.c.l.b16 %v2984
    %v3061 = vunpack.c.h.b16 %v2984
    %v3062 = vunpack.c.l.b16 %v2985
    %v3063 = vunpack.c.h.b16 %v2985
    %v3064 = vunpack.c.l.b16 %v2986
    %v3065 = vunpack.c.h.b16 %v2986
    %v3066 = vunpack.c.l.b16 %v2987
    %v3067 = vunpack.c.h.b16 %v2987
    %v3068 = vunpack.c.l.b16 %v2988
    %v3069 = vunpack.c.h.b16 %v2988
    %v3070 = vunpack.c.l.b16 %v2989
    %v3071 = vunpack.c.h.b16 %v2989
    %v3072 = vunpack.c.l.b16 %v2990
    %v3073 = vunpack.c.h.b16 %v2990
    %v3074 = vunpack.c.l.b16 %v2991
    %v3075 = vunpack.c.h.b16 %v2991
    %v3076 = vunpack.c.l.b16 %v2992
    %v3077 = vunpack.c.h.b16 %v2992
    %v3078 = vunpack.c.l.b16 %v2993
    %v3079 = vunpack.c.h.b16 %v2993
    %v3080 = vunpack.c.l.b16 %v2994
    %v3081 = vunpack.c.h.b16 %v2994
    %v3082 = vunpack.c.l.b16 %v2995
    %v3083 = vunpack.c.h.b16 %v2995
    %v3084 = vunpack.c.l.b16 %v2996
    %v3085 = vunpack.c.h.b16 %v2996
    %v3086 = vunpack.c.l.b16 %v2997
    %v3087 = vunpack.c.h.b16 %v2997
    %v3088 = vunpack.c.l.b16 %v2998
    %v3089 = vunpack.c.h.b16 %v2998
    %v3090 = vunpack.c.l.b16 %v2999
    %v3091 = vunpack.c.h.b16 %v2999
    %v3092 = vunpack.c.l.b16 %v3000
    %v3093 = vunpack.c.h.b16 %v3000
    %v3094 = vunpack.c.l.b16 %v3001
    %v3095 = vunpack.c.h.b16 %v3001
    %v3096 = vunpack.c.l.b16 %v3002
    %v3097 = vunpack.c.h.b16 %v3002
    %v3098 = vunpack.c.l.b16 %v3003
    %v3099 = vunpack.c.h.b16 %v3003
    %v3100 = vunpack.c.l.b16 %v3004
    %v3101 = vunpack.c.h.b16 %v3004
    %v3102 = vpack.c.b16 %v3040, %v3038
    %v3103 = vpack.c.b16 %v3041, %v3039
    %v3104 = vpack.c.b16 %v3044, %v3042
    %v3105 = vpack.c.b16 %v3045, %v3043
    %v3106 = vpack.c.b16 %v3048, %v3046
    %v3107 = vpack.c.b16 %v3049, %v3047
    %v3108 = vpack.c.b16 %v3052, %v3050
    %v3109 = vpack.c.b16 %v3053, %v3051
    %v3110 = vpack.c.b16 %v3056, %v3054
    %v3111 = vpack.c.b16 %v3057, %v3055
    %v3112 = vpack.c.b16 %v3060, %v3058
    %v3113 = vpack.c.b16 %v3061, %v3059
    %v3114 = vpack.c.b16 %v3064, %v3062
    %v3115 = vpack.c.b16 %v3065, %v3063
    %v3116 = vpack.c.b16 %v3068, %v3066
    %v3117 = vpack.c.b16 %v3069, %v3067
    %v3118 = vpack.c.b16 %v3072, %v3070
    %v3119 = vpack.c.b16 %v3073, %v3071
    %v3120 = vpack.c.b16 %v3076, %v3074
    %v3121 = vpack.c.b16 %v3077, %v3075
    %v3122 = vpack.c.b16 %v3080, %v3078
    %v3123 = vpack.c.b16 %v3081, %v3079
    %v3124 = vpack.c.b16 %v3084, %v3082
    %v3125 = vpack.c.b16 %v3085, %v3083
    %v3126 = vpack.c.b16 %v3088, %v3086
    %v3127 = vpack.c.b16 %v3089, %v3087
    %v3128 = vpack.c.b16 %v3092, %v3090
    %v3129 = vpack.c.b16 %v3093, %v3091
    %v3130 = vpack.c.b16 %v3096, %v3094
    %v3131 = vpack.c.b16 %v3097, %v3095
    %v3132 = vpack.c.b16 %v3100, %v3098
    %v3133 = vpack.c.b16 %v3101, %v3099
    %v3167 = vlaneseq
    %v3168 = vshrl.u32 %v3167, 7
    %v3169 = vsub.s32 0, %v3168
    %v3170 = vrot.slane %v3005, %v3169
    %v3171 = vlaneseq
    %v3172 = vshrl.u32 %v3171, 7
    %v3173 = vsub.s32 1, %v3172
    %v3174 = vrot.slane %v3005, %v3173
    %3177 = vmatprep.subr.bf16.mxu0 %v3103
    %3178 = vmatpush1.bf16.msra.mxu0 %v3102
    %3179 = vmatprep.subr.bf16.mxu0 %v3105
    %3180 = vmatpush1.bf16.msra.mxu0 %v3104
    %3181 = vmatprep.subr.bf16.mxu0 %v3107
    %3182 = vmatpush1.bf16.msra.mxu0 %v3106
    %3183 = vmatprep.subr.bf16.mxu0 %v3109
    %3184 = vmatpush1.bf16.msra.mxu0 %v3108
    %3185 = vmatprep.subr.bf16.mxu0 %v3111
    %3186 = vmatpush1.bf16.msra.mxu0 %v3110
    %3187 = vmatprep.subr.bf16.mxu0 %v3113
    %3188 = vmatpush1.bf16.msra.mxu0 %v3112
    %3189 = vmatprep.subr.bf16.mxu0 %v3115
    %3190 = vmatpush1.bf16.msra.mxu0 %v3114
    %3191 = vmatprep.subr.bf16.mxu0 %v3117
    %3192 = vmatpush1.bf16.msra.mxu0 %v3116
    %3193 = vmatprep.subr.bf16.mxu0 %v3119
    %3194 = vmatpush1.bf16.msra.mxu0 %v3118
    %3195 = vmatprep.subr.bf16.mxu0 %v3121
    %3196 = vmatpush1.bf16.msra.mxu0 %v3120
    %3197 = vmatprep.subr.bf16.mxu0 %v3123
    %3198 = vmatpush1.bf16.msra.mxu0 %v3122
    %3199 = vmatprep.subr.bf16.mxu0 %v3125
    %3200 = vmatpush1.bf16.msra.mxu0 %v3124
    %3201 = vmatprep.subr.bf16.mxu0 %v3127
    %3202 = vmatpush1.bf16.msra.mxu0 %v3126
    %3203 = vmatprep.subr.bf16.mxu0 %v3129
    %3204 = vmatpush1.bf16.msra.mxu0 %v3128
    %3205 = vmatprep.subr.bf16.mxu0 %v3131
    %3206 = vmatpush1.bf16.msra.mxu0 %v3130
    %3207 = vmatprep.subr.bf16.mxu0 %v3133
    %3208 = vmatpush1.bf16.msra.mxu0 %v3132
    %3209 = vmatprep.mubr.bf16.mxu0 %v2491
    %3210 = vmatmul.mubr.bf16.gmra.mrb[0].mxu0 %v2972
    %v3211 = vpop.f32.mrb[0].mxu0
    %v3212 = vadd.f32 %v3170, %v3211
    %v3213 = vpop.f32.mrb[0].mxu0
    %v3214 = vadd.f32 %v3174, %v3213
    %v3215 = vpop.f32.mrb[0].mxu0
    %v3216 = vpop.f32.mrb[0].mxu0
    %3217 = vdwg.mxu0
    %v3218 = vxor.u32 %v3212, 2147483648
    %v3219 = vmul.f32 %v3218, 1.442695
    %v3220 = vpow.pop %v3219
    %v3221 = vadd.f32 %v3220, 1.0
    %v3222 = vrcp.pop %v3221
    %v3223 = vmul.f32 1.0, %v3222
    %v3224 = vxor.u32 %v3214, 2147483648
    %v3225 = vmul.f32 %v3224, 1.442695
    %v3226 = vpow.pop %v3225
    %v3227 = vadd.f32 %v3226, 1.0
    %v3228 = vrcp.pop %v3227
    %v3229 = vmul.f32 1.0, %v3228
    %v3230 = vld [vmem:[#allocation9] sm:$0xf]
    %v3231 = vld [vmem:[#allocation9 + $0x4] sm:$0xf]
    %v3232 = vld [vmem:[#allocation9 + $0x8] sm:$0xf]
    %v3233 = vld [vmem:[#allocation9 + $0xc] sm:$0xf]
    %v3234 = vld [vmem:[#allocation9 + $0x10] sm:$0xf]
    %v3235 = vld [vmem:[#allocation9 + $0x14] sm:$0xf]
    %v3236 = vld [vmem:[#allocation9 + $0x18] sm:$0xf]
    %v3237 = vld [vmem:[#allocation9 + $0x1c] sm:$0xf]
    %v3238 = vld [vmem:[#allocation9 + $0x20] sm:$0xf]
    %v3239 = vld [vmem:[#allocation9 + $0x24] sm:$0xf]
    %v3240 = vld [vmem:[#allocation9 + $0x28] sm:$0xf]
    %v3241 = vld [vmem:[#allocation9 + $0x2c] sm:$0xf]
    %v3242 = vld [vmem:[#allocation9 + $0x30] sm:$0xf]
    %v3243 = vld [vmem:[#allocation9 + $0x34] sm:$0xf]
    %v3244 = vld [vmem:[#allocation9 + $0x38] sm:$0xf]
    %v3245 = vld [vmem:[#allocation9 + $0x3c] sm:$0xf]
    %v3246 = vld [vmem:[%s6] sm:$0x1]
    %v3263 = vunpack.c.l.b16 %v3230
    %v3264 = vunpack.c.l.b16 %v3231
    %v3265 = vunpack.c.l.b16 %v3232
    %v3266 = vunpack.c.l.b16 %v3233
    %v3267 = vunpack.c.l.b16 %v3234
    %v3268 = vunpack.c.l.b16 %v3235
    %v3269 = vunpack.c.l.b16 %v3236
    %v3270 = vunpack.c.l.b16 %v3237
    %v3271 = vunpack.c.l.b16 %v3238
    %v3272 = vunpack.c.l.b16 %v3239
    %v3273 = vunpack.c.l.b16 %v3240
    %v3274 = vunpack.c.l.b16 %v3241
    %v3275 = vunpack.c.l.b16 %v3242
    %v3276 = vunpack.c.l.b16 %v3243
    %v3277 = vunpack.c.l.b16 %v3244
    %v3278 = vunpack.c.l.b16 %v3245
    %v3279 = vpack.c.b16 %v3264, %v3263
    %v3280 = vpack.c.b16 %v3266, %v3265
    %v3281 = vpack.c.b16 %v3268, %v3267
    %v3282 = vpack.c.b16 %v3270, %v3269
    %v3283 = vpack.c.b16 %v3272, %v3271
    %v3284 = vpack.c.b16 %v3274, %v3273
    %v3285 = vpack.c.b16 %v3276, %v3275
    %v3286 = vpack.c.b16 %v3278, %v3277
    %3295 = vmatprep.subr.bf16.mxu0 0
    %3296 = vmatpush1.bf16.msra.mxu0 %v3279
    %3297 = vmatprep.subr.bf16.mxu0 0
    %3298 = vmatpush1.bf16.msra.mxu0 %v3280
    %3299 = vmatprep.subr.bf16.mxu0 0
    %3300 = vmatpush1.bf16.msra.mxu0 %v3281
    %3301 = vmatprep.subr.bf16.mxu0 0
    %3302 = vmatpush1.bf16.msra.mxu0 %v3282
    %3303 = vmatprep.subr.bf16.mxu0 0
    %3304 = vmatpush1.bf16.msra.mxu0 %v3283
    %3305 = vmatprep.subr.bf16.mxu0 0
    %3306 = vmatpush1.bf16.msra.mxu0 %v3284
    %3307 = vmatprep.subr.bf16.mxu0 0
    %3308 = vmatpush1.bf16.msra.mxu0 %v3285
    %3309 = vmatprep.subr.bf16.mxu0 0
    %3310 = vmatpush1.bf16.msra.mxu0 %v3286
    %3311 = vmatprep.subr.bf16.mxu0 0
    %3312 = vmatpush1.bf16.msra.mxu0 0
    %3313 = vmatprep.subr.bf16.mxu0 0
    %3314 = vmatpush1.bf16.msra.mxu0 0
    %3315 = vmatprep.subr.bf16.mxu0 0
    %3316 = vmatpush1.bf16.msra.mxu0 0
    %3317 = vmatprep.subr.bf16.mxu0 0
    %3318 = vmatpush1.bf16.msra.mxu0 0
    %3319 = vmatprep.subr.bf16.mxu0 0
    %3320 = vmatpush1.bf16.msra.mxu0 0
    %3321 = vmatprep.subr.bf16.mxu0 0
    %3322 = vmatpush1.bf16.msra.mxu0 0
    %3323 = vmatprep.subr.bf16.mxu0 0
    %3324 = vmatpush1.bf16.msra.mxu0 0
    %3325 = vmatprep.subr.bf16.mxu0 0
    %3326 = vmatpush1.bf16.msra.mxu0 0
    %3327 = vmatprep.mubr.bf16.mxu0 0
    %3328 = vmatmul.mubr.bf16.gmra.mrb[0].mxu0 %v2972
    %v3329 = vpop.f32.mrb[0].mxu0
    %v3330 = vadd.f32 %v3246, %v3329
    %v3331 = vpop.f32.mrb[0].mxu0
    %v3332 = vpop.f32.mrb[0].mxu0
    %v3333 = vpop.f32.mrb[0].mxu0
    %3334 = vdwg.mxu0
    %v3335 = vld [vmem:[#allocation10] sm:$0xf]
    %v3336 = vld [vmem:[#allocation10 + $0x4] sm:$0xf]
    %v3337 = vld [vmem:[#allocation10 + $0x8] sm:$0xf]
    %v3338 = vld [vmem:[#allocation10 + $0xc] sm:$0xf]
    %v3339 = vld [vmem:[#allocation10 + $0x10] sm:$0xf]
    %v3340 = vld [vmem:[#allocation10 + $0x14] sm:$0xf]
    %v3341 = vld [vmem:[#allocation10 + $0x18] sm:$0xf]
    %v3342 = vld [vmem:[#allocation10 + $0x1c] sm:$0xf]
    %v3343 = vld [vmem:[#allocation10 + $0x20] sm:$0xf]
    %v3344 = vld [vmem:[#allocation10 + $0x24] sm:$0xf]
    %v3345 = vld [vmem:[#allocation10 + $0x28] sm:$0xf]
    %v3346 = vld [vmem:[#allocation10 + $0x2c] sm:$0xf]
    %v3347 = vld [vmem:[#allocation10 + $0x30] sm:$0xf]
    %v3348 = vld [vmem:[#allocation10 + $0x34] sm:$0xf]
    %v3349 = vld [vmem:[#allocation10 + $0x38] sm:$0xf]
    %v3350 = vld [vmem:[#allocation10 + $0x3c] sm:$0xf]
    %v3351 = vld [vmem:[%s8] sm:$0x1]
    %v3368 = vunpack.c.l.b16 %v3335
    %v3369 = vunpack.c.l.b16 %v3336
    %v3370 = vunpack.c.l.b16 %v3337
    %v3371 = vunpack.c.l.b16 %v3338
    %v3372 = vunpack.c.l.b16 %v3339
    %v3373 = vunpack.c.l.b16 %v3340
    %v3374 = vunpack.c.l.b16 %v3341
    %v3375 = vunpack.c.l.b16 %v3342
    %v3376 = vunpack.c.l.b16 %v3343
    %v3377 = vunpack.c.l.b16 %v3344
    %v3378 = vunpack.c.l.b16 %v3345
    %v3379 = vunpack.c.l.b16 %v3346
    %v3380 = vunpack.c.l.b16 %v3347
    %v3381 = vunpack.c.l.b16 %v3348
    %v3382 = vunpack.c.l.b16 %v3349
    %v3383 = vunpack.c.l.b16 %v3350
    %v3384 = vpack.c.b16 %v3369, %v3368
    %v3385 = vpack.c.b16 %v3371, %v3370
    %v3386 = vpack.c.b16 %v3373, %v3372
    %v3387 = vpack.c.b16 %v3375, %v3374
    %v3388 = vpack.c.b16 %v3377, %v3376
    %v3389 = vpack.c.b16 %v3379, %v3378
    %v3390 = vpack.c.b16 %v3381, %v3380
    %v3391 = vpack.c.b16 %v3383, %v3382
    %3400 = vmatprep.subr.bf16.mxu0 0
    %3401 = vmatpush1.bf16.msra.mxu0 %v3384
    %3402 = vmatprep.subr.bf16.mxu0 0
    %3403 = vmatpush1.bf16.msra.mxu0 %v3385
    %3404 = vmatprep.subr.bf16.mxu0 0
    %3405 = vmatpush1.bf16.msra.mxu0 %v3386
    %3406 = vmatprep.subr.bf16.mxu0 0
    %3407 = vmatpush1.bf16.msra.mxu0 %v3387
    %3408 = vmatprep.subr.bf16.mxu0 0
    %3409 = vmatpush1.bf16.msra.mxu0 %v3388
    %3410 = vmatprep.subr.bf16.mxu0 0
    %3411 = vmatpush1.bf16.msra.mxu0 %v3389
    %3412 = vmatprep.subr.bf16.mxu0 0
    %3413 = vmatpush1.bf16.msra.mxu0 %v3390
    %3414 = vmatprep.subr.bf16.mxu0 0
    %3415 = vmatpush1.bf16.msra.mxu0 %v3391
    %3416 = vmatprep.subr.bf16.mxu0 0
    %3417 = vmatpush1.bf16.msra.mxu0 0
    %3418 = vmatprep.subr.bf16.mxu0 0
    %3419 = vmatpush1.bf16.msra.mxu0 0
    %3420 = vmatprep.subr.bf16.mxu0 0
    %3421 = vmatpush1.bf16.msra.mxu0 0
    %3422 = vmatprep.subr.bf16.mxu0 0
    %3423 = vmatpush1.bf16.msra.mxu0 0
    %3424 = vmatprep.subr.bf16.mxu0 0
    %3425 = vmatpush1.bf16.msra.mxu0 0
    %3426 = vmatprep.subr.bf16.mxu0 0
    %3427 = vmatpush1.bf16.msra.mxu0 0
    %3428 = vmatprep.subr.bf16.mxu0 0
    %3429 = vmatpush1.bf16.msra.mxu0 0
    %3430 = vmatprep.subr.bf16.mxu0 0
    %3431 = vmatpush1.bf16.msra.mxu0 0
    %3432 = vmatprep.mubr.bf16.mxu0 0
    %3433 = vmatmul.mubr.bf16.gmra.mrb[0].mxu0 %v2491
    %v3434 = vpop.f32.mrb[0].mxu0
    %v3435 = vadd.f32 %v3351, %v3434
    %v3436 = vpop.f32.mrb[0].mxu0
    %v3437 = vpop.f32.mrb[0].mxu0
    %v3438 = vpop.f32.mrb[0].mxu0
    %3439 = vdwg.mxu0
    %v3440 = vmul.f32 %v3223, %v3435
    %v3441 = vadd.f32 %v3330, %v3440
    %v3442 = vtanh.pop %v3441
    %v3443 = vsub.f32 1.0, %v3229
    %v3444 = vmul.f32 %v3443, %v3442
    %v3445 = vmul.f32 %v3229, %v2490
    %v3446 = vadd.f32 %v3444, %v3445
    %v3447 = vpack.c.bf16 %v3446, %v3446
    %v3448 = vpack.c.bf16 %v2966, %v2966
    %v3449 = vld [vmem:[%s578] sm:$0xff]
    %v3450 = vld [vmem:[%s578 + $0x8] sm:$0xff]
    %v3451 = vld [vmem:[%s578 + $0x10] sm:$0xff]
    %v3452 = vld [vmem:[%s578 + $0x18] sm:$0xff]
    %v3453 = vld [vmem:[%s578 + $0x20] sm:$0xff]
    %v3454 = vld [vmem:[%s578 + $0x28] sm:$0xff]
    %v3455 = vld [vmem:[%s578 + $0x30] sm:$0xff]
    %v3456 = vld [vmem:[%s578 + $0x38] sm:$0xff]
    %v3457 = vld [vmem:[%s578 + $0x40] sm:$0xff]
    %v3458 = vld [vmem:[%s578 + $0x48] sm:$0xff]
    %v3459 = vld [vmem:[%s578 + $0x50] sm:$0xff]
    %v3460 = vld [vmem:[%s578 + $0x58] sm:$0xff]
    %v3461 = vld [vmem:[%s578 + $0x60] sm:$0xff]
    %v3462 = vld [vmem:[%s578 + $0x68] sm:$0xff]
    %v3463 = vld [vmem:[%s578 + $0x70] sm:$0xff]
    %v3464 = vld [vmem:[%s578 + $0x78] sm:$0xff]
    %v3465 = vld [vmem:[%s578 + $0x80] sm:$0xff]
    %v3466 = vld [vmem:[%s578 + $0x88] sm:$0xff]
    %v3467 = vld [vmem:[%s578 + $0x90] sm:$0xff]
    %v3468 = vld [vmem:[%s578 + $0x98] sm:$0xff]
    %v3469 = vld [vmem:[%s578 + $0xa0] sm:$0xff]
    %v3470 = vld [vmem:[%s578 + $0xa8] sm:$0xff]
    %v3471 = vld [vmem:[%s578 + $0xb0] sm:$0xff]
    %v3472 = vld [vmem:[%s578 + $0xb8] sm:$0xff]
    %v3473 = vld [vmem:[%s578 + $0xc0] sm:$0xff]
    %v3474 = vld [vmem:[%s578 + $0xc8] sm:$0xff]
    %v3475 = vld [vmem:[%s578 + $0xd0] sm:$0xff]
    %v3476 = vld [vmem:[%s578 + $0xd8] sm:$0xff]
    %v3477 = vld [vmem:[%s578 + $0xe0] sm:$0xff]
    %v3478 = vld [vmem:[%s578 + $0xe8] sm:$0xff]
    %v3479 = vld [vmem:[%s578 + $0xf0] sm:$0xff]
    %v3480 = vld [vmem:[%s578 + $0xf8] sm:$0xff]
    %v3481 = vld [vmem:[%s611] ss:$2 sm:$0x3]
    %v3514 = vunpack.c.l.b16 %v3449
    %v3515 = vunpack.c.h.b16 %v3449
    %v3516 = vunpack.c.l.b16 %v3450
    %v3517 = vunpack.c.h.b16 %v3450
    %v3518 = vunpack.c.l.b16 %v3451
    %v3519 = vunpack.c.h.b16 %v3451
    %v3520 = vunpack.c.l.b16 %v3452
    %v3521 = vunpack.c.h.b16 %v3452
    %v3522 = vunpack.c.l.b16 %v3453
    %v3523 = vunpack.c.h.b16 %v3453
    %v3524 = vunpack.c.l.b16 %v3454
    %v3525 = vunpack.c.h.b16 %v3454
    %v3526 = vunpack.c.l.b16 %v3455
    %v3527 = vunpack.c.h.b16 %v3455
    %v3528 = vunpack.c.l.b16 %v3456
    %v3529 = vunpack.c.h.b16 %v3456
    %v3530 = vunpack.c.l.b16 %v3457
    %v3531 = vunpack.c.h.b16 %v3457
    %v3532 = vunpack.c.l.b16 %v3458
    %v3533 = vunpack.c.h.b16 %v3458
    %v3534 = vunpack.c.l.b16 %v3459
    %v3535 = vunpack.c.h.b16 %v3459
    %v3536 = vunpack.c.l.b16 %v3460
    %v3537 = vunpack.c.h.b16 %v3460
    %v3538 = vunpack.c.l.b16 %v3461
    %v3539 = vunpack.c.h.b16 %v3461
    %v3540 = vunpack.c.l.b16 %v3462
    %v3541 = vunpack.c.h.b16 %v3462
    %v3542 = vunpack.c.l.b16 %v3463
    %v3543 = vunpack.c.h.b16 %v3463
    %v3544 = vunpack.c.l.b16 %v3464
    %v3545 = vunpack.c.h.b16 %v3464
    %v3546 = vunpack.c.l.b16 %v3465
    %v3547 = vunpack.c.h.b16 %v3465
    %v3548 = vunpack.c.l.b16 %v3466
    %v3549 = vunpack.c.h.b16 %v3466
    %v3550 = vunpack.c.l.b16 %v3467
    %v3551 = vunpack.c.h.b16 %v3467
    %v3552 = vunpack.c.l.b16 %v3468
    %v3553 = vunpack.c.h.b16 %v3468
    %v3554 = vunpack.c.l.b16 %v3469
    %v3555 = vunpack.c.h.b16 %v3469
    %v3556 = vunpack.c.l.b16 %v3470
    %v3557 = vunpack.c.h.b16 %v3470
    %v3558 = vunpack.c.l.b16 %v3471
    %v3559 = vunpack.c.h.b16 %v3471
    %v3560 = vunpack.c.l.b16 %v3472
    %v3561 = vunpack.c.h.b16 %v3472
    %v3562 = vunpack.c.l.b16 %v3473
    %v3563 = vunpack.c.h.b16 %v3473
    %v3564 = vunpack.c.l.b16 %v3474
    %v3565 = vunpack.c.h.b16 %v3474
    %v3566 = vunpack.c.l.b16 %v3475
    %v3567 = vunpack.c.h.b16 %v3475
    %v3568 = vunpack.c.l.b16 %v3476
    %v3569 = vunpack.c.h.b16 %v3476
    %v3570 = vunpack.c.l.b16 %v3477
    %v3571 = vunpack.c.h.b16 %v3477
    %v3572 = vunpack.c.l.b16 %v3478
    %v3573 = vunpack.c.h.b16 %v3478
    %v3574 = vunpack.c.l.b16 %v3479
    %v3575 = vunpack.c.h.b16 %v3479
    %v3576 = vunpack.c.l.b16 %v3480
    %v3577 = vunpack.c.h.b16 %v3480
    %v3578 = vpack.c.b16 %v3516, %v3514
    %v3579 = vpack.c.b16 %v3517, %v3515
    %v3580 = vpack.c.b16 %v3520, %v3518
    %v3581 = vpack.c.b16 %v3521, %v3519
    %v3582 = vpack.c.b16 %v3524, %v3522
    %v3583 = vpack.c.b16 %v3525, %v3523
    %v3584 = vpack.c.b16 %v3528, %v3526
    %v3585 = vpack.c.b16 %v3529, %v3527
    %v3586 = vpack.c.b16 %v3532, %v3530
    %v3587 = vpack.c.b16 %v3533, %v3531
    %v3588 = vpack.c.b16 %v3536, %v3534
    %v3589 = vpack.c.b16 %v3537, %v3535
    %v3590 = vpack.c.b16 %v3540, %v3538
    %v3591 = vpack.c.b16 %v3541, %v3539
    %v3592 = vpack.c.b16 %v3544, %v3542
    %v3593 = vpack.c.b16 %v3545, %v3543
    %v3594 = vpack.c.b16 %v3548, %v3546
    %v3595 = vpack.c.b16 %v3549, %v3547
    %v3596 = vpack.c.b16 %v3552, %v3550
    %v3597 = vpack.c.b16 %v3553, %v3551
    %v3598 = vpack.c.b16 %v3556, %v3554
    %v3599 = vpack.c.b16 %v3557, %v3555
    %v3600 = vpack.c.b16 %v3560, %v3558
    %v3601 = vpack.c.b16 %v3561, %v3559
    %v3602 = vpack.c.b16 %v3564, %v3562
    %v3603 = vpack.c.b16 %v3565, %v3563
    %v3604 = vpack.c.b16 %v3568, %v3566
    %v3605 = vpack.c.b16 %v3569, %v3567
    %v3606 = vpack.c.b16 %v3572, %v3570
    %v3607 = vpack.c.b16 %v3573, %v3571
    %v3608 = vpack.c.b16 %v3576, %v3574
    %v3609 = vpack.c.b16 %v3577, %v3575
    %v3643 = vlaneseq
    %v3644 = vshrl.u32 %v3643, 7
    %v3645 = vsub.s32 0, %v3644
    %v3646 = vrot.slane %v3481, %v3645
    %v3647 = vlaneseq
    %v3648 = vshrl.u32 %v3647, 7
    %v3649 = vsub.s32 1, %v3648
    %v3650 = vrot.slane %v3481, %v3649
    %3653 = vmatprep.subr.bf16.mxu0 %v3579
    %3654 = vmatpush1.bf16.msra.mxu0 %v3578
    %3655 = vmatprep.subr.bf16.mxu0 %v3581
    %3656 = vmatpush1.bf16.msra.mxu0 %v3580
    %3657 = vmatprep.subr.bf16.mxu0 %v3583
    %3658 = vmatpush1.bf16.msra.mxu0 %v3582
    %3659 = vmatprep.subr.bf16.mxu0 %v3585
    %3660 = vmatpush1.bf16.msra.mxu0 %v3584
    %3661 = vmatprep.subr.bf16.mxu0 %v3587
    %3662 = vmatpush1.bf16.msra.mxu0 %v3586
    %3663 = vmatprep.subr.bf16.mxu0 %v3589
    %3664 = vmatpush1.bf16.msra.mxu0 %v3588
    %3665 = vmatprep.subr.bf16.mxu0 %v3591
    %3666 = vmatpush1.bf16.msra.mxu0 %v3590
    %3667 = vmatprep.subr.bf16.mxu0 %v3593
    %3668 = vmatpush1.bf16.msra.mxu0 %v3592
    %3669 = vmatprep.subr.bf16.mxu0 %v3595
    %3670 = vmatpush1.bf16.msra.mxu0 %v3594
    %3671 = vmatprep.subr.bf16.mxu0 %v3597
    %3672 = vmatpush1.bf16.msra.mxu0 %v3596
    %3673 = vmatprep.subr.bf16.mxu0 %v3599
    %3674 = vmatpush1.bf16.msra.mxu0 %v3598
    %3675 = vmatprep.subr.bf16.mxu0 %v3601
    %3676 = vmatpush1.bf16.msra.mxu0 %v3600
    %3677 = vmatprep.subr.bf16.mxu0 %v3603
    %3678 = vmatpush1.bf16.msra.mxu0 %v3602
    %3679 = vmatprep.subr.bf16.mxu0 %v3605
    %3680 = vmatpush1.bf16.msra.mxu0 %v3604
    %3681 = vmatprep.subr.bf16.mxu0 %v3607
    %3682 = vmatpush1.bf16.msra.mxu0 %v3606
    %3683 = vmatprep.subr.bf16.mxu0 %v3609
    %3684 = vmatpush1.bf16.msra.mxu0 %v3608
    %3685 = vmatprep.mubr.bf16.mxu0 %v3448
    %3686 = vmatmul.mubr.bf16.gmra.mrb[0].mxu0 %v3447
    %v3687 = vpop.f32.mrb[0].mxu0
    %v3688 = vadd.f32 %v3646, %v3687
    %v3689 = vpop.f32.mrb[0].mxu0
    %v3690 = vadd.f32 %v3650, %v3689
    %v3691 = vpop.f32.mrb[0].mxu0
    %v3692 = vpop.f32.mrb[0].mxu0
    %3693 = vdwg.mxu0
    %v3694 = vxor.u32 %v3688, 2147483648
    %v3695 = vmul.f32 %v3694, 1.442695
    %v3696 = vpow.pop %v3695
    %v3697 = vadd.f32 %v3696, 1.0
    %v3698 = vrcp.pop %v3697
    %v3699 = vmul.f32 1.0, %v3698
    %v3700 = vxor.u32 %v3690, 2147483648
    %v3701 = vmul.f32 %v3700, 1.442695
    %v3702 = vpow.pop %v3701
    %v3703 = vadd.f32 %v3702, 1.0
    %v3704 = vrcp.pop %v3703
    %v3705 = vmul.f32 1.0, %v3704
    %v3706 = vld [vmem:[%s837] sm:$0xf]
    %v3707 = vld [vmem:[%s837 + $0x4] sm:$0xf]
    %v3708 = vld [vmem:[%s837 + $0x8] sm:$0xf]
    %v3709 = vld [vmem:[%s837 + $0xc] sm:$0xf]
    %v3710 = vld [vmem:[%s837 + $0x10] sm:$0xf]
    %v3711 = vld [vmem:[%s837 + $0x14] sm:$0xf]
    %v3712 = vld [vmem:[%s837 + $0x18] sm:$0xf]
    %v3713 = vld [vmem:[%s837 + $0x1c] sm:$0xf]
    %v3714 = vld [vmem:[%s837 + $0x20] sm:$0xf]
    %v3715 = vld [vmem:[%s837 + $0x24] sm:$0xf]
    %v3716 = vld [vmem:[%s837 + $0x28] sm:$0xf]
    %v3717 = vld [vmem:[%s837 + $0x2c] sm:$0xf]
    %v3718 = vld [vmem:[%s837 + $0x30] sm:$0xf]
    %v3719 = vld [vmem:[%s837 + $0x34] sm:$0xf]
    %v3720 = vld [vmem:[%s837 + $0x38] sm:$0xf]
    %v3721 = vld [vmem:[%s837 + $0x3c] sm:$0xf]
    %v3722 = vld [vmem:[%s6 + $0x1] sm:$0x1]
    %v3739 = vunpack.c.l.b16 %v3706
    %v3740 = vunpack.c.l.b16 %v3707
    %v3741 = vunpack.c.l.b16 %v3708
    %v3742 = vunpack.c.l.b16 %v3709
    %v3743 = vunpack.c.l.b16 %v3710
    %v3744 = vunpack.c.l.b16 %v3711
    %v3745 = vunpack.c.l.b16 %v3712
    %v3746 = vunpack.c.l.b16 %v3713
    %v3747 = vunpack.c.l.b16 %v3714
    %v3748 = vunpack.c.l.b16 %v3715
    %v3749 = vunpack.c.l.b16 %v3716
    %v3750 = vunpack.c.l.b16 %v3717
    %v3751 = vunpack.c.l.b16 %v3718
    %v3752 = vunpack.c.l.b16 %v3719
    %v3753 = vunpack.c.l.b16 %v3720
    %v3754 = vunpack.c.l.b16 %v3721
    %v3755 = vpack.c.b16 %v3740, %v3739
    %v3756 = vpack.c.b16 %v3742, %v3741
    %v3757 = vpack.c.b16 %v3744, %v3743
    %v3758 = vpack.c.b16 %v3746, %v3745
    %v3759 = vpack.c.b16 %v3748, %v3747
    %v3760 = vpack.c.b16 %v3750, %v3749
    %v3761 = vpack.c.b16 %v3752, %v3751
    %v3762 = vpack.c.b16 %v3754, %v3753
    %3771 = vmatprep.subr.bf16.mxu0 0
    %3772 = vmatpush1.bf16.msra.mxu0 %v3755
    %3773 = vmatprep.subr.bf16.mxu0 0
    %3774 = vmatpush1.bf16.msra.mxu0 %v3756
    %3775 = vmatprep.subr.bf16.mxu0 0
    %3776 = vmatpush1.bf16.msra.mxu0 %v3757
    %3777 = vmatprep.subr.bf16.mxu0 0
    %3778 = vmatpush1.bf16.msra.mxu0 %v3758
    %3779 = vmatprep.subr.bf16.mxu0 0
    %3780 = vmatpush1.bf16.msra.mxu0 %v3759
    %3781 = vmatprep.subr.bf16.mxu0 0
    %3782 = vmatpush1.bf16.msra.mxu0 %v3760
    %3783 = vmatprep.subr.bf16.mxu0 0
    %3784 = vmatpush1.bf16.msra.mxu0 %v3761
    %3785 = vmatprep.subr.bf16.mxu0 0
    %3786 = vmatpush1.bf16.msra.mxu0 %v3762
    %3787 = vmatprep.subr.bf16.mxu0 0
    %3788 = vmatpush1.bf16.msra.mxu0 0
    %3789 = vmatprep.subr.bf16.mxu0 0
    %3790 = vmatpush1.bf16.msra.mxu0 0
    %3791 = vmatprep.subr.bf16.mxu0 0
    %3792 = vmatpush1.bf16.msra.mxu0 0
    %3793 = vmatprep.subr.bf16.mxu0 0
    %3794 = vmatpush1.bf16.msra.mxu0 0
    %3795 = vmatprep.subr.bf16.mxu0 0
    %3796 = vmatpush1.bf16.msra.mxu0 0
    %3797 = vmatprep.subr.bf16.mxu0 0
    %3798 = vmatpush1.bf16.msra.mxu0 0
    %3799 = vmatprep.subr.bf16.mxu0 0
    %3800 = vmatpush1.bf16.msra.mxu0 0
    %3801 = vmatprep.subr.bf16.mxu0 0
    %3802 = vmatpush1.bf16.msra.mxu0 0
    %3803 = vmatprep.mubr.bf16.mxu0 0
    %3804 = vmatmul.mubr.bf16.gmra.mrb[0].mxu0 %v3447
    %v3805 = vpop.f32.mrb[0].mxu0
    %v3806 = vadd.f32 %v3722, %v3805
    %v3807 = vpop.f32.mrb[0].mxu0
    %v3808 = vpop.f32.mrb[0].mxu0
    %v3809 = vpop.f32.mrb[0].mxu0
    %3810 = vdwg.mxu0
    %v3811 = vld [vmem:[%s943] sm:$0xf]
    %v3812 = vld [vmem:[%s943 + $0x4] sm:$0xf]
    %v3813 = vld [vmem:[%s943 + $0x8] sm:$0xf]
    %v3814 = vld [vmem:[%s943 + $0xc] sm:$0xf]
    %v3815 = vld [vmem:[%s943 + $0x10] sm:$0xf]
    %v3816 = vld [vmem:[%s943 + $0x14] sm:$0xf]
    %v3817 = vld [vmem:[%s943 + $0x18] sm:$0xf]
    %v3818 = vld [vmem:[%s943 + $0x1c] sm:$0xf]
    %v3819 = vld [vmem:[%s943 + $0x20] sm:$0xf]
    %v3820 = vld [vmem:[%s943 + $0x24] sm:$0xf]
    %v3821 = vld [vmem:[%s943 + $0x28] sm:$0xf]
    %v3822 = vld [vmem:[%s943 + $0x2c] sm:$0xf]
    %v3823 = vld [vmem:[%s943 + $0x30] sm:$0xf]
    %v3824 = vld [vmem:[%s943 + $0x34] sm:$0xf]
    %v3825 = vld [vmem:[%s943 + $0x38] sm:$0xf]
    %v3826 = vld [vmem:[%s943 + $0x3c] sm:$0xf]
    %v3827 = vld [vmem:[%s8 + $0x1] sm:$0x1]
    %v3844 = vunpack.c.l.b16 %v3811
    %v3845 = vunpack.c.l.b16 %v3812
    %v3846 = vunpack.c.l.b16 %v3813
    %v3847 = vunpack.c.l.b16 %v3814
    %v3848 = vunpack.c.l.b16 %v3815
    %v3849 = vunpack.c.l.b16 %v3816
    %v3850 = vunpack.c.l.b16 %v3817
    %v3851 = vunpack.c.l.b16 %v3818
    %v3852 = vunpack.c.l.b16 %v3819
    %v3853 = vunpack.c.l.b16 %v3820
    %v3854 = vunpack.c.l.b16 %v3821
    %v3855 = vunpack.c.l.b16 %v3822
    %v3856 = vunpack.c.l.b16 %v3823
    %v3857 = vunpack.c.l.b16 %v3824
    %v3858 = vunpack.c.l.b16 %v3825
    %v3859 = vunpack.c.l.b16 %v3826
    %v3860 = vpack.c.b16 %v3845, %v3844
    %v3861 = vpack.c.b16 %v3847, %v3846
    %v3862 = vpack.c.b16 %v3849, %v3848
    %v3863 = vpack.c.b16 %v3851, %v3850
    %v3864 = vpack.c.b16 %v3853, %v3852
    %v3865 = vpack.c.b16 %v3855, %v3854
    %v3866 = vpack.c.b16 %v3857, %v3856
    %v3867 = vpack.c.b16 %v3859, %v3858
    %3876 = vmatprep.subr.bf16.mxu0 0
    %3877 = vmatpush1.bf16.msra.mxu0 %v3860
    %3878 = vmatprep.subr.bf16.mxu0 0
    %3879 = vmatpush1.bf16.msra.mxu0 %v3861
    %3880 = vmatprep.subr.bf16.mxu0 0
    %3881 = vmatpush1.bf16.msra.mxu0 %v3862
    %3882 = vmatprep.subr.bf16.mxu0 0
    %3883 = vmatpush1.bf16.msra.mxu0 %v3863
    %3884 = vmatprep.subr.bf16.mxu0 0
    %3885 = vmatpush1.bf16.msra.mxu0 %v3864
    %3886 = vmatprep.subr.bf16.mxu0 0
    %3887 = vmatpush1.bf16.msra.mxu0 %v3865
    %3888 = vmatprep.subr.bf16.mxu0 0
    %3889 = vmatpush1.bf16.msra.mxu0 %v3866
    %3890 = vmatprep.subr.bf16.mxu0 0
    %3891 = vmatpush1.bf16.msra.mxu0 %v3867
    %3892 = vmatprep.subr.bf16.mxu0 0
    %3893 = vmatpush1.bf16.msra.mxu0 0
    %3894 = vmatprep.subr.bf16.mxu0 0
    %3895 = vmatpush1.bf16.msra.mxu0 0
    %3896 = vmatprep.subr.bf16.mxu0 0
    %3897 = vmatpush1.bf16.msra.mxu0 0
    %3898 = vmatprep.subr.bf16.mxu0 0
    %3899 = vmatpush1.bf16.msra.mxu0 0
    %3900 = vmatprep.subr.bf16.mxu0 0
    %3901 = vmatpush1.bf16.msra.mxu0 0
    %3902 = vmatprep.subr.bf16.mxu0 0
    %3903 = vmatpush1.bf16.msra.mxu0 0
    %3904 = vmatprep.subr.bf16.mxu0 0
    %3905 = vmatpush1.bf16.msra.mxu0 0
    %3906 = vmatprep.subr.bf16.mxu0 0
    %3907 = vmatpush1.bf16.msra.mxu0 0
    %3908 = vmatprep.mubr.bf16.mxu0 0
    %3909 = vmatmul.mubr.bf16.gmra.mrb[0].mxu0 %v3448
    %v3910 = vpop.f32.mrb[0].mxu0
    %v3911 = vadd.f32 %v3827, %v3910
    %v3912 = vpop.f32.mrb[0].mxu0
    %v3913 = vpop.f32.mrb[0].mxu0
    %v3914 = vpop.f32.mrb[0].mxu0
    %3915 = vdwg.mxu0
    %v3916 = vmul.f32 %v3699, %v3911
    %v3917 = vadd.f32 %v3806, %v3916
    %v3918 = vtanh.pop %v3917
    %v3919 = vsub.f32 1.0, %v3705
    %v3920 = vmul.f32 %v3919, %v3918
    %v3921 = vmul.f32 %v3705, %v2966
    %v3922 = vadd.f32 %v3920, %v3921
    %s3923 = scalar_lea.vmem %s9, 3
    %3924 = vst [vmem:[%s3923] sm:$0x1] %v3922
    %s3925 = sld [smem:[#allocation3 + $0x4]]
    %s3926 = scalar_lea.vmem [#allocation4], %s3925
    %v3927 = vld [vmem:[%s3926] sm:$0x1]
    %v3928 = vpack.c.bf16 %v3927, %v3927
    %v3929 = vld [vmem:[#allocation7] sm:$0xff]
    %v3930 = vld [vmem:[#allocation7 + $0x8] sm:$0xff]
    %v3931 = vld [vmem:[#allocation7 + $0x10] sm:$0xff]
    %v3932 = vld [vmem:[#allocation7 + $0x18] sm:$0xff]
    %v3933 = vld [vmem:[#allocation7 + $0x20] sm:$0xff]
    %v3934 = vld [vmem:[#allocation7 + $0x28] sm:$0xff]
    %v3935 = vld [vmem:[#allocation7 + $0x30] sm:$0xff]
    %v3936 = vld [vmem:[#allocation7 + $0x38] sm:$0xff]
    %v3937 = vld [vmem:[#allocation7 + $0x40] sm:$0xff]
    %v3938 = vld [vmem:[#allocation7 + $0x48] sm:$0xff]
    %v3939 = vld [vmem:[#allocation7 + $0x50] sm:$0xff]
    %v3940 = vld [vmem:[#allocation7 + $0x58] sm:$0xff]
    %v3941 = vld [vmem:[#allocation7 + $0x60] sm:$0xff]
    %v3942 = vld [vmem:[#allocation7 + $0x68] sm:$0xff]
    %v3943 = vld [vmem:[#allocation7 + $0x70] sm:$0xff]
    %v3944 = vld [vmem:[#allocation7 + $0x78] sm:$0xff]
    %v3945 = vld [vmem:[#allocation7 + $0x80] sm:$0xff]
    %v3946 = vld [vmem:[#allocation7 + $0x88] sm:$0xff]
    %v3947 = vld [vmem:[#allocation7 + $0x90] sm:$0xff]
    %v3948 = vld [vmem:[#allocation7 + $0x98] sm:$0xff]
    %v3949 = vld [vmem:[#allocation7 + $0xa0] sm:$0xff]
    %v3950 = vld [vmem:[#allocation7 + $0xa8] sm:$0xff]
    %v3951 = vld [vmem:[#allocation7 + $0xb0] sm:$0xff]
    %v3952 = vld [vmem:[#allocation7 + $0xb8] sm:$0xff]
    %v3953 = vld [vmem:[#allocation7 + $0xc0] sm:$0xff]
    %v3954 = vld [vmem:[#allocation7 + $0xc8] sm:$0xff]
    %v3955 = vld [vmem:[#allocation7 + $0xd0] sm:$0xff]
    %v3956 = vld [vmem:[#allocation7 + $0xd8] sm:$0xff]
    %v3957 = vld [vmem:[#allocation7 + $0xe0] sm:$0xff]
    %v3958 = vld [vmem:[#allocation7 + $0xe8] sm:$0xff]
    %v3959 = vld [vmem:[#allocation7 + $0xf0] sm:$0xff]
    %v3960 = vld [vmem:[#allocation7 + $0xf8] sm:$0xff]
    %v3961 = vld [vmem:[%s4] ss:$2 sm:$0x3]
    %v3994 = vunpack.c.l.b16 %v3929
    %v3995 = vunpack.c.h.b16 %v3929
    %v3996 = vunpack.c.l.b16 %v3930
    %v3997 = vunpack.c.h.b16 %v3930
    %v3998 = vunpack.c.l.b16 %v3931
    %v3999 = vunpack.c.h.b16 %v3931
    %v4000 = vunpack.c.l.b16 %v3932
    %v4001 = vunpack.c.h.b16 %v3932
    %v4002 = vunpack.c.l.b16 %v3933
    %v4003 = vunpack.c.h.b16 %v3933
    %v4004 = vunpack.c.l.b16 %v3934
    %v4005 = vunpack.c.h.b16 %v3934
    %v4006 = vunpack.c.l.b16 %v3935
    %v4007 = vunpack.c.h.b16 %v3935
    %v4008 = vunpack.c.l.b16 %v3936
    %v4009 = vunpack.c.h.b16 %v3936
    %v4010 = vunpack.c.l.b16 %v3937
    %v4011 = vunpack.c.h.b16 %v3937
    %v4012 = vunpack.c.l.b16 %v3938
    %v4013 = vunpack.c.h.b16 %v3938
    %v4014 = vunpack.c.l.b16 %v3939
    %v4015 = vunpack.c.h.b16 %v3939
    %v4016 = vunpack.c.l.b16 %v3940
    %v4017 = vunpack.c.h.b16 %v3940
    %v4018 = vunpack.c.l.b16 %v3941
    %v4019 = vunpack.c.h.b16 %v3941
    %v4020 = vunpack.c.l.b16 %v3942
    %v4021 = vunpack.c.h.b16 %v3942
    %v4022 = vunpack.c.l.b16 %v3943
    %v4023 = vunpack.c.h.b16 %v3943
    %v4024 = vunpack.c.l.b16 %v3944
    %v4025 = vunpack.c.h.b16 %v3944
    %v4026 = vunpack.c.l.b16 %v3945
    %v4027 = vunpack.c.h.b16 %v3945
    %v4028 = vunpack.c.l.b16 %v3946
    %v4029 = vunpack.c.h.b16 %v3946
    %v4030 = vunpack.c.l.b16 %v3947
    %v4031 = vunpack.c.h.b16 %v3947
    %v4032 = vunpack.c.l.b16 %v3948
    %v4033 = vunpack.c.h.b16 %v3948
    %v4034 = vunpack.c.l.b16 %v3949
    %v4035 = vunpack.c.h.b16 %v3949
    %v4036 = vunpack.c.l.b16 %v3950
    %v4037 = vunpack.c.h.b16 %v3950
    %v4038 = vunpack.c.l.b16 %v3951
    %v4039 = vunpack.c.h.b16 %v3951
    %v4040 = vunpack.c.l.b16 %v3952
    %v4041 = vunpack.c.h.b16 %v3952
    %v4042 = vunpack.c.l.b16 %v3953
    %v4043 = vunpack.c.h.b16 %v3953
    %v4044 = vunpack.c.l.b16 %v3954
    %v4045 = vunpack.c.h.b16 %v3954
    %v4046 = vunpack.c.l.b16 %v3955
    %v4047 = vunpack.c.h.b16 %v3955
    %v4048 = vunpack.c.l.b16 %v3956
    %v4049 = vunpack.c.h.b16 %v3956
    %v4050 = vunpack.c.l.b16 %v3957
    %v4051 = vunpack.c.h.b16 %v3957
    %v4052 = vunpack.c.l.b16 %v3958
    %v4053 = vunpack.c.h.b16 %v3958
    %v4054 = vunpack.c.l.b16 %v3959
    %v4055 = vunpack.c.h.b16 %v3959
    %v4056 = vunpack.c.l.b16 %v3960
    %v4057 = vunpack.c.h.b16 %v3960
    %v4058 = vpack.c.b16 %v3996, %v3994
    %v4059 = vpack.c.b16 %v3997, %v3995
    %v4060 = vpack.c.b16 %v4000, %v3998
    %v4061 = vpack.c.b16 %v4001, %v3999
    %v4062 = vpack.c.b16 %v4004, %v4002
    %v4063 = vpack.c.b16 %v4005, %v4003
    %v4064 = vpack.c.b16 %v4008, %v4006
    %v4065 = vpack.c.b16 %v4009, %v4007
    %v4066 = vpack.c.b16 %v4012, %v4010
    %v4067 = vpack.c.b16 %v4013, %v4011
    %v4068 = vpack.c.b16 %v4016, %v4014
    %v4069 = vpack.c.b16 %v4017, %v4015
    %v4070 = vpack.c.b16 %v4020, %v4018
    %v4071 = vpack.c.b16 %v4021, %v4019
    %v4072 = vpack.c.b16 %v4024, %v4022
    %v4073 = vpack.c.b16 %v4025, %v4023
    %v4074 = vpack.c.b16 %v4028, %v4026
    %v4075 = vpack.c.b16 %v4029, %v4027
    %v4076 = vpack.c.b16 %v4032, %v4030
    %v4077 = vpack.c.b16 %v4033, %v4031
    %v4078 = vpack.c.b16 %v4036, %v4034
    %v4079 = vpack.c.b16 %v4037, %v4035
    %v4080 = vpack.c.b16 %v4040, %v4038
    %v4081 = vpack.c.b16 %v4041, %v4039
    %v4082 = vpack.c.b16 %v4044, %v4042
    %v4083 = vpack.c.b16 %v4045, %v4043
    %v4084 = vpack.c.b16 %v4048, %v4046
    %v4085 = vpack.c.b16 %v4049, %v4047
    %v4086 = vpack.c.b16 %v4052, %v4050
    %v4087 = vpack.c.b16 %v4053, %v4051
    %v4088 = vpack.c.b16 %v4056, %v4054
    %v4089 = vpack.c.b16 %v4057, %v4055
    %v4123 = vlaneseq
    %v4124 = vshrl.u32 %v4123, 7
    %v4125 = vsub.s32 0, %v4124
    %v4126 = vrot.slane %v3961, %v4125
    %v4127 = vlaneseq
    %v4128 = vshrl.u32 %v4127, 7
    %v4129 = vsub.s32 1, %v4128
    %v4130 = vrot.slane %v3961, %v4129
    %4133 = vmatprep.subr.bf16.mxu0 %v4059
    %4134 = vmatpush1.bf16.msra.mxu0 %v4058
    %4135 = vmatprep.subr.bf16.mxu0 %v4061
    %4136 = vmatpush1.bf16.msra.mxu0 %v4060
    %4137 = vmatprep.subr.bf16.mxu0 %v4063
    %4138 = vmatpush1.bf16.msra.mxu0 %v4062
    %4139 = vmatprep.subr.bf16.mxu0 %v4065
    %4140 = vmatpush1.bf16.msra.mxu0 %v4064
    %4141 = vmatprep.subr.bf16.mxu0 %v4067
    %4142 = vmatpush1.bf16.msra.mxu0 %v4066
    %4143 = vmatprep.subr.bf16.mxu0 %v4069
    %4144 = vmatpush1.bf16.msra.mxu0 %v4068
    %4145 = vmatprep.subr.bf16.mxu0 %v4071
    %4146 = vmatpush1.bf16.msra.mxu0 %v4070
    %4147 = vmatprep.subr.bf16.mxu0 %v4073
    %4148 = vmatpush1.bf16.msra.mxu0 %v4072
    %4149 = vmatprep.subr.bf16.mxu0 %v4075
    %4150 = vmatpush1.bf16.msra.mxu0 %v4074
    %4151 = vmatprep.subr.bf16.mxu0 %v4077
    %4152 = vmatpush1.bf16.msra.mxu0 %v4076
    %4153 = vmatprep.subr.bf16.mxu0 %v4079
    %4154 = vmatpush1.bf16.msra.mxu0 %v4078
    %4155 = vmatprep.subr.bf16.mxu0 %v4081
    %4156 = vmatpush1.bf16.msra.mxu0 %v4080
    %4157 = vmatprep.subr.bf16.mxu0 %v4083
    %4158 = vmatpush1.bf16.msra.mxu0 %v4082
    %4159 = vmatprep.subr.bf16.mxu0 %v4085
    %4160 = vmatpush1.bf16.msra.mxu0 %v4084
    %4161 = vmatprep.subr.bf16.mxu0 %v4087
    %4162 = vmatpush1.bf16.msra.mxu0 %v4086
    %4163 = vmatprep.subr.bf16.mxu0 %v4089
    %4164 = vmatpush1.bf16.msra.mxu0 %v4088
    %4165 = vmatprep.mubr.bf16.mxu0 %v3447
    %4166 = vmatmul.mubr.bf16.gmra.mrb[0].mxu0 %v3928
    %v4167 = vpop.f32.mrb[0].mxu0
    %v4168 = vadd.f32 %v4126, %v4167
    %v4169 = vpop.f32.mrb[0].mxu0
    %v4170 = vadd.f32 %v4130, %v4169
    %v4171 = vpop.f32.mrb[0].mxu0
    %v4172 = vpop.f32.mrb[0].mxu0
    %4173 = vdwg.mxu0
    %v4174 = vxor.u32 %v4168, 2147483648
    %v4175 = vmul.f32 %v4174, 1.442695
    %v4176 = vpow.pop %v4175
    %v4177 = vadd.f32 %v4176, 1.0
    %v4178 = vrcp.pop %v4177
    %v4179 = vmul.f32 1.0, %v4178
    %v4180 = vxor.u32 %v4170, 2147483648
    %v4181 = vmul.f32 %v4180, 1.442695
    %v4182 = vpow.pop %v4181
    %v4183 = vadd.f32 %v4182, 1.0
    %v4184 = vrcp.pop %v4183
    %v4185 = vmul.f32 1.0, %v4184
    %v4186 = vld [vmem:[#allocation9] sm:$0xf]
    %v4187 = vld [vmem:[#allocation9 + $0x4] sm:$0xf]
    %v4188 = vld [vmem:[#allocation9 + $0x8] sm:$0xf]
    %v4189 = vld [vmem:[#allocation9 + $0xc] sm:$0xf]
    %v4190 = vld [vmem:[#allocation9 + $0x10] sm:$0xf]
    %v4191 = vld [vmem:[#allocation9 + $0x14] sm:$0xf]
    %v4192 = vld [vmem:[#allocation9 + $0x18] sm:$0xf]
    %v4193 = vld [vmem:[#allocation9 + $0x1c] sm:$0xf]
    %v4194 = vld [vmem:[#allocation9 + $0x20] sm:$0xf]
    %v4195 = vld [vmem:[#allocation9 + $0x24] sm:$0xf]
    %v4196 = vld [vmem:[#allocation9 + $0x28] sm:$0xf]
    %v4197 = vld [vmem:[#allocation9 + $0x2c] sm:$0xf]
    %v4198 = vld [vmem:[#allocation9 + $0x30] sm:$0xf]
    %v4199 = vld [vmem:[#allocation9 + $0x34] sm:$0xf]
    %v4200 = vld [vmem:[#allocation9 + $0x38] sm:$0xf]
    %v4201 = vld [vmem:[#allocation9 + $0x3c] sm:$0xf]
    %v4202 = vld [vmem:[%s6] sm:$0x1]
    %v4219 = vunpack.c.l.b16 %v4186
    %v4220 = vunpack.c.l.b16 %v4187
    %v4221 = vunpack.c.l.b16 %v4188
    %v4222 = vunpack.c.l.b16 %v4189
    %v4223 = vunpack.c.l.b16 %v4190
    %v4224 = vunpack.c.l.b16 %v4191
    %v4225 = vunpack.c.l.b16 %v4192
    %v4226 = vunpack.c.l.b16 %v4193
    %v4227 = vunpack.c.l.b16 %v4194
    %v4228 = vunpack.c.l.b16 %v4195
    %v4229 = vunpack.c.l.b16 %v4196
    %v4230 = vunpack.c.l.b16 %v4197
    %v4231 = vunpack.c.l.b16 %v4198
    %v4232 = vunpack.c.l.b16 %v4199
    %v4233 = vunpack.c.l.b16 %v4200
    %v4234 = vunpack.c.l.b16 %v4201
    %v4235 = vpack.c.b16 %v4220, %v4219
    %v4236 = vpack.c.b16 %v4222, %v4221
    %v4237 = vpack.c.b16 %v4224, %v4223
    %v4238 = vpack.c.b16 %v4226, %v4225
    %v4239 = vpack.c.b16 %v4228, %v4227
    %v4240 = vpack.c.b16 %v4230, %v4229
    %v4241 = vpack.c.b16 %v4232, %v4231
    %v4242 = vpack.c.b16 %v4234, %v4233
    %4251 = vmatprep.subr.bf16.mxu0 0
    %4252 = vmatpush1.bf16.msra.mxu0 %v4235
    %4253 = vmatprep.subr.bf16.mxu0 0
    %4254 = vmatpush1.bf16.msra.mxu0 %v4236
    %4255 = vmatprep.subr.bf16.mxu0 0
    %4256 = vmatpush1.bf16.msra.mxu0 %v4237
    %4257 = vmatprep.subr.bf16.mxu0 0
    %4258 = vmatpush1.bf16.msra.mxu0 %v4238
    %4259 = vmatprep.subr.bf16.mxu0 0
    %4260 = vmatpush1.bf16.msra.mxu0 %v4239
    %4261 = vmatprep.subr.bf16.mxu0 0
    %4262 = vmatpush1.bf16.msra.mxu0 %v4240
    %4263 = vmatprep.subr.bf16.mxu0 0
    %4264 = vmatpush1.bf16.msra.mxu0 %v4241
    %4265 = vmatprep.subr.bf16.mxu0 0
    %4266 = vmatpush1.bf16.msra.mxu0 %v4242
    %4267 = vmatprep.subr.bf16.mxu0 0
    %4268 = vmatpush1.bf16.msra.mxu0 0
    %4269 = vmatprep.subr.bf16.mxu0 0
    %4270 = vmatpush1.bf16.msra.mxu0 0
    %4271 = vmatprep.subr.bf16.mxu0 0
    %4272 = vmatpush1.bf16.msra.mxu0 0
    %4273 = vmatprep.subr.bf16.mxu0 0
    %4274 = vmatpush1.bf16.msra.mxu0 0
    %4275 = vmatprep.subr.bf16.mxu0 0
    %4276 = vmatpush1.bf16.msra.mxu0 0
    %4277 = vmatprep.subr.bf16.mxu0 0
    %4278 = vmatpush1.bf16.msra.mxu0 0
    %4279 = vmatprep.subr.bf16.mxu0 0
    %4280 = vmatpush1.bf16.msra.mxu0 0
    %4281 = vmatprep.subr.bf16.mxu0 0
    %4282 = vmatpush1.bf16.msra.mxu0 0
    %4283 = vmatprep.mubr.bf16.mxu0 0
    %4284 = vmatmul.mubr.bf16.gmra.mrb[0].mxu0 %v3928
    %v4285 = vpop.f32.mrb[0].mxu0
    %v4286 = vadd.f32 %v4202, %v4285
    %v4287 = vpop.f32.mrb[0].mxu0
    %v4288 = vpop.f32.mrb[0].mxu0
    %v4289 = vpop.f32.mrb[0].mxu0
    %4290 = vdwg.mxu0
    %v4291 = vld [vmem:[#allocation10] sm:$0xf]
    %v4292 = vld [vmem:[#allocation10 + $0x4] sm:$0xf]
    %v4293 = vld [vmem:[#allocation10 + $0x8] sm:$0xf]
    %v4294 = vld [vmem:[#allocation10 + $0xc] sm:$0xf]
    %v4295 = vld [vmem:[#allocation10 + $0x10] sm:$0xf]
    %v4296 = vld [vmem:[#allocation10 + $0x14] sm:$0xf]
    %v4297 = vld [vmem:[#allocation10 + $0x18] sm:$0xf]
    %v4298 = vld [vmem:[#allocation10 + $0x1c] sm:$0xf]
    %v4299 = vld [vmem:[#allocation10 + $0x20] sm:$0xf]
    %v4300 = vld [vmem:[#allocation10 + $0x24] sm:$0xf]
    %v4301 = vld [vmem:[#allocation10 + $0x28] sm:$0xf]
    %v4302 = vld [vmem:[#allocation10 + $0x2c] sm:$0xf]
    %v4303 = vld [vmem:[#allocation10 + $0x30] sm:$0xf]
    %v4304 = vld [vmem:[#allocation10 + $0x34] sm:$0xf]
    %v4305 = vld [vmem:[#allocation10 + $0x38] sm:$0xf]
    %v4306 = vld [vmem:[#allocation10 + $0x3c] sm:$0xf]
    %v4307 = vld [vmem:[%s8] sm:$0x1]
    %v4324 = vunpack.c.l.b16 %v4291
    %v4325 = vunpack.c.l.b16 %v4292
    %v4326 = vunpack.c.l.b16 %v4293
    %v4327 = vunpack.c.l.b16 %v4294
    %v4328 = vunpack.c.l.b16 %v4295
    %v4329 = vunpack.c.l.b16 %v4296
    %v4330 = vunpack.c.l.b16 %v4297
    %v4331 = vunpack.c.l.b16 %v4298
    %v4332 = vunpack.c.l.b16 %v4299
    %v4333 = vunpack.c.l.b16 %v4300
    %v4334 = vunpack.c.l.b16 %v4301
    %v4335 = vunpack.c.l.b16 %v4302
    %v4336 = vunpack.c.l.b16 %v4303
    %v4337 = vunpack.c.l.b16 %v4304
    %v4338 = vunpack.c.l.b16 %v4305
    %v4339 = vunpack.c.l.b16 %v4306
    %v4340 = vpack.c.b16 %v4325, %v4324
    %v4341 = vpack.c.b16 %v4327, %v4326
    %v4342 = vpack.c.b16 %v4329, %v4328
    %v4343 = vpack.c.b16 %v4331, %v4330
    %v4344 = vpack.c.b16 %v4333, %v4332
    %v4345 = vpack.c.b16 %v4335, %v4334
    %v4346 = vpack.c.b16 %v4337, %v4336
    %v4347 = vpack.c.b16 %v4339, %v4338
    %4356 = vmatprep.subr.bf16.mxu0 0
    %4357 = vmatpush1.bf16.msra.mxu0 %v4340
    %4358 = vmatprep.subr.bf16.mxu0 0
    %4359 = vmatpush1.bf16.msra.mxu0 %v4341
    %4360 = vmatprep.subr.bf16.mxu0 0
    %4361 = vmatpush1.bf16.msra.mxu0 %v4342
    %4362 = vmatprep.subr.bf16.mxu0 0
    %4363 = vmatpush1.bf16.msra.mxu0 %v4343
    %4364 = vmatprep.subr.bf16.mxu0 0
    %4365 = vmatpush1.bf16.msra.mxu0 %v4344
    %4366 = vmatprep.subr.bf16.mxu0 0
    %4367 = vmatpush1.bf16.msra.mxu0 %v4345
    %4368 = vmatprep.subr.bf16.mxu0 0
    %4369 = vmatpush1.bf16.msra.mxu0 %v4346
    %4370 = vmatprep.subr.bf16.mxu0 0
    %4371 = vmatpush1.bf16.msra.mxu0 %v4347
    %4372 = vmatprep.subr.bf16.mxu0 0
    %4373 = vmatpush1.bf16.msra.mxu0 0
    %4374 = vmatprep.subr.bf16.mxu0 0
    %4375 = vmatpush1.bf16.msra.mxu0 0
    %4376 = vmatprep.subr.bf16.mxu0 0
    %4377 = vmatpush1.bf16.msra.mxu0 0
    %4378 = vmatprep.subr.bf16.mxu0 0
    %4379 = vmatpush1.bf16.msra.mxu0 0
    %4380 = vmatprep.subr.bf16.mxu0 0
    %4381 = vmatpush1.bf16.msra.mxu0 0
    %4382 = vmatprep.subr.bf16.mxu0 0
    %4383 = vmatpush1.bf16.msra.mxu0 0
    %4384 = vmatprep.subr.bf16.mxu0 0
    %4385 = vmatpush1.bf16.msra.mxu0 0
    %4386 = vmatprep.subr.bf16.mxu0 0
    %4387 = vmatpush1.bf16.msra.mxu0 0
    %4388 = vmatprep.mubr.bf16.mxu0 0
    %4389 = vmatmul.mubr.bf16.gmra.mrb[0].mxu0 %v3447
    %v4390 = vpop.f32.mrb[0].mxu0
    %v4391 = vadd.f32 %v4307, %v4390
    %v4392 = vpop.f32.mrb[0].mxu0
    %v4393 = vpop.f32.mrb[0].mxu0
    %v4394 = vpop.f32.mrb[0].mxu0
    %4395 = vdwg.mxu0
    %v4396 = vmul.f32 %v4179, %v4391
    %v4397 = vadd.f32 %v4286, %v4396
    %v4398 = vtanh.pop %v4397
    %v4399 = vsub.f32 1.0, %v4185
    %v4400 = vmul.f32 %v4399, %v4398
    %v4401 = vmul.f32 %v4185, %v3446
    %v4402 = vadd.f32 %v4400, %v4401
    %v4403 = vpack.c.bf16 %v4402, %v4402
    %v4404 = vpack.c.bf16 %v3922, %v3922
    %v4405 = vld [vmem:[%s578] sm:$0xff]
    %v4406 = vld [vmem:[%s578 + $0x8] sm:$0xff]
    %v4407 = vld [vmem:[%s578 + $0x10] sm:$0xff]
    %v4408 = vld [vmem:[%s578 + $0x18] sm:$0xff]
    %v4409 = vld [vmem:[%s578 + $0x20] sm:$0xff]
    %v4410 = vld [vmem:[%s578 + $0x28] sm:$0xff]
    %v4411 = vld [vmem:[%s578 + $0x30] sm:$0xff]
    %v4412 = vld [vmem:[%s578 + $0x38] sm:$0xff]
    %v4413 = vld [vmem:[%s578 + $0x40] sm:$0xff]
    %v4414 = vld [vmem:[%s578 + $0x48] sm:$0xff]
    %v4415 = vld [vmem:[%s578 + $0x50] sm:$0xff]
    %v4416 = vld [vmem:[%s578 + $0x58] sm:$0xff]
    %v4417 = vld [vmem:[%s578 + $0x60] sm:$0xff]
    %v4418 = vld [vmem:[%s578 + $0x68] sm:$0xff]
    %v4419 = vld [vmem:[%s578 + $0x70] sm:$0xff]
    %v4420 = vld [vmem:[%s578 + $0x78] sm:$0xff]
    %v4421 = vld [vmem:[%s578 + $0x80] sm:$0xff]
    %v4422 = vld [vmem:[%s578 + $0x88] sm:$0xff]
    %v4423 = vld [vmem:[%s578 + $0x90] sm:$0xff]
    %v4424 = vld [vmem:[%s578 + $0x98] sm:$0xff]
    %v4425 = vld [vmem:[%s578 + $0xa0] sm:$0xff]
    %v4426 = vld [vmem:[%s578 + $0xa8] sm:$0xff]
    %v4427 = vld [vmem:[%s578 + $0xb0] sm:$0xff]
    %v4428 = vld [vmem:[%s578 + $0xb8] sm:$0xff]
    %v4429 = vld [vmem:[%s578 + $0xc0] sm:$0xff]
    %v4430 = vld [vmem:[%s578 + $0xc8] sm:$0xff]
    %v4431 = vld [vmem:[%s578 + $0xd0] sm:$0xff]
    %v4432 = vld [vmem:[%s578 + $0xd8] sm:$0xff]
    %v4433 = vld [vmem:[%s578 + $0xe0] sm:$0xff]
    %v4434 = vld [vmem:[%s578 + $0xe8] sm:$0xff]
    %v4435 = vld [vmem:[%s578 + $0xf0] sm:$0xff]
    %v4436 = vld [vmem:[%s578 + $0xf8] sm:$0xff]
    %v4437 = vld [vmem:[%s611] ss:$2 sm:$0x3]
    %v4470 = vunpack.c.l.b16 %v4405
    %v4471 = vunpack.c.h.b16 %v4405
    %v4472 = vunpack.c.l.b16 %v4406
    %v4473 = vunpack.c.h.b16 %v4406
    %v4474 = vunpack.c.l.b16 %v4407
    %v4475 = vunpack.c.h.b16 %v4407
    %v4476 = vunpack.c.l.b16 %v4408
    %v4477 = vunpack.c.h.b16 %v4408
    %v4478 = vunpack.c.l.b16 %v4409
    %v4479 = vunpack.c.h.b16 %v4409
    %v4480 = vunpack.c.l.b16 %v4410
    %v4481 = vunpack.c.h.b16 %v4410
    %v4482 = vunpack.c.l.b16 %v4411
    %v4483 = vunpack.c.h.b16 %v4411
    %v4484 = vunpack.c.l.b16 %v4412
    %v4485 = vunpack.c.h.b16 %v4412
    %v4486 = vunpack.c.l.b16 %v4413
    %v4487 = vunpack.c.h.b16 %v4413
    %v4488 = vunpack.c.l.b16 %v4414
    %v4489 = vunpack.c.h.b16 %v4414
    %v4490 = vunpack.c.l.b16 %v4415
    %v4491 = vunpack.c.h.b16 %v4415
    %v4492 = vunpack.c.l.b16 %v4416
    %v4493 = vunpack.c.h.b16 %v4416
    %v4494 = vunpack.c.l.b16 %v4417
    %v4495 = vunpack.c.h.b16 %v4417
    %v4496 = vunpack.c.l.b16 %v4418
    %v4497 = vunpack.c.h.b16 %v4418
    %v4498 = vunpack.c.l.b16 %v4419
    %v4499 = vunpack.c.h.b16 %v4419
    %v4500 = vunpack.c.l.b16 %v4420
    %v4501 = vunpack.c.h.b16 %v4420
    %v4502 = vunpack.c.l.b16 %v4421
    %v4503 = vunpack.c.h.b16 %v4421
    %v4504 = vunpack.c.l.b16 %v4422
    %v4505 = vunpack.c.h.b16 %v4422
    %v4506 = vunpack.c.l.b16 %v4423
    %v4507 = vunpack.c.h.b16 %v4423
    %v4508 = vunpack.c.l.b16 %v4424
    %v4509 = vunpack.c.h.b16 %v4424
    %v4510 = vunpack.c.l.b16 %v4425
    %v4511 = vunpack.c.h.b16 %v4425
    %v4512 = vunpack.c.l.b16 %v4426
    %v4513 = vunpack.c.h.b16 %v4426
    %v4514 = vunpack.c.l.b16 %v4427
    %v4515 = vunpack.c.h.b16 %v4427
    %v4516 = vunpack.c.l.b16 %v4428
    %v4517 = vunpack.c.h.b16 %v4428
    %v4518 = vunpack.c.l.b16 %v4429
    %v4519 = vunpack.c.h.b16 %v4429
    %v4520 = vunpack.c.l.b16 %v4430
    %v4521 = vunpack.c.h.b16 %v4430
    %v4522 = vunpack.c.l.b16 %v4431
    %v4523 = vunpack.c.h.b16 %v4431
    %v4524 = vunpack.c.l.b16 %v4432
    %v4525 = vunpack.c.h.b16 %v4432
    %v4526 = vunpack.c.l.b16 %v4433
    %v4527 = vunpack.c.h.b16 %v4433
    %v4528 = vunpack.c.l.b16 %v4434
    %v4529 = vunpack.c.h.b16 %v4434
    %v4530 = vunpack.c.l.b16 %v4435
    %v4531 = vunpack.c.h.b16 %v4435
    %v4532 = vunpack.c.l.b16 %v4436
    %v4533 = vunpack.c.h.b16 %v4436
    %v4534 = vpack.c.b16 %v4472, %v4470
    %v4535 = vpack.c.b16 %v4473, %v4471
    %v4536 = vpack.c.b16 %v4476, %v4474
    %v4537 = vpack.c.b16 %v4477, %v4475
    %v4538 = vpack.c.b16 %v4480, %v4478
    %v4539 = vpack.c.b16 %v4481, %v4479
    %v4540 = vpack.c.b16 %v4484, %v4482
    %v4541 = vpack.c.b16 %v4485, %v4483
    %v4542 = vpack.c.b16 %v4488, %v4486
    %v4543 = vpack.c.b16 %v4489, %v4487
    %v4544 = vpack.c.b16 %v4492, %v4490
    %v4545 = vpack.c.b16 %v4493, %v4491
    %v4546 = vpack.c.b16 %v4496, %v4494
    %v4547 = vpack.c.b16 %v4497, %v4495
    %v4548 = vpack.c.b16 %v4500, %v4498
    %v4549 = vpack.c.b16 %v4501, %v4499
    %v4550 = vpack.c.b16 %v4504, %v4502
    %v4551 = vpack.c.b16 %v4505, %v4503
    %v4552 = vpack.c.b16 %v4508, %v4506
    %v4553 = vpack.c.b16 %v4509, %v4507
    %v4554 = vpack.c.b16 %v4512, %v4510
    %v4555 = vpack.c.b16 %v4513, %v4511
    %v4556 = vpack.c.b16 %v4516, %v4514
    %v4557 = vpack.c.b16 %v4517, %v4515
    %v4558 = vpack.c.b16 %v4520, %v4518
    %v4559 = vpack.c.b16 %v4521, %v4519
    %v4560 = vpack.c.b16 %v4524, %v4522
    %v4561 = vpack.c.b16 %v4525, %v4523
    %v4562 = vpack.c.b16 %v4528, %v4526
    %v4563 = vpack.c.b16 %v4529, %v4527
    %v4564 = vpack.c.b16 %v4532, %v4530
    %v4565 = vpack.c.b16 %v4533, %v4531
    %v4599 = vlaneseq
    %v4600 = vshrl.u32 %v4599, 7
    %v4601 = vsub.s32 0, %v4600
    %v4602 = vrot.slane %v4437, %v4601
    %v4603 = vlaneseq
    %v4604 = vshrl.u32 %v4603, 7
    %v4605 = vsub.s32 1, %v4604
    %v4606 = vrot.slane %v4437, %v4605
    %4609 = vmatprep.subr.bf16.mxu0 %v4535
    %4610 = vmatpush1.bf16.msra.mxu0 %v4534
    %4611 = vmatprep.subr.bf16.mxu0 %v4537
    %4612 = vmatpush1.bf16.msra.mxu0 %v4536
    %4613 = vmatprep.subr.bf16.mxu0 %v4539
    %4614 = vmatpush1.bf16.msra.mxu0 %v4538
    %4615 = vmatprep.subr.bf16.mxu0 %v4541
    %4616 = vmatpush1.bf16.msra.mxu0 %v4540
    %4617 = vmatprep.subr.bf16.mxu0 %v4543
    %4618 = vmatpush1.bf16.msra.mxu0 %v4542
    %4619 = vmatprep.subr.bf16.mxu0 %v4545
    %4620 = vmatpush1.bf16.msra.mxu0 %v4544
    %4621 = vmatprep.subr.bf16.mxu0 %v4547
    %4622 = vmatpush1.bf16.msra.mxu0 %v4546
    %4623 = vmatprep.subr.bf16.mxu0 %v4549
    %4624 = vmatpush1.bf16.msra.mxu0 %v4548
    %4625 = vmatprep.subr.bf16.mxu0 %v4551
    %4626 = vmatpush1.bf16.msra.mxu0 %v4550
    %4627 = vmatprep.subr.bf16.mxu0 %v4553
    %4628 = vmatpush1.bf16.msra.mxu0 %v4552
    %4629 = vmatprep.subr.bf16.mxu0 %v4555
    %4630 = vmatpush1.bf16.msra.mxu0 %v4554
    %4631 = vmatprep.subr.bf16.mxu0 %v4557
    %4632 = vmatpush1.bf16.msra.mxu0 %v4556
    %4633 = vmatprep.subr.bf16.mxu0 %v4559
    %4634 = vmatpush1.bf16.msra.mxu0 %v4558
    %4635 = vmatprep.subr.bf16.mxu0 %v4561
    %4636 = vmatpush1.bf16.msra.mxu0 %v4560
    %4637 = vmatprep.subr.bf16.mxu0 %v4563
    %4638 = vmatpush1.bf16.msra.mxu0 %v4562
    %4639 = vmatprep.subr.bf16.mxu0 %v4565
    %4640 = vmatpush1.bf16.msra.mxu0 %v4564
    %4641 = vmatprep.mubr.bf16.mxu0 %v4404
    %4642 = vmatmul.mubr.bf16.gmra.mrb[0].mxu0 %v4403
    %v4643 = vpop.f32.mrb[0].mxu0
    %v4644 = vadd.f32 %v4602, %v4643
    %v4645 = vpop.f32.mrb[0].mxu0
    %v4646 = vadd.f32 %v4606, %v4645
    %v4647 = vpop.f32.mrb[0].mxu0
    %v4648 = vpop.f32.mrb[0].mxu0
    %4649 = vdwg.mxu0
    %v4650 = vxor.u32 %v4644, 2147483648
    %v4651 = vmul.f32 %v4650, 1.442695
    %v4652 = vpow.pop %v4651
    %v4653 = vadd.f32 %v4652, 1.0
    %v4654 = vrcp.pop %v4653
    %v4655 = vmul.f32 1.0, %v4654
    %v4656 = vxor.u32 %v4646, 2147483648
    %v4657 = vmul.f32 %v4656, 1.442695
    %v4658 = vpow.pop %v4657
    %v4659 = vadd.f32 %v4658, 1.0
    %v4660 = vrcp.pop %v4659
    %v4661 = vmul.f32 1.0, %v4660
    %v4662 = vld [vmem:[%s837] sm:$0xf]
    %v4663 = vld [vmem:[%s837 + $0x4] sm:$0xf]
    %v4664 = vld [vmem:[%s837 + $0x8] sm:$0xf]
    %v4665 = vld [vmem:[%s837 + $0xc] sm:$0xf]
    %v4666 = vld [vmem:[%s837 + $0x10] sm:$0xf]
    %v4667 = vld [vmem:[%s837 + $0x14] sm:$0xf]
    %v4668 = vld [vmem:[%s837 + $0x18] sm:$0xf]
    %v4669 = vld [vmem:[%s837 + $0x1c] sm:$0xf]
    %v4670 = vld [vmem:[%s837 + $0x20] sm:$0xf]
    %v4671 = vld [vmem:[%s837 + $0x24] sm:$0xf]
    %v4672 = vld [vmem:[%s837 + $0x28] sm:$0xf]
    %v4673 = vld [vmem:[%s837 + $0x2c] sm:$0xf]
    %v4674 = vld [vmem:[%s837 + $0x30] sm:$0xf]
    %v4675 = vld [vmem:[%s837 + $0x34] sm:$0xf]
    %v4676 = vld [vmem:[%s837 + $0x38] sm:$0xf]
    %v4677 = vld [vmem:[%s837 + $0x3c] sm:$0xf]
    %v4678 = vld [vmem:[%s6 + $0x1] sm:$0x1]
    %v4695 = vunpack.c.l.b16 %v4662
    %v4696 = vunpack.c.l.b16 %v4663
    %v4697 = vunpack.c.l.b16 %v4664
    %v4698 = vunpack.c.l.b16 %v4665
    %v4699 = vunpack.c.l.b16 %v4666
    %v4700 = vunpack.c.l.b16 %v4667
    %v4701 = vunpack.c.l.b16 %v4668
    %v4702 = vunpack.c.l.b16 %v4669
    %v4703 = vunpack.c.l.b16 %v4670
    %v4704 = vunpack.c.l.b16 %v4671
    %v4705 = vunpack.c.l.b16 %v4672
    %v4706 = vunpack.c.l.b16 %v4673
    %v4707 = vunpack.c.l.b16 %v4674
    %v4708 = vunpack.c.l.b16 %v4675
    %v4709 = vunpack.c.l.b16 %v4676
    %v4710 = vunpack.c.l.b16 %v4677
    %v4711 = vpack.c.b16 %v4696, %v4695
    %v4712 = vpack.c.b16 %v4698, %v4697
    %v4713 = vpack.c.b16 %v4700, %v4699
    %v4714 = vpack.c.b16 %v4702, %v4701
    %v4715 = vpack.c.b16 %v4704, %v4703
    %v4716 = vpack.c.b16 %v4706, %v4705
    %v4717 = vpack.c.b16 %v4708, %v4707
    %v4718 = vpack.c.b16 %v4710, %v4709
    %4727 = vmatprep.subr.bf16.mxu0 0
    %4728 = vmatpush1.bf16.msra.mxu0 %v4711
    %4729 = vmatprep.subr.bf16.mxu0 0
    %4730 = vmatpush1.bf16.msra.mxu0 %v4712
    %4731 = vmatprep.subr.bf16.mxu0 0
    %4732 = vmatpush1.bf16.msra.mxu0 %v4713
    %4733 = vmatprep.subr.bf16.mxu0 0
    %4734 = vmatpush1.bf16.msra.mxu0 %v4714
    %4735 = vmatprep.subr.bf16.mxu0 0
    %4736 = vmatpush1.bf16.msra.mxu0 %v4715
    %4737 = vmatprep.subr.bf16.mxu0 0
    %4738 = vmatpush1.bf16.msra.mxu0 %v4716
    %4739 = vmatprep.subr.bf16.mxu0 0
    %4740 = vmatpush1.bf16.msra.mxu0 %v4717
    %4741 = vmatprep.subr.bf16.mxu0 0
    %4742 = vmatpush1.bf16.msra.mxu0 %v4718
    %4743 = vmatprep.subr.bf16.mxu0 0
    %4744 = vmatpush1.bf16.msra.mxu0 0
    %4745 = vmatprep.subr.bf16.mxu0 0
    %4746 = vmatpush1.bf16.msra.mxu0 0
    %4747 = vmatprep.subr.bf16.mxu0 0
    %4748 = vmatpush1.bf16.msra.mxu0 0
    %4749 = vmatprep.subr.bf16.mxu0 0
    %4750 = vmatpush1.bf16.msra.mxu0 0
    %4751 = vmatprep.subr.bf16.mxu0 0
    %4752 = vmatpush1.bf16.msra.mxu0 0
    %4753 = vmatprep.subr.bf16.mxu0 0
    %4754 = vmatpush1.bf16.msra.mxu0 0
    %4755 = vmatprep.subr.bf16.mxu0 0
    %4756 = vmatpush1.bf16.msra.mxu0 0
    %4757 = vmatprep.subr.bf16.mxu0 0
    %4758 = vmatpush1.bf16.msra.mxu0 0
    %4759 = vmatprep.mubr.bf16.mxu0 0
    %4760 = vmatmul.mubr.bf16.gmra.mrb[0].mxu0 %v4403
    %v4761 = vpop.f32.mrb[0].mxu0
    %v4762 = vadd.f32 %v4678, %v4761
    %v4763 = vpop.f32.mrb[0].mxu0
    %v4764 = vpop.f32.mrb[0].mxu0
    %v4765 = vpop.f32.mrb[0].mxu0
    %4766 = vdwg.mxu0
    %v4767 = vld [vmem:[%s943] sm:$0xf]
    %v4768 = vld [vmem:[%s943 + $0x4] sm:$0xf]
    %v4769 = vld [vmem:[%s943 + $0x8] sm:$0xf]
    %v4770 = vld [vmem:[%s943 + $0xc] sm:$0xf]
    %v4771 = vld [vmem:[%s943 + $0x10] sm:$0xf]
    %v4772 = vld [vmem:[%s943 + $0x14] sm:$0xf]
    %v4773 = vld [vmem:[%s943 + $0x18] sm:$0xf]
    %v4774 = vld [vmem:[%s943 + $0x1c] sm:$0xf]
    %v4775 = vld [vmem:[%s943 + $0x20] sm:$0xf]
    %v4776 = vld [vmem:[%s943 + $0x24] sm:$0xf]
    %v4777 = vld [vmem:[%s943 + $0x28] sm:$0xf]
    %v4778 = vld [vmem:[%s943 + $0x2c] sm:$0xf]
    %v4779 = vld [vmem:[%s943 + $0x30] sm:$0xf]
    %v4780 = vld [vmem:[%s943 + $0x34] sm:$0xf]
    %v4781 = vld [vmem:[%s943 + $0x38] sm:$0xf]
    %v4782 = vld [vmem:[%s943 + $0x3c] sm:$0xf]
    %v4783 = vld [vmem:[%s8 + $0x1] sm:$0x1]
    %v4800 = vunpack.c.l.b16 %v4767
    %v4801 = vunpack.c.l.b16 %v4768
    %v4802 = vunpack.c.l.b16 %v4769
    %v4803 = vunpack.c.l.b16 %v4770
    %v4804 = vunpack.c.l.b16 %v4771
    %v4805 = vunpack.c.l.b16 %v4772
    %v4806 = vunpack.c.l.b16 %v4773
    %v4807 = vunpack.c.l.b16 %v4774
    %v4808 = vunpack.c.l.b16 %v4775
    %v4809 = vunpack.c.l.b16 %v4776
    %v4810 = vunpack.c.l.b16 %v4777
    %v4811 = vunpack.c.l.b16 %v4778
    %v4812 = vunpack.c.l.b16 %v4779
    %v4813 = vunpack.c.l.b16 %v4780
    %v4814 = vunpack.c.l.b16 %v4781
    %v4815 = vunpack.c.l.b16 %v4782
    %v4816 = vpack.c.b16 %v4801, %v4800
    %v4817 = vpack.c.b16 %v4803, %v4802
    %v4818 = vpack.c.b16 %v4805, %v4804
    %v4819 = vpack.c.b16 %v4807, %v4806
    %v4820 = vpack.c.b16 %v4809, %v4808
    %v4821 = vpack.c.b16 %v4811, %v4810
    %v4822 = vpack.c.b16 %v4813, %v4812
    %v4823 = vpack.c.b16 %v4815, %v4814
    %4832 = vmatprep.subr.bf16.mxu0 0
    %4833 = vmatpush1.bf16.msra.mxu0 %v4816
    %4834 = vmatprep.subr.bf16.mxu0 0
    %4835 = vmatpush1.bf16.msra.mxu0 %v4817
    %4836 = vmatprep.subr.bf16.mxu0 0
    %4837 = vmatpush1.bf16.msra.mxu0 %v4818
    %4838 = vmatprep.subr.bf16.mxu0 0
    %4839 = vmatpush1.bf16.msra.mxu0 %v4819
    %4840 = vmatprep.subr.bf16.mxu0 0
    %4841 = vmatpush1.bf16.msra.mxu0 %v4820
    %4842 = vmatprep.subr.bf16.mxu0 0
    %4843 = vmatpush1.bf16.msra.mxu0 %v4821
    %4844 = vmatprep.subr.bf16.mxu0 0
    %4845 = vmatpush1.bf16.msra.mxu0 %v4822
    %4846 = vmatprep.subr.bf16.mxu0 0
    %4847 = vmatpush1.bf16.msra.mxu0 %v4823
    %4848 = vmatprep.subr.bf16.mxu0 0
    %4849 = vmatpush1.bf16.msra.mxu0 0
    %4850 = vmatprep.subr.bf16.mxu0 0
    %4851 = vmatpush1.bf16.msra.mxu0 0
    %4852 = vmatprep.subr.bf16.mxu0 0
    %4853 = vmatpush1.bf16.msra.mxu0 0
    %4854 = vmatprep.subr.bf16.mxu0 0
    %4855 = vmatpush1.bf16.msra.mxu0 0
    %4856 = vmatprep.subr.bf16.mxu0 0
    %4857 = vmatpush1.bf16.msra.mxu0 0
    %4858 = vmatprep.subr.bf16.mxu0 0
    %4859 = vmatpush1.bf16.msra.mxu0 0
    %4860 = vmatprep.subr.bf16.mxu0 0
    %4861 = vmatpush1.bf16.msra.mxu0 0
    %4862 = vmatprep.subr.bf16.mxu0 0
    %4863 = vmatpush1.bf16.msra.mxu0 0
    %4864 = vmatprep.mubr.bf16.mxu0 0
    %4865 = vmatmul.mubr.bf16.gmra.mrb[0].mxu0 %v4404
    %v4866 = vpop.f32.mrb[0].mxu0
    %v4867 = vadd.f32 %v4783, %v4866
    %v4868 = vpop.f32.mrb[0].mxu0
    %v4869 = vpop.f32.mrb[0].mxu0
    %v4870 = vpop.f32.mrb[0].mxu0
    %4871 = vdwg.mxu0
    %v4872 = vmul.f32 %v4655, %v4867
    %v4873 = vadd.f32 %v4762, %v4872
    %v4874 = vtanh.pop %v4873
    %v4875 = vsub.f32 1.0, %v4661
    %v4876 = vmul.f32 %v4875, %v4874
    %v4877 = vmul.f32 %v4661, %v3922
    %v4878 = vadd.f32 %v4876, %v4877
    %s4879 = scalar_lea.vmem %s9, 4
    %4880 = vst [vmem:[%s4879] sm:$0x1] %v4878
    %s4881 = sld [smem:[#allocation3 + $0x5]]
    %s4882 = scalar_lea.vmem [#allocation4], %s4881
    %v4883 = vld [vmem:[%s4882] sm:$0x1]
    %v4884 = vpack.c.bf16 %v4883, %v4883
    %v4885 = vld [vmem:[#allocation7] sm:$0xff]
    %v4886 = vld [vmem:[#allocation7 + $0x8] sm:$0xff]
    %v4887 = vld [vmem:[#allocation7 + $0x10] sm:$0xff]
    %v4888 = vld [vmem:[#allocation7 + $0x18] sm:$0xff]
    %v4889 = vld [vmem:[#allocation7 + $0x20] sm:$0xff]
    %v4890 = vld [vmem:[#allocation7 + $0x28] sm:$0xff]
    %v4891 = vld [vmem:[#allocation7 + $0x30] sm:$0xff]
    %v4892 = vld [vmem:[#allocation7 + $0x38] sm:$0xff]
    %v4893 = vld [vmem:[#allocation7 + $0x40] sm:$0xff]
    %v4894 = vld [vmem:[#allocation7 + $0x48] sm:$0xff]
    %v4895 = vld [vmem:[#allocation7 + $0x50] sm:$0xff]
    %v4896 = vld [vmem:[#allocation7 + $0x58] sm:$0xff]
    %v4897 = vld [vmem:[#allocation7 + $0x60] sm:$0xff]
    %v4898 = vld [vmem:[#allocation7 + $0x68] sm:$0xff]
    %v4899 = vld [vmem:[#allocation7 + $0x70] sm:$0xff]
    %v4900 = vld [vmem:[#allocation7 + $0x78] sm:$0xff]
    %v4901 = vld [vmem:[#allocation7 + $0x80] sm:$0xff]
    %v4902 = vld [vmem:[#allocation7 + $0x88] sm:$0xff]
    %v4903 = vld [vmem:[#allocation7 + $0x90] sm:$0xff]
    %v4904 = vld [vmem:[#allocation7 + $0x98] sm:$0xff]
    %v4905 = vld [vmem:[#allocation7 + $0xa0] sm:$0xff]
    %v4906 = vld [vmem:[#allocation7 + $0xa8] sm:$0xff]
    %v4907 = vld [vmem:[#allocation7 + $0xb0] sm:$0xff]
    %v4908 = vld [vmem:[#allocation7 + $0xb8] sm:$0xff]
    %v4909 = vld [vmem:[#allocation7 + $0xc0] sm:$0xff]
    %v4910 = vld [vmem:[#allocation7 + $0xc8] sm:$0xff]
    %v4911 = vld [vmem:[#allocation7 + $0xd0] sm:$0xff]
    %v4912 = vld [vmem:[#allocation7 + $0xd8] sm:$0xff]
    %v4913 = vld [vmem:[#allocation7 + $0xe0] sm:$0xff]
    %v4914 = vld [vmem:[#allocation7 + $0xe8] sm:$0xff]
    %v4915 = vld [vmem:[#allocation7 + $0xf0] sm:$0xff]
    %v4916 = vld [vmem:[#allocation7 + $0xf8] sm:$0xff]
    %v4917 = vld [vmem:[%s4] ss:$2 sm:$0x3]
    %v4950 = vunpack.c.l.b16 %v4885
    %v4951 = vunpack.c.h.b16 %v4885
    %v4952 = vunpack.c.l.b16 %v4886
    %v4953 = vunpack.c.h.b16 %v4886
    %v4954 = vunpack.c.l.b16 %v4887
    %v4955 = vunpack.c.h.b16 %v4887
    %v4956 = vunpack.c.l.b16 %v4888
    %v4957 = vunpack.c.h.b16 %v4888
    %v4958 = vunpack.c.l.b16 %v4889
    %v4959 = vunpack.c.h.b16 %v4889
    %v4960 = vunpack.c.l.b16 %v4890
    %v4961 = vunpack.c.h.b16 %v4890
    %v4962 = vunpack.c.l.b16 %v4891
    %v4963 = vunpack.c.h.b16 %v4891
    %v4964 = vunpack.c.l.b16 %v4892
    %v4965 = vunpack.c.h.b16 %v4892
    %v4966 = vunpack.c.l.b16 %v4893
    %v4967 = vunpack.c.h.b16 %v4893
    %v4968 = vunpack.c.l.b16 %v4894
    %v4969 = vunpack.c.h.b16 %v4894
    %v4970 = vunpack.c.l.b16 %v4895
    %v4971 = vunpack.c.h.b16 %v4895
    %v4972 = vunpack.c.l.b16 %v4896
    %v4973 = vunpack.c.h.b16 %v4896
    %v4974 = vunpack.c.l.b16 %v4897
    %v4975 = vunpack.c.h.b16 %v4897
    %v4976 = vunpack.c.l.b16 %v4898
    %v4977 = vunpack.c.h.b16 %v4898
    %v4978 = vunpack.c.l.b16 %v4899
    %v4979 = vunpack.c.h.b16 %v4899
    %v4980 = vunpack.c.l.b16 %v4900
    %v4981 = vunpack.c.h.b16 %v4900
    %v4982 = vunpack.c.l.b16 %v4901
    %v4983 = vunpack.c.h.b16 %v4901
    %v4984 = vunpack.c.l.b16 %v4902
    %v4985 = vunpack.c.h.b16 %v4902
    %v4986 = vunpack.c.l.b16 %v4903
    %v4987 = vunpack.c.h.b16 %v4903
    %v4988 = vunpack.c.l.b16 %v4904
    %v4989 = vunpack.c.h.b16 %v4904
    %v4990 = vunpack.c.l.b16 %v4905
    %v4991 = vunpack.c.h.b16 %v4905
    %v4992 = vunpack.c.l.b16 %v4906
    %v4993 = vunpack.c.h.b16 %v4906
    %v4994 = vunpack.c.l.b16 %v4907
    %v4995 = vunpack.c.h.b16 %v4907
    %v4996 = vunpack.c.l.b16 %v4908
    %v4997 = vunpack.c.h.b16 %v4908
    %v4998 = vunpack.c.l.b16 %v4909
    %v4999 = vunpack.c.h.b16 %v4909
    %v5000 = vunpack.c.l.b16 %v4910
    %v5001 = vunpack.c.h.b16 %v4910
    %v5002 = vunpack.c.l.b16 %v4911
    %v5003 = vunpack.c.h.b16 %v4911
    %v5004 = vunpack.c.l.b16 %v4912
    %v5005 = vunpack.c.h.b16 %v4912
    %v5006 = vunpack.c.l.b16 %v4913
    %v5007 = vunpack.c.h.b16 %v4913
    %v5008 = vunpack.c.l.b16 %v4914
    %v5009 = vunpack.c.h.b16 %v4914
    %v5010 = vunpack.c.l.b16 %v4915
    %v5011 = vunpack.c.h.b16 %v4915
    %v5012 = vunpack.c.l.b16 %v4916
    %v5013 = vunpack.c.h.b16 %v4916
    %v5014 = vpack.c.b16 %v4952, %v4950
    %v5015 = vpack.c.b16 %v4953, %v4951
    %v5016 = vpack.c.b16 %v4956, %v4954
    %v5017 = vpack.c.b16 %v4957, %v4955
    %v5018 = vpack.c.b16 %v4960, %v4958
    %v5019 = vpack.c.b16 %v4961, %v4959
    %v5020 = vpack.c.b16 %v4964, %v4962
    %v5021 = vpack.c.b16 %v4965, %v4963
    %v5022 = vpack.c.b16 %v4968, %v4966
    %v5023 = vpack.c.b16 %v4969, %v4967
    %v5024 = vpack.c.b16 %v4972, %v4970
    %v5025 = vpack.c.b16 %v4973, %v4971
    %v5026 = vpack.c.b16 %v4976, %v4974
    %v5027 = vpack.c.b16 %v4977, %v4975
    %v5028 = vpack.c.b16 %v4980, %v4978
    %v5029 = vpack.c.b16 %v4981, %v4979
    %v5030 = vpack.c.b16 %v4984, %v4982
    %v5031 = vpack.c.b16 %v4985, %v4983
    %v5032 = vpack.c.b16 %v4988, %v4986
    %v5033 = vpack.c.b16 %v4989, %v4987
    %v5034 = vpack.c.b16 %v4992, %v4990
    %v5035 = vpack.c.b16 %v4993, %v4991
    %v5036 = vpack.c.b16 %v4996, %v4994
    %v5037 = vpack.c.b16 %v4997, %v4995
    %v5038 = vpack.c.b16 %v5000, %v4998
    %v5039 = vpack.c.b16 %v5001, %v4999
    %v5040 = vpack.c.b16 %v5004, %v5002
    %v5041 = vpack.c.b16 %v5005, %v5003
    %v5042 = vpack.c.b16 %v5008, %v5006
    %v5043 = vpack.c.b16 %v5009, %v5007
    %v5044 = vpack.c.b16 %v5012, %v5010
    %v5045 = vpack.c.b16 %v5013, %v5011
    %v5079 = vlaneseq
    %v5080 = vshrl.u32 %v5079, 7
    %v5081 = vsub.s32 0, %v5080
    %v5082 = vrot.slane %v4917, %v5081
    %v5083 = vlaneseq
    %v5084 = vshrl.u32 %v5083, 7
    %v5085 = vsub.s32 1, %v5084
    %v5086 = vrot.slane %v4917, %v5085
    %5089 = vmatprep.subr.bf16.mxu0 %v5015
    %5090 = vmatpush1.bf16.msra.mxu0 %v5014
    %5091 = vmatprep.subr.bf16.mxu0 %v5017
    %5092 = vmatpush1.bf16.msra.mxu0 %v5016
    %5093 = vmatprep.subr.bf16.mxu0 %v5019
    %5094 = vmatpush1.bf16.msra.mxu0 %v5018
    %5095 = vmatprep.subr.bf16.mxu0 %v5021
    %5096 = vmatpush1.bf16.msra.mxu0 %v5020
    %5097 = vmatprep.subr.bf16.mxu0 %v5023
    %5098 = vmatpush1.bf16.msra.mxu0 %v5022
    %5099 = vmatprep.subr.bf16.mxu0 %v5025
    %5100 = vmatpush1.bf16.msra.mxu0 %v5024
    %5101 = vmatprep.subr.bf16.mxu0 %v5027
    %5102 = vmatpush1.bf16.msra.mxu0 %v5026
    %5103 = vmatprep.subr.bf16.mxu0 %v5029
    %5104 = vmatpush1.bf16.msra.mxu0 %v5028
    %5105 = vmatprep.subr.bf16.mxu0 %v5031
    %5106 = vmatpush1.bf16.msra.mxu0 %v5030
    %5107 = vmatprep.subr.bf16.mxu0 %v5033
    %5108 = vmatpush1.bf16.msra.mxu0 %v5032
    %5109 = vmatprep.subr.bf16.mxu0 %v5035
    %5110 = vmatpush1.bf16.msra.mxu0 %v5034
    %5111 = vmatprep.subr.bf16.mxu0 %v5037
    %5112 = vmatpush1.bf16.msra.mxu0 %v5036
    %5113 = vmatprep.subr.bf16.mxu0 %v5039
    %5114 = vmatpush1.bf16.msra.mxu0 %v5038
    %5115 = vmatprep.subr.bf16.mxu0 %v5041
    %5116 = vmatpush1.bf16.msra.mxu0 %v5040
    %5117 = vmatprep.subr.bf16.mxu0 %v5043
    %5118 = vmatpush1.bf16.msra.mxu0 %v5042
    %5119 = vmatprep.subr.bf16.mxu0 %v5045
    %5120 = vmatpush1.bf16.msra.mxu0 %v5044
    %5121 = vmatprep.mubr.bf16.mxu0 %v4403
    %5122 = vmatmul.mubr.bf16.gmra.mrb[0].mxu0 %v4884
    %v5123 = vpop.f32.mrb[0].mxu0
    %v5124 = vadd.f32 %v5082, %v5123
    %v5125 = vpop.f32.mrb[0].mxu0
    %v5126 = vadd.f32 %v5086, %v5125
    %v5127 = vpop.f32.mrb[0].mxu0
    %v5128 = vpop.f32.mrb[0].mxu0
    %5129 = vdwg.mxu0
    %v5130 = vxor.u32 %v5124, 2147483648
    %v5131 = vmul.f32 %v5130, 1.442695
    %v5132 = vpow.pop %v5131
    %v5133 = vadd.f32 %v5132, 1.0
    %v5134 = vrcp.pop %v5133
    %v5135 = vmul.f32 1.0, %v5134
    %v5136 = vxor.u32 %v5126, 2147483648
    %v5137 = vmul.f32 %v5136, 1.442695
    %v5138 = vpow.pop %v5137
    %v5139 = vadd.f32 %v5138, 1.0
    %v5140 = vrcp.pop %v5139
    %v5141 = vmul.f32 1.0, %v5140
    %v5142 = vld [vmem:[#allocation9] sm:$0xf]
    %v5143 = vld [vmem:[#allocation9 + $0x4] sm:$0xf]
    %v5144 = vld [vmem:[#allocation9 + $0x8] sm:$0xf]
    %v5145 = vld [vmem:[#allocation9 + $0xc] sm:$0xf]
    %v5146 = vld [vmem:[#allocation9 + $0x10] sm:$0xf]
    %v5147 = vld [vmem:[#allocation9 + $0x14] sm:$0xf]
    %v5148 = vld [vmem:[#allocation9 + $0x18] sm:$0xf]
    %v5149 = vld [vmem:[#allocation9 + $0x1c] sm:$0xf]
    %v5150 = vld [vmem:[#allocation9 + $0x20] sm:$0xf]
    %v5151 = vld [vmem:[#allocation9 + $0x24] sm:$0xf]
    %v5152 = vld [vmem:[#allocation9 + $0x28] sm:$0xf]
    %v5153 = vld [vmem:[#allocation9 + $0x2c] sm:$0xf]
    %v5154 = vld [vmem:[#allocation9 + $0x30] sm:$0xf]
    %v5155 = vld [vmem:[#allocation9 + $0x34] sm:$0xf]
    %v5156 = vld [vmem:[#allocation9 + $0x38] sm:$0xf]
    %v5157 = vld [vmem:[#allocation9 + $0x3c] sm:$0xf]
    %v5158 = vld [vmem:[%s6] sm:$0x1]
    %v5175 = vunpack.c.l.b16 %v5142
    %v5176 = vunpack.c.l.b16 %v5143
    %v5177 = vunpack.c.l.b16 %v5144
    %v5178 = vunpack.c.l.b16 %v5145
    %v5179 = vunpack.c.l.b16 %v5146
    %v5180 = vunpack.c.l.b16 %v5147
    %v5181 = vunpack.c.l.b16 %v5148
    %v5182 = vunpack.c.l.b16 %v5149
    %v5183 = vunpack.c.l.b16 %v5150
    %v5184 = vunpack.c.l.b16 %v5151
    %v5185 = vunpack.c.l.b16 %v5152
    %v5186 = vunpack.c.l.b16 %v5153
    %v5187 = vunpack.c.l.b16 %v5154
    %v5188 = vunpack.c.l.b16 %v5155
    %v5189 = vunpack.c.l.b16 %v5156
    %v5190 = vunpack.c.l.b16 %v5157
    %v5191 = vpack.c.b16 %v5176, %v5175
    %v5192 = vpack.c.b16 %v5178, %v5177
    %v5193 = vpack.c.b16 %v5180, %v5179
    %v5194 = vpack.c.b16 %v5182, %v5181
    %v5195 = vpack.c.b16 %v5184, %v5183
    %v5196 = vpack.c.b16 %v5186, %v5185
    %v5197 = vpack.c.b16 %v5188, %v5187
    %v5198 = vpack.c.b16 %v5190, %v5189
    %5207 = vmatprep.subr.bf16.mxu0 0
    %5208 = vmatpush1.bf16.msra.mxu0 %v5191
    %5209 = vmatprep.subr.bf16.mxu0 0
    %5210 = vmatpush1.bf16.msra.mxu0 %v5192
    %5211 = vmatprep.subr.bf16.mxu0 0
    %5212 = vmatpush1.bf16.msra.mxu0 %v5193
    %5213 = vmatprep.subr.bf16.mxu0 0
    %5214 = vmatpush1.bf16.msra.mxu0 %v5194
    %5215 = vmatprep.subr.bf16.mxu0 0
    %5216 = vmatpush1.bf16.msra.mxu0 %v5195
    %5217 = vmatprep.subr.bf16.mxu0 0
    %5218 = vmatpush1.bf16.msra.mxu0 %v5196
    %5219 = vmatprep.subr.bf16.mxu0 0
    %5220 = vmatpush1.bf16.msra.mxu0 %v5197
    %5221 = vmatprep.subr.bf16.mxu0 0
    %5222 = vmatpush1.bf16.msra.mxu0 %v5198
    %5223 = vmatprep.subr.bf16.mxu0 0
    %5224 = vmatpush1.bf16.msra.mxu0 0
    %5225 = vmatprep.subr.bf16.mxu0 0
    %5226 = vmatpush1.bf16.msra.mxu0 0
    %5227 = vmatprep.subr.bf16.mxu0 0
    %5228 = vmatpush1.bf16.msra.mxu0 0
    %5229 = vmatprep.subr.bf16.mxu0 0
    %5230 = vmatpush1.bf16.msra.mxu0 0
    %5231 = vmatprep.subr.bf16.mxu0 0
    %5232 = vmatpush1.bf16.msra.mxu0 0
    %5233 = vmatprep.subr.bf16.mxu0 0
    %5234 = vmatpush1.bf16.msra.mxu0 0
    %5235 = vmatprep.subr.bf16.mxu0 0
    %5236 = vmatpush1.bf16.msra.mxu0 0
    %5237 = vmatprep.subr.bf16.mxu0 0
    %5238 = vmatpush1.bf16.msra.mxu0 0
    %5239 = vmatprep.mubr.bf16.mxu0 0
    %5240 = vmatmul.mubr.bf16.gmra.mrb[0].mxu0 %v4884
    %v5241 = vpop.f32.mrb[0].mxu0
    %v5242 = vadd.f32 %v5158, %v5241
    %v5243 = vpop.f32.mrb[0].mxu0
    %v5244 = vpop.f32.mrb[0].mxu0
    %v5245 = vpop.f32.mrb[0].mxu0
    %5246 = vdwg.mxu0
    %v5247 = vld [vmem:[#allocation10] sm:$0xf]
    %v5248 = vld [vmem:[#allocation10 + $0x4] sm:$0xf]
    %v5249 = vld [vmem:[#allocation10 + $0x8] sm:$0xf]
    %v5250 = vld [vmem:[#allocation10 + $0xc] sm:$0xf]
    %v5251 = vld [vmem:[#allocation10 + $0x10] sm:$0xf]
    %v5252 = vld [vmem:[#allocation10 + $0x14] sm:$0xf]
    %v5253 = vld [vmem:[#allocation10 + $0x18] sm:$0xf]
    %v5254 = vld [vmem:[#allocation10 + $0x1c] sm:$0xf]
    %v5255 = vld [vmem:[#allocation10 + $0x20] sm:$0xf]
    %v5256 = vld [vmem:[#allocation10 + $0x24] sm:$0xf]
    %v5257 = vld [vmem:[#allocation10 + $0x28] sm:$0xf]
    %v5258 = vld [vmem:[#allocation10 + $0x2c] sm:$0xf]
    %v5259 = vld [vmem:[#allocation10 + $0x30] sm:$0xf]
    %v5260 = vld [vmem:[#allocation10 + $0x34] sm:$0xf]
    %v5261 = vld [vmem:[#allocation10 + $0x38] sm:$0xf]
    %v5262 = vld [vmem:[#allocation10 + $0x3c] sm:$0xf]
    %v5263 = vld [vmem:[%s8] sm:$0x1]
    %v5280 = vunpack.c.l.b16 %v5247
    %v5281 = vunpack.c.l.b16 %v5248
    %v5282 = vunpack.c.l.b16 %v5249
    %v5283 = vunpack.c.l.b16 %v5250
    %v5284 = vunpack.c.l.b16 %v5251
    %v5285 = vunpack.c.l.b16 %v5252
    %v5286 = vunpack.c.l.b16 %v5253
    %v5287 = vunpack.c.l.b16 %v5254
    %v5288 = vunpack.c.l.b16 %v5255
    %v5289 = vunpack.c.l.b16 %v5256
    %v5290 = vunpack.c.l.b16 %v5257
    %v5291 = vunpack.c.l.b16 %v5258
    %v5292 = vunpack.c.l.b16 %v5259
    %v5293 = vunpack.c.l.b16 %v5260
    %v5294 = vunpack.c.l.b16 %v5261
    %v5295 = vunpack.c.l.b16 %v5262
    %v5296 = vpack.c.b16 %v5281, %v5280
    %v5297 = vpack.c.b16 %v5283, %v5282
    %v5298 = vpack.c.b16 %v5285, %v5284
    %v5299 = vpack.c.b16 %v5287, %v5286
    %v5300 = vpack.c.b16 %v5289, %v5288
    %v5301 = vpack.c.b16 %v5291, %v5290
    %v5302 = vpack.c.b16 %v5293, %v5292
    %v5303 = vpack.c.b16 %v5295, %v5294
    %5312 = vmatprep.subr.bf16.mxu0 0
    %5313 = vmatpush1.bf16.msra.mxu0 %v5296
    %5314 = vmatprep.subr.bf16.mxu0 0
    %5315 = vmatpush1.bf16.msra.mxu0 %v5297
    %5316 = vmatprep.subr.bf16.mxu0 0
    %5317 = vmatpush1.bf16.msra.mxu0 %v5298
    %5318 = vmatprep.subr.bf16.mxu0 0
    %5319 = vmatpush1.bf16.msra.mxu0 %v5299
    %5320 = vmatprep.subr.bf16.mxu0 0
    %5321 = vmatpush1.bf16.msra.mxu0 %v5300
    %5322 = vmatprep.subr.bf16.mxu0 0
    %5323 = vmatpush1.bf16.msra.mxu0 %v5301
    %5324 = vmatprep.subr.bf16.mxu0 0
    %5325 = vmatpush1.bf16.msra.mxu0 %v5302
    %5326 = vmatprep.subr.bf16.mxu0 0
    %5327 = vmatpush1.bf16.msra.mxu0 %v5303
    %5328 = vmatprep.subr.bf16.mxu0 0
    %5329 = vmatpush1.bf16.msra.mxu0 0
    %5330 = vmatprep.subr.bf16.mxu0 0
    %5331 = vmatpush1.bf16.msra.mxu0 0
    %5332 = vmatprep.subr.bf16.mxu0 0
    %5333 = vmatpush1.bf16.msra.mxu0 0
    %5334 = vmatprep.subr.bf16.mxu0 0
    %5335 = vmatpush1.bf16.msra.mxu0 0
    %5336 = vmatprep.subr.bf16.mxu0 0
    %5337 = vmatpush1.bf16.msra.mxu0 0
    %5338 = vmatprep.subr.bf16.mxu0 0
    %5339 = vmatpush1.bf16.msra.mxu0 0
    %5340 = vmatprep.subr.bf16.mxu0 0
    %5341 = vmatpush1.bf16.msra.mxu0 0
    %5342 = vmatprep.subr.bf16.mxu0 0
    %5343 = vmatpush1.bf16.msra.mxu0 0
    %5344 = vmatprep.mubr.bf16.mxu0 0
    %5345 = vmatmul.mubr.bf16.gmra.mrb[0].mxu0 %v4403
    %v5346 = vpop.f32.mrb[0].mxu0
    %v5347 = vadd.f32 %v5263, %v5346
    %v5348 = vpop.f32.mrb[0].mxu0
    %v5349 = vpop.f32.mrb[0].mxu0
    %v5350 = vpop.f32.mrb[0].mxu0
    %5351 = vdwg.mxu0
    %v5352 = vmul.f32 %v5135, %v5347
    %v5353 = vadd.f32 %v5242, %v5352
    %v5354 = vtanh.pop %v5353
    %v5355 = vsub.f32 1.0, %v5141
    %v5356 = vmul.f32 %v5355, %v5354
    %v5357 = vmul.f32 %v5141, %v4402
    %v5358 = vadd.f32 %v5356, %v5357
    %v5359 = vpack.c.bf16 %v5358, %v5358
    %v5360 = vpack.c.bf16 %v4878, %v4878
    %v5361 = vld [vmem:[%s578] sm:$0xff]
    %v5362 = vld [vmem:[%s578 + $0x8] sm:$0xff]
    %v5363 = vld [vmem:[%s578 + $0x10] sm:$0xff]
    %v5364 = vld [vmem:[%s578 + $0x18] sm:$0xff]
    %v5365 = vld [vmem:[%s578 + $0x20] sm:$0xff]
    %v5366 = vld [vmem:[%s578 + $0x28] sm:$0xff]
    %v5367 = vld [vmem:[%s578 + $0x30] sm:$0xff]
    %v5368 = vld [vmem:[%s578 + $0x38] sm:$0xff]
    %v5369 = vld [vmem:[%s578 + $0x40] sm:$0xff]
    %v5370 = vld [vmem:[%s578 + $0x48] sm:$0xff]
    %v5371 = vld [vmem:[%s578 + $0x50] sm:$0xff]
    %v5372 = vld [vmem:[%s578 + $0x58] sm:$0xff]
    %v5373 = vld [vmem:[%s578 + $0x60] sm:$0xff]
    %v5374 = vld [vmem:[%s578 + $0x68] sm:$0xff]
    %v5375 = vld [vmem:[%s578 + $0x70] sm:$0xff]
    %v5376 = vld [vmem:[%s578 + $0x78] sm:$0xff]
    %v5377 = vld [vmem:[%s578 + $0x80] sm:$0xff]
    %v5378 = vld [vmem:[%s578 + $0x88] sm:$0xff]
    %v5379 = vld [vmem:[%s578 + $0x90] sm:$0xff]
    %v5380 = vld [vmem:[%s578 + $0x98] sm:$0xff]
    %v5381 = vld [vmem:[%s578 + $0xa0] sm:$0xff]
    %v5382 = vld [vmem:[%s578 + $0xa8] sm:$0xff]
    %v5383 = vld [vmem:[%s578 + $0xb0] sm:$0xff]
    %v5384 = vld [vmem:[%s578 + $0xb8] sm:$0xff]
    %v5385 = vld [vmem:[%s578 + $0xc0] sm:$0xff]
    %v5386 = vld [vmem:[%s578 + $0xc8] sm:$0xff]
    %v5387 = vld [vmem:[%s578 + $0xd0] sm:$0xff]
    %v5388 = vld [vmem:[%s578 + $0xd8] sm:$0xff]
    %v5389 = vld [vmem:[%s578 + $0xe0] sm:$0xff]
    %v5390 = vld [vmem:[%s578 + $0xe8] sm:$0xff]
    %v5391 = vld [vmem:[%s578 + $0xf0] sm:$0xff]
    %v5392 = vld [vmem:[%s578 + $0xf8] sm:$0xff]
    %v5393 = vld [vmem:[%s611] ss:$2 sm:$0x3]
    %v5426 = vunpack.c.l.b16 %v5361
    %v5427 = vunpack.c.h.b16 %v5361
    %v5428 = vunpack.c.l.b16 %v5362
    %v5429 = vunpack.c.h.b16 %v5362
    %v5430 = vunpack.c.l.b16 %v5363
    %v5431 = vunpack.c.h.b16 %v5363
    %v5432 = vunpack.c.l.b16 %v5364
    %v5433 = vunpack.c.h.b16 %v5364
    %v5434 = vunpack.c.l.b16 %v5365
    %v5435 = vunpack.c.h.b16 %v5365
    %v5436 = vunpack.c.l.b16 %v5366
    %v5437 = vunpack.c.h.b16 %v5366
    %v5438 = vunpack.c.l.b16 %v5367
    %v5439 = vunpack.c.h.b16 %v5367
    %v5440 = vunpack.c.l.b16 %v5368
    %v5441 = vunpack.c.h.b16 %v5368
    %v5442 = vunpack.c.l.b16 %v5369
    %v5443 = vunpack.c.h.b16 %v5369
    %v5444 = vunpack.c.l.b16 %v5370
    %v5445 = vunpack.c.h.b16 %v5370
    %v5446 = vunpack.c.l.b16 %v5371
    %v5447 = vunpack.c.h.b16 %v5371
    %v5448 = vunpack.c.l.b16 %v5372
    %v5449 = vunpack.c.h.b16 %v5372
    %v5450 = vunpack.c.l.b16 %v5373
    %v5451 = vunpack.c.h.b16 %v5373
    %v5452 = vunpack.c.l.b16 %v5374
    %v5453 = vunpack.c.h.b16 %v5374
    %v5454 = vunpack.c.l.b16 %v5375
    %v5455 = vunpack.c.h.b16 %v5375
    %v5456 = vunpack.c.l.b16 %v5376
    %v5457 = vunpack.c.h.b16 %v5376
    %v5458 = vunpack.c.l.b16 %v5377
    %v5459 = vunpack.c.h.b16 %v5377
    %v5460 = vunpack.c.l.b16 %v5378
    %v5461 = vunpack.c.h.b16 %v5378
    %v5462 = vunpack.c.l.b16 %v5379
    %v5463 = vunpack.c.h.b16 %v5379
    %v5464 = vunpack.c.l.b16 %v5380
    %v5465 = vunpack.c.h.b16 %v5380
    %v5466 = vunpack.c.l.b16 %v5381
    %v5467 = vunpack.c.h.b16 %v5381
    %v5468 = vunpack.c.l.b16 %v5382
    %v5469 = vunpack.c.h.b16 %v5382
    %v5470 = vunpack.c.l.b16 %v5383
    %v5471 = vunpack.c.h.b16 %v5383
    %v5472 = vunpack.c.l.b16 %v5384
    %v5473 = vunpack.c.h.b16 %v5384
    %v5474 = vunpack.c.l.b16 %v5385
    %v5475 = vunpack.c.h.b16 %v5385
    %v5476 = vunpack.c.l.b16 %v5386
    %v5477 = vunpack.c.h.b16 %v5386
    %v5478 = vunpack.c.l.b16 %v5387
    %v5479 = vunpack.c.h.b16 %v5387
    %v5480 = vunpack.c.l.b16 %v5388
    %v5481 = vunpack.c.h.b16 %v5388
    %v5482 = vunpack.c.l.b16 %v5389
    %v5483 = vunpack.c.h.b16 %v5389
    %v5484 = vunpack.c.l.b16 %v5390
    %v5485 = vunpack.c.h.b16 %v5390
    %v5486 = vunpack.c.l.b16 %v5391
    %v5487 = vunpack.c.h.b16 %v5391
    %v5488 = vunpack.c.l.b16 %v5392
    %v5489 = vunpack.c.h.b16 %v5392
    %v5490 = vpack.c.b16 %v5428, %v5426
    %v5491 = vpack.c.b16 %v5429, %v5427
    %v5492 = vpack.c.b16 %v5432, %v5430
    %v5493 = vpack.c.b16 %v5433, %v5431
    %v5494 = vpack.c.b16 %v5436, %v5434
    %v5495 = vpack.c.b16 %v5437, %v5435
    %v5496 = vpack.c.b16 %v5440, %v5438
    %v5497 = vpack.c.b16 %v5441, %v5439
    %v5498 = vpack.c.b16 %v5444, %v5442
    %v5499 = vpack.c.b16 %v5445, %v5443
    %v5500 = vpack.c.b16 %v5448, %v5446
    %v5501 = vpack.c.b16 %v5449, %v5447
    %v5502 = vpack.c.b16 %v5452, %v5450
    %v5503 = vpack.c.b16 %v5453, %v5451
    %v5504 = vpack.c.b16 %v5456, %v5454
    %v5505 = vpack.c.b16 %v5457, %v5455
    %v5506 = vpack.c.b16 %v5460, %v5458
    %v5507 = vpack.c.b16 %v5461, %v5459
    %v5508 = vpack.c.b16 %v5464, %v5462
    %v5509 = vpack.c.b16 %v5465, %v5463
    %v5510 = vpack.c.b16 %v5468, %v5466
    %v5511 = vpack.c.b16 %v5469, %v5467
    %v5512 = vpack.c.b16 %v5472, %v5470
    %v5513 = vpack.c.b16 %v5473, %v5471
    %v5514 = vpack.c.b16 %v5476, %v5474
    %v5515 = vpack.c.b16 %v5477, %v5475
    %v5516 = vpack.c.b16 %v5480, %v5478
    %v5517 = vpack.c.b16 %v5481, %v5479
    %v5518 = vpack.c.b16 %v5484, %v5482
    %v5519 = vpack.c.b16 %v5485, %v5483
    %v5520 = vpack.c.b16 %v5488, %v5486
    %v5521 = vpack.c.b16 %v5489, %v5487
    %v5555 = vlaneseq
    %v5556 = vshrl.u32 %v5555, 7
    %v5557 = vsub.s32 0, %v5556
    %v5558 = vrot.slane %v5393, %v5557
    %v5559 = vlaneseq
    %v5560 = vshrl.u32 %v5559, 7
    %v5561 = vsub.s32 1, %v5560
    %v5562 = vrot.slane %v5393, %v5561
    %5565 = vmatprep.subr.bf16.mxu0 %v5491
    %5566 = vmatpush1.bf16.msra.mxu0 %v5490
    %5567 = vmatprep.subr.bf16.mxu0 %v5493
    %5568 = vmatpush1.bf16.msra.mxu0 %v5492
    %5569 = vmatprep.subr.bf16.mxu0 %v5495
    %5570 = vmatpush1.bf16.msra.mxu0 %v5494
    %5571 = vmatprep.subr.bf16.mxu0 %v5497
    %5572 = vmatpush1.bf16.msra.mxu0 %v5496
    %5573 = vmatprep.subr.bf16.mxu0 %v5499
    %5574 = vmatpush1.bf16.msra.mxu0 %v5498
    %5575 = vmatprep.subr.bf16.mxu0 %v5501
    %5576 = vmatpush1.bf16.msra.mxu0 %v5500
    %5577 = vmatprep.subr.bf16.mxu0 %v5503
    %5578 = vmatpush1.bf16.msra.mxu0 %v5502
    %5579 = vmatprep.subr.bf16.mxu0 %v5505
    %5580 = vmatpush1.bf16.msra.mxu0 %v5504
    %5581 = vmatprep.subr.bf16.mxu0 %v5507
    %5582 = vmatpush1.bf16.msra.mxu0 %v5506
    %5583 = vmatprep.subr.bf16.mxu0 %v5509
    %5584 = vmatpush1.bf16.msra.mxu0 %v5508
    %5585 = vmatprep.subr.bf16.mxu0 %v5511
    %5586 = vmatpush1.bf16.msra.mxu0 %v5510
    %5587 = vmatprep.subr.bf16.mxu0 %v5513
    %5588 = vmatpush1.bf16.msra.mxu0 %v5512
    %5589 = vmatprep.subr.bf16.mxu0 %v5515
    %5590 = vmatpush1.bf16.msra.mxu0 %v5514
    %5591 = vmatprep.subr.bf16.mxu0 %v5517
    %5592 = vmatpush1.bf16.msra.mxu0 %v5516
    %5593 = vmatprep.subr.bf16.mxu0 %v5519
    %5594 = vmatpush1.bf16.msra.mxu0 %v5518
    %5595 = vmatprep.subr.bf16.mxu0 %v5521
    %5596 = vmatpush1.bf16.msra.mxu0 %v5520
    %5597 = vmatprep.mubr.bf16.mxu0 %v5360
    %5598 = vmatmul.mubr.bf16.gmra.mrb[0].mxu0 %v5359
    %v5599 = vpop.f32.mrb[0].mxu0
    %v5600 = vadd.f32 %v5558, %v5599
    %v5601 = vpop.f32.mrb[0].mxu0
    %v5602 = vadd.f32 %v5562, %v5601
    %v5603 = vpop.f32.mrb[0].mxu0
    %v5604 = vpop.f32.mrb[0].mxu0
    %5605 = vdwg.mxu0
    %v5606 = vxor.u32 %v5600, 2147483648
    %v5607 = vmul.f32 %v5606, 1.442695
    %v5608 = vpow.pop %v5607
    %v5609 = vadd.f32 %v5608, 1.0
    %v5610 = vrcp.pop %v5609
    %v5611 = vmul.f32 1.0, %v5610
    %v5612 = vxor.u32 %v5602, 2147483648
    %v5613 = vmul.f32 %v5612, 1.442695
    %v5614 = vpow.pop %v5613
    %v5615 = vadd.f32 %v5614, 1.0
    %v5616 = vrcp.pop %v5615
    %v5617 = vmul.f32 1.0, %v5616
    %v5618 = vld [vmem:[%s837] sm:$0xf]
    %v5619 = vld [vmem:[%s837 + $0x4] sm:$0xf]
    %v5620 = vld [vmem:[%s837 + $0x8] sm:$0xf]
    %v5621 = vld [vmem:[%s837 + $0xc] sm:$0xf]
    %v5622 = vld [vmem:[%s837 + $0x10] sm:$0xf]
    %v5623 = vld [vmem:[%s837 + $0x14] sm:$0xf]
    %v5624 = vld [vmem:[%s837 + $0x18] sm:$0xf]
    %v5625 = vld [vmem:[%s837 + $0x1c] sm:$0xf]
    %v5626 = vld [vmem:[%s837 + $0x20] sm:$0xf]
    %v5627 = vld [vmem:[%s837 + $0x24] sm:$0xf]
    %v5628 = vld [vmem:[%s837 + $0x28] sm:$0xf]
    %v5629 = vld [vmem:[%s837 + $0x2c] sm:$0xf]
    %v5630 = vld [vmem:[%s837 + $0x30] sm:$0xf]
    %v5631 = vld [vmem:[%s837 + $0x34] sm:$0xf]
    %v5632 = vld [vmem:[%s837 + $0x38] sm:$0xf]
    %v5633 = vld [vmem:[%s837 + $0x3c] sm:$0xf]
    %v5634 = vld [vmem:[%s6 + $0x1] sm:$0x1]
    %v5651 = vunpack.c.l.b16 %v5618
    %v5652 = vunpack.c.l.b16 %v5619
    %v5653 = vunpack.c.l.b16 %v5620
    %v5654 = vunpack.c.l.b16 %v5621
    %v5655 = vunpack.c.l.b16 %v5622
    %v5656 = vunpack.c.l.b16 %v5623
    %v5657 = vunpack.c.l.b16 %v5624
    %v5658 = vunpack.c.l.b16 %v5625
    %v5659 = vunpack.c.l.b16 %v5626
    %v5660 = vunpack.c.l.b16 %v5627
    %v5661 = vunpack.c.l.b16 %v5628
    %v5662 = vunpack.c.l.b16 %v5629
    %v5663 = vunpack.c.l.b16 %v5630
    %v5664 = vunpack.c.l.b16 %v5631
    %v5665 = vunpack.c.l.b16 %v5632
    %v5666 = vunpack.c.l.b16 %v5633
    %v5667 = vpack.c.b16 %v5652, %v5651
    %v5668 = vpack.c.b16 %v5654, %v5653
    %v5669 = vpack.c.b16 %v5656, %v5655
    %v5670 = vpack.c.b16 %v5658, %v5657
    %v5671 = vpack.c.b16 %v5660, %v5659
    %v5672 = vpack.c.b16 %v5662, %v5661
    %v5673 = vpack.c.b16 %v5664, %v5663
    %v5674 = vpack.c.b16 %v5666, %v5665
    %5683 = vmatprep.subr.bf16.mxu0 0
    %5684 = vmatpush1.bf16.msra.mxu0 %v5667
    %5685 = vmatprep.subr.bf16.mxu0 0
    %5686 = vmatpush1.bf16.msra.mxu0 %v5668
    %5687 = vmatprep.subr.bf16.mxu0 0
    %5688 = vmatpush1.bf16.msra.mxu0 %v5669
    %5689 = vmatprep.subr.bf16.mxu0 0
    %5690 = vmatpush1.bf16.msra.mxu0 %v5670
    %5691 = vmatprep.subr.bf16.mxu0 0
    %5692 = vmatpush1.bf16.msra.mxu0 %v5671
    %5693 = vmatprep.subr.bf16.mxu0 0
    %5694 = vmatpush1.bf16.msra.mxu0 %v5672
    %5695 = vmatprep.subr.bf16.mxu0 0
    %5696 = vmatpush1.bf16.msra.mxu0 %v5673
    %5697 = vmatprep.subr.bf16.mxu0 0
    %5698 = vmatpush1.bf16.msra.mxu0 %v5674
    %5699 = vmatprep.subr.bf16.mxu0 0
    %5700 = vmatpush1.bf16.msra.mxu0 0
    %5701 = vmatprep.subr.bf16.mxu0 0
    %5702 = vmatpush1.bf16.msra.mxu0 0
    %5703 = vmatprep.subr.bf16.mxu0 0
    %5704 = vmatpush1.bf16.msra.mxu0 0
    %5705 = vmatprep.subr.bf16.mxu0 0
    %5706 = vmatpush1.bf16.msra.mxu0 0
    %5707 = vmatprep.subr.bf16.mxu0 0
    %5708 = vmatpush1.bf16.msra.mxu0 0
    %5709 = vmatprep.subr.bf16.mxu0 0
    %5710 = vmatpush1.bf16.msra.mxu0 0
    %5711 = vmatprep.subr.bf16.mxu0 0
    %5712 = vmatpush1.bf16.msra.mxu0 0
    %5713 = vmatprep.subr.bf16.mxu0 0
    %5714 = vmatpush1.bf16.msra.mxu0 0
    %5715 = vmatprep.mubr.bf16.mxu0 0
    %5716 = vmatmul.mubr.bf16.gmra.mrb[0].mxu0 %v5359
    %v5717 = vpop.f32.mrb[0].mxu0
    %v5718 = vadd.f32 %v5634, %v5717
    %v5719 = vpop.f32.mrb[0].mxu0
    %v5720 = vpop.f32.mrb[0].mxu0
    %v5721 = vpop.f32.mrb[0].mxu0
    %5722 = vdwg.mxu0
    %v5723 = vld [vmem:[%s943] sm:$0xf]
    %v5724 = vld [vmem:[%s943 + $0x4] sm:$0xf]
    %v5725 = vld [vmem:[%s943 + $0x8] sm:$0xf]
    %v5726 = vld [vmem:[%s943 + $0xc] sm:$0xf]
    %v5727 = vld [vmem:[%s943 + $0x10] sm:$0xf]
    %v5728 = vld [vmem:[%s943 + $0x14] sm:$0xf]
    %v5729 = vld [vmem:[%s943 + $0x18] sm:$0xf]
    %v5730 = vld [vmem:[%s943 + $0x1c] sm:$0xf]
    %v5731 = vld [vmem:[%s943 + $0x20] sm:$0xf]
    %v5732 = vld [vmem:[%s943 + $0x24] sm:$0xf]
    %v5733 = vld [vmem:[%s943 + $0x28] sm:$0xf]
    %v5734 = vld [vmem:[%s943 + $0x2c] sm:$0xf]
    %v5735 = vld [vmem:[%s943 + $0x30] sm:$0xf]
    %v5736 = vld [vmem:[%s943 + $0x34] sm:$0xf]
    %v5737 = vld [vmem:[%s943 + $0x38] sm:$0xf]
    %v5738 = vld [vmem:[%s943 + $0x3c] sm:$0xf]
    %v5739 = vld [vmem:[%s8 + $0x1] sm:$0x1]
    %v5756 = vunpack.c.l.b16 %v5723
    %v5757 = vunpack.c.l.b16 %v5724
    %v5758 = vunpack.c.l.b16 %v5725
    %v5759 = vunpack.c.l.b16 %v5726
    %v5760 = vunpack.c.l.b16 %v5727
    %v5761 = vunpack.c.l.b16 %v5728
    %v5762 = vunpack.c.l.b16 %v5729
    %v5763 = vunpack.c.l.b16 %v5730
    %v5764 = vunpack.c.l.b16 %v5731
    %v5765 = vunpack.c.l.b16 %v5732
    %v5766 = vunpack.c.l.b16 %v5733
    %v5767 = vunpack.c.l.b16 %v5734
    %v5768 = vunpack.c.l.b16 %v5735
    %v5769 = vunpack.c.l.b16 %v5736
    %v5770 = vunpack.c.l.b16 %v5737
    %v5771 = vunpack.c.l.b16 %v5738
    %v5772 = vpack.c.b16 %v5757, %v5756
    %v5773 = vpack.c.b16 %v5759, %v5758
    %v5774 = vpack.c.b16 %v5761, %v5760
    %v5775 = vpack.c.b16 %v5763, %v5762
    %v5776 = vpack.c.b16 %v5765, %v5764
    %v5777 = vpack.c.b16 %v5767, %v5766
    %v5778 = vpack.c.b16 %v5769, %v5768
    %v5779 = vpack.c.b16 %v5771, %v5770
    %5788 = vmatprep.subr.bf16.mxu0 0
    %5789 = vmatpush1.bf16.msra.mxu0 %v5772
    %5790 = vmatprep.subr.bf16.mxu0 0
    %5791 = vmatpush1.bf16.msra.mxu0 %v5773
    %5792 = vmatprep.subr.bf16.mxu0 0
    %5793 = vmatpush1.bf16.msra.mxu0 %v5774
    %5794 = vmatprep.subr.bf16.mxu0 0
    %5795 = vmatpush1.bf16.msra.mxu0 %v5775
    %5796 = vmatprep.subr.bf16.mxu0 0
    %5797 = vmatpush1.bf16.msra.mxu0 %v5776
    %5798 = vmatprep.subr.bf16.mxu0 0
    %5799 = vmatpush1.bf16.msra.mxu0 %v5777
    %5800 = vmatprep.subr.bf16.mxu0 0
    %5801 = vmatpush1.bf16.msra.mxu0 %v5778
    %5802 = vmatprep.subr.bf16.mxu0 0
    %5803 = vmatpush1.bf16.msra.mxu0 %v5779
    %5804 = vmatprep.subr.bf16.mxu0 0
    %5805 = vmatpush1.bf16.msra.mxu0 0
    %5806 = vmatprep.subr.bf16.mxu0 0
    %5807 = vmatpush1.bf16.msra.mxu0 0
    %5808 = vmatprep.subr.bf16.mxu0 0
    %5809 = vmatpush1.bf16.msra.mxu0 0
    %5810 = vmatprep.subr.bf16.mxu0 0
    %5811 = vmatpush1.bf16.msra.mxu0 0
    %5812 = vmatprep.subr.bf16.mxu0 0
    %5813 = vmatpush1.bf16.msra.mxu0 0
    %5814 = vmatprep.subr.bf16.mxu0 0
    %5815 = vmatpush1.bf16.msra.mxu0 0
    %5816 = vmatprep.subr.bf16.mxu0 0
    %5817 = vmatpush1.bf16.msra.mxu0 0
    %5818 = vmatprep.subr.bf16.mxu0 0
    %5819 = vmatpush1.bf16.msra.mxu0 0
    %5820 = vmatprep.mubr.bf16.mxu0 0
    %5821 = vmatmul.mubr.bf16.gmra.mrb[0].mxu0 %v5360
    %v5822 = vpop.f32.mrb[0].mxu0
    %v5823 = vadd.f32 %v5739, %v5822
    %v5824 = vpop.f32.mrb[0].mxu0
    %v5825 = vpop.f32.mrb[0].mxu0
    %v5826 = vpop.f32.mrb[0].mxu0
    %5827 = vdwg.mxu0
    %v5828 = vmul.f32 %v5611, %v5823
    %v5829 = vadd.f32 %v5718, %v5828
    %v5830 = vtanh.pop %v5829
    %v5831 = vsub.f32 1.0, %v5617
    %v5832 = vmul.f32 %v5831, %v5830
    %v5833 = vmul.f32 %v5617, %v4878
    %v5834 = vadd.f32 %v5832, %v5833
    %s5835 = scalar_lea.vmem %s9, 5
    %5836 = vst [vmem:[%s5835] sm:$0x1] %v5834
    %s5837 = sld [smem:[#allocation3 + $0x6]]
    %s5838 = scalar_lea.vmem [#allocation4], %s5837
    %v5839 = vld [vmem:[%s5838] sm:$0x1]
    %v5840 = vpack.c.bf16 %v5839, %v5839
    %v5841 = vld [vmem:[#allocation7] sm:$0xff]
    %v5842 = vld [vmem:[#allocation7 + $0x8] sm:$0xff]
    %v5843 = vld [vmem:[#allocation7 + $0x10] sm:$0xff]
    %v5844 = vld [vmem:[#allocation7 + $0x18] sm:$0xff]
    %v5845 = vld [vmem:[#allocation7 + $0x20] sm:$0xff]
    %v5846 = vld [vmem:[#allocation7 + $0x28] sm:$0xff]
    %v5847 = vld [vmem:[#allocation7 + $0x30] sm:$0xff]
    %v5848 = vld [vmem:[#allocation7 + $0x38] sm:$0xff]
    %v5849 = vld [vmem:[#allocation7 + $0x40] sm:$0xff]
    %v5850 = vld [vmem:[#allocation7 + $0x48] sm:$0xff]
    %v5851 = vld [vmem:[#allocation7 + $0x50] sm:$0xff]
    %v5852 = vld [vmem:[#allocation7 + $0x58] sm:$0xff]
    %v5853 = vld [vmem:[#allocation7 + $0x60] sm:$0xff]
    %v5854 = vld [vmem:[#allocation7 + $0x68] sm:$0xff]
    %v5855 = vld [vmem:[#allocation7 + $0x70] sm:$0xff]
    %v5856 = vld [vmem:[#allocation7 + $0x78] sm:$0xff]
    %v5857 = vld [vmem:[#allocation7 + $0x80] sm:$0xff]
    %v5858 = vld [vmem:[#allocation7 + $0x88] sm:$0xff]
    %v5859 = vld [vmem:[#allocation7 + $0x90] sm:$0xff]
    %v5860 = vld [vmem:[#allocation7 + $0x98] sm:$0xff]
    %v5861 = vld [vmem:[#allocation7 + $0xa0] sm:$0xff]
    %v5862 = vld [vmem:[#allocation7 + $0xa8] sm:$0xff]
    %v5863 = vld [vmem:[#allocation7 + $0xb0] sm:$0xff]
    %v5864 = vld [vmem:[#allocation7 + $0xb8] sm:$0xff]
    %v5865 = vld [vmem:[#allocation7 + $0xc0] sm:$0xff]
    %v5866 = vld [vmem:[#allocation7 + $0xc8] sm:$0xff]
    %v5867 = vld [vmem:[#allocation7 + $0xd0] sm:$0xff]
    %v5868 = vld [vmem:[#allocation7 + $0xd8] sm:$0xff]
    %v5869 = vld [vmem:[#allocation7 + $0xe0] sm:$0xff]
    %v5870 = vld [vmem:[#allocation7 + $0xe8] sm:$0xff]
    %v5871 = vld [vmem:[#allocation7 + $0xf0] sm:$0xff]
    %v5872 = vld [vmem:[#allocation7 + $0xf8] sm:$0xff]
    %v5873 = vld [vmem:[%s4] ss:$2 sm:$0x3]
    %v5906 = vunpack.c.l.b16 %v5841
    %v5907 = vunpack.c.h.b16 %v5841
    %v5908 = vunpack.c.l.b16 %v5842
    %v5909 = vunpack.c.h.b16 %v5842
    %v5910 = vunpack.c.l.b16 %v5843
    %v5911 = vunpack.c.h.b16 %v5843
    %v5912 = vunpack.c.l.b16 %v5844
    %v5913 = vunpack.c.h.b16 %v5844
    %v5914 = vunpack.c.l.b16 %v5845
    %v5915 = vunpack.c.h.b16 %v5845
    %v5916 = vunpack.c.l.b16 %v5846
    %v5917 = vunpack.c.h.b16 %v5846
    %v5918 = vunpack.c.l.b16 %v5847
    %v5919 = vunpack.c.h.b16 %v5847
    %v5920 = vunpack.c.l.b16 %v5848
    %v5921 = vunpack.c.h.b16 %v5848
    %v5922 = vunpack.c.l.b16 %v5849
    %v5923 = vunpack.c.h.b16 %v5849
    %v5924 = vunpack.c.l.b16 %v5850
    %v5925 = vunpack.c.h.b16 %v5850
    %v5926 = vunpack.c.l.b16 %v5851
    %v5927 = vunpack.c.h.b16 %v5851
    %v5928 = vunpack.c.l.b16 %v5852
    %v5929 = vunpack.c.h.b16 %v5852
    %v5930 = vunpack.c.l.b16 %v5853
    %v5931 = vunpack.c.h.b16 %v5853
    %v5932 = vunpack.c.l.b16 %v5854
    %v5933 = vunpack.c.h.b16 %v5854
    %v5934 = vunpack.c.l.b16 %v5855
    %v5935 = vunpack.c.h.b16 %v5855
    %v5936 = vunpack.c.l.b16 %v5856
    %v5937 = vunpack.c.h.b16 %v5856
    %v5938 = vunpack.c.l.b16 %v5857
    %v5939 = vunpack.c.h.b16 %v5857
    %v5940 = vunpack.c.l.b16 %v5858
    %v5941 = vunpack.c.h.b16 %v5858
    %v5942 = vunpack.c.l.b16 %v5859
    %v5943 = vunpack.c.h.b16 %v5859
    %v5944 = vunpack.c.l.b16 %v5860
    %v5945 = vunpack.c.h.b16 %v5860
    %v5946 = vunpack.c.l.b16 %v5861
    %v5947 = vunpack.c.h.b16 %v5861
    %v5948 = vunpack.c.l.b16 %v5862
    %v5949 = vunpack.c.h.b16 %v5862
    %v5950 = vunpack.c.l.b16 %v5863
    %v5951 = vunpack.c.h.b16 %v5863
    %v5952 = vunpack.c.l.b16 %v5864
    %v5953 = vunpack.c.h.b16 %v5864
    %v5954 = vunpack.c.l.b16 %v5865
    %v5955 = vunpack.c.h.b16 %v5865
    %v5956 = vunpack.c.l.b16 %v5866
    %v5957 = vunpack.c.h.b16 %v5866
    %v5958 = vunpack.c.l.b16 %v5867
    %v5959 = vunpack.c.h.b16 %v5867
    %v5960 = vunpack.c.l.b16 %v5868
    %v5961 = vunpack.c.h.b16 %v5868
    %v5962 = vunpack.c.l.b16 %v5869
    %v5963 = vunpack.c.h.b16 %v5869
    %v5964 = vunpack.c.l.b16 %v5870
    %v5965 = vunpack.c.h.b16 %v5870
    %v5966 = vunpack.c.l.b16 %v5871
    %v5967 = vunpack.c.h.b16 %v5871
    %v5968 = vunpack.c.l.b16 %v5872
    %v5969 = vunpack.c.h.b16 %v5872
    %v5970 = vpack.c.b16 %v5908, %v5906
    %v5971 = vpack.c.b16 %v5909, %v5907
    %v5972 = vpack.c.b16 %v5912, %v5910
    %v5973 = vpack.c.b16 %v5913, %v5911
    %v5974 = vpack.c.b16 %v5916, %v5914
    %v5975 = vpack.c.b16 %v5917, %v5915
    %v5976 = vpack.c.b16 %v5920, %v5918
    %v5977 = vpack.c.b16 %v5921, %v5919
    %v5978 = vpack.c.b16 %v5924, %v5922
    %v5979 = vpack.c.b16 %v5925, %v5923
    %v5980 = vpack.c.b16 %v5928, %v5926
    %v5981 = vpack.c.b16 %v5929, %v5927
    %v5982 = vpack.c.b16 %v5932, %v5930
    %v5983 = vpack.c.b16 %v5933, %v5931
    %v5984 = vpack.c.b16 %v5936, %v5934
    %v5985 = vpack.c.b16 %v5937, %v5935
    %v5986 = vpack.c.b16 %v5940, %v5938
    %v5987 = vpack.c.b16 %v5941, %v5939
    %v5988 = vpack.c.b16 %v5944, %v5942
    %v5989 = vpack.c.b16 %v5945, %v5943
    %v5990 = vpack.c.b16 %v5948, %v5946
    %v5991 = vpack.c.b16 %v5949, %v5947
    %v5992 = vpack.c.b16 %v5952, %v5950
    %v5993 = vpack.c.b16 %v5953, %v5951
    %v5994 = vpack.c.b16 %v5956, %v5954
    %v5995 = vpack.c.b16 %v5957, %v5955
    %v5996 = vpack.c.b16 %v5960, %v5958
    %v5997 = vpack.c.b16 %v5961, %v5959
    %v5998 = vpack.c.b16 %v5964, %v5962
    %v5999 = vpack.c.b16 %v5965, %v5963
    %v6000 = vpack.c.b16 %v5968, %v5966
    %v6001 = vpack.c.b16 %v5969, %v5967
    %v6035 = vlaneseq
    %v6036 = vshrl.u32 %v6035, 7
    %v6037 = vsub.s32 0, %v6036
    %v6038 = vrot.slane %v5873, %v6037
    %v6039 = vlaneseq
    %v6040 = vshrl.u32 %v6039, 7
    %v6041 = vsub.s32 1, %v6040
    %v6042 = vrot.slane %v5873, %v6041
    %6045 = vmatprep.subr.bf16.mxu0 %v5971
    %6046 = vmatpush1.bf16.msra.mxu0 %v5970
    %6047 = vmatprep.subr.bf16.mxu0 %v5973
    %6048 = vmatpush1.bf16.msra.mxu0 %v5972
    %6049 = vmatprep.subr.bf16.mxu0 %v5975
    %6050 = vmatpush1.bf16.msra.mxu0 %v5974
    %6051 = vmatprep.subr.bf16.mxu0 %v5977
    %6052 = vmatpush1.bf16.msra.mxu0 %v5976
    %6053 = vmatprep.subr.bf16.mxu0 %v5979
    %6054 = vmatpush1.bf16.msra.mxu0 %v5978
    %6055 = vmatprep.subr.bf16.mxu0 %v5981
    %6056 = vmatpush1.bf16.msra.mxu0 %v5980
    %6057 = vmatprep.subr.bf16.mxu0 %v5983
    %6058 = vmatpush1.bf16.msra.mxu0 %v5982
    %6059 = vmatprep.subr.bf16.mxu0 %v5985
    %6060 = vmatpush1.bf16.msra.mxu0 %v5984
    %6061 = vmatprep.subr.bf16.mxu0 %v5987
    %6062 = vmatpush1.bf16.msra.mxu0 %v5986
    %6063 = vmatprep.subr.bf16.mxu0 %v5989
    %6064 = vmatpush1.bf16.msra.mxu0 %v5988
    %6065 = vmatprep.subr.bf16.mxu0 %v5991
    %6066 = vmatpush1.bf16.msra.mxu0 %v5990
    %6067 = vmatprep.subr.bf16.mxu0 %v5993
    %6068 = vmatpush1.bf16.msra.mxu0 %v5992
    %6069 = vmatprep.subr.bf16.mxu0 %v5995
    %6070 = vmatpush1.bf16.msra.mxu0 %v5994
    %6071 = vmatprep.subr.bf16.mxu0 %v5997
    %6072 = vmatpush1.bf16.msra.mxu0 %v5996
    %6073 = vmatprep.subr.bf16.mxu0 %v5999
    %6074 = vmatpush1.bf16.msra.mxu0 %v5998
    %6075 = vmatprep.subr.bf16.mxu0 %v6001
    %6076 = vmatpush1.bf16.msra.mxu0 %v6000
    %6077 = vmatprep.mubr.bf16.mxu0 %v5359
    %6078 = vmatmul.mubr.bf16.gmra.mrb[0].mxu0 %v5840
    %v6079 = vpop.f32.mrb[0].mxu0
    %v6080 = vadd.f32 %v6038, %v6079
    %v6081 = vpop.f32.mrb[0].mxu0
    %v6082 = vadd.f32 %v6042, %v6081
    %v6083 = vpop.f32.mrb[0].mxu0
    %v6084 = vpop.f32.mrb[0].mxu0
    %6085 = vdwg.mxu0
    %v6086 = vxor.u32 %v6080, 2147483648
    %v6087 = vmul.f32 %v6086, 1.442695
    %v6088 = vpow.pop %v6087
    %v6089 = vadd.f32 %v6088, 1.0
    %v6090 = vrcp.pop %v6089
    %v6091 = vmul.f32 1.0, %v6090
    %v6092 = vxor.u32 %v6082, 2147483648
    %v6093 = vmul.f32 %v6092, 1.442695
    %v6094 = vpow.pop %v6093
    %v6095 = vadd.f32 %v6094, 1.0
    %v6096 = vrcp.pop %v6095
    %v6097 = vmul.f32 1.0, %v6096
    %v6098 = vld [vmem:[#allocation9] sm:$0xf]
    %v6099 = vld [vmem:[#allocation9 + $0x4] sm:$0xf]
    %v6100 = vld [vmem:[#allocation9 + $0x8] sm:$0xf]
    %v6101 = vld [vmem:[#allocation9 + $0xc] sm:$0xf]
    %v6102 = vld [vmem:[#allocation9 + $0x10] sm:$0xf]
    %v6103 = vld [vmem:[#allocation9 + $0x14] sm:$0xf]
    %v6104 = vld [vmem:[#allocation9 + $0x18] sm:$0xf]
    %v6105 = vld [vmem:[#allocation9 + $0x1c] sm:$0xf]
    %v6106 = vld [vmem:[#allocation9 + $0x20] sm:$0xf]
    %v6107 = vld [vmem:[#allocation9 + $0x24] sm:$0xf]
    %v6108 = vld [vmem:[#allocation9 + $0x28] sm:$0xf]
    %v6109 = vld [vmem:[#allocation9 + $0x2c] sm:$0xf]
    %v6110 = vld [vmem:[#allocation9 + $0x30] sm:$0xf]
    %v6111 = vld [vmem:[#allocation9 + $0x34] sm:$0xf]
    %v6112 = vld [vmem:[#allocation9 + $0x38] sm:$0xf]
    %v6113 = vld [vmem:[#allocation9 + $0x3c] sm:$0xf]
    %v6114 = vld [vmem:[%s6] sm:$0x1]
    %v6131 = vunpack.c.l.b16 %v6098
    %v6132 = vunpack.c.l.b16 %v6099
    %v6133 = vunpack.c.l.b16 %v6100
    %v6134 = vunpack.c.l.b16 %v6101
    %v6135 = vunpack.c.l.b16 %v6102
    %v6136 = vunpack.c.l.b16 %v6103
    %v6137 = vunpack.c.l.b16 %v6104
    %v6138 = vunpack.c.l.b16 %v6105
    %v6139 = vunpack.c.l.b16 %v6106
    %v6140 = vunpack.c.l.b16 %v6107
    %v6141 = vunpack.c.l.b16 %v6108
    %v6142 = vunpack.c.l.b16 %v6109
    %v6143 = vunpack.c.l.b16 %v6110
    %v6144 = vunpack.c.l.b16 %v6111
    %v6145 = vunpack.c.l.b16 %v6112
    %v6146 = vunpack.c.l.b16 %v6113
    %v6147 = vpack.c.b16 %v6132, %v6131
    %v6148 = vpack.c.b16 %v6134, %v6133
    %v6149 = vpack.c.b16 %v6136, %v6135
    %v6150 = vpack.c.b16 %v6138, %v6137
    %v6151 = vpack.c.b16 %v6140, %v6139
    %v6152 = vpack.c.b16 %v6142, %v6141
    %v6153 = vpack.c.b16 %v6144, %v6143
    %v6154 = vpack.c.b16 %v6146, %v6145
    %6163 = vmatprep.subr.bf16.mxu0 0
    %6164 = vmatpush1.bf16.msra.mxu0 %v6147
    %6165 = vmatprep.subr.bf16.mxu0 0
    %6166 = vmatpush1.bf16.msra.mxu0 %v6148
    %6167 = vmatprep.subr.bf16.mxu0 0
    %6168 = vmatpush1.bf16.msra.mxu0 %v6149
    %6169 = vmatprep.subr.bf16.mxu0 0
    %6170 = vmatpush1.bf16.msra.mxu0 %v6150
    %6171 = vmatprep.subr.bf16.mxu0 0
    %6172 = vmatpush1.bf16.msra.mxu0 %v6151
    %6173 = vmatprep.subr.bf16.mxu0 0
    %6174 = vmatpush1.bf16.msra.mxu0 %v6152
    %6175 = vmatprep.subr.bf16.mxu0 0
    %6176 = vmatpush1.bf16.msra.mxu0 %v6153
    %6177 = vmatprep.subr.bf16.mxu0 0
    %6178 = vmatpush1.bf16.msra.mxu0 %v6154
    %6179 = vmatprep.subr.bf16.mxu0 0
    %6180 = vmatpush1.bf16.msra.mxu0 0
    %6181 = vmatprep.subr.bf16.mxu0 0
    %6182 = vmatpush1.bf16.msra.mxu0 0
    %6183 = vmatprep.subr.bf16.mxu0 0
    %6184 = vmatpush1.bf16.msra.mxu0 0
    %6185 = vmatprep.subr.bf16.mxu0 0
    %6186 = vmatpush1.bf16.msra.mxu0 0
    %6187 = vmatprep.subr.bf16.mxu0 0
    %6188 = vmatpush1.bf16.msra.mxu0 0
    %6189 = vmatprep.subr.bf16.mxu0 0
    %6190 = vmatpush1.bf16.msra.mxu0 0
    %6191 = vmatprep.subr.bf16.mxu0 0
    %6192 = vmatpush1.bf16.msra.mxu0 0
    %6193 = vmatprep.subr.bf16.mxu0 0
    %6194 = vmatpush1.bf16.msra.mxu0 0
    %6195 = vmatprep.mubr.bf16.mxu0 0
    %6196 = vmatmul.mubr.bf16.gmra.mrb[0].mxu0 %v5840
    %v6197 = vpop.f32.mrb[0].mxu0
    %v6198 = vadd.f32 %v6114, %v6197
    %v6199 = vpop.f32.mrb[0].mxu0
    %v6200 = vpop.f32.mrb[0].mxu0
    %v6201 = vpop.f32.mrb[0].mxu0
    %6202 = vdwg.mxu0
    %v6203 = vld [vmem:[#allocation10] sm:$0xf]
    %v6204 = vld [vmem:[#allocation10 + $0x4] sm:$0xf]
    %v6205 = vld [vmem:[#allocation10 + $0x8] sm:$0xf]
    %v6206 = vld [vmem:[#allocation10 + $0xc] sm:$0xf]
    %v6207 = vld [vmem:[#allocation10 + $0x10] sm:$0xf]
    %v6208 = vld [vmem:[#allocation10 + $0x14] sm:$0xf]
    %v6209 = vld [vmem:[#allocation10 + $0x18] sm:$0xf]
    %v6210 = vld [vmem:[#allocation10 + $0x1c] sm:$0xf]
    %v6211 = vld [vmem:[#allocation10 + $0x20] sm:$0xf]
    %v6212 = vld [vmem:[#allocation10 + $0x24] sm:$0xf]
    %v6213 = vld [vmem:[#allocation10 + $0x28] sm:$0xf]
    %v6214 = vld [vmem:[#allocation10 + $0x2c] sm:$0xf]
    %v6215 = vld [vmem:[#allocation10 + $0x30] sm:$0xf]
    %v6216 = vld [vmem:[#allocation10 + $0x34] sm:$0xf]
    %v6217 = vld [vmem:[#allocation10 + $0x38] sm:$0xf]
    %v6218 = vld [vmem:[#allocation10 + $0x3c] sm:$0xf]
    %v6219 = vld [vmem:[%s8] sm:$0x1]
    %v6236 = vunpack.c.l.b16 %v6203
    %v6237 = vunpack.c.l.b16 %v6204
    %v6238 = vunpack.c.l.b16 %v6205
    %v6239 = vunpack.c.l.b16 %v6206
    %v6240 = vunpack.c.l.b16 %v6207
    %v6241 = vunpack.c.l.b16 %v6208
    %v6242 = vunpack.c.l.b16 %v6209
    %v6243 = vunpack.c.l.b16 %v6210
    %v6244 = vunpack.c.l.b16 %v6211
    %v6245 = vunpack.c.l.b16 %v6212
    %v6246 = vunpack.c.l.b16 %v6213
    %v6247 = vunpack.c.l.b16 %v6214
    %v6248 = vunpack.c.l.b16 %v6215
    %v6249 = vunpack.c.l.b16 %v6216
    %v6250 = vunpack.c.l.b16 %v6217
    %v6251 = vunpack.c.l.b16 %v6218
    %v6252 = vpack.c.b16 %v6237, %v6236
    %v6253 = vpack.c.b16 %v6239, %v6238
    %v6254 = vpack.c.b16 %v6241, %v6240
    %v6255 = vpack.c.b16 %v6243, %v6242
    %v6256 = vpack.c.b16 %v6245, %v6244
    %v6257 = vpack.c.b16 %v6247, %v6246
    %v6258 = vpack.c.b16 %v6249, %v6248
    %v6259 = vpack.c.b16 %v6251, %v6250
    %6268 = vmatprep.subr.bf16.mxu0 0
    %6269 = vmatpush1.bf16.msra.mxu0 %v6252
    %6270 = vmatprep.subr.bf16.mxu0 0
    %6271 = vmatpush1.bf16.msra.mxu0 %v6253
    %6272 = vmatprep.subr.bf16.mxu0 0
    %6273 = vmatpush1.bf16.msra.mxu0 %v6254
    %6274 = vmatprep.subr.bf16.mxu0 0
    %6275 = vmatpush1.bf16.msra.mxu0 %v6255
    %6276 = vmatprep.subr.bf16.mxu0 0
    %6277 = vmatpush1.bf16.msra.mxu0 %v6256
    %6278 = vmatprep.subr.bf16.mxu0 0
    %6279 = vmatpush1.bf16.msra.mxu0 %v6257
    %6280 = vmatprep.subr.bf16.mxu0 0
    %6281 = vmatpush1.bf16.msra.mxu0 %v6258
    %6282 = vmatprep.subr.bf16.mxu0 0
    %6283 = vmatpush1.bf16.msra.mxu0 %v6259
    %6284 = vmatprep.subr.bf16.mxu0 0
    %6285 = vmatpush1.bf16.msra.mxu0 0
    %6286 = vmatprep.subr.bf16.mxu0 0
    %6287 = vmatpush1.bf16.msra.mxu0 0
    %6288 = vmatprep.subr.bf16.mxu0 0
    %6289 = vmatpush1.bf16.msra.mxu0 0
    %6290 = vmatprep.subr.bf16.mxu0 0
    %6291 = vmatpush1.bf16.msra.mxu0 0
    %6292 = vmatprep.subr.bf16.mxu0 0
    %6293 = vmatpush1.bf16.msra.mxu0 0
    %6294 = vmatprep.subr.bf16.mxu0 0
    %6295 = vmatpush1.bf16.msra.mxu0 0
    %6296 = vmatprep.subr.bf16.mxu0 0
    %6297 = vmatpush1.bf16.msra.mxu0 0
    %6298 = vmatprep.subr.bf16.mxu0 0
    %6299 = vmatpush1.bf16.msra.mxu0 0
    %6300 = vmatprep.mubr.bf16.mxu0 0
    %6301 = vmatmul.mubr.bf16.gmra.mrb[0].mxu0 %v5359
    %v6302 = vpop.f32.mrb[0].mxu0
    %v6303 = vadd.f32 %v6219, %v6302
    %v6304 = vpop.f32.mrb[0].mxu0
    %v6305 = vpop.f32.mrb[0].mxu0
    %v6306 = vpop.f32.mrb[0].mxu0
    %6307 = vdwg.mxu0
    %v6308 = vmul.f32 %v6091, %v6303
    %v6309 = vadd.f32 %v6198, %v6308
    %v6310 = vtanh.pop %v6309
    %v6311 = vsub.f32 1.0, %v6097
    %v6312 = vmul.f32 %v6311, %v6310
    %v6313 = vmul.f32 %v6097, %v5358
    %v6314 = vadd.f32 %v6312, %v6313
    %v6315 = vpack.c.bf16 %v6314, %v6314
    %v6316 = vpack.c.bf16 %v5834, %v5834
    %v6317 = vld [vmem:[%s578] sm:$0xff]
    %v6318 = vld [vmem:[%s578 + $0x8] sm:$0xff]
    %v6319 = vld [vmem:[%s578 + $0x10] sm:$0xff]
    %v6320 = vld [vmem:[%s578 + $0x18] sm:$0xff]
    %v6321 = vld [vmem:[%s578 + $0x20] sm:$0xff]
    %v6322 = vld [vmem:[%s578 + $0x28] sm:$0xff]
    %v6323 = vld [vmem:[%s578 + $0x30] sm:$0xff]
    %v6324 = vld [vmem:[%s578 + $0x38] sm:$0xff]
    %v6325 = vld [vmem:[%s578 + $0x40] sm:$0xff]
    %v6326 = vld [vmem:[%s578 + $0x48] sm:$0xff]
    %v6327 = vld [vmem:[%s578 + $0x50] sm:$0xff]
    %v6328 = vld [vmem:[%s578 + $0x58] sm:$0xff]
    %v6329 = vld [vmem:[%s578 + $0x60] sm:$0xff]
    %v6330 = vld [vmem:[%s578 + $0x68] sm:$0xff]
    %v6331 = vld [vmem:[%s578 + $0x70] sm:$0xff]
    %v6332 = vld [vmem:[%s578 + $0x78] sm:$0xff]
    %v6333 = vld [vmem:[%s578 + $0x80] sm:$0xff]
    %v6334 = vld [vmem:[%s578 + $0x88] sm:$0xff]
    %v6335 = vld [vmem:[%s578 + $0x90] sm:$0xff]
    %v6336 = vld [vmem:[%s578 + $0x98] sm:$0xff]
    %v6337 = vld [vmem:[%s578 + $0xa0] sm:$0xff]
    %v6338 = vld [vmem:[%s578 + $0xa8] sm:$0xff]
    %v6339 = vld [vmem:[%s578 + $0xb0] sm:$0xff]
    %v6340 = vld [vmem:[%s578 + $0xb8] sm:$0xff]
    %v6341 = vld [vmem:[%s578 + $0xc0] sm:$0xff]
    %v6342 = vld [vmem:[%s578 + $0xc8] sm:$0xff]
    %v6343 = vld [vmem:[%s578 + $0xd0] sm:$0xff]
    %v6344 = vld [vmem:[%s578 + $0xd8] sm:$0xff]
    %v6345 = vld [vmem:[%s578 + $0xe0] sm:$0xff]
    %v6346 = vld [vmem:[%s578 + $0xe8] sm:$0xff]
    %v6347 = vld [vmem:[%s578 + $0xf0] sm:$0xff]
    %v6348 = vld [vmem:[%s578 + $0xf8] sm:$0xff]
    %v6349 = vld [vmem:[%s611] ss:$2 sm:$0x3]
    %v6382 = vunpack.c.l.b16 %v6317
    %v6383 = vunpack.c.h.b16 %v6317
    %v6384 = vunpack.c.l.b16 %v6318
    %v6385 = vunpack.c.h.b16 %v6318
    %v6386 = vunpack.c.l.b16 %v6319
    %v6387 = vunpack.c.h.b16 %v6319
    %v6388 = vunpack.c.l.b16 %v6320
    %v6389 = vunpack.c.h.b16 %v6320
    %v6390 = vunpack.c.l.b16 %v6321
    %v6391 = vunpack.c.h.b16 %v6321
    %v6392 = vunpack.c.l.b16 %v6322
    %v6393 = vunpack.c.h.b16 %v6322
    %v6394 = vunpack.c.l.b16 %v6323
    %v6395 = vunpack.c.h.b16 %v6323
    %v6396 = vunpack.c.l.b16 %v6324
    %v6397 = vunpack.c.h.b16 %v6324
    %v6398 = vunpack.c.l.b16 %v6325
    %v6399 = vunpack.c.h.b16 %v6325
    %v6400 = vunpack.c.l.b16 %v6326
    %v6401 = vunpack.c.h.b16 %v6326
    %v6402 = vunpack.c.l.b16 %v6327
    %v6403 = vunpack.c.h.b16 %v6327
    %v6404 = vunpack.c.l.b16 %v6328
    %v6405 = vunpack.c.h.b16 %v6328
    %v6406 = vunpack.c.l.b16 %v6329
    %v6407 = vunpack.c.h.b16 %v6329
    %v6408 = vunpack.c.l.b16 %v6330
    %v6409 = vunpack.c.h.b16 %v6330
    %v6410 = vunpack.c.l.b16 %v6331
    %v6411 = vunpack.c.h.b16 %v6331
    %v6412 = vunpack.c.l.b16 %v6332
    %v6413 = vunpack.c.h.b16 %v6332
    %v6414 = vunpack.c.l.b16 %v6333
    %v6415 = vunpack.c.h.b16 %v6333
    %v6416 = vunpack.c.l.b16 %v6334
    %v6417 = vunpack.c.h.b16 %v6334
    %v6418 = vunpack.c.l.b16 %v6335
    %v6419 = vunpack.c.h.b16 %v6335
    %v6420 = vunpack.c.l.b16 %v6336
    %v6421 = vunpack.c.h.b16 %v6336
    %v6422 = vunpack.c.l.b16 %v6337
    %v6423 = vunpack.c.h.b16 %v6337
    %v6424 = vunpack.c.l.b16 %v6338
    %v6425 = vunpack.c.h.b16 %v6338
    %v6426 = vunpack.c.l.b16 %v6339
    %v6427 = vunpack.c.h.b16 %v6339
    %v6428 = vunpack.c.l.b16 %v6340
    %v6429 = vunpack.c.h.b16 %v6340
    %v6430 = vunpack.c.l.b16 %v6341
    %v6431 = vunpack.c.h.b16 %v6341
    %v6432 = vunpack.c.l.b16 %v6342
    %v6433 = vunpack.c.h.b16 %v6342
    %v6434 = vunpack.c.l.b16 %v6343
    %v6435 = vunpack.c.h.b16 %v6343
    %v6436 = vunpack.c.l.b16 %v6344
    %v6437 = vunpack.c.h.b16 %v6344
    %v6438 = vunpack.c.l.b16 %v6345
    %v6439 = vunpack.c.h.b16 %v6345
    %v6440 = vunpack.c.l.b16 %v6346
    %v6441 = vunpack.c.h.b16 %v6346
    %v6442 = vunpack.c.l.b16 %v6347
    %v6443 = vunpack.c.h.b16 %v6347
    %v6444 = vunpack.c.l.b16 %v6348
    %v6445 = vunpack.c.h.b16 %v6348
    %v6446 = vpack.c.b16 %v6384, %v6382
    %v6447 = vpack.c.b16 %v6385, %v6383
    %v6448 = vpack.c.b16 %v6388, %v6386
    %v6449 = vpack.c.b16 %v6389, %v6387
    %v6450 = vpack.c.b16 %v6392, %v6390
    %v6451 = vpack.c.b16 %v6393, %v6391
    %v6452 = vpack.c.b16 %v6396, %v6394
    %v6453 = vpack.c.b16 %v6397, %v6395
    %v6454 = vpack.c.b16 %v6400, %v6398
    %v6455 = vpack.c.b16 %v6401, %v6399
    %v6456 = vpack.c.b16 %v6404, %v6402
    %v6457 = vpack.c.b16 %v6405, %v6403
    %v6458 = vpack.c.b16 %v6408, %v6406
    %v6459 = vpack.c.b16 %v6409, %v6407
    %v6460 = vpack.c.b16 %v6412, %v6410
    %v6461 = vpack.c.b16 %v6413, %v6411
    %v6462 = vpack.c.b16 %v6416, %v6414
    %v6463 = vpack.c.b16 %v6417, %v6415
    %v6464 = vpack.c.b16 %v6420, %v6418
    %v6465 = vpack.c.b16 %v6421, %v6419
    %v6466 = vpack.c.b16 %v6424, %v6422
    %v6467 = vpack.c.b16 %v6425, %v6423
    %v6468 = vpack.c.b16 %v6428, %v6426
    %v6469 = vpack.c.b16 %v6429, %v6427
    %v6470 = vpack.c.b16 %v6432, %v6430
    %v6471 = vpack.c.b16 %v6433, %v6431
    %v6472 = vpack.c.b16 %v6436, %v6434
    %v6473 = vpack.c.b16 %v6437, %v6435
    %v6474 = vpack.c.b16 %v6440, %v6438
    %v6475 = vpack.c.b16 %v6441, %v6439
    %v6476 = vpack.c.b16 %v6444, %v6442
    %v6477 = vpack.c.b16 %v6445, %v6443
    %v6511 = vlaneseq
    %v6512 = vshrl.u32 %v6511, 7
    %v6513 = vsub.s32 0, %v6512
    %v6514 = vrot.slane %v6349, %v6513
    %v6515 = vlaneseq
    %v6516 = vshrl.u32 %v6515, 7
    %v6517 = vsub.s32 1, %v6516
    %v6518 = vrot.slane %v6349, %v6517
    %6521 = vmatprep.subr.bf16.mxu0 %v6447
    %6522 = vmatpush1.bf16.msra.mxu0 %v6446
    %6523 = vmatprep.subr.bf16.mxu0 %v6449
    %6524 = vmatpush1.bf16.msra.mxu0 %v6448
    %6525 = vmatprep.subr.bf16.mxu0 %v6451
    %6526 = vmatpush1.bf16.msra.mxu0 %v6450
    %6527 = vmatprep.subr.bf16.mxu0 %v6453
    %6528 = vmatpush1.bf16.msra.mxu0 %v6452
    %6529 = vmatprep.subr.bf16.mxu0 %v6455
    %6530 = vmatpush1.bf16.msra.mxu0 %v6454
    %6531 = vmatprep.subr.bf16.mxu0 %v6457
    %6532 = vmatpush1.bf16.msra.mxu0 %v6456
    %6533 = vmatprep.subr.bf16.mxu0 %v6459
    %6534 = vmatpush1.bf16.msra.mxu0 %v6458
    %6535 = vmatprep.subr.bf16.mxu0 %v6461
    %6536 = vmatpush1.bf16.msra.mxu0 %v6460
    %6537 = vmatprep.subr.bf16.mxu0 %v6463
    %6538 = vmatpush1.bf16.msra.mxu0 %v6462
    %6539 = vmatprep.subr.bf16.mxu0 %v6465
    %6540 = vmatpush1.bf16.msra.mxu0 %v6464
    %6541 = vmatprep.subr.bf16.mxu0 %v6467
    %6542 = vmatpush1.bf16.msra.mxu0 %v6466
    %6543 = vmatprep.subr.bf16.mxu0 %v6469
    %6544 = vmatpush1.bf16.msra.mxu0 %v6468
    %6545 = vmatprep.subr.bf16.mxu0 %v6471
    %6546 = vmatpush1.bf16.msra.mxu0 %v6470
    %6547 = vmatprep.subr.bf16.mxu0 %v6473
    %6548 = vmatpush1.bf16.msra.mxu0 %v6472
    %6549 = vmatprep.subr.bf16.mxu0 %v6475
    %6550 = vmatpush1.bf16.msra.mxu0 %v6474
    %6551 = vmatprep.subr.bf16.mxu0 %v6477
    %6552 = vmatpush1.bf16.msra.mxu0 %v6476
    %6553 = vmatprep.mubr.bf16.mxu0 %v6316
    %6554 = vmatmul.mubr.bf16.gmra.mrb[0].mxu0 %v6315
    %v6555 = vpop.f32.mrb[0].mxu0
    %v6556 = vadd.f32 %v6514, %v6555
    %v6557 = vpop.f32.mrb[0].mxu0
    %v6558 = vadd.f32 %v6518, %v6557
    %v6559 = vpop.f32.mrb[0].mxu0
    %v6560 = vpop.f32.mrb[0].mxu0
    %6561 = vdwg.mxu0
    %v6562 = vxor.u32 %v6556, 2147483648
    %v6563 = vmul.f32 %v6562, 1.442695
    %v6564 = vpow.pop %v6563
    %v6565 = vadd.f32 %v6564, 1.0
    %v6566 = vrcp.pop %v6565
    %v6567 = vmul.f32 1.0, %v6566
    %v6568 = vxor.u32 %v6558, 2147483648
    %v6569 = vmul.f32 %v6568, 1.442695
    %v6570 = vpow.pop %v6569
    %v6571 = vadd.f32 %v6570, 1.0
    %v6572 = vrcp.pop %v6571
    %v6573 = vmul.f32 1.0, %v6572
    %v6574 = vld [vmem:[%s837] sm:$0xf]
    %v6575 = vld [vmem:[%s837 + $0x4] sm:$0xf]
    %v6576 = vld [vmem:[%s837 + $0x8] sm:$0xf]
    %v6577 = vld [vmem:[%s837 + $0xc] sm:$0xf]
    %v6578 = vld [vmem:[%s837 + $0x10] sm:$0xf]
    %v6579 = vld [vmem:[%s837 + $0x14] sm:$0xf]
    %v6580 = vld [vmem:[%s837 + $0x18] sm:$0xf]
    %v6581 = vld [vmem:[%s837 + $0x1c] sm:$0xf]
    %v6582 = vld [vmem:[%s837 + $0x20] sm:$0xf]
    %v6583 = vld [vmem:[%s837 + $0x24] sm:$0xf]
    %v6584 = vld [vmem:[%s837 + $0x28] sm:$0xf]
    %v6585 = vld [vmem:[%s837 + $0x2c] sm:$0xf]
    %v6586 = vld [vmem:[%s837 + $0x30] sm:$0xf]
    %v6587 = vld [vmem:[%s837 + $0x34] sm:$0xf]
    %v6588 = vld [vmem:[%s837 + $0x38] sm:$0xf]
    %v6589 = vld [vmem:[%s837 + $0x3c] sm:$0xf]
    %v6590 = vld [vmem:[%s6 + $0x1] sm:$0x1]
    %v6607 = vunpack.c.l.b16 %v6574
    %v6608 = vunpack.c.l.b16 %v6575
    %v6609 = vunpack.c.l.b16 %v6576
    %v6610 = vunpack.c.l.b16 %v6577
    %v6611 = vunpack.c.l.b16 %v6578
    %v6612 = vunpack.c.l.b16 %v6579
    %v6613 = vunpack.c.l.b16 %v6580
    %v6614 = vunpack.c.l.b16 %v6581
    %v6615 = vunpack.c.l.b16 %v6582
    %v6616 = vunpack.c.l.b16 %v6583
    %v6617 = vunpack.c.l.b16 %v6584
    %v6618 = vunpack.c.l.b16 %v6585
    %v6619 = vunpack.c.l.b16 %v6586
    %v6620 = vunpack.c.l.b16 %v6587
    %v6621 = vunpack.c.l.b16 %v6588
    %v6622 = vunpack.c.l.b16 %v6589
    %v6623 = vpack.c.b16 %v6608, %v6607
    %v6624 = vpack.c.b16 %v6610, %v6609
    %v6625 = vpack.c.b16 %v6612, %v6611
    %v6626 = vpack.c.b16 %v6614, %v6613
    %v6627 = vpack.c.b16 %v6616, %v6615
    %v6628 = vpack.c.b16 %v6618, %v6617
    %v6629 = vpack.c.b16 %v6620, %v6619
    %v6630 = vpack.c.b16 %v6622, %v6621
    %6639 = vmatprep.subr.bf16.mxu0 0
    %6640 = vmatpush1.bf16.msra.mxu0 %v6623
    %6641 = vmatprep.subr.bf16.mxu0 0
    %6642 = vmatpush1.bf16.msra.mxu0 %v6624
    %6643 = vmatprep.subr.bf16.mxu0 0
    %6644 = vmatpush1.bf16.msra.mxu0 %v6625
    %6645 = vmatprep.subr.bf16.mxu0 0
    %6646 = vmatpush1.bf16.msra.mxu0 %v6626
    %6647 = vmatprep.subr.bf16.mxu0 0
    %6648 = vmatpush1.bf16.msra.mxu0 %v6627
    %6649 = vmatprep.subr.bf16.mxu0 0
    %6650 = vmatpush1.bf16.msra.mxu0 %v6628
    %6651 = vmatprep.subr.bf16.mxu0 0
    %6652 = vmatpush1.bf16.msra.mxu0 %v6629
    %6653 = vmatprep.subr.bf16.mxu0 0
    %6654 = vmatpush1.bf16.msra.mxu0 %v6630
    %6655 = vmatprep.subr.bf16.mxu0 0
    %6656 = vmatpush1.bf16.msra.mxu0 0
    %6657 = vmatprep.subr.bf16.mxu0 0
    %6658 = vmatpush1.bf16.msra.mxu0 0
    %6659 = vmatprep.subr.bf16.mxu0 0
    %6660 = vmatpush1.bf16.msra.mxu0 0
    %6661 = vmatprep.subr.bf16.mxu0 0
    %6662 = vmatpush1.bf16.msra.mxu0 0
    %6663 = vmatprep.subr.bf16.mxu0 0
    %6664 = vmatpush1.bf16.msra.mxu0 0
    %6665 = vmatprep.subr.bf16.mxu0 0
    %6666 = vmatpush1.bf16.msra.mxu0 0
    %6667 = vmatprep.subr.bf16.mxu0 0
    %6668 = vmatpush1.bf16.msra.mxu0 0
    %6669 = vmatprep.subr.bf16.mxu0 0
    %6670 = vmatpush1.bf16.msra.mxu0 0
    %6671 = vmatprep.mubr.bf16.mxu0 0
    %6672 = vmatmul.mubr.bf16.gmra.mrb[0].mxu0 %v6315
    %v6673 = vpop.f32.mrb[0].mxu0
    %v6674 = vadd.f32 %v6590, %v6673
    %v6675 = vpop.f32.mrb[0].mxu0
    %v6676 = vpop.f32.mrb[0].mxu0
    %v6677 = vpop.f32.mrb[0].mxu0
    %6678 = vdwg.mxu0
    %v6679 = vld [vmem:[%s943] sm:$0xf]
    %v6680 = vld [vmem:[%s943 + $0x4] sm:$0xf]
    %v6681 = vld [vmem:[%s943 + $0x8] sm:$0xf]
    %v6682 = vld [vmem:[%s943 + $0xc] sm:$0xf]
    %v6683 = vld [vmem:[%s943 + $0x10] sm:$0xf]
    %v6684 = vld [vmem:[%s943 + $0x14] sm:$0xf]
    %v6685 = vld [vmem:[%s943 + $0x18] sm:$0xf]
    %v6686 = vld [vmem:[%s943 + $0x1c] sm:$0xf]
    %v6687 = vld [vmem:[%s943 + $0x20] sm:$0xf]
    %v6688 = vld [vmem:[%s943 + $0x24] sm:$0xf]
    %v6689 = vld [vmem:[%s943 + $0x28] sm:$0xf]
    %v6690 = vld [vmem:[%s943 + $0x2c] sm:$0xf]
    %v6691 = vld [vmem:[%s943 + $0x30] sm:$0xf]
    %v6692 = vld [vmem:[%s943 + $0x34] sm:$0xf]
    %v6693 = vld [vmem:[%s943 + $0x38] sm:$0xf]
    %v6694 = vld [vmem:[%s943 + $0x3c] sm:$0xf]
    %v6695 = vld [vmem:[%s8 + $0x1] sm:$0x1]
    %v6712 = vunpack.c.l.b16 %v6679
    %v6713 = vunpack.c.l.b16 %v6680
    %v6714 = vunpack.c.l.b16 %v6681
    %v6715 = vunpack.c.l.b16 %v6682
    %v6716 = vunpack.c.l.b16 %v6683
    %v6717 = vunpack.c.l.b16 %v6684
    %v6718 = vunpack.c.l.b16 %v6685
    %v6719 = vunpack.c.l.b16 %v6686
    %v6720 = vunpack.c.l.b16 %v6687
    %v6721 = vunpack.c.l.b16 %v6688
    %v6722 = vunpack.c.l.b16 %v6689
    %v6723 = vunpack.c.l.b16 %v6690
    %v6724 = vunpack.c.l.b16 %v6691
    %v6725 = vunpack.c.l.b16 %v6692
    %v6726 = vunpack.c.l.b16 %v6693
    %v6727 = vunpack.c.l.b16 %v6694
    %v6728 = vpack.c.b16 %v6713, %v6712
    %v6729 = vpack.c.b16 %v6715, %v6714
    %v6730 = vpack.c.b16 %v6717, %v6716
    %v6731 = vpack.c.b16 %v6719, %v6718
    %v6732 = vpack.c.b16 %v6721, %v6720
    %v6733 = vpack.c.b16 %v6723, %v6722
    %v6734 = vpack.c.b16 %v6725, %v6724
    %v6735 = vpack.c.b16 %v6727, %v6726
    %6744 = vmatprep.subr.bf16.mxu0 0
    %6745 = vmatpush1.bf16.msra.mxu0 %v6728
    %6746 = vmatprep.subr.bf16.mxu0 0
    %6747 = vmatpush1.bf16.msra.mxu0 %v6729
    %6748 = vmatprep.subr.bf16.mxu0 0
    %6749 = vmatpush1.bf16.msra.mxu0 %v6730
    %6750 = vmatprep.subr.bf16.mxu0 0
    %6751 = vmatpush1.bf16.msra.mxu0 %v6731
    %6752 = vmatprep.subr.bf16.mxu0 0
    %6753 = vmatpush1.bf16.msra.mxu0 %v6732
    %6754 = vmatprep.subr.bf16.mxu0 0
    %6755 = vmatpush1.bf16.msra.mxu0 %v6733
    %6756 = vmatprep.subr.bf16.mxu0 0
    %6757 = vmatpush1.bf16.msra.mxu0 %v6734
    %6758 = vmatprep.subr.bf16.mxu0 0
    %6759 = vmatpush1.bf16.msra.mxu0 %v6735
    %6760 = vmatprep.subr.bf16.mxu0 0
    %6761 = vmatpush1.bf16.msra.mxu0 0
    %6762 = vmatprep.subr.bf16.mxu0 0
    %6763 = vmatpush1.bf16.msra.mxu0 0
    %6764 = vmatprep.subr.bf16.mxu0 0
    %6765 = vmatpush1.bf16.msra.mxu0 0
    %6766 = vmatprep.subr.bf16.mxu0 0
    %6767 = vmatpush1.bf16.msra.mxu0 0
    %6768 = vmatprep.subr.bf16.mxu0 0
    %6769 = vmatpush1.bf16.msra.mxu0 0
    %6770 = vmatprep.subr.bf16.mxu0 0
    %6771 = vmatpush1.bf16.msra.mxu0 0
    %6772 = vmatprep.subr.bf16.mxu0 0
    %6773 = vmatpush1.bf16.msra.mxu0 0
    %6774 = vmatprep.subr.bf16.mxu0 0
    %6775 = vmatpush1.bf16.msra.mxu0 0
    %6776 = vmatprep.mubr.bf16.mxu0 0
    %6777 = vmatmul.mubr.bf16.gmra.mrb[0].mxu0 %v6316
    %v6778 = vpop.f32.mrb[0].mxu0
    %v6779 = vadd.f32 %v6695, %v6778
    %v6780 = vpop.f32.mrb[0].mxu0
    %v6781 = vpop.f32.mrb[0].mxu0
    %v6782 = vpop.f32.mrb[0].mxu0
    %6783 = vdwg.mxu0
    %v6784 = vmul.f32 %v6567, %v6779
    %v6785 = vadd.f32 %v6674, %v6784
    %v6786 = vtanh.pop %v6785
    %v6787 = vsub.f32 1.0, %v6573
    %v6788 = vmul.f32 %v6787, %v6786
    %v6789 = vmul.f32 %v6573, %v5834
    %v6790 = vadd.f32 %v6788, %v6789
    %s6791 = scalar_lea.vmem %s9, 6
    %6792 = vst [vmem:[%s6791] sm:$0x1] %v6790
    %s6793 = sld [smem:[#allocation3 + $0x7]]
    %s6794 = scalar_lea.vmem [#allocation4], %s6793
    %v6795 = vld [vmem:[%s6794] sm:$0x1]
    %v6796 = vpack.c.bf16 %v6795, %v6795
    %v6797 = vld [vmem:[#allocation7] sm:$0xff]
    %v6798 = vld [vmem:[#allocation7 + $0x8] sm:$0xff]
    %v6799 = vld [vmem:[#allocation7 + $0x10] sm:$0xff]
    %v6800 = vld [vmem:[#allocation7 + $0x18] sm:$0xff]
    %v6801 = vld [vmem:[#allocation7 + $0x20] sm:$0xff]
    %v6802 = vld [vmem:[#allocation7 + $0x28] sm:$0xff]
    %v6803 = vld [vmem:[#allocation7 + $0x30] sm:$0xff]
    %v6804 = vld [vmem:[#allocation7 + $0x38] sm:$0xff]
    %v6805 = vld [vmem:[#allocation7 + $0x40] sm:$0xff]
    %v6806 = vld [vmem:[#allocation7 + $0x48] sm:$0xff]
    %v6807 = vld [vmem:[#allocation7 + $0x50] sm:$0xff]
    %v6808 = vld [vmem:[#allocation7 + $0x58] sm:$0xff]
    %v6809 = vld [vmem:[#allocation7 + $0x60] sm:$0xff]
    %v6810 = vld [vmem:[#allocation7 + $0x68] sm:$0xff]
    %v6811 = vld [vmem:[#allocation7 + $0x70] sm:$0xff]
    %v6812 = vld [vmem:[#allocation7 + $0x78] sm:$0xff]
    %v6813 = vld [vmem:[#allocation7 + $0x80] sm:$0xff]
    %v6814 = vld [vmem:[#allocation7 + $0x88] sm:$0xff]
    %v6815 = vld [vmem:[#allocation7 + $0x90] sm:$0xff]
    %v6816 = vld [vmem:[#allocation7 + $0x98] sm:$0xff]
    %v6817 = vld [vmem:[#allocation7 + $0xa0] sm:$0xff]
    %v6818 = vld [vmem:[#allocation7 + $0xa8] sm:$0xff]
    %v6819 = vld [vmem:[#allocation7 + $0xb0] sm:$0xff]
    %v6820 = vld [vmem:[#allocation7 + $0xb8] sm:$0xff]
    %v6821 = vld [vmem:[#allocation7 + $0xc0] sm:$0xff]
    %v6822 = vld [vmem:[#allocation7 + $0xc8] sm:$0xff]
    %v6823 = vld [vmem:[#allocation7 + $0xd0] sm:$0xff]
    %v6824 = vld [vmem:[#allocation7 + $0xd8] sm:$0xff]
    %v6825 = vld [vmem:[#allocation7 + $0xe0] sm:$0xff]
    %v6826 = vld [vmem:[#allocation7 + $0xe8] sm:$0xff]
    %v6827 = vld [vmem:[#allocation7 + $0xf0] sm:$0xff]
    %v6828 = vld [vmem:[#allocation7 + $0xf8] sm:$0xff]
    %v6829 = vld [vmem:[%s4] ss:$2 sm:$0x3]
    %v6862 = vunpack.c.l.b16 %v6797
    %v6863 = vunpack.c.h.b16 %v6797
    %v6864 = vunpack.c.l.b16 %v6798
    %v6865 = vunpack.c.h.b16 %v6798
    %v6866 = vunpack.c.l.b16 %v6799
    %v6867 = vunpack.c.h.b16 %v6799
    %v6868 = vunpack.c.l.b16 %v6800
    %v6869 = vunpack.c.h.b16 %v6800
    %v6870 = vunpack.c.l.b16 %v6801
    %v6871 = vunpack.c.h.b16 %v6801
    %v6872 = vunpack.c.l.b16 %v6802
    %v6873 = vunpack.c.h.b16 %v6802
    %v6874 = vunpack.c.l.b16 %v6803
    %v6875 = vunpack.c.h.b16 %v6803
    %v6876 = vunpack.c.l.b16 %v6804
    %v6877 = vunpack.c.h.b16 %v6804
    %v6878 = vunpack.c.l.b16 %v6805
    %v6879 = vunpack.c.h.b16 %v6805
    %v6880 = vunpack.c.l.b16 %v6806
    %v6881 = vunpack.c.h.b16 %v6806
    %v6882 = vunpack.c.l.b16 %v6807
    %v6883 = vunpack.c.h.b16 %v6807
    %v6884 = vunpack.c.l.b16 %v6808
    %v6885 = vunpack.c.h.b16 %v6808
    %v6886 = vunpack.c.l.b16 %v6809
    %v6887 = vunpack.c.h.b16 %v6809
    %v6888 = vunpack.c.l.b16 %v6810
    %v6889 = vunpack.c.h.b16 %v6810
    %v6890 = vunpack.c.l.b16 %v6811
    %v6891 = vunpack.c.h.b16 %v6811
    %v6892 = vunpack.c.l.b16 %v6812
    %v6893 = vunpack.c.h.b16 %v6812
    %v6894 = vunpack.c.l.b16 %v6813
    %v6895 = vunpack.c.h.b16 %v6813
    %v6896 = vunpack.c.l.b16 %v6814
    %v6897 = vunpack.c.h.b16 %v6814
    %v6898 = vunpack.c.l.b16 %v6815
    %v6899 = vunpack.c.h.b16 %v6815
    %v6900 = vunpack.c.l.b16 %v6816
    %v6901 = vunpack.c.h.b16 %v6816
    %v6902 = vunpack.c.l.b16 %v6817
    %v6903 = vunpack.c.h.b16 %v6817
    %v6904 = vunpack.c.l.b16 %v6818
    %v6905 = vunpack.c.h.b16 %v6818
    %v6906 = vunpack.c.l.b16 %v6819
    %v6907 = vunpack.c.h.b16 %v6819
    %v6908 = vunpack.c.l.b16 %v6820
    %v6909 = vunpack.c.h.b16 %v6820
    %v6910 = vunpack.c.l.b16 %v6821
    %v6911 = vunpack.c.h.b16 %v6821
    %v6912 = vunpack.c.l.b16 %v6822
    %v6913 = vunpack.c.h.b16 %v6822
    %v6914 = vunpack.c.l.b16 %v6823
    %v6915 = vunpack.c.h.b16 %v6823
    %v6916 = vunpack.c.l.b16 %v6824
    %v6917 = vunpack.c.h.b16 %v6824
    %v6918 = vunpack.c.l.b16 %v6825
    %v6919 = vunpack.c.h.b16 %v6825
    %v6920 = vunpack.c.l.b16 %v6826
    %v6921 = vunpack.c.h.b16 %v6826
    %v6922 = vunpack.c.l.b16 %v6827
    %v6923 = vunpack.c.h.b16 %v6827
    %v6924 = vunpack.c.l.b16 %v6828
    %v6925 = vunpack.c.h.b16 %v6828
    %v6926 = vpack.c.b16 %v6864, %v6862
    %v6927 = vpack.c.b16 %v6865, %v6863
    %v6928 = vpack.c.b16 %v6868, %v6866
    %v6929 = vpack.c.b16 %v6869, %v6867
    %v6930 = vpack.c.b16 %v6872, %v6870
    %v6931 = vpack.c.b16 %v6873, %v6871
    %v6932 = vpack.c.b16 %v6876, %v6874
    %v6933 = vpack.c.b16 %v6877, %v6875
    %v6934 = vpack.c.b16 %v6880, %v6878
    %v6935 = vpack.c.b16 %v6881, %v6879
    %v6936 = vpack.c.b16 %v6884, %v6882
    %v6937 = vpack.c.b16 %v6885, %v6883
    %v6938 = vpack.c.b16 %v6888, %v6886
    %v6939 = vpack.c.b16 %v6889, %v6887
    %v6940 = vpack.c.b16 %v6892, %v6890
    %v6941 = vpack.c.b16 %v6893, %v6891
    %v6942 = vpack.c.b16 %v6896, %v6894
    %v6943 = vpack.c.b16 %v6897, %v6895
    %v6944 = vpack.c.b16 %v6900, %v6898
    %v6945 = vpack.c.b16 %v6901, %v6899
    %v6946 = vpack.c.b16 %v6904, %v6902
    %v6947 = vpack.c.b16 %v6905, %v6903
    %v6948 = vpack.c.b16 %v6908, %v6906
    %v6949 = vpack.c.b16 %v6909, %v6907
    %v6950 = vpack.c.b16 %v6912, %v6910
    %v6951 = vpack.c.b16 %v6913, %v6911
    %v6952 = vpack.c.b16 %v6916, %v6914
    %v6953 = vpack.c.b16 %v6917, %v6915
    %v6954 = vpack.c.b16 %v6920, %v6918
    %v6955 = vpack.c.b16 %v6921, %v6919
    %v6956 = vpack.c.b16 %v6924, %v6922
    %v6957 = vpack.c.b16 %v6925, %v6923
    %v6991 = vlaneseq
    %v6992 = vshrl.u32 %v6991, 7
    %v6993 = vsub.s32 0, %v6992
    %v6994 = vrot.slane %v6829, %v6993
    %v6995 = vlaneseq
    %v6996 = vshrl.u32 %v6995, 7
    %v6997 = vsub.s32 1, %v6996
    %v6998 = vrot.slane %v6829, %v6997
    %7001 = vmatprep.subr.bf16.mxu0 %v6927
    %7002 = vmatpush1.bf16.msra.mxu0 %v6926
    %7003 = vmatprep.subr.bf16.mxu0 %v6929
    %7004 = vmatpush1.bf16.msra.mxu0 %v6928
    %7005 = vmatprep.subr.bf16.mxu0 %v6931
    %7006 = vmatpush1.bf16.msra.mxu0 %v6930
    %7007 = vmatprep.subr.bf16.mxu0 %v6933
    %7008 = vmatpush1.bf16.msra.mxu0 %v6932
    %7009 = vmatprep.subr.bf16.mxu0 %v6935
    %7010 = vmatpush1.bf16.msra.mxu0 %v6934
    %7011 = vmatprep.subr.bf16.mxu0 %v6937
    %7012 = vmatpush1.bf16.msra.mxu0 %v6936
    %7013 = vmatprep.subr.bf16.mxu0 %v6939
    %7014 = vmatpush1.bf16.msra.mxu0 %v6938
    %7015 = vmatprep.subr.bf16.mxu0 %v6941
    %7016 = vmatpush1.bf16.msra.mxu0 %v6940
    %7017 = vmatprep.subr.bf16.mxu0 %v6943
    %7018 = vmatpush1.bf16.msra.mxu0 %v6942
    %7019 = vmatprep.subr.bf16.mxu0 %v6945
    %7020 = vmatpush1.bf16.msra.mxu0 %v6944
    %7021 = vmatprep.subr.bf16.mxu0 %v6947
    %7022 = vmatpush1.bf16.msra.mxu0 %v6946
    %7023 = vmatprep.subr.bf16.mxu0 %v6949
    %7024 = vmatpush1.bf16.msra.mxu0 %v6948
    %7025 = vmatprep.subr.bf16.mxu0 %v6951
    %7026 = vmatpush1.bf16.msra.mxu0 %v6950
    %7027 = vmatprep.subr.bf16.mxu0 %v6953
    %7028 = vmatpush1.bf16.msra.mxu0 %v6952
    %7029 = vmatprep.subr.bf16.mxu0 %v6955
    %7030 = vmatpush1.bf16.msra.mxu0 %v6954
    %7031 = vmatprep.subr.bf16.mxu0 %v6957
    %7032 = vmatpush1.bf16.msra.mxu0 %v6956
    %7033 = vmatprep.mubr.bf16.mxu0 %v6315
    %7034 = vmatmul.mubr.bf16.gmra.mrb[0].mxu0 %v6796
    %v7035 = vpop.f32.mrb[0].mxu0
    %v7036 = vadd.f32 %v6994, %v7035
    %v7037 = vpop.f32.mrb[0].mxu0
    %v7038 = vadd.f32 %v6998, %v7037
    %v7039 = vpop.f32.mrb[0].mxu0
    %v7040 = vpop.f32.mrb[0].mxu0
    %7041 = vdwg.mxu0
    %v7042 = vxor.u32 %v7036, 2147483648
    %v7043 = vmul.f32 %v7042, 1.442695
    %v7044 = vpow.pop %v7043
    %v7045 = vadd.f32 %v7044, 1.0
    %v7046 = vrcp.pop %v7045
    %v7047 = vmul.f32 1.0, %v7046
    %v7048 = vxor.u32 %v7038, 2147483648
    %v7049 = vmul.f32 %v7048, 1.442695
    %v7050 = vpow.pop %v7049
    %v7051 = vadd.f32 %v7050, 1.0
    %v7052 = vrcp.pop %v7051
    %v7053 = vmul.f32 1.0, %v7052
    %v7054 = vld [vmem:[#allocation9] sm:$0xf]
    %v7055 = vld [vmem:[#allocation9 + $0x4] sm:$0xf]
    %v7056 = vld [vmem:[#allocation9 + $0x8] sm:$0xf]
    %v7057 = vld [vmem:[#allocation9 + $0xc] sm:$0xf]
    %v7058 = vld [vmem:[#allocation9 + $0x10] sm:$0xf]
    %v7059 = vld [vmem:[#allocation9 + $0x14] sm:$0xf]
    %v7060 = vld [vmem:[#allocation9 + $0x18] sm:$0xf]
    %v7061 = vld [vmem:[#allocation9 + $0x1c] sm:$0xf]
    %v7062 = vld [vmem:[#allocation9 + $0x20] sm:$0xf]
    %v7063 = vld [vmem:[#allocation9 + $0x24] sm:$0xf]
    %v7064 = vld [vmem:[#allocation9 + $0x28] sm:$0xf]
    %v7065 = vld [vmem:[#allocation9 + $0x2c] sm:$0xf]
    %v7066 = vld [vmem:[#allocation9 + $0x30] sm:$0xf]
    %v7067 = vld [vmem:[#allocation9 + $0x34] sm:$0xf]
    %v7068 = vld [vmem:[#allocation9 + $0x38] sm:$0xf]
    %v7069 = vld [vmem:[#allocation9 + $0x3c] sm:$0xf]
    %v7070 = vld [vmem:[%s6] sm:$0x1]
    %v7087 = vunpack.c.l.b16 %v7054
    %v7088 = vunpack.c.l.b16 %v7055
    %v7089 = vunpack.c.l.b16 %v7056
    %v7090 = vunpack.c.l.b16 %v7057
    %v7091 = vunpack.c.l.b16 %v7058
    %v7092 = vunpack.c.l.b16 %v7059
    %v7093 = vunpack.c.l.b16 %v7060
    %v7094 = vunpack.c.l.b16 %v7061
    %v7095 = vunpack.c.l.b16 %v7062
    %v7096 = vunpack.c.l.b16 %v7063
    %v7097 = vunpack.c.l.b16 %v7064
    %v7098 = vunpack.c.l.b16 %v7065
    %v7099 = vunpack.c.l.b16 %v7066
    %v7100 = vunpack.c.l.b16 %v7067
    %v7101 = vunpack.c.l.b16 %v7068
    %v7102 = vunpack.c.l.b16 %v7069
    %v7103 = vpack.c.b16 %v7088, %v7087
    %v7104 = vpack.c.b16 %v7090, %v7089
    %v7105 = vpack.c.b16 %v7092, %v7091
    %v7106 = vpack.c.b16 %v7094, %v7093
    %v7107 = vpack.c.b16 %v7096, %v7095
    %v7108 = vpack.c.b16 %v7098, %v7097
    %v7109 = vpack.c.b16 %v7100, %v7099
    %v7110 = vpack.c.b16 %v7102, %v7101
    %7119 = vmatprep.subr.bf16.mxu0 0
    %7120 = vmatpush1.bf16.msra.mxu0 %v7103
    %7121 = vmatprep.subr.bf16.mxu0 0
    %7122 = vmatpush1.bf16.msra.mxu0 %v7104
    %7123 = vmatprep.subr.bf16.mxu0 0
    %7124 = vmatpush1.bf16.msra.mxu0 %v7105
    %7125 = vmatprep.subr.bf16.mxu0 0
    %7126 = vmatpush1.bf16.msra.mxu0 %v7106
    %7127 = vmatprep.subr.bf16.mxu0 0
    %7128 = vmatpush1.bf16.msra.mxu0 %v7107
    %7129 = vmatprep.subr.bf16.mxu0 0
    %7130 = vmatpush1.bf16.msra.mxu0 %v7108
    %7131 = vmatprep.subr.bf16.mxu0 0
    %7132 = vmatpush1.bf16.msra.mxu0 %v7109
    %7133 = vmatprep.subr.bf16.mxu0 0
    %7134 = vmatpush1.bf16.msra.mxu0 %v7110
    %7135 = vmatprep.subr.bf16.mxu0 0
    %7136 = vmatpush1.bf16.msra.mxu0 0
    %7137 = vmatprep.subr.bf16.mxu0 0
    %7138 = vmatpush1.bf16.msra.mxu0 0
    %7139 = vmatprep.subr.bf16.mxu0 0
    %7140 = vmatpush1.bf16.msra.mxu0 0
    %7141 = vmatprep.subr.bf16.mxu0 0
    %7142 = vmatpush1.bf16.msra.mxu0 0
    %7143 = vmatprep.subr.bf16.mxu0 0
    %7144 = vmatpush1.bf16.msra.mxu0 0
    %7145 = vmatprep.subr.bf16.mxu0 0
    %7146 = vmatpush1.bf16.msra.mxu0 0
    %7147 = vmatprep.subr.bf16.mxu0 0
    %7148 = vmatpush1.bf16.msra.mxu0 0
    %7149 = vmatprep.subr.bf16.mxu0 0
    %7150 = vmatpush1.bf16.msra.mxu0 0
    %7151 = vmatprep.mubr.bf16.mxu0 0
    %7152 = vmatmul.mubr.bf16.gmra.mrb[0].mxu0 %v6796
    %v7153 = vpop.f32.mrb[0].mxu0
    %v7154 = vadd.f32 %v7070, %v7153
    %v7155 = vpop.f32.mrb[0].mxu0
    %v7156 = vpop.f32.mrb[0].mxu0
    %v7157 = vpop.f32.mrb[0].mxu0
    %7158 = vdwg.mxu0
    %v7159 = vld [vmem:[#allocation10] sm:$0xf]
    %v7160 = vld [vmem:[#allocation10 + $0x4] sm:$0xf]
    %v7161 = vld [vmem:[#allocation10 + $0x8] sm:$0xf]
    %v7162 = vld [vmem:[#allocation10 + $0xc] sm:$0xf]
    %v7163 = vld [vmem:[#allocation10 + $0x10] sm:$0xf]
    %v7164 = vld [vmem:[#allocation10 + $0x14] sm:$0xf]
    %v7165 = vld [vmem:[#allocation10 + $0x18] sm:$0xf]
    %v7166 = vld [vmem:[#allocation10 + $0x1c] sm:$0xf]
    %v7167 = vld [vmem:[#allocation10 + $0x20] sm:$0xf]
    %v7168 = vld [vmem:[#allocation10 + $0x24] sm:$0xf]
    %v7169 = vld [vmem:[#allocation10 + $0x28] sm:$0xf]
    %v7170 = vld [vmem:[#allocation10 + $0x2c] sm:$0xf]
    %v7171 = vld [vmem:[#allocation10 + $0x30] sm:$0xf]
    %v7172 = vld [vmem:[#allocation10 + $0x34] sm:$0xf]
    %v7173 = vld [vmem:[#allocation10 + $0x38] sm:$0xf]
    %v7174 = vld [vmem:[#allocation10 + $0x3c] sm:$0xf]
    %v7175 = vld [vmem:[%s8] sm:$0x1]
    %v7192 = vunpack.c.l.b16 %v7159
    %v7193 = vunpack.c.l.b16 %v7160
    %v7194 = vunpack.c.l.b16 %v7161
    %v7195 = vunpack.c.l.b16 %v7162
    %v7196 = vunpack.c.l.b16 %v7163
    %v7197 = vunpack.c.l.b16 %v7164
    %v7198 = vunpack.c.l.b16 %v7165
    %v7199 = vunpack.c.l.b16 %v7166
    %v7200 = vunpack.c.l.b16 %v7167
    %v7201 = vunpack.c.l.b16 %v7168
    %v7202 = vunpack.c.l.b16 %v7169
    %v7203 = vunpack.c.l.b16 %v7170
    %v7204 = vunpack.c.l.b16 %v7171
    %v7205 = vunpack.c.l.b16 %v7172
    %v7206 = vunpack.c.l.b16 %v7173
    %v7207 = vunpack.c.l.b16 %v7174
    %v7208 = vpack.c.b16 %v7193, %v7192
    %v7209 = vpack.c.b16 %v7195, %v7194
    %v7210 = vpack.c.b16 %v7197, %v7196
    %v7211 = vpack.c.b16 %v7199, %v7198
    %v7212 = vpack.c.b16 %v7201, %v7200
    %v7213 = vpack.c.b16 %v7203, %v7202
    %v7214 = vpack.c.b16 %v7205, %v7204
    %v7215 = vpack.c.b16 %v7207, %v7206
    %7224 = vmatprep.subr.bf16.mxu0 0
    %7225 = vmatpush1.bf16.msra.mxu0 %v7208
    %7226 = vmatprep.subr.bf16.mxu0 0
    %7227 = vmatpush1.bf16.msra.mxu0 %v7209
    %7228 = vmatprep.subr.bf16.mxu0 0
    %7229 = vmatpush1.bf16.msra.mxu0 %v7210
    %7230 = vmatprep.subr.bf16.mxu0 0
    %7231 = vmatpush1.bf16.msra.mxu0 %v7211
    %7232 = vmatprep.subr.bf16.mxu0 0
    %7233 = vmatpush1.bf16.msra.mxu0 %v7212
    %7234 = vmatprep.subr.bf16.mxu0 0
    %7235 = vmatpush1.bf16.msra.mxu0 %v7213
    %7236 = vmatprep.subr.bf16.mxu0 0
    %7237 = vmatpush1.bf16.msra.mxu0 %v7214
    %7238 = vmatprep.subr.bf16.mxu0 0
    %7239 = vmatpush1.bf16.msra.mxu0 %v7215
    %7240 = vmatprep.subr.bf16.mxu0 0
    %7241 = vmatpush1.bf16.msra.mxu0 0
    %7242 = vmatprep.subr.bf16.mxu0 0
    %7243 = vmatpush1.bf16.msra.mxu0 0
    %7244 = vmatprep.subr.bf16.mxu0 0
    %7245 = vmatpush1.bf16.msra.mxu0 0
    %7246 = vmatprep.subr.bf16.mxu0 0
    %7247 = vmatpush1.bf16.msra.mxu0 0
    %7248 = vmatprep.subr.bf16.mxu0 0
    %7249 = vmatpush1.bf16.msra.mxu0 0
    %7250 = vmatprep.subr.bf16.mxu0 0
    %7251 = vmatpush1.bf16.msra.mxu0 0
    %7252 = vmatprep.subr.bf16.mxu0 0
    %7253 = vmatpush1.bf16.msra.mxu0 0
    %7254 = vmatprep.subr.bf16.mxu0 0
    %7255 = vmatpush1.bf16.msra.mxu0 0
    %7256 = vmatprep.mubr.bf16.mxu0 0
    %7257 = vmatmul.mubr.bf16.gmra.mrb[0].mxu0 %v6315
    %v7258 = vpop.f32.mrb[0].mxu0
    %v7259 = vadd.f32 %v7175, %v7258
    %v7260 = vpop.f32.mrb[0].mxu0
    %v7261 = vpop.f32.mrb[0].mxu0
    %v7262 = vpop.f32.mrb[0].mxu0
    %7263 = vdwg.mxu0
    %v7264 = vmul.f32 %v7047, %v7259
    %v7265 = vadd.f32 %v7154, %v7264
    %v7266 = vtanh.pop %v7265
    %v7267 = vsub.f32 1.0, %v7053
    %v7268 = vmul.f32 %v7267, %v7266
    %v7269 = vmul.f32 %v7053, %v6314
    %v7270 = vadd.f32 %v7268, %v7269
    %v7271 = vpack.c.bf16 %v7270, %v7270
    %v7272 = vpack.c.bf16 %v6790, %v6790
    %v7273 = vld [vmem:[%s578] sm:$0xff]
    %v7274 = vld [vmem:[%s578 + $0x8] sm:$0xff]
    %v7275 = vld [vmem:[%s578 + $0x10] sm:$0xff]
    %v7276 = vld [vmem:[%s578 + $0x18] sm:$0xff]
    %v7277 = vld [vmem:[%s578 + $0x20] sm:$0xff]
    %v7278 = vld [vmem:[%s578 + $0x28] sm:$0xff]
    %v7279 = vld [vmem:[%s578 + $0x30] sm:$0xff]
    %v7280 = vld [vmem:[%s578 + $0x38] sm:$0xff]
    %v7281 = vld [vmem:[%s578 + $0x40] sm:$0xff]
    %v7282 = vld [vmem:[%s578 + $0x48] sm:$0xff]
    %v7283 = vld [vmem:[%s578 + $0x50] sm:$0xff]
    %v7284 = vld [vmem:[%s578 + $0x58] sm:$0xff]
    %v7285 = vld [vmem:[%s578 + $0x60] sm:$0xff]
    %v7286 = vld [vmem:[%s578 + $0x68] sm:$0xff]
    %v7287 = vld [vmem:[%s578 + $0x70] sm:$0xff]
    %v7288 = vld [vmem:[%s578 + $0x78] sm:$0xff]
    %v7289 = vld [vmem:[%s578 + $0x80] sm:$0xff]
    %v7290 = vld [vmem:[%s578 + $0x88] sm:$0xff]
    %v7291 = vld [vmem:[%s578 + $0x90] sm:$0xff]
    %v7292 = vld [vmem:[%s578 + $0x98] sm:$0xff]
    %v7293 = vld [vmem:[%s578 + $0xa0] sm:$0xff]
    %v7294 = vld [vmem:[%s578 + $0xa8] sm:$0xff]
    %v7295 = vld [vmem:[%s578 + $0xb0] sm:$0xff]
    %v7296 = vld [vmem:[%s578 + $0xb8] sm:$0xff]
    %v7297 = vld [vmem:[%s578 + $0xc0] sm:$0xff]
    %v7298 = vld [vmem:[%s578 + $0xc8] sm:$0xff]
    %v7299 = vld [vmem:[%s578 + $0xd0] sm:$0xff]
    %v7300 = vld [vmem:[%s578 + $0xd8] sm:$0xff]
    %v7301 = vld [vmem:[%s578 + $0xe0] sm:$0xff]
    %v7302 = vld [vmem:[%s578 + $0xe8] sm:$0xff]
    %v7303 = vld [vmem:[%s578 + $0xf0] sm:$0xff]
    %v7304 = vld [vmem:[%s578 + $0xf8] sm:$0xff]
    %v7305 = vld [vmem:[%s611] ss:$2 sm:$0x3]
    %v7338 = vunpack.c.l.b16 %v7273
    %v7339 = vunpack.c.h.b16 %v7273
    %v7340 = vunpack.c.l.b16 %v7274
    %v7341 = vunpack.c.h.b16 %v7274
    %v7342 = vunpack.c.l.b16 %v7275
    %v7343 = vunpack.c.h.b16 %v7275
    %v7344 = vunpack.c.l.b16 %v7276
    %v7345 = vunpack.c.h.b16 %v7276
    %v7346 = vunpack.c.l.b16 %v7277
    %v7347 = vunpack.c.h.b16 %v7277
    %v7348 = vunpack.c.l.b16 %v7278
    %v7349 = vunpack.c.h.b16 %v7278
    %v7350 = vunpack.c.l.b16 %v7279
    %v7351 = vunpack.c.h.b16 %v7279
    %v7352 = vunpack.c.l.b16 %v7280
    %v7353 = vunpack.c.h.b16 %v7280
    %v7354 = vunpack.c.l.b16 %v7281
    %v7355 = vunpack.c.h.b16 %v7281
    %v7356 = vunpack.c.l.b16 %v7282
    %v7357 = vunpack.c.h.b16 %v7282
    %v7358 = vunpack.c.l.b16 %v7283
    %v7359 = vunpack.c.h.b16 %v7283
    %v7360 = vunpack.c.l.b16 %v7284
    %v7361 = vunpack.c.h.b16 %v7284
    %v7362 = vunpack.c.l.b16 %v7285
    %v7363 = vunpack.c.h.b16 %v7285
    %v7364 = vunpack.c.l.b16 %v7286
    %v7365 = vunpack.c.h.b16 %v7286
    %v7366 = vunpack.c.l.b16 %v7287
    %v7367 = vunpack.c.h.b16 %v7287
    %v7368 = vunpack.c.l.b16 %v7288
    %v7369 = vunpack.c.h.b16 %v7288
    %v7370 = vunpack.c.l.b16 %v7289
    %v7371 = vunpack.c.h.b16 %v7289
    %v7372 = vunpack.c.l.b16 %v7290
    %v7373 = vunpack.c.h.b16 %v7290
    %v7374 = vunpack.c.l.b16 %v7291
    %v7375 = vunpack.c.h.b16 %v7291
    %v7376 = vunpack.c.l.b16 %v7292
    %v7377 = vunpack.c.h.b16 %v7292
    %v7378 = vunpack.c.l.b16 %v7293
    %v7379 = vunpack.c.h.b16 %v7293
    %v7380 = vunpack.c.l.b16 %v7294
    %v7381 = vunpack.c.h.b16 %v7294
    %v7382 = vunpack.c.l.b16 %v7295
    %v7383 = vunpack.c.h.b16 %v7295
    %v7384 = vunpack.c.l.b16 %v7296
    %v7385 = vunpack.c.h.b16 %v7296
    %v7386 = vunpack.c.l.b16 %v7297
    %v7387 = vunpack.c.h.b16 %v7297
    %v7388 = vunpack.c.l.b16 %v7298
    %v7389 = vunpack.c.h.b16 %v7298
    %v7390 = vunpack.c.l.b16 %v7299
    %v7391 = vunpack.c.h.b16 %v7299
    %v7392 = vunpack.c.l.b16 %v7300
    %v7393 = vunpack.c.h.b16 %v7300
    %v7394 = vunpack.c.l.b16 %v7301
    %v7395 = vunpack.c.h.b16 %v7301
    %v7396 = vunpack.c.l.b16 %v7302
    %v7397 = vunpack.c.h.b16 %v7302
    %v7398 = vunpack.c.l.b16 %v7303
    %v7399 = vunpack.c.h.b16 %v7303
    %v7400 = vunpack.c.l.b16 %v7304
    %v7401 = vunpack.c.h.b16 %v7304
    %v7402 = vpack.c.b16 %v7340, %v7338
    %v7403 = vpack.c.b16 %v7341, %v7339
    %v7404 = vpack.c.b16 %v7344, %v7342
    %v7405 = vpack.c.b16 %v7345, %v7343
    %v7406 = vpack.c.b16 %v7348, %v7346
    %v7407 = vpack.c.b16 %v7349, %v7347
    %v7408 = vpack.c.b16 %v7352, %v7350
    %v7409 = vpack.c.b16 %v7353, %v7351
    %v7410 = vpack.c.b16 %v7356, %v7354
    %v7411 = vpack.c.b16 %v7357, %v7355
    %v7412 = vpack.c.b16 %v7360, %v7358
    %v7413 = vpack.c.b16 %v7361, %v7359
    %v7414 = vpack.c.b16 %v7364, %v7362
    %v7415 = vpack.c.b16 %v7365, %v7363
    %v7416 = vpack.c.b16 %v7368, %v7366
    %v7417 = vpack.c.b16 %v7369, %v7367
    %v7418 = vpack.c.b16 %v7372, %v7370
    %v7419 = vpack.c.b16 %v7373, %v7371
    %v7420 = vpack.c.b16 %v7376, %v7374
    %v7421 = vpack.c.b16 %v7377, %v7375
    %v7422 = vpack.c.b16 %v7380, %v7378
    %v7423 = vpack.c.b16 %v7381, %v7379
    %v7424 = vpack.c.b16 %v7384, %v7382
    %v7425 = vpack.c.b16 %v7385, %v7383
    %v7426 = vpack.c.b16 %v7388, %v7386
    %v7427 = vpack.c.b16 %v7389, %v7387
    %v7428 = vpack.c.b16 %v7392, %v7390
    %v7429 = vpack.c.b16 %v7393, %v7391
    %v7430 = vpack.c.b16 %v7396, %v7394
    %v7431 = vpack.c.b16 %v7397, %v7395
    %v7432 = vpack.c.b16 %v7400, %v7398
    %v7433 = vpack.c.b16 %v7401, %v7399
    %v7467 = vlaneseq
    %v7468 = vshrl.u32 %v7467, 7
    %v7469 = vsub.s32 0, %v7468
    %v7470 = vrot.slane %v7305, %v7469
    %v7471 = vlaneseq
    %v7472 = vshrl.u32 %v7471, 7
    %v7473 = vsub.s32 1, %v7472
    %v7474 = vrot.slane %v7305, %v7473
    %7477 = vmatprep.subr.bf16.mxu0 %v7403
    %7478 = vmatpush1.bf16.msra.mxu0 %v7402
    %7479 = vmatprep.subr.bf16.mxu0 %v7405
    %7480 = vmatpush1.bf16.msra.mxu0 %v7404
    %7481 = vmatprep.subr.bf16.mxu0 %v7407
    %7482 = vmatpush1.bf16.msra.mxu0 %v7406
    %7483 = vmatprep.subr.bf16.mxu0 %v7409
    %7484 = vmatpush1.bf16.msra.mxu0 %v7408
    %7485 = vmatprep.subr.bf16.mxu0 %v7411
    %7486 = vmatpush1.bf16.msra.mxu0 %v7410
    %7487 = vmatprep.subr.bf16.mxu0 %v7413
    %7488 = vmatpush1.bf16.msra.mxu0 %v7412
    %7489 = vmatprep.subr.bf16.mxu0 %v7415
    %7490 = vmatpush1.bf16.msra.mxu0 %v7414
    %7491 = vmatprep.subr.bf16.mxu0 %v7417
    %7492 = vmatpush1.bf16.msra.mxu0 %v7416
    %7493 = vmatprep.subr.bf16.mxu0 %v7419
    %7494 = vmatpush1.bf16.msra.mxu0 %v7418
    %7495 = vmatprep.subr.bf16.mxu0 %v7421
    %7496 = vmatpush1.bf16.msra.mxu0 %v7420
    %7497 = vmatprep.subr.bf16.mxu0 %v7423
    %7498 = vmatpush1.bf16.msra.mxu0 %v7422
    %7499 = vmatprep.subr.bf16.mxu0 %v7425
    %7500 = vmatpush1.bf16.msra.mxu0 %v7424
    %7501 = vmatprep.subr.bf16.mxu0 %v7427
    %7502 = vmatpush1.bf16.msra.mxu0 %v7426
    %7503 = vmatprep.subr.bf16.mxu0 %v7429
    %7504 = vmatpush1.bf16.msra.mxu0 %v7428
    %7505 = vmatprep.subr.bf16.mxu0 %v7431
    %7506 = vmatpush1.bf16.msra.mxu0 %v7430
    %7507 = vmatprep.subr.bf16.mxu0 %v7433
    %7508 = vmatpush1.bf16.msra.mxu0 %v7432
    %7509 = vmatprep.mubr.bf16.mxu0 %v7272
    %7510 = vmatmul.mubr.bf16.gmra.mrb[0].mxu0 %v7271
    %v7511 = vpop.f32.mrb[0].mxu0
    %v7512 = vadd.f32 %v7470, %v7511
    %v7513 = vpop.f32.mrb[0].mxu0
    %v7514 = vadd.f32 %v7474, %v7513
    %v7515 = vpop.f32.mrb[0].mxu0
    %v7516 = vpop.f32.mrb[0].mxu0
    %7517 = vdwg.mxu0
    %v7518 = vxor.u32 %v7512, 2147483648
    %v7519 = vmul.f32 %v7518, 1.442695
    %v7520 = vpow.pop %v7519
    %v7521 = vadd.f32 %v7520, 1.0
    %v7522 = vrcp.pop %v7521
    %v7523 = vmul.f32 1.0, %v7522
    %v7524 = vxor.u32 %v7514, 2147483648
    %v7525 = vmul.f32 %v7524, 1.442695
    %v7526 = vpow.pop %v7525
    %v7527 = vadd.f32 %v7526, 1.0
    %v7528 = vrcp.pop %v7527
    %v7529 = vmul.f32 1.0, %v7528
    %v7530 = vld [vmem:[%s837] sm:$0xf]
    %v7531 = vld [vmem:[%s837 + $0x4] sm:$0xf]
    %v7532 = vld [vmem:[%s837 + $0x8] sm:$0xf]
    %v7533 = vld [vmem:[%s837 + $0xc] sm:$0xf]
    %v7534 = vld [vmem:[%s837 + $0x10] sm:$0xf]
    %v7535 = vld [vmem:[%s837 + $0x14] sm:$0xf]
    %v7536 = vld [vmem:[%s837 + $0x18] sm:$0xf]
    %v7537 = vld [vmem:[%s837 + $0x1c] sm:$0xf]
    %v7538 = vld [vmem:[%s837 + $0x20] sm:$0xf]
    %v7539 = vld [vmem:[%s837 + $0x24] sm:$0xf]
    %v7540 = vld [vmem:[%s837 + $0x28] sm:$0xf]
    %v7541 = vld [vmem:[%s837 + $0x2c] sm:$0xf]
    %v7542 = vld [vmem:[%s837 + $0x30] sm:$0xf]
    %v7543 = vld [vmem:[%s837 + $0x34] sm:$0xf]
    %v7544 = vld [vmem:[%s837 + $0x38] sm:$0xf]
    %v7545 = vld [vmem:[%s837 + $0x3c] sm:$0xf]
    %v7546 = vld [vmem:[%s6 + $0x1] sm:$0x1]
    %v7563 = vunpack.c.l.b16 %v7530
    %v7564 = vunpack.c.l.b16 %v7531
    %v7565 = vunpack.c.l.b16 %v7532
    %v7566 = vunpack.c.l.b16 %v7533
    %v7567 = vunpack.c.l.b16 %v7534
    %v7568 = vunpack.c.l.b16 %v7535
    %v7569 = vunpack.c.l.b16 %v7536
    %v7570 = vunpack.c.l.b16 %v7537
    %v7571 = vunpack.c.l.b16 %v7538
    %v7572 = vunpack.c.l.b16 %v7539
    %v7573 = vunpack.c.l.b16 %v7540
    %v7574 = vunpack.c.l.b16 %v7541
    %v7575 = vunpack.c.l.b16 %v7542
    %v7576 = vunpack.c.l.b16 %v7543
    %v7577 = vunpack.c.l.b16 %v7544
    %v7578 = vunpack.c.l.b16 %v7545
    %v7579 = vpack.c.b16 %v7564, %v7563
    %v7580 = vpack.c.b16 %v7566, %v7565
    %v7581 = vpack.c.b16 %v7568, %v7567
    %v7582 = vpack.c.b16 %v7570, %v7569
    %v7583 = vpack.c.b16 %v7572, %v7571
    %v7584 = vpack.c.b16 %v7574, %v7573
    %v7585 = vpack.c.b16 %v7576, %v7575
    %v7586 = vpack.c.b16 %v7578, %v7577
    %7595 = vmatprep.subr.bf16.mxu0 0
    %7596 = vmatpush1.bf16.msra.mxu0 %v7579
    %7597 = vmatprep.subr.bf16.mxu0 0
    %7598 = vmatpush1.bf16.msra.mxu0 %v7580
    %7599 = vmatprep.subr.bf16.mxu0 0
    %7600 = vmatpush1.bf16.msra.mxu0 %v7581
    %7601 = vmatprep.subr.bf16.mxu0 0
    %7602 = vmatpush1.bf16.msra.mxu0 %v7582
    %7603 = vmatprep.subr.bf16.mxu0 0
    %7604 = vmatpush1.bf16.msra.mxu0 %v7583
    %7605 = vmatprep.subr.bf16.mxu0 0
    %7606 = vmatpush1.bf16.msra.mxu0 %v7584
    %7607 = vmatprep.subr.bf16.mxu0 0
    %7608 = vmatpush1.bf16.msra.mxu0 %v7585
    %7609 = vmatprep.subr.bf16.mxu0 0
    %7610 = vmatpush1.bf16.msra.mxu0 %v7586
    %7611 = vmatprep.subr.bf16.mxu0 0
    %7612 = vmatpush1.bf16.msra.mxu0 0
    %7613 = vmatprep.subr.bf16.mxu0 0
    %7614 = vmatpush1.bf16.msra.mxu0 0
    %7615 = vmatprep.subr.bf16.mxu0 0
    %7616 = vmatpush1.bf16.msra.mxu0 0
    %7617 = vmatprep.subr.bf16.mxu0 0
    %7618 = vmatpush1.bf16.msra.mxu0 0
    %7619 = vmatprep.subr.bf16.mxu0 0
    %7620 = vmatpush1.bf16.msra.mxu0 0
    %7621 = vmatprep.subr.bf16.mxu0 0
    %7622 = vmatpush1.bf16.msra.mxu0 0
    %7623 = vmatprep.subr.bf16.mxu0 0
    %7624 = vmatpush1.bf16.msra.mxu0 0
    %7625 = vmatprep.subr.bf16.mxu0 0
    %7626 = vmatpush1.bf16.msra.mxu0 0
    %7627 = vmatprep.mubr.bf16.mxu0 0
    %7628 = vmatmul.mubr.bf16.gmra.mrb[0].mxu0 %v7271
    %v7629 = vpop.f32.mrb[0].mxu0
    %v7630 = vadd.f32 %v7546, %v7629
    %v7631 = vpop.f32.mrb[0].mxu0
    %v7632 = vpop.f32.mrb[0].mxu0
    %v7633 = vpop.f32.mrb[0].mxu0
    %7634 = vdwg.mxu0
    %v7635 = vld [vmem:[%s943] sm:$0xf]
    %v7636 = vld [vmem:[%s943 + $0x4] sm:$0xf]
    %v7637 = vld [vmem:[%s943 + $0x8] sm:$0xf]
    %v7638 = vld [vmem:[%s943 + $0xc] sm:$0xf]
    %v7639 = vld [vmem:[%s943 + $0x10] sm:$0xf]
    %v7640 = vld [vmem:[%s943 + $0x14] sm:$0xf]
    %v7641 = vld [vmem:[%s943 + $0x18] sm:$0xf]
    %v7642 = vld [vmem:[%s943 + $0x1c] sm:$0xf]
    %v7643 = vld [vmem:[%s943 + $0x20] sm:$0xf]
    %v7644 = vld [vmem:[%s943 + $0x24] sm:$0xf]
    %v7645 = vld [vmem:[%s943 + $0x28] sm:$0xf]
    %v7646 = vld [vmem:[%s943 + $0x2c] sm:$0xf]
    %v7647 = vld [vmem:[%s943 + $0x30] sm:$0xf]
    %v7648 = vld [vmem:[%s943 + $0x34] sm:$0xf]
    %v7649 = vld [vmem:[%s943 + $0x38] sm:$0xf]
    %v7650 = vld [vmem:[%s943 + $0x3c] sm:$0xf]
    %v7651 = vld [vmem:[%s8 + $0x1] sm:$0x1]
    %v7668 = vunpack.c.l.b16 %v7635
    %v7669 = vunpack.c.l.b16 %v7636
    %v7670 = vunpack.c.l.b16 %v7637
    %v7671 = vunpack.c.l.b16 %v7638
    %v7672 = vunpack.c.l.b16 %v7639
    %v7673 = vunpack.c.l.b16 %v7640
    %v7674 = vunpack.c.l.b16 %v7641
    %v7675 = vunpack.c.l.b16 %v7642
    %v7676 = vunpack.c.l.b16 %v7643
    %v7677 = vunpack.c.l.b16 %v7644
    %v7678 = vunpack.c.l.b16 %v7645
    %v7679 = vunpack.c.l.b16 %v7646
    %v7680 = vunpack.c.l.b16 %v7647
    %v7681 = vunpack.c.l.b16 %v7648
    %v7682 = vunpack.c.l.b16 %v7649
    %v7683 = vunpack.c.l.b16 %v7650
    %v7684 = vpack.c.b16 %v7669, %v7668
    %v7685 = vpack.c.b16 %v7671, %v7670
    %v7686 = vpack.c.b16 %v7673, %v7672
    %v7687 = vpack.c.b16 %v7675, %v7674
    %v7688 = vpack.c.b16 %v7677, %v7676
    %v7689 = vpack.c.b16 %v7679, %v7678
    %v7690 = vpack.c.b16 %v7681, %v7680
    %v7691 = vpack.c.b16 %v7683, %v7682
    %7700 = vmatprep.subr.bf16.mxu0 0
    %7701 = vmatpush1.bf16.msra.mxu0 %v7684
    %7702 = vmatprep.subr.bf16.mxu0 0
    %7703 = vmatpush1.bf16.msra.mxu0 %v7685
    %7704 = vmatprep.subr.bf16.mxu0 0
    %7705 = vmatpush1.bf16.msra.mxu0 %v7686
    %7706 = vmatprep.subr.bf16.mxu0 0
    %7707 = vmatpush1.bf16.msra.mxu0 %v7687
    %7708 = vmatprep.subr.bf16.mxu0 0
    %7709 = vmatpush1.bf16.msra.mxu0 %v7688
    %7710 = vmatprep.subr.bf16.mxu0 0
    %7711 = vmatpush1.bf16.msra.mxu0 %v7689
    %7712 = vmatprep.subr.bf16.mxu0 0
    %7713 = vmatpush1.bf16.msra.mxu0 %v7690
    %7714 = vmatprep.subr.bf16.mxu0 0
    %7715 = vmatpush1.bf16.msra.mxu0 %v7691
    %7716 = vmatprep.subr.bf16.mxu0 0
    %7717 = vmatpush1.bf16.msra.mxu0 0
    %7718 = vmatprep.subr.bf16.mxu0 0
    %7719 = vmatpush1.bf16.msra.mxu0 0
    %7720 = vmatprep.subr.bf16.mxu0 0
    %7721 = vmatpush1.bf16.msra.mxu0 0
    %7722 = vmatprep.subr.bf16.mxu0 0
    %7723 = vmatpush1.bf16.msra.mxu0 0
    %7724 = vmatprep.subr.bf16.mxu0 0
    %7725 = vmatpush1.bf16.msra.mxu0 0
    %7726 = vmatprep.subr.bf16.mxu0 0
    %7727 = vmatpush1.bf16.msra.mxu0 0
    %7728 = vmatprep.subr.bf16.mxu0 0
    %7729 = vmatpush1.bf16.msra.mxu0 0
    %7730 = vmatprep.subr.bf16.mxu0 0
    %7731 = vmatpush1.bf16.msra.mxu0 0
    %7732 = vmatprep.mubr.bf16.mxu0 0
    %7733 = vmatmul.mubr.bf16.gmra.mrb[0].mxu0 %v7272
    %v7734 = vpop.f32.mrb[0].mxu0
    %v7735 = vadd.f32 %v7651, %v7734
    %v7736 = vpop.f32.mrb[0].mxu0
    %v7737 = vpop.f32.mrb[0].mxu0
    %v7738 = vpop.f32.mrb[0].mxu0
    %7739 = vdwg.mxu0
    %v7740 = vmul.f32 %v7523, %v7735
    %v7741 = vadd.f32 %v7630, %v7740
    %v7742 = vtanh.pop %v7741
    %v7743 = vsub.f32 1.0, %v7529
    %v7744 = vmul.f32 %v7743, %v7742
    %v7745 = vmul.f32 %v7529, %v6790
    %v7746 = vadd.f32 %v7744, %v7745
    %s7747 = scalar_lea.vmem %s9, 7
    %7748 = vst [vmem:[%s7747] sm:$0x1] %v7746
    %v7750 = vrot.slane %v7746, 7
    %vm7752 = vcmask 1040384
    %v7753 = vsel %vm7752, %v7270, %v7750
    %7754 = vst [vmem:[#allocation12] sm:$0x3] %v7753
    // Predicated region
    $region50: #{rnn_decode_sequence.2} parent=1 // pred_check
      _
    $region51: #{rnn_decode_sequence.2} parent=1 // pred_check_branch
      %7756 = sbr.rel (0) target = $region53
    $region52: #{rnn_decode_sequence.2} parent=1 // pred_region
      _
    $region53: #{rnn_decode_sequence.2} parent=1 // pred_fallthru
      _
    // Predicated region
    $region54: #{rnn_decode_sequence.2} parent=1 // pred_check
      _
    $region55: #{rnn_decode_sequence.2} parent=1 // pred_check_branch
      %7758 = sbr.rel (0) target = $region57
    $region56: #{rnn_decode_sequence.2} parent=1 // pred_region
      %s7760 = ssub.s32 32, 32
      %7761 = vsyncadd [#allocation6], %s7760
      %s7763 = sshll.u32 [#allocation12], 4
      %s7764 = int_to_ptr.vmem [resolvable:$true] %s7763
      %7766 = dma.vmem_to_hbm [thread:$0]  %s7764, 32, %s10, [#allocation6]
    $region57: #{rnn_decode_sequence.2} parent=1 // pred_fallthru
      _
    // Predicated region
    $region58: #{rnn_decode_sequence.2} parent=1 // pred_check
      _
    $region59: #{rnn_decode_sequence.2} parent=1 // pred_check_branch
      %7768 = sbr.rel (0) target = $region61
    $region60: #{rnn_decode_sequence.2} parent=1 // pred_region
      _
    $region61: #{rnn_decode_sequence.2} parent=1 // pred_fallthru
      _
    // Predicated region
    $region62: #{rnn_decode_sequence.2} parent=1 // pred_check
      _
    $region63: #{rnn_decode_sequence.2} parent=1 // pred_check_branch
      %7770 = sbr.rel (0) target = $region65
    $region64: #{rnn_decode_sequence.2} parent=1 // pred_region
      %7771 = dma.done [#allocation6], 32
    $region65: #{rnn_decode_sequence.2} parent=1 // pred_fallthru
      _
    %7772 = vsyncpa [#allocation5], 1
    %7773 = vsyncpa [#allocation8], 1
    %7774 = vsyncpa [#allocation11], 1
    %7775 = vsyncpa [#allocation6], 1

</llo_original>
